<compile_context>
chip_gen: v5e
topology: v5e:2x2
jax: 0.10.0
libtpu: 0.0.40
codegen_flags: <defaults>
</compile_context>

<pallas_src>
import functools
import math

import jax
import jax.numpy as jnp
from jax import lax
from jax.experimental import pallas as pl
from jax.experimental.pallas import tpu as pltpu

_INV_SQRT2 = 0.7071067811865475
_GN_EPS = 1e-5                       # torch.nn.GroupNorm default
_VMEM_LIMIT_BYTES = 40 * 1024 * 1024  # safe on v5e/v6e (128 MiB) and v7x (64 MiB/TC)


def _gelu_exact(x):
    # torch.nn.GELU() default (approximate='none'): 0.5*x*(1+erf(x/sqrt(2)))
    return 0.5 * x * (1.0 + lax.erf(x * _INV_SQRT2))


def _cdiv(a, b):
    return (a + b - 1) // b


def _round_up(a, b):
    return _cdiv(a, b) * b


def _pick_tile_t(t_out, tile_t):
    tile_t = max(128, _round_up(tile_t, 128))
    return min(tile_t, _round_up(t_out, 128))


def _time_pad(h, rows):
    if h.shape[1] < rows:
        h = jnp.pad(h, ((0, 0), (0, rows - h.shape[1]), (0, 0)))
    return h


def _compiler_params(semantics):
    return pltpu.CompilerParams(dimension_semantics=semantics,
                                vmem_limit_bytes=_VMEM_LIMIT_BYTES)


# ---------------------------------------------------------------------------
# In-kernel helpers
# ---------------------------------------------------------------------------
def _fill_window(win_ref, xm_ref, xh_ref, blk_in, halo):
    """Assemble the f32 conv window (main block + small halo) in VMEM scratch."""
    win_ref[0:blk_in, :] = xm_ref[0].astype(jnp.float32)
    if halo > 0:
        win_ref[blk_in:, :] = xh_ref[0].astype(jnp.float32)


def _l0_conv_taps(win_ref, w_ref, k, stride, tile_t):
    """Layer-0 conv (Cin==1): K broadcast FMAs on the VPU, f32."""
    c = w_ref.shape[1]
    acc = jnp.zeros((tile_t, c), jnp.float32)
    for j in range(k):
        xj = win_ref[pl.ds(j, tile_t, stride=stride), :]      # (tile_t, 1) f32
        acc = acc + xj * w_ref[j:j + 1, :]                     # (tile_t,1)*(1,C) -> (tile_t,C)
    return acc


# ---------------------------------------------------------------------------
# Pallas kernels
# ---------------------------------------------------------------------------
def _l0_stats_kernel(*refs, k, stride, tile_t, blk_in, halo, t_valid):
    """Pass 1 of layer-0 GroupNorm: masked per-(batch, channel) sum / sumsq over all time tiles."""
    if halo > 0:
        xm_ref, xh_ref, w_ref, sum_ref, sq_ref, win_ref = refs
    else:
        xm_ref, w_ref, sum_ref, sq_ref, win_ref = refs
        xh_ref = None
    t = pl.program_id(1)

    @pl.when(t == 0)
    def _init():
        sum_ref[...] = jnp.zeros_like(sum_ref)
        sq_ref[...] = jnp.zeros_like(sq_ref)

    _fill_window(win_ref, xm_ref, xh_ref, blk_in, halo)
    y = _l0_conv_taps(win_ref, w_ref, k, stride, tile_t)        # (tile_t, C) f32
    rows = t * tile_t + lax.broadcasted_iota(jnp.int32, (tile_t, 1), 0)
    y = jnp.where(rows < t_valid, y, 0.0)                       # mask padded output rows
    sum_ref[0] = sum_ref[0] + jnp.sum(y, axis=0, keepdims=True)
    sq_ref[0] = sq_ref[0] + jnp.sum(y * y, axis=0, keepdims=True)


def _l0_apply_kernel(*refs, k, stride, tile_t, blk_in, halo):
    """Pass 2 of layer 0: recompute cheap conv, apply GroupNorm scale/shift, exact GELU."""
    if halo > 0:
        xm_ref, xh_ref, w_ref, scale_ref, shift_ref, o_ref, win_ref = refs
    else:
        xm_ref, w_ref, scale_ref, shift_ref, o_ref, win_ref = refs
        xh_ref = None
    _fill_window(win_ref, xm_ref, xh_ref, blk_in, halo)
    y = _l0_conv_taps(win_ref, w_ref, k, stride, tile_t)        # (tile_t, C) f32
    y = y * scale_ref[0] + shift_ref[0]                          # per-(batch, channel) affine
    o_ref[0] = _gelu_exact(y).astype(o_ref.dtype)


def _conv_gelu_kernel(*refs, k, stride, tile_t, blk_in, halo, c_out, out_nct):
    """Layers >= 1: K strided taps x bf16 MXU dots with f32 accumulation, then exact GELU.

    If out_nct, the (tile_t, Cout) tile is transposed in-kernel so the output is stored
    directly in PyTorch's (B, C, T) layout (no separate transpose pass over HBM).
    """
    if halo > 0:
        xm_ref, xh_ref, w_ref, o_ref, win_ref = refs
    else:
        xm_ref, w_ref, o_ref, win_ref = refs
        xh_ref = None
    _fill_window(win_ref, xm_ref, xh_ref, blk_in, halo)
    acc = jnp.zeros((tile_t, c_out), jnp.float32)
    for j in range(k):
        xj = win_ref[pl.ds(j, tile_t, stride=stride), :].astype(jnp.bfloat16)   # (tile_t, Cin)
        acc = acc + jnp.dot(xj, w_ref[j], preferred_element_type=jnp.float32)
    y = _gelu_exact(acc)
    if out_nct:
        o_ref[0] = jnp.transpose(y).astype(o_ref.dtype)          # (Cout, tile_t)
    else:
        o_ref[0] = y.astype(o_ref.dtype)


# ---------------------------------------------------------------------------
# Per-layer wrappers (build grids / BlockSpecs)
# ---------------------------------------------------------------------------
def _layer0_conv_gn_gelu(x, p, *, act_dtype, tile_t):
    """x: (B, T) raw signal. Returns (h, t_valid) with h: (B, n_t*tile, C) act_dtype."""
    w_tap = p["w_tap"]                         # (K, C) f32
    k, stride = p["k"], p["stride"]
    B, T = x.shape
    C = w_tap.shape[1]
    t_out = (T - k) // stride + 1
    tile = _pick_tile_t(t_out, tile_t)
    n_t = _cdiv(t_out, tile)
    blk_in = tile * stride
    halo = max(k - stride, 0)
    halo_blk = 8 if halo > 0 else 0
    assert halo <= 8  # TODO(synk): generalize halo block sizing for k - stride > 8
    x3 = _time_pad(x.astype(jnp.float32)[:, :, None], n_t * blk_in + halo_blk)  # (B, Tpad, 1)

    in_specs = [pl.BlockSpec((1, blk_in, 1), lambda b, t: (b, t, 0))]
    inputs = [x3]
    if halo > 0:
        hsteps = blk_in // halo_blk
        in_specs.append(pl.BlockSpec((1, halo_blk, 1), lambda b, t: (b, (t + 1) * hsteps, 0)))
        inputs.append(x3)
    in_specs.append(pl.BlockSpec((k, C), lambda b, t: (0, 0)))   # resident weights
    inputs.append(w_tap)
    scratch = [pltpu.VMEM((blk_in + halo_blk, 1), jnp.float32)]

    # pass 1: GroupNorm statistics accumulated across the (arbitrary) time-tile axis
    sums, sqs = pl.pallas_call(
        functools.partial(_l0_stats_kernel, k=k, stride=stride, tile_t=tile,
                          blk_in=blk_in, halo=halo, t_valid=t_out),
        grid=(B, n_t),
        in_specs=in_specs,
        out_specs=[pl.BlockSpec((1, 1, C), lambda b, t: (b, 0, 0)),
                   pl.BlockSpec((1, 1, C), lambda b, t: (b, 0, 0))],
        out_shape=[jax.ShapeDtypeStruct((B, 1, C), jnp.float32),
                   jax.ShapeDtypeStruct((B, 1, C), jnp.float32)],
        scratch_shapes=scratch,
        compiler_params=_compiler_params(("parallel", "arbitrary")),
    )(*inputs)

    mean = sums / float(t_out)
    var = jnp.maximum(sqs / float(t_out) - mean * mean, 0.0)     # biased variance (torch GroupNorm)
    rstd = lax.rsqrt(var + _GN_EPS)
    scale = p["gamma"].reshape(1, 1, C).astype(jnp.float32) * rstd           # (B, 1, C)
    shift = p["beta"].reshape(1, 1, C).astype(jnp.float32) - mean * scale

    # pass 2: recompute cheap conv, fused GroupNorm affine + GELU, store bf16
    in_specs2 = list(in_specs) + [pl.BlockSpec((1, 1, C), lambda b, t: (b, 0, 0)),
                                  pl.BlockSpec((1, 1, C), lambda b, t: (b, 0, 0))]
    inputs2 = list(inputs) + [scale, shift]
    h = pl.pallas_call(
        functools.partial(_l0_apply_kernel, k=k, stride=stride, tile_t=tile,
                          blk_in=blk_in, halo=halo),
        grid=(B, n_t),
        in_specs=in_specs2,
        out_specs=pl.BlockSpec((1, tile, C), lambda b, t: (b, t, 0)),
        out_shape=jax.ShapeDtypeStruct((B, n_t * tile, C), act_dtype),
        scratch_shapes=scratch,
        compiler_params=_compiler_params(("parallel", "parallel")),
    )(*inputs2)
    return h, t_out


def _conv_gelu_layer(h, t_in, p, *, out_nct, act_dtype, tile_t):
    """h: (B, >=t_in, Cin) act_dtype. Returns (out, t_out)."""
    w_kio = p["w_kio"]                          # (K, Cin, Cout) bf16
    k, stride = p["k"], p["stride"]
    B, _, Cin = h.shape
    Cout = w_kio.shape[2]
    t_out = (t_in - k) // stride + 1
    tile = _pick_tile_t(t_out, tile_t)
    n_t = _cdiv(t_out, tile)
    blk_in = tile * stride
    halo = max(k - stride, 0)
    halo_blk = 8 if halo > 0 else 0
    assert halo <= 8  # TODO(synk): generalize halo block sizing for k - stride > 8
    h = _time_pad(h, n_t * blk_in + halo_blk)

    in_specs = [pl.BlockSpec((1, blk_in, Cin), lambda b, t: (b, t, 0))]
    inputs = [h]
    if halo > 0:
        hsteps = blk_in // halo_blk
        in_specs.append(pl.BlockSpec((1, halo_blk, Cin), lambda b, t: (b, (t + 1) * hsteps, 0)))
        inputs.append(h)
    in_specs.append(pl.BlockSpec((k, Cin, Cout), lambda b, t: (0, 0, 0)))    # resident weights
    inputs.append(w_kio)

    if out_nct:
        out_spec = pl.BlockSpec((1, Cout, tile), lambda b, t: (b, 0, t))
        out_shape = jax.ShapeDtypeStruct((B, Cout, n_t * tile), act_dtype)
    else:
        out_spec = pl.BlockSpec((1, tile, Cout), lambda b, t: (b, t, 0))
        out_shape = jax.ShapeDtypeStruct((B, n_t * tile, Cout), act_dtype)

    out = pl.pallas_call(
        functools.partial(_conv_gelu_kernel, k=k, stride=stride, tile_t=tile,
                          blk_in=blk_in, halo=halo, c_out=Cout, out_nct=out_nct),
        grid=(B, n_t),
        in_specs=in_specs,
        out_specs=out_spec,
        out_shape=out_shape,
        scratch_shapes=[pltpu.VMEM((blk_in + halo_blk, Cin), jnp.float32)],
        compiler_params=_compiler_params(("parallel", "parallel")),
    )(*inputs)
    return out, t_out


# ---------------------------------------------------------------------------
# Parameters / forward / reference
# ---------------------------------------------------------------------------
def init_params(key, conv_layers):
    """Matches the PyTorch __init__ shapes: Conv1d weight (Cout, Cin, K), kaiming_normal_."""
    params = []
    in_d = 1
    for i, (dim, k, stride) in enumerate(conv_layers):
        key, wk, gk, bk = jax.random.split(key, 4)
        std = math.sqrt(2.0 / (in_d * k))                                  # fan_in, gain=sqrt(2)
        w = jax.random.normal(wk, (dim, in_d, k), jnp.float32) * std       # (Cout, Cin, K)
        entry = dict(k=k, stride=stride, w=w)
        if i == 0:
            assert in_d == 1
            entry["w_tap"] = jnp.transpose(w, (2, 1, 0)).reshape(k, dim)   # (K, C) f32
            # torch GroupNorm default init is weight=1/bias=0; randomized here to exercise the affine path
            entry["gamma"] = 1.0 + 0.1 * jax.random.normal(gk, (dim,), jnp.float32)
            entry["beta"] = 0.1 * jax.random.normal(bk, (dim,), jnp.float32)
        else:
            entry["w_kio"] = jnp.transpose(w, (2, 1, 0)).astype(jnp.bfloat16)  # (K, Cin, Cout) bf16
        params.append(entry)
        in_d = dim
    return params


def conv_feature_extraction_forward(x, params, *, tile_t=512, act_dtype=jnp.bfloat16):
    """x: (B, T) raw signal -> (B, C_last, T_out), matching the PyTorch module layout."""
    h, t_valid = _layer0_conv_gn_gelu(x, params[0], act_dtype=act_dtype, tile_t=tile_t)
    n = len(params)
    for i in range(1, n):
        h, t_valid = _conv_gelu_layer(h, t_valid, params[i], out_nct=(i == n - 1),
                                      act_dtype=act_dtype, tile_t=tile_t)
    if n == 1:
        h = jnp.transpose(h, (0, 2, 1))        # single-layer case: transpose not fused
    return h[:, :, :t_valid]


def reference_forward(x, params, act_dtype=jnp.bfloat16):
    """Pure-JAX reference with the same precision policy (f32 layer 0 + GN, bf16 matmuls, bf16 storage)."""
    h = x.astype(jnp.float32)[:, None, :]       # (B, 1, T)
    for i, p in enumerate(params):
        if i == 0:
            y = lax.conv_general_dilated(
                h, p["w"].astype(jnp.float32), (p["stride"],), "VALID",
                dimension_numbers=("NCH", "OIH", "NCH"),
                precision=lax.Precision.HIGHEST)
            mean = jnp.mean(y, axis=2, keepdims=True)
            var = jnp.mean(jnp.square(y - mean), axis=2, keepdims=True)
            y = (y - mean) * lax.rsqrt(var + _GN_EPS)
            y = y * p["gamma"].reshape(1, -1, 1) + p["beta"].reshape(1, -1, 1)
        else:
            w = jnp.transpose(p["w_kio"], (2, 1, 0))                       # (Cout, Cin, K) bf16
            y = lax.conv_general_dilated(
                h.astype(jnp.bfloat16), w, (p["stride"],), "VALID",
                dimension_numbers=("NCH", "OIH", "NCH"),
                preferred_element_type=jnp.float32)
        h = _gelu_exact(y.astype(jnp.float32)).astype(act_dtype).astype(jnp.float32)
    return h.astype(act_dtype)


if __name__ == "__main__":
    # Small SpeechT5-flavoured config: (dim, kernel, stride). Exercises GroupNorm layer,
    # halo'd strided convs, multi-tile time grids, masked tails and the fused NCT output.
    conv_layers = [(64, 10, 5), (64, 3, 2), (64, 2, 2)]
    B, T = 2, 2048

    key = jax.random.PRNGKey(0)
    key, xkey = jax.random.split(key)
    x = jax.random.normal(xkey, (B, T), jnp.float32)
    params = init_params(key, conv_layers)

    fwd = jax.jit(lambda xx: conv_feature_extraction_forward(xx, params, tile_t=128))
    out = jax.block_until_ready(fwd(x))

    ref = jax.block_until_ready(reference_forward(x, params))
    assert out.shape == ref.shape, (out.shape, ref.shape)
    out_f = out.astype(jnp.float32)
    ref_f = ref.astype(jnp.float32)
    max_err = float(jnp.max(jnp.abs(out_f - ref_f)))
    assert bool(jnp.allclose(out_f, ref_f, atol=2e-2, rtol=2e-2)), max_err

    print("KERNEL_OK")
</pallas_src>

<mosaic_0001>
module attributes {stable_mosaic.version = 11 : i64} {
  func.func @_l0_stats_kernel(%arg0: i32, %arg1: i32, %arg2: memref<1x640x1xf32, #tpu.memory_space<vmem>>, %arg3: memref<1x8x1xf32, #tpu.memory_space<vmem>>, %arg4: memref<10x64xf32, #tpu.memory_space<vmem>>, %arg5: memref<1x1x64xf32, #tpu.memory_space<vmem>>, %arg6: memref<1x1x64xf32, #tpu.memory_space<vmem>>, %arg7: memref<648x1xf32, #tpu.memory_space<vmem>>) attributes {dimension_semantics = [#tpu.dimension_semantics<parallel>, #tpu.dimension_semantics<arbitrary>], iteration_bounds = array<i64: 2, 4>, scalar_prefetch = 0 : i64, scratch_operands = 1 : i64, tpu.core_type = #tpu.core_type<tc>, window_params = [{transform_indices = @transform_0, window_bounds = array<i64: 1, 640, 1>}, {transform_indices = @transform_1, window_bounds = array<i64: 1, 8, 1>}, {pipeline_mode = #tpu.pipeline_mode<synchronous>, transform_indices = @transform_2, window_bounds = array<i64: 10, 64>}, {transform_indices = @transform_3, window_bounds = array<i64: 1, 1, 64>}, {transform_indices = @transform_4, window_bounds = array<i64: 1, 1, 64>}]} {
    %c0_i32 = arith.constant 0 : i32
    %0 = arith.cmpi eq, %arg1, %c0_i32 : i32
    %1 = arith.extui %0 : i1 to i32
    %c0_i32_0 = arith.constant 0 : i32
    %2 = arith.cmpi ne, %1, %c0_i32_0 : i32
    scf.if %2 {
      %cst_55 = arith.constant 0.000000e+00 : f32
      %97 = vector.broadcast %cst_55 : f32 to vector<1x1x64xf32>
      %c0_56 = arith.constant 0 : index
      %c0_57 = arith.constant 0 : index
      %c0_58 = arith.constant 0 : index
      %98 = vector.load %arg5[%c0_56, %c0_57, %c0_58] : memref<1x1x64xf32, #tpu.memory_space<vmem>>, vector<1x1x64xf32>
      tpu.vector_store %arg5[%c0_56, %c0_57, %c0_58], %97 {strides = array<i32>} : memref<1x1x64xf32, #tpu.memory_space<vmem>>, vector<1x1x64xf32>,
      %cst_59 = arith.constant 0.000000e+00 : f32
      %99 = vector.broadcast %cst_59 : f32 to vector<1x1x64xf32>
      %c0_60 = arith.constant 0 : index
      %c0_61 = arith.constant 0 : index
      %c0_62 = arith.constant 0 : index
      %100 = vector.load %arg6[%c0_60, %c0_61, %c0_62] : memref<1x1x64xf32, #tpu.memory_space<vmem>>, vector<1x1x64xf32>
      tpu.vector_store %arg6[%c0_60, %c0_61, %c0_62], %99 {strides = array<i32>} : memref<1x1x64xf32, #tpu.memory_space<vmem>>, vector<1x1x64xf32>,
    } else {
    }
    %c0 = arith.constant 0 : index
    %c0_1 = arith.constant 0 : index
    %c0_2 = arith.constant 0 : index
    %3 = vector.load %arg2[%c0, %c0_1, %c0_2] : memref<1x640x1xf32, #tpu.memory_space<vmem>>, vector<1x640x1xf32>
    %4 = vector.shape_cast %3 : vector<1x640x1xf32> to vector<640x1xf32>
    %c0_3 = arith.constant 0 : index
    %c0_4 = arith.constant 0 : index
    %5 = vector.load %arg7[%c0_3, %c0_4] : memref<648x1xf32, #tpu.memory_space<vmem>>, vector<640x1xf32>
    tpu.vector_store %arg7[%c0_3, %c0_4], %4 {strides = array<i32>} : memref<648x1xf32, #tpu.memory_space<vmem>>, vector<640x1xf32>,
    %c0_5 = arith.constant 0 : index
    %c0_6 = arith.constant 0 : index
    %c0_7 = arith.constant 0 : index
    %6 = vector.load %arg3[%c0_5, %c0_6, %c0_7] : memref<1x8x1xf32, #tpu.memory_space<vmem>>, vector<1x8x1xf32>
    %7 = vector.shape_cast %6 : vector<1x8x1xf32> to vector<8x1xf32>
    %c640 = arith.constant 640 : index
    %c0_8 = arith.constant 0 : index
    %8 = vector.load %arg7[%c640, %c0_8] : memref<648x1xf32, #tpu.memory_space<vmem>>, vector<8x1xf32>
    tpu.vector_store %arg7[%c640, %c0_8], %7 {strides = array<i32>} : memref<648x1xf32, #tpu.memory_space<vmem>>, vector<8x1xf32>,
    %cst = arith.constant 0.000000e+00 : f32
    %9 = vector.broadcast %cst : f32 to vector<128x64xf32>
    %c0_9 = arith.constant 0 : index
    %c0_10 = arith.constant 0 : index
    %10 = tpu.strided_load %arg7[%c0_9, %c0_10] {strides = array<i32: 5, 1>} : memref<648x1xf32, #tpu.memory_space<vmem>>, vector<128x1xf32>
    %c0_11 = arith.constant 0 : index
    %c0_12 = arith.constant 0 : index
    %11 = vector.load %arg4[%c0_11, %c0_12] : memref<10x64xf32, #tpu.memory_space<vmem>>, vector<1x64xf32>
    %12 = vector.broadcast %10 : vector<128x1xf32> to vector<128x64xf32>
    %13 = vector.broadcast %11 : vector<1x64xf32> to vector<128x64xf32>
    %14 = arith.mulf %12, %13 : vector<128x64xf32>
    %15 = arith.addf %9, %14 : vector<128x64xf32>
    %c1 = arith.constant 1 : index
    %c0_13 = arith.constant 0 : index
    %16 = tpu.strided_load %arg7[%c1, %c0_13] {strides = array<i32: 5, 1>} : memref<648x1xf32, #tpu.memory_space<vmem>>, vector<128x1xf32>
    %c1_14 = arith.constant 1 : index
    %c0_15 = arith.constant 0 : index
    %17 = vector.load %arg4[%c1_14, %c0_15] : memref<10x64xf32, #tpu.memory_space<vmem>>, vector<1x64xf32>
    %18 = vector.broadcast %16 : vector<128x1xf32> to vector<128x64xf32>
    %19 = vector.broadcast %17 : vector<1x64xf32> to vector<128x64xf32>
    %20 = arith.mulf %18, %19 : vector<128x64xf32>
    %21 = arith.addf %15, %20 : vector<128x64xf32>
    %c2 = arith.constant 2 : index
    %c0_16 = arith.constant 0 : index
    %22 = tpu.strided_load %arg7[%c2, %c0_16] {strides = array<i32: 5, 1>} : memref<648x1xf32, #tpu.memory_space<vmem>>, vector<128x1xf32>
    %c2_17 = arith.constant 2 : index
    %c0_18 = arith.constant 0 : index
    %23 = vector.load %arg4[%c2_17, %c0_18] : memref<10x64xf32, #tpu.memory_space<vmem>>, vector<1x64xf32>
    %24 = vector.broadcast %22 : vector<128x1xf32> to vector<128x64xf32>
    %25 = vector.broadcast %23 : vector<1x64xf32> to vector<128x64xf32>
    %26 = arith.mulf %24, %25 : vector<128x64xf32>
    %27 = arith.addf %21, %26 : vector<128x64xf32>
    %c3 = arith.constant 3 : index
    %c0_19 = arith.constant 0 : index
    %28 = tpu.strided_load %arg7[%c3, %c0_19] {strides = array<i32: 5, 1>} : memref<648x1xf32, #tpu.memory_space<vmem>>, vector<128x1xf32>
    %c3_20 = arith.constant 3 : index
    %c0_21 = arith.constant 0 : index
    %29 = vector.load %arg4[%c3_20, %c0_21] : memref<10x64xf32, #tpu.memory_space<vmem>>, vector<1x64xf32>
    %30 = vector.broadcast %28 : vector<128x1xf32> to vector<128x64xf32>
    %31 = vector.broadcast %29 : vector<1x64xf32> to vector<128x64xf32>
    %32 = arith.mulf %30, %31 : vector<128x64xf32>
    %33 = arith.addf %27, %32 : vector<128x64xf32>
    %c4 = arith.constant 4 : index
    %c0_22 = arith.constant 0 : index
    %34 = tpu.strided_load %arg7[%c4, %c0_22] {strides = array<i32: 5, 1>} : memref<648x1xf32, #tpu.memory_space<vmem>>, vector<128x1xf32>
    %c4_23 = arith.constant 4 : index
    %c0_24 = arith.constant 0 : index
    %35 = vector.load %arg4[%c4_23, %c0_24] : memref<10x64xf32, #tpu.memory_space<vmem>>, vector<1x64xf32>
    %36 = vector.broadcast %34 : vector<128x1xf32> to vector<128x64xf32>
    %37 = vector.broadcast %35 : vector<1x64xf32> to vector<128x64xf32>
    %38 = arith.mulf %36, %37 : vector<128x64xf32>
    %39 = arith.addf %33, %38 : vector<128x64xf32>
    %c5 = arith.constant 5 : index
    %c0_25 = arith.constant 0 : index
    %40 = tpu.strided_load %arg7[%c5, %c0_25] {strides = array<i32: 5, 1>} : memref<648x1xf32, #tpu.memory_space<vmem>>, vector<128x1xf32>
    %c5_26 = arith.constant 5 : index
    %c0_27 = arith.constant 0 : index
    %41 = vector.load %arg4[%c5_26, %c0_27] : memref<10x64xf32, #tpu.memory_space<vmem>>, vector<1x64xf32>
    %42 = vector.broadcast %40 : vector<128x1xf32> to vector<128x64xf32>
    %43 = vector.broadcast %41 : vector<1x64xf32> to vector<128x64xf32>
    %44 = arith.mulf %42, %43 : vector<128x64xf32>
    %45 = arith.addf %39, %44 : vector<128x64xf32>
    %c6 = arith.constant 6 : index
    %c0_28 = arith.constant 0 : index
    %46 = tpu.strided_load %arg7[%c6, %c0_28] {strides = array<i32: 5, 1>} : memref<648x1xf32, #tpu.memory_space<vmem>>, vector<128x1xf32>
    %c6_29 = arith.constant 6 : index
    %c0_30 = arith.constant 0 : index
    %47 = vector.load %arg4[%c6_29, %c0_30] : memref<10x64xf32, #tpu.memory_space<vmem>>, vector<1x64xf32>
    %48 = vector.broadcast %46 : vector<128x1xf32> to vector<128x64xf32>
    %49 = vector.broadcast %47 : vector<1x64xf32> to vector<128x64xf32>
    %50 = arith.mulf %48, %49 : vector<128x64xf32>
    %51 = arith.addf %45, %50 : vector<128x64xf32>
    %c7 = arith.constant 7 : index
    %c0_31 = arith.constant 0 : index
    %52 = tpu.strided_load %arg7[%c7, %c0_31] {strides = array<i32: 5, 1>} : memref<648x1xf32, #tpu.memory_space<vmem>>, vector<128x1xf32>
    %c7_32 = arith.constant 7 : index
    %c0_33 = arith.constant 0 : index
    %53 = vector.load %arg4[%c7_32, %c0_33] : memref<10x64xf32, #tpu.memory_space<vmem>>, vector<1x64xf32>
    %54 = vector.broadcast %52 : vector<128x1xf32> to vector<128x64xf32>
    %55 = vector.broadcast %53 : vector<1x64xf32> to vector<128x64xf32>
    %56 = arith.mulf %54, %55 : vector<128x64xf32>
    %57 = arith.addf %51, %56 : vector<128x64xf32>
    %c8 = arith.constant 8 : index
    %c0_34 = arith.constant 0 : index
    %58 = tpu.strided_load %arg7[%c8, %c0_34] {strides = array<i32: 5, 1>} : memref<648x1xf32, #tpu.memory_space<vmem>>, vector<128x1xf32>
    %c8_35 = arith.constant 8 : index
    %c0_36 = arith.constant 0 : index
    %59 = vector.load %arg4[%c8_35, %c0_36] : memref<10x64xf32, #tpu.memory_space<vmem>>, vector<1x64xf32>
    %60 = vector.broadcast %58 : vector<128x1xf32> to vector<128x64xf32>
    %61 = vector.broadcast %59 : vector<1x64xf32> to vector<128x64xf32>
    %62 = arith.mulf %60, %61 : vector<128x64xf32>
    %63 = arith.addf %57, %62 : vector<128x64xf32>
    %c9 = arith.constant 9 : index
    %c0_37 = arith.constant 0 : index
    %64 = tpu.strided_load %arg7[%c9, %c0_37] {strides = array<i32: 5, 1>} : memref<648x1xf32, #tpu.memory_space<vmem>>, vector<128x1xf32>
    %c9_38 = arith.constant 9 : index
    %c0_39 = arith.constant 0 : index
    %65 = vector.load %arg4[%c9_38, %c0_39] : memref<10x64xf32, #tpu.memory_space<vmem>>, vector<1x64xf32>
    %66 = vector.broadcast %64 : vector<128x1xf32> to vector<128x64xf32>
    %67 = vector.broadcast %65 : vector<1x64xf32> to vector<128x64xf32>
    %68 = arith.mulf %66, %67 : vector<128x64xf32>
    %69 = arith.addf %63, %68 : vector<128x64xf32>
    %c128_i32 = arith.constant 128 : i32
    %70 = arith.muli %arg1, %c128_i32 : i32
    %71 = tpu.iota {dimensions = array<i32: 0>} : vector<128x1xi32>
    %72 = vector.broadcast %70 : i32 to vector<128x1xi32>
    %73 = arith.addi %72, %71 : vector<128x1xi32>
    %c408_i32 = arith.constant 408 : i32
    %74 = vector.broadcast %c408_i32 : i32 to vector<128x1xi32>
    %75 = arith.cmpi slt, %73, %74 : vector<128x1xi32>
    %cst_40 = arith.constant 0.000000e+00 : f32
    %76 = vector.shape_cast %75 : vector<128x1xi1> to vector<128x1xi1>
    %77 = vector.broadcast %76 : vector<128x1xi1> to vector<128x64xi1>
    %78 = vector.broadcast %cst_40 : f32 to vector<128x64xf32>
    %79 = arith.select %77, %69, %78 : vector<128x64xi1>, vector<128x64xf32>
    %c0_41 = arith.constant 0 : index
    %c0_42 = arith.constant 0 : index
    %c0_43 = arith.constant 0 : index
    %80 = vector.load %arg5[%c0_41, %c0_42, %c0_43] : memref<1x1x64xf32, #tpu.memory_space<vmem>>, vector<1x1x64xf32>
    %81 = vector.shape_cast %80 : vector<1x1x64xf32> to vector<1x64xf32>
    %cst_44 = arith.constant dense<0.000000e+00> : vector<64xf32>
    %82 = vector.multi_reduction <add>, %79, %cst_44 [0] : vector<128x64xf32> to vector<64xf32>
    %83 = vector.shape_cast %82 : vector<64xf32> to vector<1x64xf32>
    %84 = arith.addf %81, %83 : vector<1x64xf32>
    %c0_45 = arith.constant 0 : index
    %c0_46 = arith.constant 0 : index
    %c0_47 = arith.constant 0 : index
    %85 = vector.load %arg5[%c0_45, %c0_46, %c0_47] : memref<1x1x64xf32, #tpu.memory_space<vmem>>, vector<1x1x64xf32>
    %86 = vector.shape_cast %85 : vector<1x1x64xf32> to vector<1x64xf32>
    %87 = vector.shape_cast %84 : vector<1x64xf32> to vector<1x1x64xf32>
    tpu.vector_store %arg5[%c0_45, %c0_46, %c0_47], %87 {strides = array<i32>} : memref<1x1x64xf32, #tpu.memory_space<vmem>>, vector<1x1x64xf32>,
    %c0_48 = arith.constant 0 : index
    %c0_49 = arith.constant 0 : index
    %c0_50 = arith.constant 0 : index
    %88 = vector.load %arg6[%c0_48, %c0_49, %c0_50] : memref<1x1x64xf32, #tpu.memory_space<vmem>>, vector<1x1x64xf32>
    %89 = vector.shape_cast %88 : vector<1x1x64xf32> to vector<1x64xf32>
    %90 = arith.mulf %79, %79 : vector<128x64xf32>
    %cst_51 = arith.constant dense<0.000000e+00> : vector<64xf32>
    %91 = vector.multi_reduction <add>, %90, %cst_51 [0] : vector<128x64xf32> to vector<64xf32>
    %92 = vector.shape_cast %91 : vector<64xf32> to vector<1x64xf32>
    %93 = arith.addf %89, %92 : vector<1x64xf32>
    %c0_52 = arith.constant 0 : index
    %c0_53 = arith.constant 0 : index
    %c0_54 = arith.constant 0 : index
    %94 = vector.load %arg6[%c0_52, %c0_53, %c0_54] : memref<1x1x64xf32, #tpu.memory_space<vmem>>, vector<1x1x64xf32>
    %95 = vector.shape_cast %94 : vector<1x1x64xf32> to vector<1x64xf32>
    %96 = vector.shape_cast %93 : vector<1x64xf32> to vector<1x1x64xf32>
    tpu.vector_store %arg6[%c0_52, %c0_53, %c0_54], %96 {strides = array<i32>} : memref<1x1x64xf32, #tpu.memory_space<vmem>>, vector<1x1x64xf32>,
    return
  }
  func.func @transform_0(%arg0: i32, %arg1: i32) -> (i32, i32, i32) {
    %c0_i32 = arith.constant 0 : i32
    %c0_i32_0 = arith.constant 0 : i32
    return %arg0, %arg1, %c0_i32 : i32, i32, i32
  }
  func.func @transform_1(%arg0: i32, %arg1: i32) -> (i32, i32, i32) {
    %c1_i32 = arith.constant 1 : i32
    %0 = arith.addi %arg1, %c1_i32 : i32
    %c80_i32 = arith.constant 80 : i32
    %1 = arith.muli %0, %c80_i32 : i32
    %c0_i32 = arith.constant 0 : i32
    %c0_i32_0 = arith.constant 0 : i32
    return %arg0, %1, %c0_i32 : i32, i32, i32
  }
  func.func @transform_2(%arg0: i32, %arg1: i32) -> (i32, i32) {
    %c0_i32 = arith.constant 0 : i32
    %c0_i32_0 = arith.constant 0 : i32
    %c0_i32_1 = arith.constant 0 : i32
    return %c0_i32, %c0_i32_0 : i32, i32
  }
  func.func @transform_3(%arg0: i32, %arg1: i32) -> (i32, i32, i32) {
    %c0_i32 = arith.constant 0 : i32
    %c0_i32_0 = arith.constant 0 : i32
    %c0_i32_1 = arith.constant 0 : i32
    return %arg0, %c0_i32, %c0_i32_0 : i32, i32, i32
  }
  func.func @transform_4(%arg0: i32, %arg1: i32) -> (i32, i32, i32) {
    %c0_i32 = arith.constant 0 : i32
    %c0_i32_0 = arith.constant 0 : i32
    %c0_i32_1 = arith.constant 0 : i32
    return %arg0, %c0_i32, %c0_i32_0 : i32, i32, i32
  }
}

module attributes {stable_mosaic.version = 11 : i64} {
  func.func @_l0_apply_kernel(%arg0: i32, %arg1: i32, %arg2: memref<1x640x1xf32, #tpu.memory_space<vmem>>, %arg3: memref<1x8x1xf32, #tpu.memory_space<vmem>>, %arg4: memref<10x64xf32, #tpu.memory_space<vmem>>, %arg5: memref<1x1x64xf32, #tpu.memory_space<vmem>>, %arg6: memref<1x1x64xf32, #tpu.memory_space<vmem>>, %arg7: memref<1x128x64xbf16, #tpu.memory_space<vmem>>, %arg8: memref<648x1xf32, #tpu.memory_space<vmem>>) attributes {dimension_semantics = [#tpu.dimension_semantics<parallel>, #tpu.dimension_semantics<parallel>], iteration_bounds = array<i64: 2, 4>, scalar_prefetch = 0 : i64, scratch_operands = 1 : i64, tpu.core_type = #tpu.core_type<tc>, window_params = [{transform_indices = @transform_0, window_bounds = array<i64: 1, 640, 1>}, {transform_indices = @transform_1, window_bounds = array<i64: 1, 8, 1>}, {pipeline_mode = #tpu.pipeline_mode<synchronous>, transform_indices = @transform_2, window_bounds = array<i64: 10, 64>}, {transform_indices = @transform_3, window_bounds = array<i64: 1, 1, 64>}, {transform_indices = @transform_4, window_bounds = array<i64: 1, 1, 64>}, {transform_indices = @transform_5, window_bounds = array<i64: 1, 128, 64>}]} {
    %c0 = arith.constant 0 : index
    %c0_0 = arith.constant 0 : index
    %c0_1 = arith.constant 0 : index
    %0 = vector.load %arg2[%c0, %c0_0, %c0_1] : memref<1x640x1xf32, #tpu.memory_space<vmem>>, vector<1x640x1xf32>
    %1 = vector.shape_cast %0 : vector<1x640x1xf32> to vector<640x1xf32>
    %c0_2 = arith.constant 0 : index
    %c0_3 = arith.constant 0 : index
    %2 = vector.load %arg8[%c0_2, %c0_3] : memref<648x1xf32, #tpu.memory_space<vmem>>, vector<640x1xf32>
    tpu.vector_store %arg8[%c0_2, %c0_3], %1 {strides = array<i32>} : memref<648x1xf32, #tpu.memory_space<vmem>>, vector<640x1xf32>,
    %c0_4 = arith.constant 0 : index
    %c0_5 = arith.constant 0 : index
    %c0_6 = arith.constant 0 : index
    %3 = vector.load %arg3[%c0_4, %c0_5, %c0_6] : memref<1x8x1xf32, #tpu.memory_space<vmem>>, vector<1x8x1xf32>
    %4 = vector.shape_cast %3 : vector<1x8x1xf32> to vector<8x1xf32>
    %c640 = arith.constant 640 : index
    %c0_7 = arith.constant 0 : index
    %5 = vector.load %arg8[%c640, %c0_7] : memref<648x1xf32, #tpu.memory_space<vmem>>, vector<8x1xf32>
    tpu.vector_store %arg8[%c640, %c0_7], %4 {strides = array<i32>} : memref<648x1xf32, #tpu.memory_space<vmem>>, vector<8x1xf32>,
    %cst = arith.constant 0.000000e+00 : f32
    %6 = vector.broadcast %cst : f32 to vector<128x64xf32>
    %c0_8 = arith.constant 0 : index
    %c0_9 = arith.constant 0 : index
    %7 = tpu.strided_load %arg8[%c0_8, %c0_9] {strides = array<i32: 5, 1>} : memref<648x1xf32, #tpu.memory_space<vmem>>, vector<128x1xf32>
    %c0_10 = arith.constant 0 : index
    %c0_11 = arith.constant 0 : index
    %8 = vector.load %arg4[%c0_10, %c0_11] : memref<10x64xf32, #tpu.memory_space<vmem>>, vector<1x64xf32>
    %9 = vector.broadcast %7 : vector<128x1xf32> to vector<128x64xf32>
    %10 = vector.broadcast %8 : vector<1x64xf32> to vector<128x64xf32>
    %11 = arith.mulf %9, %10 : vector<128x64xf32>
    %12 = arith.addf %6, %11 : vector<128x64xf32>
    %c1 = arith.constant 1 : index
    %c0_12 = arith.constant 0 : index
    %13 = tpu.strided_load %arg8[%c1, %c0_12] {strides = array<i32: 5, 1>} : memref<648x1xf32, #tpu.memory_space<vmem>>, vector<128x1xf32>
    %c1_13 = arith.constant 1 : index
    %c0_14 = arith.constant 0 : index
    %14 = vector.load %arg4[%c1_13, %c0_14] : memref<10x64xf32, #tpu.memory_space<vmem>>, vector<1x64xf32>
    %15 = vector.broadcast %13 : vector<128x1xf32> to vector<128x64xf32>
    %16 = vector.broadcast %14 : vector<1x64xf32> to vector<128x64xf32>
    %17 = arith.mulf %15, %16 : vector<128x64xf32>
    %18 = arith.addf %12, %17 : vector<128x64xf32>
    %c2 = arith.constant 2 : index
    %c0_15 = arith.constant 0 : index
    %19 = tpu.strided_load %arg8[%c2, %c0_15] {strides = array<i32: 5, 1>} : memref<648x1xf32, #tpu.memory_space<vmem>>, vector<128x1xf32>
    %c2_16 = arith.constant 2 : index
    %c0_17 = arith.constant 0 : index
    %20 = vector.load %arg4[%c2_16, %c0_17] : memref<10x64xf32, #tpu.memory_space<vmem>>, vector<1x64xf32>
    %21 = vector.broadcast %19 : vector<128x1xf32> to vector<128x64xf32>
    %22 = vector.broadcast %20 : vector<1x64xf32> to vector<128x64xf32>
    %23 = arith.mulf %21, %22 : vector<128x64xf32>
    %24 = arith.addf %18, %23 : vector<128x64xf32>
    %c3 = arith.constant 3 : index
    %c0_18 = arith.constant 0 : index
    %25 = tpu.strided_load %arg8[%c3, %c0_18] {strides = array<i32: 5, 1>} : memref<648x1xf32, #tpu.memory_space<vmem>>, vector<128x1xf32>
    %c3_19 = arith.constant 3 : index
    %c0_20 = arith.constant 0 : index
    %26 = vector.load %arg4[%c3_19, %c0_20] : memref<10x64xf32, #tpu.memory_space<vmem>>, vector<1x64xf32>
    %27 = vector.broadcast %25 : vector<128x1xf32> to vector<128x64xf32>
    %28 = vector.broadcast %26 : vector<1x64xf32> to vector<128x64xf32>
    %29 = arith.mulf %27, %28 : vector<128x64xf32>
    %30 = arith.addf %24, %29 : vector<128x64xf32>
    %c4 = arith.constant 4 : index
    %c0_21 = arith.constant 0 : index
    %31 = tpu.strided_load %arg8[%c4, %c0_21] {strides = array<i32: 5, 1>} : memref<648x1xf32, #tpu.memory_space<vmem>>, vector<128x1xf32>
    %c4_22 = arith.constant 4 : index
    %c0_23 = arith.constant 0 : index
    %32 = vector.load %arg4[%c4_22, %c0_23] : memref<10x64xf32, #tpu.memory_space<vmem>>, vector<1x64xf32>
    %33 = vector.broadcast %31 : vector<128x1xf32> to vector<128x64xf32>
    %34 = vector.broadcast %32 : vector<1x64xf32> to vector<128x64xf32>
    %35 = arith.mulf %33, %34 : vector<128x64xf32>
    %36 = arith.addf %30, %35 : vector<128x64xf32>
    %c5 = arith.constant 5 : index
    %c0_24 = arith.constant 0 : index
    %37 = tpu.strided_load %arg8[%c5, %c0_24] {strides = array<i32: 5, 1>} : memref<648x1xf32, #tpu.memory_space<vmem>>, vector<128x1xf32>
    %c5_25 = arith.constant 5 : index
    %c0_26 = arith.constant 0 : index
    %38 = vector.load %arg4[%c5_25, %c0_26] : memref<10x64xf32, #tpu.memory_space<vmem>>, vector<1x64xf32>
    %39 = vector.broadcast %37 : vector<128x1xf32> to vector<128x64xf32>
    %40 = vector.broadcast %38 : vector<1x64xf32> to vector<128x64xf32>
    %41 = arith.mulf %39, %40 : vector<128x64xf32>
    %42 = arith.addf %36, %41 : vector<128x64xf32>
    %c6 = arith.constant 6 : index
    %c0_27 = arith.constant 0 : index
    %43 = tpu.strided_load %arg8[%c6, %c0_27] {strides = array<i32: 5, 1>} : memref<648x1xf32, #tpu.memory_space<vmem>>, vector<128x1xf32>
    %c6_28 = arith.constant 6 : index
    %c0_29 = arith.constant 0 : index
    %44 = vector.load %arg4[%c6_28, %c0_29] : memref<10x64xf32, #tpu.memory_space<vmem>>, vector<1x64xf32>
    %45 = vector.broadcast %43 : vector<128x1xf32> to vector<128x64xf32>
    %46 = vector.broadcast %44 : vector<1x64xf32> to vector<128x64xf32>
    %47 = arith.mulf %45, %46 : vector<128x64xf32>
    %48 = arith.addf %42, %47 : vector<128x64xf32>
    %c7 = arith.constant 7 : index
    %c0_30 = arith.constant 0 : index
    %49 = tpu.strided_load %arg8[%c7, %c0_30] {strides = array<i32: 5, 1>} : memref<648x1xf32, #tpu.memory_space<vmem>>, vector<128x1xf32>
    %c7_31 = arith.constant 7 : index
    %c0_32 = arith.constant 0 : index
    %50 = vector.load %arg4[%c7_31, %c0_32] : memref<10x64xf32, #tpu.memory_space<vmem>>, vector<1x64xf32>
    %51 = vector.broadcast %49 : vector<128x1xf32> to vector<128x64xf32>
    %52 = vector.broadcast %50 : vector<1x64xf32> to vector<128x64xf32>
    %53 = arith.mulf %51, %52 : vector<128x64xf32>
    %54 = arith.addf %48, %53 : vector<128x64xf32>
    %c8 = arith.constant 8 : index
    %c0_33 = arith.constant 0 : index
    %55 = tpu.strided_load %arg8[%c8, %c0_33] {strides = array<i32: 5, 1>} : memref<648x1xf32, #tpu.memory_space<vmem>>, vector<128x1xf32>
    %c8_34 = arith.constant 8 : index
    %c0_35 = arith.constant 0 : index
    %56 = vector.load %arg4[%c8_34, %c0_35] : memref<10x64xf32, #tpu.memory_space<vmem>>, vector<1x64xf32>
    %57 = vector.broadcast %55 : vector<128x1xf32> to vector<128x64xf32>
    %58 = vector.broadcast %56 : vector<1x64xf32> to vector<128x64xf32>
    %59 = arith.mulf %57, %58 : vector<128x64xf32>
    %60 = arith.addf %54, %59 : vector<128x64xf32>
    %c9 = arith.constant 9 : index
    %c0_36 = arith.constant 0 : index
    %61 = tpu.strided_load %arg8[%c9, %c0_36] {strides = array<i32: 5, 1>} : memref<648x1xf32, #tpu.memory_space<vmem>>, vector<128x1xf32>
    %c9_37 = arith.constant 9 : index
    %c0_38 = arith.constant 0 : index
    %62 = vector.load %arg4[%c9_37, %c0_38] : memref<10x64xf32, #tpu.memory_space<vmem>>, vector<1x64xf32>
    %63 = vector.broadcast %61 : vector<128x1xf32> to vector<128x64xf32>
    %64 = vector.broadcast %62 : vector<1x64xf32> to vector<128x64xf32>
    %65 = arith.mulf %63, %64 : vector<128x64xf32>
    %66 = arith.addf %60, %65 : vector<128x64xf32>
    %c0_39 = arith.constant 0 : index
    %c0_40 = arith.constant 0 : index
    %c0_41 = arith.constant 0 : index
    %67 = vector.load %arg5[%c0_39, %c0_40, %c0_41] : memref<1x1x64xf32, #tpu.memory_space<vmem>>, vector<1x1x64xf32>
    %68 = vector.shape_cast %67 : vector<1x1x64xf32> to vector<1x64xf32>
    %69 = vector.broadcast %68 : vector<1x64xf32> to vector<128x64xf32>
    %70 = arith.mulf %66, %69 : vector<128x64xf32>
    %c0_42 = arith.constant 0 : index
    %c0_43 = arith.constant 0 : index
    %c0_44 = arith.constant 0 : index
    %71 = vector.load %arg6[%c0_42, %c0_43, %c0_44] : memref<1x1x64xf32, #tpu.memory_space<vmem>>, vector<1x1x64xf32>
    %72 = vector.shape_cast %71 : vector<1x1x64xf32> to vector<1x64xf32>
    %73 = vector.broadcast %72 : vector<1x64xf32> to vector<128x64xf32>
    %74 = arith.addf %70, %73 : vector<128x64xf32>
    %cst_45 = arith.constant 5.000000e-01 : f32
    %75 = vector.broadcast %cst_45 : f32 to vector<128x64xf32>
    %76 = arith.mulf %75, %74 : vector<128x64xf32>
    %cst_46 = arith.constant 0.707106769 : f32
    %77 = vector.broadcast %cst_46 : f32 to vector<128x64xf32>
    %78 = arith.mulf %74, %77 : vector<128x64xf32>
    %79 = math.erf %78 : vector<128x64xf32>
    %cst_47 = arith.constant 1.000000e+00 : f32
    %80 = vector.broadcast %cst_47 : f32 to vector<128x64xf32>
    %81 = arith.addf %80, %79 : vector<128x64xf32>
    %82 = arith.mulf %76, %81 : vector<128x64xf32>
    %83 = arith.truncf %82 : vector<128x64xf32> to vector<128x64xbf16>
    %c0_48 = arith.constant 0 : index
    %c0_49 = arith.constant 0 : index
    %c0_50 = arith.constant 0 : index
    %84 = vector.load %arg7[%c0_48, %c0_49, %c0_50] : memref<1x128x64xbf16, #tpu.memory_space<vmem>>, vector<1x128x64xbf16>
    %85 = vector.shape_cast %84 : vector<1x128x64xbf16> to vector<128x64xbf16>
    %86 = vector.shape_cast %83 : vector<128x64xbf16> to vector<1x128x64xbf16>
    tpu.vector_store %arg7[%c0_48, %c0_49, %c0_50], %86 {strides = array<i32>} : memref<1x128x64xbf16, #tpu.memory_space<vmem>>, vector<1x128x64xbf16>,
    return
  }
  func.func @transform_0(%arg0: i32, %arg1: i32) -> (i32, i32, i32) {
    %c0_i32 = arith.constant 0 : i32
    %c0_i32_0 = arith.constant 0 : i32
    return %arg0, %arg1, %c0_i32 : i32, i32, i32
  }
  func.func @transform_1(%arg0: i32, %arg1: i32) -> (i32, i32, i32) {
    %c1_i32 = arith.constant 1 : i32
    %0 = arith.addi %arg1, %c1_i32 : i32
    %c80_i32 = arith.constant 80 : i32
    %1 = arith.muli %0, %c80_i32 : i32
    %c0_i32 = arith.constant 0 : i32
    %c0_i32_0 = arith.constant 0 : i32
    return %arg0, %1, %c0_i32 : i32, i32, i32
  }
  func.func @transform_2(%arg0: i32, %arg1: i32) -> (i32, i32) {
    %c0_i32 = arith.constant 0 : i32
    %c0_i32_0 = arith.constant 0 : i32
    %c0_i32_1 = arith.constant 0 : i32
    return %c0_i32, %c0_i32_0 : i32, i32
  }
  func.func @transform_3(%arg0: i32, %arg1: i32) -> (i32, i32, i32) {
    %c0_i32 = arith.constant 0 : i32
    %c0_i32_0 = arith.constant 0 : i32
    %c0_i32_1 = arith.constant 0 : i32
    return %arg0, %c0_i32, %c0_i32_0 : i32, i32, i32
  }
  func.func @transform_4(%arg0: i32, %arg1: i32) -> (i32, i32, i32) {
    %c0_i32 = arith.constant 0 : i32
    %c0_i32_0 = arith.constant 0 : i32
    %c0_i32_1 = arith.constant 0 : i32
    return %arg0, %c0_i32, %c0_i32_0 : i32, i32, i32
  }
  func.func @transform_5(%arg0: i32, %arg1: i32) -> (i32, i32, i32) {
    %c0_i32 = arith.constant 0 : i32
    %c0_i32_0 = arith.constant 0 : i32
    return %arg0, %arg1, %c0_i32 : i32, i32, i32
  }
}

module attributes {stable_mosaic.version = 11 : i64} {
  func.func @_conv_gelu_kernel(%arg0: i32, %arg1: i32, %arg2: memref<1x256x64xbf16, #tpu.memory_space<vmem>>, %arg3: memref<1x8x64xbf16, #tpu.memory_space<vmem>>, %arg4: memref<3x64x64xbf16, #tpu.memory_space<vmem>>, %arg5: memref<1x128x64xbf16, #tpu.memory_space<vmem>>, %arg6: memref<264x64xf32, #tpu.memory_space<vmem>>) attributes {dimension_semantics = [#tpu.dimension_semantics<parallel>, #tpu.dimension_semantics<parallel>], iteration_bounds = array<i64: 2, 2>, scalar_prefetch = 0 : i64, scratch_operands = 1 : i64, tpu.core_type = #tpu.core_type<tc>, window_params = [{transform_indices = @transform_0, window_bounds = array<i64: 1, 256, 64>}, {transform_indices = @transform_1, window_bounds = array<i64: 1, 8, 64>}, {pipeline_mode = #tpu.pipeline_mode<synchronous>, transform_indices = @transform_2, window_bounds = array<i64: 3, 64, 64>}, {transform_indices = @transform_3, window_bounds = array<i64: 1, 128, 64>}]} {
    %c0 = arith.constant 0 : index
    %c0_0 = arith.constant 0 : index
    %c0_1 = arith.constant 0 : index
    %0 = vector.load %arg2[%c0, %c0_0, %c0_1] : memref<1x256x64xbf16, #tpu.memory_space<vmem>>, vector<1x256x64xbf16>
    %1 = vector.shape_cast %0 : vector<1x256x64xbf16> to vector<256x64xbf16>
    %2 = arith.extf %1 : vector<256x64xbf16> to vector<256x64xf32>
    %c0_2 = arith.constant 0 : index
    %c0_3 = arith.constant 0 : index
    %3 = vector.load %arg6[%c0_2, %c0_3] : memref<264x64xf32, #tpu.memory_space<vmem>>, vector<256x64xf32>
    tpu.vector_store %arg6[%c0_2, %c0_3], %2 {strides = array<i32>} : memref<264x64xf32, #tpu.memory_space<vmem>>, vector<256x64xf32>,
    %c0_4 = arith.constant 0 : index
    %c0_5 = arith.constant 0 : index
    %c0_6 = arith.constant 0 : index
    %4 = vector.load %arg3[%c0_4, %c0_5, %c0_6] : memref<1x8x64xbf16, #tpu.memory_space<vmem>>, vector<1x8x64xbf16>
    %5 = vector.shape_cast %4 : vector<1x8x64xbf16> to vector<8x64xbf16>
    %6 = arith.extf %5 : vector<8x64xbf16> to vector<8x64xf32>
    %c256 = arith.constant 256 : index
    %c0_7 = arith.constant 0 : index
    %7 = vector.load %arg6[%c256, %c0_7] : memref<264x64xf32, #tpu.memory_space<vmem>>, vector<8x64xf32>
    tpu.vector_store %arg6[%c256, %c0_7], %6 {strides = array<i32>} : memref<264x64xf32, #tpu.memory_space<vmem>>, vector<8x64xf32>,
    %cst = arith.constant 0.000000e+00 : f32
    %8 = vector.broadcast %cst : f32 to vector<128x64xf32>
    %c0_8 = arith.constant 0 : index
    %c0_9 = arith.constant 0 : index
    %9 = tpu.strided_load %arg6[%c0_8, %c0_9] {strides = array<i32: 2, 1>} : memref<264x64xf32, #tpu.memory_space<vmem>>, vector<128x64xf32>
    %10 = arith.truncf %9 : vector<128x64xf32> to vector<128x64xbf16>
    %c0_10 = arith.constant 0 : index
    %c0_11 = arith.constant 0 : index
    %c0_12 = arith.constant 0 : index
    %11 = vector.load %arg4[%c0_10, %c0_11, %c0_12] : memref<3x64x64xbf16, #tpu.memory_space<vmem>>, vector<1x64x64xbf16>
    %12 = vector.shape_cast %11 : vector<1x64x64xbf16> to vector<64x64xbf16>
    %cst_13 = arith.constant dense<0.000000e+00> : vector<128x64xf32>
    %13 = tpu.matmul %10, %12, %cst_13 {dimension_numbers = #tpu.dot_dimension_numbers<[1], [0], [0], [1], [0, 0, 1, 1], [], []>} : vector<128x64xbf16>, vector<64x64xbf16>, vector<128x64xf32> -> vector<128x64xf32>
    %14 = arith.addf %8, %13 : vector<128x64xf32>
    %c1 = arith.constant 1 : index
    %c0_14 = arith.constant 0 : index
    %15 = tpu.strided_load %arg6[%c1, %c0_14] {strides = array<i32: 2, 1>} : memref<264x64xf32, #tpu.memory_space<vmem>>, vector<128x64xf32>
    %16 = arith.truncf %15 : vector<128x64xf32> to vector<128x64xbf16>
    %c1_15 = arith.constant 1 : index
    %c0_16 = arith.constant 0 : index
    %c0_17 = arith.constant 0 : index
    %17 = vector.load %arg4[%c1_15, %c0_16, %c0_17] : memref<3x64x64xbf16, #tpu.memory_space<vmem>>, vector<1x64x64xbf16>
    %18 = vector.shape_cast %17 : vector<1x64x64xbf16> to vector<64x64xbf16>
    %cst_18 = arith.constant dense<0.000000e+00> : vector<128x64xf32>
    %19 = tpu.matmul %16, %18, %cst_18 {dimension_numbers = #tpu.dot_dimension_numbers<[1], [0], [0], [1], [0, 0, 1, 1], [], []>} : vector<128x64xbf16>, vector<64x64xbf16>, vector<128x64xf32> -> vector<128x64xf32>
    %20 = arith.addf %14, %19 : vector<128x64xf32>
    %c2 = arith.constant 2 : index
    %c0_19 = arith.constant 0 : index
    %21 = tpu.strided_load %arg6[%c2, %c0_19] {strides = array<i32: 2, 1>} : memref<264x64xf32, #tpu.memory_space<vmem>>, vector<128x64xf32>
    %22 = arith.truncf %21 : vector<128x64xf32> to vector<128x64xbf16>
    %c2_20 = arith.constant 2 : index
    %c0_21 = arith.constant 0 : index
    %c0_22 = arith.constant 0 : index
    %23 = vector.load %arg4[%c2_20, %c0_21, %c0_22] : memref<3x64x64xbf16, #tpu.memory_space<vmem>>, vector<1x64x64xbf16>
    %24 = vector.shape_cast %23 : vector<1x64x64xbf16> to vector<64x64xbf16>
    %cst_23 = arith.constant dense<0.000000e+00> : vector<128x64xf32>
    %25 = tpu.matmul %22, %24, %cst_23 {dimension_numbers = #tpu.dot_dimension_numbers<[1], [0], [0], [1], [0, 0, 1, 1], [], []>} : vector<128x64xbf16>, vector<64x64xbf16>, vector<128x64xf32> -> vector<128x64xf32>
    %26 = arith.addf %20, %25 : vector<128x64xf32>
    %cst_24 = arith.constant 5.000000e-01 : f32
    %27 = vector.broadcast %cst_24 : f32 to vector<128x64xf32>
    %28 = arith.mulf %27, %26 : vector<128x64xf32>
    %cst_25 = arith.constant 0.707106769 : f32
    %29 = vector.broadcast %cst_25 : f32 to vector<128x64xf32>
    %30 = arith.mulf %26, %29 : vector<128x64xf32>
    %31 = math.erf %30 : vector<128x64xf32>
    %cst_26 = arith.constant 1.000000e+00 : f32
    %32 = vector.broadcast %cst_26 : f32 to vector<128x64xf32>
    %33 = arith.addf %32, %31 : vector<128x64xf32>
    %34 = arith.mulf %28, %33 : vector<128x64xf32>
    %35 = arith.truncf %34 : vector<128x64xf32> to vector<128x64xbf16>
    %c0_27 = arith.constant 0 : index
    %c0_28 = arith.constant 0 : index
    %c0_29 = arith.constant 0 : index
    %36 = vector.load %arg5[%c0_27, %c0_28, %c0_29] : memref<1x128x64xbf16, #tpu.memory_space<vmem>>, vector<1x128x64xbf16>
    %37 = vector.shape_cast %36 : vector<1x128x64xbf16> to vector<128x64xbf16>
    %38 = vector.shape_cast %35 : vector<128x64xbf16> to vector<1x128x64xbf16>
    tpu.vector_store %arg5[%c0_27, %c0_28, %c0_29], %38 {strides = array<i32>} : memref<1x128x64xbf16, #tpu.memory_space<vmem>>, vector<1x128x64xbf16>,
    return
  }
  func.func @transform_0(%arg0: i32, %arg1: i32) -> (i32, i32, i32) {
    %c0_i32 = arith.constant 0 : i32
    %c0_i32_0 = arith.constant 0 : i32
    return %arg0, %arg1, %c0_i32 : i32, i32, i32
  }
  func.func @transform_1(%arg0: i32, %arg1: i32) -> (i32, i32, i32) {
    %c1_i32 = arith.constant 1 : i32
    %0 = arith.addi %arg1, %c1_i32 : i32
    %c32_i32 = arith.constant 32 : i32
    %1 = arith.muli %0, %c32_i32 : i32
    %c0_i32 = arith.constant 0 : i32
    %c0_i32_0 = arith.constant 0 : i32
    return %arg0, %1, %c0_i32 : i32, i32, i32
  }
  func.func @transform_2(%arg0: i32, %arg1: i32) -> (i32, i32, i32) {
    %c0_i32 = arith.constant 0 : i32
    %c0_i32_0 = arith.constant 0 : i32
    %c0_i32_1 = arith.constant 0 : i32
    %c0_i32_2 = arith.constant 0 : i32
    return %c0_i32, %c0_i32_0, %c0_i32_1 : i32, i32, i32
  }
  func.func @transform_3(%arg0: i32, %arg1: i32) -> (i32, i32, i32) {
    %c0_i32 = arith.constant 0 : i32
    %c0_i32_0 = arith.constant 0 : i32
    return %arg0, %arg1, %c0_i32 : i32, i32, i32
  }
}

module attributes {stable_mosaic.version = 11 : i64} {
  func.func @_conv_gelu_kernel(%arg0: i32, %arg1: i32, %arg2: memref<1x256x64xbf16, #tpu.memory_space<vmem>>, %arg3: memref<2x64x64xbf16, #tpu.memory_space<vmem>>, %arg4: memref<1x64x128xbf16, #tpu.memory_space<vmem>>, %arg5: memref<256x64xf32, #tpu.memory_space<vmem>>) attributes {dimension_semantics = [#tpu.dimension_semantics<parallel>, #tpu.dimension_semantics<parallel>], iteration_bounds = array<i64: 2, 1>, scalar_prefetch = 0 : i64, scratch_operands = 1 : i64, tpu.core_type = #tpu.core_type<tc>, window_params = [{transform_indices = @transform_0, window_bounds = array<i64: 1, 256, 64>}, {pipeline_mode = #tpu.pipeline_mode<synchronous>, transform_indices = @transform_1, window_bounds = array<i64: 2, 64, 64>}, {transform_indices = @transform_2, window_bounds = array<i64: 1, 64, 128>}]} {
    %c0 = arith.constant 0 : index
    %c0_0 = arith.constant 0 : index
    %c0_1 = arith.constant 0 : index
    %0 = vector.load %arg2[%c0, %c0_0, %c0_1] : memref<1x256x64xbf16, #tpu.memory_space<vmem>>, vector<1x256x64xbf16>
    %1 = vector.shape_cast %0 : vector<1x256x64xbf16> to vector<256x64xbf16>
    %2 = arith.extf %1 : vector<256x64xbf16> to vector<256x64xf32>
    %c0_2 = arith.constant 0 : index
    %c0_3 = arith.constant 0 : index
    %3 = vector.load %arg5[%c0_2, %c0_3] : memref<256x64xf32, #tpu.memory_space<vmem>>, vector<256x64xf32>
    tpu.vector_store %arg5[%c0_2, %c0_3], %2 {strides = array<i32>} : memref<256x64xf32, #tpu.memory_space<vmem>>, vector<256x64xf32>,
    %cst = arith.constant 0.000000e+00 : f32
    %4 = vector.broadcast %cst : f32 to vector<128x64xf32>
    %c0_4 = arith.constant 0 : index
    %c0_5 = arith.constant 0 : index
    %5 = tpu.strided_load %arg5[%c0_4, %c0_5] {strides = array<i32: 2, 1>} : memref<256x64xf32, #tpu.memory_space<vmem>>, vector<128x64xf32>
    %6 = arith.truncf %5 : vector<128x64xf32> to vector<128x64xbf16>
    %c0_6 = arith.constant 0 : index
    %c0_7 = arith.constant 0 : index
    %c0_8 = arith.constant 0 : index
    %7 = vector.load %arg3[%c0_6, %c0_7, %c0_8] : memref<2x64x64xbf16, #tpu.memory_space<vmem>>, vector<1x64x64xbf16>
    %8 = vector.shape_cast %7 : vector<1x64x64xbf16> to vector<64x64xbf16>
    %cst_9 = arith.constant dense<0.000000e+00> : vector<128x64xf32>
    %9 = tpu.matmul %6, %8, %cst_9 {dimension_numbers = #tpu.dot_dimension_numbers<[1], [0], [0], [1], [0, 0, 1, 1], [], []>} : vector<128x64xbf16>, vector<64x64xbf16>, vector<128x64xf32> -> vector<128x64xf32>
    %10 = arith.addf %4, %9 : vector<128x64xf32>
    %c1 = arith.constant 1 : index
    %c0_10 = arith.constant 0 : index
    %11 = tpu.strided_load %arg5[%c1, %c0_10] {strides = array<i32: 2, 1>} : memref<256x64xf32, #tpu.memory_space<vmem>>, vector<128x64xf32>
    %12 = arith.truncf %11 : vector<128x64xf32> to vector<128x64xbf16>
    %c1_11 = arith.constant 1 : index
    %c0_12 = arith.constant 0 : index
    %c0_13 = arith.constant 0 : index
    %13 = vector.load %arg3[%c1_11, %c0_12, %c0_13] : memref<2x64x64xbf16, #tpu.memory_space<vmem>>, vector<1x64x64xbf16>
    %14 = vector.shape_cast %13 : vector<1x64x64xbf16> to vector<64x64xbf16>
    %cst_14 = arith.constant dense<0.000000e+00> : vector<128x64xf32>
    %15 = tpu.matmul %12, %14, %cst_14 {dimension_numbers = #tpu.dot_dimension_numbers<[1], [0], [0], [1], [0, 0, 1, 1], [], []>} : vector<128x64xbf16>, vector<64x64xbf16>, vector<128x64xf32> -> vector<128x64xf32>
    %16 = arith.addf %10, %15 : vector<128x64xf32>
    %cst_15 = arith.constant 5.000000e-01 : f32
    %17 = vector.broadcast %cst_15 : f32 to vector<128x64xf32>
    %18 = arith.mulf %17, %16 : vector<128x64xf32>
    %cst_16 = arith.constant 0.707106769 : f32
    %19 = vector.broadcast %cst_16 : f32 to vector<128x64xf32>
    %20 = arith.mulf %16, %19 : vector<128x64xf32>
    %21 = math.erf %20 : vector<128x64xf32>
    %cst_17 = arith.constant 1.000000e+00 : f32
    %22 = vector.broadcast %cst_17 : f32 to vector<128x64xf32>
    %23 = arith.addf %22, %21 : vector<128x64xf32>
    %24 = arith.mulf %18, %23 : vector<128x64xf32>
    %25 = tpu.transpose %24, [1, 0] : vector<128x64xf32> -> vector<64x128xf32>
    %26 = arith.truncf %25 : vector<64x128xf32> to vector<64x128xbf16>
    %c0_18 = arith.constant 0 : index
    %c0_19 = arith.constant 0 : index
    %c0_20 = arith.constant 0 : index
    %27 = vector.load %arg4[%c0_18, %c0_19, %c0_20] : memref<1x64x128xbf16, #tpu.memory_space<vmem>>, vector<1x64x128xbf16>
    %28 = vector.shape_cast %27 : vector<1x64x128xbf16> to vector<64x128xbf16>
    %29 = vector.shape_cast %26 : vector<64x128xbf16> to vector<1x64x128xbf16>
    tpu.vector_store %arg4[%c0_18, %c0_19, %c0_20], %29 {strides = array<i32>} : memref<1x64x128xbf16, #tpu.memory_space<vmem>>, vector<1x64x128xbf16>,
    return
  }
  func.func @transform_0(%arg0: i32, %arg1: i32) -> (i32, i32, i32) {
    %c0_i32 = arith.constant 0 : i32
    %c0_i32_0 = arith.constant 0 : i32
    return %arg0, %arg1, %c0_i32 : i32, i32, i32
  }
  func.func @transform_1(%arg0: i32, %arg1: i32) -> (i32, i32, i32) {
    %c0_i32 = arith.constant 0 : i32
    %c0_i32_0 = arith.constant 0 : i32
    %c0_i32_1 = arith.constant 0 : i32
    %c0_i32_2 = arith.constant 0 : i32
    return %c0_i32, %c0_i32_0, %c0_i32_1 : i32, i32, i32
  }
  func.func @transform_2(%arg0: i32, %arg1: i32) -> (i32, i32, i32) {
    %c0_i32 = arith.constant 0 : i32
    %c0_i32_0 = arith.constant 0 : i32
    return %arg0, %c0_i32, %arg1 : i32, i32, i32
  }
}

</mosaic_0001>

<llo_original>
// kernel: _lambda_.4
$region0: #{_lambda_.4}
  #allocation0 [shape = 'u32[]', space=smem, size = 0x4, offset = 0x4, fixed_abs, tag = 'smem constant byte address 0x4 - core index']
  #allocation1 [shape = 'u32[72,128]{1,0:T(1,128)}', space=vmem, size = 0x9000, scoped, tag = 'internal scratch']
  #allocation2 [shape = 'f32[648,1]{1,0:T(8,128)}', space=vmem, size = 0x51000, scoped, tag = 'scratch operand']
  %s0 = inlined_call_operand.vmem [shape: f32[2,2568,1], index: 0, kind: input, shape index: {}, may-alias: {0,1}]
  %s1 = inlined_call_operand.vmem [shape: f32[2,2568,1], index: 1, kind: input, shape index: {}, may-alias: {0,1}]
  %s2 = inlined_call_operand.vmem [shape: f32[10,64], index: 2, kind: input, shape index: {}]
  %s3 = inlined_call_operand.vmem [shape: f32[2,1,64], index: 3, kind: output, shape index: {0}]
  %s4 = inlined_call_operand.vmem [shape: f32[2,1,64], index: 4, kind: output, shape index: {1}]
  %5 = xla_tuple %s3, %s4
  %s6 = sld [smem:[#allocation0]]
  $region57: #{_lambda_.4} parent=0
    _
  %s8 = ssub.s32 1, %s6
  %s9 = scalar_select 0, %s8, %s6
  loop: start=0, step=1, limit=10
  $region2: #{_lambda_.4} parent=0 // loop_pre_header
    _
  $region3: #{_lambda_.4} parent=0 // loop_header
    %s11 = sphi 0, %s15
    %p12 = scmp.ge.s32.totalorder %s11, 10
    %s18 = sphi 0, %s30
    %s19 = sphi 0, %s26
    %s20 = sphi 0, %s18
    %s21 = sphi 0, %s19
    %s22 = sphi 0, %s20
    %s23 = sphi 0, %s21
    %s35 = sphi 0, %s37
    %s38 = sphi 0, %s35
    %s39 = sphi 0, %s38
    %s55 = sphi 0, %s39
    %s67 = sphi 0, %s69
    %s70 = sphi 0, %s67
    %s71 = sphi 0, %s70
    %s87 = sphi 0, %s71
    %s91 = sphi 0, %s91
    %s93 = sphi 0, %s91
    %s94 = sphi 0, %s93
    %s108 = sphi 0, %s94
    %s114 = sphi 0, %s116
    %s117 = sphi 0, %s114
    %s118 = sphi 0, %s117
    %s134 = sphi 0, %s118
    %s140 = sphi 0, %s142
    %s143 = sphi 0, %s140
    %s144 = sphi 0, %s143
    %s160 = sphi 0, %s144
  $region4: #{_lambda_.4} parent=0 // loop_header_branch
    %14 = sbr.rel (%p12) target = $region8
  $region5: #{_lambda_.4} parent=0 // loop_body
    %s16 = ssub.s32 %s11, 1
    %s17 = ssub.s32 %s11, 2
    %s24 = sadd.s32 1, %s19
    %p25 = scmp.ge.s32.totalorder %s24, 4
    %s26 = scalar_select %p25, 0, %s24
    %s27 = sadd.s32 1, %s18
    %s28 = scalar_select %p25, %s27, %s18
    %p29 = scmp.ge.s32.totalorder %s28, 2
    %s30 = scalar_select %p29, 0, %s28
    %s31 = ssub.s32 %s18, %s30
    %s32 = ssub.s32 %s19, %s26
    %s33 = sor.u32 %s31, %s32
    %p34 = scmp.eq.s32.totalorder %s33, 0
    %s36 = sadd.s32 %s35, 1
    %s37 = scalar_select %p34, %s35, %s36
    %p40 = pneg %p34
    %p41 = scmp.eq.s32.totalorder %s11, 7
    %p42 = por %p40, %p41
    %p43 = scmp.ne.s32.totalorder %s35, %s38
    %p44 = scmp.eq.s32.totalorder %s11, 0
    %p45 = por %p43, %p44
    %p46 = scmp.ne.s32.totalorder %s35, %s38
    %p47 = scmp.eq.s32.totalorder %s16, 7
    %p48 = por %p46, %p47
    %p49 = scmp.ne.s32.totalorder %s38, %s39
    %p50 = scmp.eq.s32.totalorder %s16, 0
    %p51 = por %p49, %p50
    %p52 = scmp.ne.s32.totalorder %s38, %s39
    %p53 = scmp.eq.s32.totalorder %s17, 7
    %p54 = por %p52, %p53
    %p56 = scmp.ne.s32.totalorder %s39, %s55
    %p57 = scmp.eq.s32.totalorder %s17, 0
    %p58 = por %p56, %p57
    %s59 = sadd.s32 %s19, 1
    %s60 = smul.u32 %s59, 80
    %s61 = sadd.s32 %s26, 1
    %s62 = smul.u32 %s61, 80
    %s63 = ssub.s32 %s18, %s30
    %s64 = ssub.s32 %s60, %s62
    %s65 = sor.u32 %s63, %s64
    %p66 = scmp.eq.s32.totalorder %s65, 0
    %s68 = sadd.s32 %s67, 1
    %s69 = scalar_select %p66, %s67, %s68
    %p72 = pneg %p66
    %p73 = scmp.eq.s32.totalorder %s11, 7
    %p74 = por %p72, %p73
    %p75 = scmp.ne.s32.totalorder %s67, %s70
    %p76 = scmp.eq.s32.totalorder %s11, 0
    %p77 = por %p75, %p76
    %p78 = scmp.ne.s32.totalorder %s67, %s70
    %p79 = scmp.eq.s32.totalorder %s16, 7
    %p80 = por %p78, %p79
    %p81 = scmp.ne.s32.totalorder %s70, %s71
    %p82 = scmp.eq.s32.totalorder %s16, 0
    %p83 = por %p81, %p82
    %p84 = scmp.ne.s32.totalorder %s70, %s71
    %p85 = scmp.eq.s32.totalorder %s17, 7
    %p86 = por %p84, %p85
    %p88 = scmp.ne.s32.totalorder %s71, %s87
    %p89 = scmp.eq.s32.totalorder %s17, 0
    %p90 = por %p88, %p89
    %s92 = sadd.s32 %s91, 1
    %p95 = scmp.eq.s32.totalorder %s11, 7
    %p96 = scmp.ne.s32.totalorder %s91, %s93
    %p97 = scmp.eq.s32.totalorder %s11, 0
    %p98 = por %p96, %p97
    %p99 = scmp.ne.s32.totalorder %s91, %s93
    %p100 = scmp.eq.s32.totalorder %s16, 7
    %p101 = por %p99, %p100
    %p102 = scmp.ne.s32.totalorder %s93, %s94
    %p103 = scmp.eq.s32.totalorder %s16, 0
    %p104 = por %p102, %p103
    %p105 = scmp.ne.s32.totalorder %s93, %s94
    %p106 = scmp.eq.s32.totalorder %s17, 7
    %p107 = por %p105, %p106
    %p109 = scmp.ne.s32.totalorder %s94, %s108
    %p110 = scmp.eq.s32.totalorder %s17, 0
    %p111 = por %p109, %p110
    %s112 = ssub.s32 %s18, %s30
    %p113 = scmp.eq.s32.totalorder %s112, 0
    %s115 = sadd.s32 %s114, 1
    %s116 = scalar_select %p113, %s114, %s115
    %p119 = pneg %p113
    %p120 = scmp.eq.s32.totalorder %s11, 7
    %p121 = por %p119, %p120
    %p122 = scmp.ne.s32.totalorder %s114, %s117
    %p123 = scmp.eq.s32.totalorder %s11, 0
    %p124 = por %p122, %p123
    %p125 = scmp.ne.s32.totalorder %s114, %s117
    %p126 = scmp.eq.s32.totalorder %s16, 7
    %p127 = por %p125, %p126
    %p128 = scmp.ne.s32.totalorder %s117, %s118
    %p129 = scmp.eq.s32.totalorder %s16, 0
    %p130 = por %p128, %p129
    %p131 = scmp.ne.s32.totalorder %s117, %s118
    %p132 = scmp.eq.s32.totalorder %s17, 7
    %p133 = por %p131, %p132
    %p135 = scmp.ne.s32.totalorder %s118, %s134
    %p136 = scmp.eq.s32.totalorder %s17, 0
    %p137 = por %p135, %p136
    %s138 = ssub.s32 %s18, %s30
    %p139 = scmp.eq.s32.totalorder %s138, 0
    %s141 = sadd.s32 %s140, 1
    %s142 = scalar_select %p139, %s140, %s141
    %p145 = pneg %p139
    %p146 = scmp.eq.s32.totalorder %s11, 7
    %p147 = por %p145, %p146
    %p148 = scmp.ne.s32.totalorder %s140, %s143
    %p149 = scmp.eq.s32.totalorder %s11, 0
    %p150 = por %p148, %p149
    %p151 = scmp.ne.s32.totalorder %s140, %s143
    %p152 = scmp.eq.s32.totalorder %s16, 7
    %p153 = por %p151, %p152
    %p154 = scmp.ne.s32.totalorder %s143, %s144
    %p155 = scmp.eq.s32.totalorder %s16, 0
    %p156 = por %p154, %p155
    %p157 = scmp.ne.s32.totalorder %s143, %s144
    %p158 = scmp.eq.s32.totalorder %s17, 7
    %p159 = por %p157, %p158
    %p161 = scmp.ne.s32.totalorder %s144, %s160
    %p162 = scmp.eq.s32.totalorder %s17, 0
    %p163 = por %p161, %p162
    %p164 = scmp.le.s32.totalorder 1, %s11
    %p165 = scmp.lt.s32.totalorder %s11, 9
    %p166 = pnand %p164, %p165
    %p167 = pneg %p166
    // Predicated region
    $region9: #{_lambda_.4} parent=5 // pred_check
      _
    $region10: #{_lambda_.4} parent=5 // pred_check_branch
      %169 = sbr.rel (%p166) target = $region12
    $region11: #{_lambda_.4} parent=5 // pred_region
      %s170 = ssub.s32 %s11, 1
      // Predicated region
      $region13: #{_lambda_.4} parent=11 // pred_check
        %p171 = pneg %p104
      $region14: #{_lambda_.4} parent=11 // pred_check_branch
        %173 = sbr.rel (%p171) target = $region16
      $region15: #{_lambda_.4} parent=11 // pred_region
        _
      $region16: #{_lambda_.4} parent=11 // pred_fallthru
        _
    $region12: #{_lambda_.4} parent=5 // pred_fallthru
      _
    %p174 = scmp.lt.s32.totalorder %s11, 8
    // Predicated region
    $region17: #{_lambda_.4} parent=5 // pred_check
      %p175 = pneg %p174
    $region18: #{_lambda_.4} parent=5 // pred_check_branch
      %177 = sbr.rel (%p175) target = $region20
    $region19: #{_lambda_.4} parent=5 // pred_region
      // Predicated region
      $region21: #{_lambda_.4} parent=19 // pred_check
        %p178 = pneg %p45
      $region22: #{_lambda_.4} parent=19 // pred_check_branch
        %180 = sbr.rel (%p178) target = $region24
      $region23: #{_lambda_.4} parent=19 // pred_region
        %s181 = smul.u32 80, %s19
        %s182 = ssub.s32 321, %s181
        %p183 = scmp.lt.s32.totalorder %s182, 80
        %s184 = scalar_select %p183, %s182, 80
        %s185 = smul.u32 8, %s184
        %p186 = scmp.lt.s32.totalorder %s18, 1
        %s187 = scalar_select %p186, %s18, 1
        %p188 = scmp.lt.s32.totalorder %s181, 320
        %s189 = scalar_select %p188, %s181, 320
        %s190 = smul.addr %s187, 321
        %s191 = sadd.s32 %s189, %s190
        %s192 = smul.addr %s191, 8
        %s193 = scalar_lea.vmem %s0, %s192
        %s194 = smul.u32 80, %s19
        %s195 = ssub.s32 321, %s194
        %p196 = scmp.lt.s32.totalorder %s195, 80
        %s197 = scalar_select %p196, %s195, 80
        %s198 = smul.u32 8, %s197
      $region24: #{_lambda_.4} parent=19 // pred_fallthru
        _
      // Predicated region
      $region25: #{_lambda_.4} parent=19 // pred_check
        %p199 = pneg %p77
      $region26: #{_lambda_.4} parent=19 // pred_check_branch
        %201 = sbr.rel (%p199) target = $region28
      $region27: #{_lambda_.4} parent=19 // pred_region
        %s202 = sadd.s32 %s19, 1
        %s203 = smul.u32 %s202, 80
        %p204 = scmp.lt.s32.totalorder %s18, 1
        %s205 = scalar_select %p204, %s18, 1
        %p206 = scmp.lt.s32.totalorder %s203, 320
        %s207 = scalar_select %p206, %s203, 320
        %s208 = smul.addr %s205, 321
        %s209 = sadd.s32 %s207, %s208
        %s210 = smul.addr %s209, 8
        %s211 = scalar_lea.vmem %s1, %s210
        %s212 = sadd.s32 %s19, 1
        %s213 = smul.u32 %s212, 80
      $region28: #{_lambda_.4} parent=19 // pred_fallthru
        _
    $region20: #{_lambda_.4} parent=5 // pred_fallthru
      _
    %p214 = scmp.le.s32.totalorder 1, %s11
    %p215 = scmp.lt.s32.totalorder %s11, 9
    %p216 = pnand %p214, %p215
    %p217 = pneg %p216
    // Predicated region
    $region29: #{_lambda_.4} parent=5 // pred_check
      _
    $region30: #{_lambda_.4} parent=5 // pred_check_branch
      %219 = sbr.rel (%p216) target = $region32
    $region31: #{_lambda_.4} parent=5 // pred_region
      %s220 = ssub.s32 %s11, 1
      %s221 = smul.u32 80, %s21
      %s222 = ssub.s32 321, %s221
      %p223 = scmp.lt.s32.totalorder %s222, 80
      %s224 = scalar_select %p223, %s222, 80
      %s225 = smul.u32 8, %s224
      %p226 = scmp.lt.s32.totalorder %s20, 1
      %s227 = scalar_select %p226, %s20, 1
      %p228 = scmp.lt.s32.totalorder %s221, 320
      %s229 = scalar_select %p228, %s221, 320
      %s230 = smul.addr %s227, 321
      %s231 = sadd.s32 %s229, %s230
      %s232 = smul.addr %s231, 8
      %s233 = scalar_lea.vmem %s0, %s232
      %p234 = pneg %p51
      %p235 = pneg %p48
      %s236 = sadd.s32 %s21, 1
      %s237 = smul.u32 %s236, 80
      %p238 = scmp.lt.s32.totalorder %s20, 1
      %s239 = scalar_select %p238, %s20, 1
      %p240 = scmp.lt.s32.totalorder %s237, 320
      %s241 = scalar_select %p240, %s237, 320
      %s242 = smul.addr %s239, 321
      %s243 = sadd.s32 %s241, %s242
      %s244 = smul.addr %s243, 8
      %s245 = scalar_lea.vmem %s1, %s244
      %p246 = pneg %p83
      %p247 = pneg %p80
      %p248 = pneg %p104
      %p249 = pneg %p101
      %p250 = pneg %p130
      %p251 = pneg %p127
      %p252 = scmp.lt.s32.totalorder %s20, 1
      %s253 = scalar_select %p252, %s20, 1
      %s254 = scalar_lea.vmem %s3, %s253
      %p255 = pneg %p156
      %p256 = pneg %p153
      %p257 = scmp.lt.s32.totalorder %s20, 1
      %s258 = scalar_select %p257, %s20, 1
      %s259 = scalar_lea.vmem %s4, %s258
      %s260 = smul.u32 80, %s21
      %s261 = ssub.s32 321, %s260
      %p262 = scmp.lt.s32.totalorder %s261, 80
      %s263 = scalar_select %p262, %s261, 80
      %s264 = smul.u32 8, %s263
      %p265 = scmp.lt.s32.totalorder %s20, 1
      %s266 = scalar_select %p265, %s20, 1
      %p267 = scmp.lt.s32.totalorder %s260, 320
      %s268 = scalar_select %p267, %s260, 320
      %s269 = smul.addr %s266, 321
      %s270 = sadd.s32 %s268, %s269
      %s271 = smul.addr %s270, 8
      %s272 = scalar_lea.vmem %s0, %s271
      %s273 = smul.u32 80, %s21
      %s274 = ssub.s32 321, %s273
      %p275 = scmp.lt.s32.totalorder %s274, 80
      %s276 = scalar_select %p275, %s274, 80
      %s277 = smul.u32 8, %s276
      %s278 = sadd.s32 %s21, 1
      %s279 = smul.u32 %s278, 80
      %p280 = scmp.lt.s32.totalorder %s20, 1
      %s281 = scalar_select %p280, %s20, 1
      %p282 = scmp.lt.s32.totalorder %s279, 320
      %s283 = scalar_select %p282, %s279, 320
      %s284 = smul.addr %s281, 321
      %s285 = sadd.s32 %s283, %s284
      %s286 = smul.addr %s285, 8
      %s287 = scalar_lea.vmem %s1, %s286
      %s288 = sadd.s32 %s21, 1
      %s289 = smul.u32 %s288, 80
      %p290 = scmp.lt.s32.totalorder %s20, 1
      %s291 = scalar_select %p290, %s20, 1
      %s292 = scalar_lea.vmem %s3, %s291
      %p293 = scmp.lt.s32.totalorder %s20, 1
      %s294 = scalar_select %p293, %s20, 1
      %s295 = scalar_lea.vmem %s4, %s294
      %p296 = scmp.eq.s32.totalorder %s21, 0
      // Predicated region
      $region33: #{_lambda_.4} parent=31 // pred_check
        %p297 = pneg %p296
      $region34: #{_lambda_.4} parent=31 // pred_check_branch
        %299 = sbr.rel (%p297) target = $region36
      $region35: #{_lambda_.4} parent=31 // pred_region
        %vm300 = vcmask 516096
        %301 = vst.msk [vmem:[%s292] sm:$0x1] %vm300, 0.0
        %302 = vst.msk [vmem:[%s295] sm:$0x1] %vm300, 0.0
      $region36: #{_lambda_.4} parent=31 // pred_fallthru
        _
      %v303 = vld [vmem:[%s272] sm:$0xff]
      %v304 = vld [vmem:[%s272 + $0x8] sm:$0xff]
      %v305 = vld [vmem:[%s272 + $0x10] sm:$0xff]
      %v306 = vld [vmem:[%s272 + $0x18] sm:$0xff]
      %v307 = vld [vmem:[%s272 + $0x20] sm:$0xff]
      %v308 = vld [vmem:[%s272 + $0x28] sm:$0xff]
      %v309 = vld [vmem:[%s272 + $0x30] sm:$0xff]
      %v310 = vld [vmem:[%s272 + $0x38] sm:$0xff]
      %v311 = vld [vmem:[%s272 + $0x40] sm:$0xff]
      %v312 = vld [vmem:[%s272 + $0x48] sm:$0xff]
      %v313 = vld [vmem:[%s272 + $0x50] sm:$0xff]
      %v314 = vld [vmem:[%s272 + $0x58] sm:$0xff]
      %v315 = vld [vmem:[%s272 + $0x60] sm:$0xff]
      %v316 = vld [vmem:[%s272 + $0x68] sm:$0xff]
      %v317 = vld [vmem:[%s272 + $0x70] sm:$0xff]
      %v318 = vld [vmem:[%s272 + $0x78] sm:$0xff]
      %v319 = vld [vmem:[%s272 + $0x80] sm:$0xff]
      %v320 = vld [vmem:[%s272 + $0x88] sm:$0xff]
      %v321 = vld [vmem:[%s272 + $0x90] sm:$0xff]
      %v322 = vld [vmem:[%s272 + $0x98] sm:$0xff]
      %v323 = vld [vmem:[%s272 + $0xa0] sm:$0xff]
      %v324 = vld [vmem:[%s272 + $0xa8] sm:$0xff]
      %v325 = vld [vmem:[%s272 + $0xb0] sm:$0xff]
      %v326 = vld [vmem:[%s272 + $0xb8] sm:$0xff]
      %v327 = vld [vmem:[%s272 + $0xc0] sm:$0xff]
      %v328 = vld [vmem:[%s272 + $0xc8] sm:$0xff]
      %v329 = vld [vmem:[%s272 + $0xd0] sm:$0xff]
      %v330 = vld [vmem:[%s272 + $0xd8] sm:$0xff]
      %v331 = vld [vmem:[%s272 + $0xe0] sm:$0xff]
      %v332 = vld [vmem:[%s272 + $0xe8] sm:$0xff]
      %v333 = vld [vmem:[%s272 + $0xf0] sm:$0xff]
      %v334 = vld [vmem:[%s272 + $0xf8] sm:$0xff]
      %v335 = vld [vmem:[%s272 + $0x100] sm:$0xff]
      %v336 = vld [vmem:[%s272 + $0x108] sm:$0xff]
      %v337 = vld [vmem:[%s272 + $0x110] sm:$0xff]
      %v338 = vld [vmem:[%s272 + $0x118] sm:$0xff]
      %v339 = vld [vmem:[%s272 + $0x120] sm:$0xff]
      %v340 = vld [vmem:[%s272 + $0x128] sm:$0xff]
      %v341 = vld [vmem:[%s272 + $0x130] sm:$0xff]
      %v342 = vld [vmem:[%s272 + $0x138] sm:$0xff]
      %v343 = vld [vmem:[%s272 + $0x140] sm:$0xff]
      %v344 = vld [vmem:[%s272 + $0x148] sm:$0xff]
      %v345 = vld [vmem:[%s272 + $0x150] sm:$0xff]
      %v346 = vld [vmem:[%s272 + $0x158] sm:$0xff]
      %v347 = vld [vmem:[%s272 + $0x160] sm:$0xff]
      %v348 = vld [vmem:[%s272 + $0x168] sm:$0xff]
      %v349 = vld [vmem:[%s272 + $0x170] sm:$0xff]
      %v350 = vld [vmem:[%s272 + $0x178] sm:$0xff]
      %v351 = vld [vmem:[%s272 + $0x180] sm:$0xff]
      %v352 = vld [vmem:[%s272 + $0x188] sm:$0xff]
      %v353 = vld [vmem:[%s272 + $0x190] sm:$0xff]
      %v354 = vld [vmem:[%s272 + $0x198] sm:$0xff]
      %v355 = vld [vmem:[%s272 + $0x1a0] sm:$0xff]
      %v356 = vld [vmem:[%s272 + $0x1a8] sm:$0xff]
      %v357 = vld [vmem:[%s272 + $0x1b0] sm:$0xff]
      %v358 = vld [vmem:[%s272 + $0x1b8] sm:$0xff]
      %v359 = vld [vmem:[%s272 + $0x1c0] sm:$0xff]
      %v360 = vld [vmem:[%s272 + $0x1c8] sm:$0xff]
      %v361 = vld [vmem:[%s272 + $0x1d0] sm:$0xff]
      %v362 = vld [vmem:[%s272 + $0x1d8] sm:$0xff]
      %v363 = vld [vmem:[%s272 + $0x1e0] sm:$0xff]
      %v364 = vld [vmem:[%s272 + $0x1e8] sm:$0xff]
      %v365 = vld [vmem:[%s272 + $0x1f0] sm:$0xff]
      %v366 = vld [vmem:[%s272 + $0x1f8] sm:$0xff]
      %v367 = vld [vmem:[%s272 + $0x200] sm:$0xff]
      %v368 = vld [vmem:[%s272 + $0x208] sm:$0xff]
      %v369 = vld [vmem:[%s272 + $0x210] sm:$0xff]
      %v370 = vld [vmem:[%s272 + $0x218] sm:$0xff]
      %v371 = vld [vmem:[%s272 + $0x220] sm:$0xff]
      %v372 = vld [vmem:[%s272 + $0x228] sm:$0xff]
      %v373 = vld [vmem:[%s272 + $0x230] sm:$0xff]
      %v374 = vld [vmem:[%s272 + $0x238] sm:$0xff]
      %v375 = vld [vmem:[%s272 + $0x240] sm:$0xff]
      %v376 = vld [vmem:[%s272 + $0x248] sm:$0xff]
      %v377 = vld [vmem:[%s272 + $0x250] sm:$0xff]
      %v378 = vld [vmem:[%s272 + $0x258] sm:$0xff]
      %v379 = vld [vmem:[%s272 + $0x260] sm:$0xff]
      %v380 = vld [vmem:[%s272 + $0x268] sm:$0xff]
      %v381 = vld [vmem:[%s272 + $0x270] sm:$0xff]
      %v382 = vld [vmem:[%s272 + $0x278] sm:$0xff]
      %vm383 = vcmask 7168
      %384 = vst.msk [vmem:[#allocation2] sm:$0xff] %vm383, %v303
      %385 = vst.msk [vmem:[#allocation2 + $0x8] sm:$0xff] %vm383, %v304
      %386 = vst.msk [vmem:[#allocation2 + $0x10] sm:$0xff] %vm383, %v305
      %387 = vst.msk [vmem:[#allocation2 + $0x18] sm:$0xff] %vm383, %v306
      %388 = vst.msk [vmem:[#allocation2 + $0x20] sm:$0xff] %vm383, %v307
      %389 = vst.msk [vmem:[#allocation2 + $0x28] sm:$0xff] %vm383, %v308
      %390 = vst.msk [vmem:[#allocation2 + $0x30] sm:$0xff] %vm383, %v309
      %391 = vst.msk [vmem:[#allocation2 + $0x38] sm:$0xff] %vm383, %v310
      %392 = vst.msk [vmem:[#allocation2 + $0x40] sm:$0xff] %vm383, %v311
      %393 = vst.msk [vmem:[#allocation2 + $0x48] sm:$0xff] %vm383, %v312
      %394 = vst.msk [vmem:[#allocation2 + $0x50] sm:$0xff] %vm383, %v313
      %395 = vst.msk [vmem:[#allocation2 + $0x58] sm:$0xff] %vm383, %v314
      %396 = vst.msk [vmem:[#allocation2 + $0x60] sm:$0xff] %vm383, %v315
      %397 = vst.msk [vmem:[#allocation2 + $0x68] sm:$0xff] %vm383, %v316
      %398 = vst.msk [vmem:[#allocation2 + $0x70] sm:$0xff] %vm383, %v317
      %399 = vst.msk [vmem:[#allocation2 + $0x78] sm:$0xff] %vm383, %v318
      %400 = vst.msk [vmem:[#allocation2 + $0x80] sm:$0xff] %vm383, %v319
      %401 = vst.msk [vmem:[#allocation2 + $0x88] sm:$0xff] %vm383, %v320
      %402 = vst.msk [vmem:[#allocation2 + $0x90] sm:$0xff] %vm383, %v321
      %403 = vst.msk [vmem:[#allocation2 + $0x98] sm:$0xff] %vm383, %v322
      %404 = vst.msk [vmem:[#allocation2 + $0xa0] sm:$0xff] %vm383, %v323
      %405 = vst.msk [vmem:[#allocation2 + $0xa8] sm:$0xff] %vm383, %v324
      %406 = vst.msk [vmem:[#allocation2 + $0xb0] sm:$0xff] %vm383, %v325
      %407 = vst.msk [vmem:[#allocation2 + $0xb8] sm:$0xff] %vm383, %v326
      %408 = vst.msk [vmem:[#allocation2 + $0xc0] sm:$0xff] %vm383, %v327
      %409 = vst.msk [vmem:[#allocation2 + $0xc8] sm:$0xff] %vm383, %v328
      %410 = vst.msk [vmem:[#allocation2 + $0xd0] sm:$0xff] %vm383, %v329
      %411 = vst.msk [vmem:[#allocation2 + $0xd8] sm:$0xff] %vm383, %v330
      %412 = vst.msk [vmem:[#allocation2 + $0xe0] sm:$0xff] %vm383, %v331
      %413 = vst.msk [vmem:[#allocation2 + $0xe8] sm:$0xff] %vm383, %v332
      %414 = vst.msk [vmem:[#allocation2 + $0xf0] sm:$0xff] %vm383, %v333
      %415 = vst.msk [vmem:[#allocation2 + $0xf8] sm:$0xff] %vm383, %v334
      %416 = vst.msk [vmem:[#allocation2 + $0x100] sm:$0xff] %vm383, %v335
      %417 = vst.msk [vmem:[#allocation2 + $0x108] sm:$0xff] %vm383, %v336
      %418 = vst.msk [vmem:[#allocation2 + $0x110] sm:$0xff] %vm383, %v337
      %419 = vst.msk [vmem:[#allocation2 + $0x118] sm:$0xff] %vm383, %v338
      %420 = vst.msk [vmem:[#allocation2 + $0x120] sm:$0xff] %vm383, %v339
      %421 = vst.msk [vmem:[#allocation2 + $0x128] sm:$0xff] %vm383, %v340
      %422 = vst.msk [vmem:[#allocation2 + $0x130] sm:$0xff] %vm383, %v341
      %423 = vst.msk [vmem:[#allocation2 + $0x138] sm:$0xff] %vm383, %v342
      %424 = vst.msk [vmem:[#allocation2 + $0x140] sm:$0xff] %vm383, %v343
      %425 = vst.msk [vmem:[#allocation2 + $0x148] sm:$0xff] %vm383, %v344
      %426 = vst.msk [vmem:[#allocation2 + $0x150] sm:$0xff] %vm383, %v345
      %427 = vst.msk [vmem:[#allocation2 + $0x158] sm:$0xff] %vm383, %v346
      %428 = vst.msk [vmem:[#allocation2 + $0x160] sm:$0xff] %vm383, %v347
      %429 = vst.msk [vmem:[#allocation2 + $0x168] sm:$0xff] %vm383, %v348
      %430 = vst.msk [vmem:[#allocation2 + $0x170] sm:$0xff] %vm383, %v349
      %431 = vst.msk [vmem:[#allocation2 + $0x178] sm:$0xff] %vm383, %v350
      %432 = vst.msk [vmem:[#allocation2 + $0x180] sm:$0xff] %vm383, %v351
      %433 = vst.msk [vmem:[#allocation2 + $0x188] sm:$0xff] %vm383, %v352
      %434 = vst.msk [vmem:[#allocation2 + $0x190] sm:$0xff] %vm383, %v353
      %435 = vst.msk [vmem:[#allocation2 + $0x198] sm:$0xff] %vm383, %v354
      %436 = vst.msk [vmem:[#allocation2 + $0x1a0] sm:$0xff] %vm383, %v355
      %437 = vst.msk [vmem:[#allocation2 + $0x1a8] sm:$0xff] %vm383, %v356
      %438 = vst.msk [vmem:[#allocation2 + $0x1b0] sm:$0xff] %vm383, %v357
      %439 = vst.msk [vmem:[#allocation2 + $0x1b8] sm:$0xff] %vm383, %v358
      %440 = vst.msk [vmem:[#allocation2 + $0x1c0] sm:$0xff] %vm383, %v359
      %441 = vst.msk [vmem:[#allocation2 + $0x1c8] sm:$0xff] %vm383, %v360
      %442 = vst.msk [vmem:[#allocation2 + $0x1d0] sm:$0xff] %vm383, %v361
      %443 = vst.msk [vmem:[#allocation2 + $0x1d8] sm:$0xff] %vm383, %v362
      %444 = vst.msk [vmem:[#allocation2 + $0x1e0] sm:$0xff] %vm383, %v363
      %445 = vst.msk [vmem:[#allocation2 + $0x1e8] sm:$0xff] %vm383, %v364
      %446 = vst.msk [vmem:[#allocation2 + $0x1f0] sm:$0xff] %vm383, %v365
      %447 = vst.msk [vmem:[#allocation2 + $0x1f8] sm:$0xff] %vm383, %v366
      %448 = vst.msk [vmem:[#allocation2 + $0x200] sm:$0xff] %vm383, %v367
      %449 = vst.msk [vmem:[#allocation2 + $0x208] sm:$0xff] %vm383, %v368
      %450 = vst.msk [vmem:[#allocation2 + $0x210] sm:$0xff] %vm383, %v369
      %451 = vst.msk [vmem:[#allocation2 + $0x218] sm:$0xff] %vm383, %v370
      %452 = vst.msk [vmem:[#allocation2 + $0x220] sm:$0xff] %vm383, %v371
      %453 = vst.msk [vmem:[#allocation2 + $0x228] sm:$0xff] %vm383, %v372
      %454 = vst.msk [vmem:[#allocation2 + $0x230] sm:$0xff] %vm383, %v373
      %455 = vst.msk [vmem:[#allocation2 + $0x238] sm:$0xff] %vm383, %v374
      %456 = vst.msk [vmem:[#allocation2 + $0x240] sm:$0xff] %vm383, %v375
      %457 = vst.msk [vmem:[#allocation2 + $0x248] sm:$0xff] %vm383, %v376
      %458 = vst.msk [vmem:[#allocation2 + $0x250] sm:$0xff] %vm383, %v377
      %459 = vst.msk [vmem:[#allocation2 + $0x258] sm:$0xff] %vm383, %v378
      %460 = vst.msk [vmem:[#allocation2 + $0x260] sm:$0xff] %vm383, %v379
      %461 = vst.msk [vmem:[#allocation2 + $0x268] sm:$0xff] %vm383, %v380
      %462 = vst.msk [vmem:[#allocation2 + $0x270] sm:$0xff] %vm383, %v381
      %463 = vst.msk [vmem:[#allocation2 + $0x278] sm:$0xff] %vm383, %v382
      %v464 = vld [vmem:[%s287] sm:$0xff]
      %465 = vst.msk [vmem:[#allocation2 + $0x280] sm:$0xff] %vm383, %v464
      %v466 = vld [vmem:[#allocation2] ss:$5 sm:$0xff]
      %s467 = scalar_lea.vmem [#allocation2], 40
      %v468 = vld [vmem:[%s467] ss:$5 sm:$0xff]
      %s469 = scalar_lea.vmem [#allocation2], 80
      %v470 = vld [vmem:[%s469] ss:$5 sm:$0xff]
      %s471 = scalar_lea.vmem [#allocation2], 120
      %v472 = vld [vmem:[%s471] ss:$5 sm:$0xff]
      %s473 = scalar_lea.vmem [#allocation2], 160
      %v474 = vld [vmem:[%s473] ss:$5 sm:$0xff]
      %s475 = scalar_lea.vmem [#allocation2], 200
      %v476 = vld [vmem:[%s475] ss:$5 sm:$0xff]
      %s477 = scalar_lea.vmem [#allocation2], 240
      %v478 = vld [vmem:[%s477] ss:$5 sm:$0xff]
      %s479 = scalar_lea.vmem [#allocation2], 280
      %v480 = vld [vmem:[%s479] ss:$5 sm:$0xff]
      %s481 = scalar_lea.vmem [#allocation2], 320
      %v482 = vld [vmem:[%s481] ss:$5 sm:$0xff]
      %s483 = scalar_lea.vmem [#allocation2], 360
      %v484 = vld [vmem:[%s483] ss:$5 sm:$0xff]
      %s485 = scalar_lea.vmem [#allocation2], 400
      %v486 = vld [vmem:[%s485] ss:$5 sm:$0xff]
      %s487 = scalar_lea.vmem [#allocation2], 440
      %v488 = vld [vmem:[%s487] ss:$5 sm:$0xff]
      %s489 = scalar_lea.vmem [#allocation2], 480
      %v490 = vld [vmem:[%s489] ss:$5 sm:$0xff]
      %s491 = scalar_lea.vmem [#allocation2], 520
      %v492 = vld [vmem:[%s491] ss:$5 sm:$0xff]
      %s493 = scalar_lea.vmem [#allocation2], 560
      %v494 = vld [vmem:[%s493] ss:$5 sm:$0xff]
      %s495 = scalar_lea.vmem [#allocation2], 600
      %v496 = vld [vmem:[%s495] ss:$5 sm:$0xff]
      %v497 = vld [vmem:[%s2] sm:$0x1]
      %499 = vset.pattern.permute.xlu0 0
      %500 = vperm.xlu0 %499, %v466
      %v501 = vpop.permute.xlu0 %500
      %504 = vset.pattern.permute.xlu0 0
      %505 = vperm.xlu0 %504, %v468
      %v506 = vpop.permute.xlu0 %505
      %509 = vset.pattern.permute.xlu0 0
      %510 = vperm.xlu0 %509, %v470
      %v511 = vpop.permute.xlu0 %510
      %514 = vset.pattern.permute.xlu0 0
      %515 = vperm.xlu0 %514, %v472
      %v516 = vpop.permute.xlu0 %515
      %519 = vset.pattern.permute.xlu0 0
      %520 = vperm.xlu0 %519, %v474
      %v521 = vpop.permute.xlu0 %520
      %524 = vset.pattern.permute.xlu0 0
      %525 = vperm.xlu0 %524, %v476
      %v526 = vpop.permute.xlu0 %525
      %529 = vset.pattern.permute.xlu0 0
      %530 = vperm.xlu0 %529, %v478
      %v531 = vpop.permute.xlu0 %530
      %534 = vset.pattern.permute.xlu0 0
      %535 = vperm.xlu0 %534, %v480
      %v536 = vpop.permute.xlu0 %535
      %539 = vset.pattern.permute.xlu0 0
      %540 = vperm.xlu0 %539, %v482
      %v541 = vpop.permute.xlu0 %540
      %544 = vset.pattern.permute.xlu0 0
      %545 = vperm.xlu0 %544, %v484
      %v546 = vpop.permute.xlu0 %545
      %549 = vset.pattern.permute.xlu0 0
      %550 = vperm.xlu0 %549, %v486
      %v551 = vpop.permute.xlu0 %550
      %554 = vset.pattern.permute.xlu0 0
      %555 = vperm.xlu0 %554, %v488
      %v556 = vpop.permute.xlu0 %555
      %559 = vset.pattern.permute.xlu0 0
      %560 = vperm.xlu0 %559, %v490
      %v561 = vpop.permute.xlu0 %560
      %564 = vset.pattern.permute.xlu0 0
      %565 = vperm.xlu0 %564, %v492
      %v566 = vpop.permute.xlu0 %565
      %569 = vset.pattern.permute.xlu0 0
      %570 = vperm.xlu0 %569, %v494
      %v571 = vpop.permute.xlu0 %570
      %574 = vset.pattern.permute.xlu0 0
      %575 = vperm.xlu0 %574, %v496
      %v576 = vpop.permute.xlu0 %575
      %v578 = vperm.slane %v497, 0
      %v579 = vmul.f32 %v501, %v578
      %v580 = vmul.f32 %v506, %v578
      %v581 = vmul.f32 %v511, %v578
      %v582 = vmul.f32 %v516, %v578
      %v583 = vmul.f32 %v521, %v578
      %v584 = vmul.f32 %v526, %v578
      %v585 = vmul.f32 %v531, %v578
      %v586 = vmul.f32 %v536, %v578
      %v587 = vmul.f32 %v541, %v578
      %v588 = vmul.f32 %v546, %v578
      %v589 = vmul.f32 %v551, %v578
      %v590 = vmul.f32 %v556, %v578
      %v591 = vmul.f32 %v561, %v578
      %v592 = vmul.f32 %v566, %v578
      %v593 = vmul.f32 %v571, %v578
      %v594 = vmul.f32 %v576, %v578
      %v595 = vadd.f32 %v579, 0.0
      %v596 = vadd.f32 %v580, 0.0
      %v597 = vadd.f32 %v581, 0.0
      %v598 = vadd.f32 %v582, 0.0
      %v599 = vadd.f32 %v583, 0.0
      %v600 = vadd.f32 %v584, 0.0
      %v601 = vadd.f32 %v585, 0.0
      %v602 = vadd.f32 %v586, 0.0
      %v603 = vadd.f32 %v587, 0.0
      %v604 = vadd.f32 %v588, 0.0
      %v605 = vadd.f32 %v589, 0.0
      %v606 = vadd.f32 %v590, 0.0
      %v607 = vadd.f32 %v591, 0.0
      %v608 = vadd.f32 %v592, 0.0
      %v609 = vadd.f32 %v593, 0.0
      %v610 = vadd.f32 %v594, 0.0
      %s611 = scalar_lea.vmem [#allocation2], 1
      %v612 = vld [vmem:[%s611] ss:$5 sm:$0xff]
      %s613 = scalar_lea.vmem [#allocation2], 41
      %v614 = vld [vmem:[%s613] ss:$5 sm:$0xff]
      %s615 = scalar_lea.vmem [#allocation2], 81
      %v616 = vld [vmem:[%s615] ss:$5 sm:$0xff]
      %s617 = scalar_lea.vmem [#allocation2], 121
      %v618 = vld [vmem:[%s617] ss:$5 sm:$0xff]
      %s619 = scalar_lea.vmem [#allocation2], 161
      %v620 = vld [vmem:[%s619] ss:$5 sm:$0xff]
      %s621 = scalar_lea.vmem [#allocation2], 201
      %v622 = vld [vmem:[%s621] ss:$5 sm:$0xff]
      %s623 = scalar_lea.vmem [#allocation2], 241
      %v624 = vld [vmem:[%s623] ss:$5 sm:$0xff]
      %s625 = scalar_lea.vmem [#allocation2], 281
      %v626 = vld [vmem:[%s625] ss:$5 sm:$0xff]
      %s627 = scalar_lea.vmem [#allocation2], 321
      %v628 = vld [vmem:[%s627] ss:$5 sm:$0xff]
      %s629 = scalar_lea.vmem [#allocation2], 361
      %v630 = vld [vmem:[%s629] ss:$5 sm:$0xff]
      %s631 = scalar_lea.vmem [#allocation2], 401
      %v632 = vld [vmem:[%s631] ss:$5 sm:$0xff]
      %s633 = scalar_lea.vmem [#allocation2], 441
      %v634 = vld [vmem:[%s633] ss:$5 sm:$0xff]
      %s635 = scalar_lea.vmem [#allocation2], 481
      %v636 = vld [vmem:[%s635] ss:$5 sm:$0xff]
      %s637 = scalar_lea.vmem [#allocation2], 521
      %v638 = vld [vmem:[%s637] ss:$5 sm:$0xff]
      %s639 = scalar_lea.vmem [#allocation2], 561
      %v640 = vld [vmem:[%s639] ss:$5 sm:$0xff]
      %s641 = scalar_lea.vmem [#allocation2], 601
      %v642 = vld [vmem:[%s641] ss:$5 sm:$0xff]
      %v643 = vld [vmem:[%s2 + $0x1] sm:$0x1]
      %645 = vset.pattern.permute.xlu0 0
      %646 = vperm.xlu0 %645, %v612
      %v647 = vpop.permute.xlu0 %646
      %650 = vset.pattern.permute.xlu0 0
      %651 = vperm.xlu0 %650, %v614
      %v652 = vpop.permute.xlu0 %651
      %655 = vset.pattern.permute.xlu0 0
      %656 = vperm.xlu0 %655, %v616
      %v657 = vpop.permute.xlu0 %656
      %660 = vset.pattern.permute.xlu0 0
      %661 = vperm.xlu0 %660, %v618
      %v662 = vpop.permute.xlu0 %661
      %665 = vset.pattern.permute.xlu0 0
      %666 = vperm.xlu0 %665, %v620
      %v667 = vpop.permute.xlu0 %666
      %670 = vset.pattern.permute.xlu0 0
      %671 = vperm.xlu0 %670, %v622
      %v672 = vpop.permute.xlu0 %671
      %675 = vset.pattern.permute.xlu0 0
      %676 = vperm.xlu0 %675, %v624
      %v677 = vpop.permute.xlu0 %676
      %680 = vset.pattern.permute.xlu0 0
      %681 = vperm.xlu0 %680, %v626
      %v682 = vpop.permute.xlu0 %681
      %685 = vset.pattern.permute.xlu0 0
      %686 = vperm.xlu0 %685, %v628
      %v687 = vpop.permute.xlu0 %686
      %690 = vset.pattern.permute.xlu0 0
      %691 = vperm.xlu0 %690, %v630
      %v692 = vpop.permute.xlu0 %691
      %695 = vset.pattern.permute.xlu0 0
      %696 = vperm.xlu0 %695, %v632
      %v697 = vpop.permute.xlu0 %696
      %700 = vset.pattern.permute.xlu0 0
      %701 = vperm.xlu0 %700, %v634
      %v702 = vpop.permute.xlu0 %701
      %705 = vset.pattern.permute.xlu0 0
      %706 = vperm.xlu0 %705, %v636
      %v707 = vpop.permute.xlu0 %706
      %710 = vset.pattern.permute.xlu0 0
      %711 = vperm.xlu0 %710, %v638
      %v712 = vpop.permute.xlu0 %711
      %715 = vset.pattern.permute.xlu0 0
      %716 = vperm.xlu0 %715, %v640
      %v717 = vpop.permute.xlu0 %716
      %720 = vset.pattern.permute.xlu0 0
      %721 = vperm.xlu0 %720, %v642
      %v722 = vpop.permute.xlu0 %721
      %v724 = vperm.slane %v643, 0
      %v725 = vmul.f32 %v647, %v724
      %v726 = vmul.f32 %v652, %v724
      %v727 = vmul.f32 %v657, %v724
      %v728 = vmul.f32 %v662, %v724
      %v729 = vmul.f32 %v667, %v724
      %v730 = vmul.f32 %v672, %v724
      %v731 = vmul.f32 %v677, %v724
      %v732 = vmul.f32 %v682, %v724
      %v733 = vmul.f32 %v687, %v724
      %v734 = vmul.f32 %v692, %v724
      %v735 = vmul.f32 %v697, %v724
      %v736 = vmul.f32 %v702, %v724
      %v737 = vmul.f32 %v707, %v724
      %v738 = vmul.f32 %v712, %v724
      %v739 = vmul.f32 %v717, %v724
      %v740 = vmul.f32 %v722, %v724
      %v741 = vadd.f32 %v595, %v725
      %v742 = vadd.f32 %v596, %v726
      %v743 = vadd.f32 %v597, %v727
      %v744 = vadd.f32 %v598, %v728
      %v745 = vadd.f32 %v599, %v729
      %v746 = vadd.f32 %v600, %v730
      %v747 = vadd.f32 %v601, %v731
      %v748 = vadd.f32 %v602, %v732
      %v749 = vadd.f32 %v603, %v733
      %v750 = vadd.f32 %v604, %v734
      %v751 = vadd.f32 %v605, %v735
      %v752 = vadd.f32 %v606, %v736
      %v753 = vadd.f32 %v607, %v737
      %v754 = vadd.f32 %v608, %v738
      %v755 = vadd.f32 %v609, %v739
      %v756 = vadd.f32 %v610, %v740
      %s757 = scalar_lea.vmem [#allocation2], 2
      %v758 = vld [vmem:[%s757] ss:$5 sm:$0xff]
      %s759 = scalar_lea.vmem [#allocation2], 42
      %v760 = vld [vmem:[%s759] ss:$5 sm:$0xff]
      %s761 = scalar_lea.vmem [#allocation2], 82
      %v762 = vld [vmem:[%s761] ss:$5 sm:$0xff]
      %s763 = scalar_lea.vmem [#allocation2], 122
      %v764 = vld [vmem:[%s763] ss:$5 sm:$0xff]
      %s765 = scalar_lea.vmem [#allocation2], 162
      %v766 = vld [vmem:[%s765] ss:$5 sm:$0xff]
      %s767 = scalar_lea.vmem [#allocation2], 202
      %v768 = vld [vmem:[%s767] ss:$5 sm:$0xff]
      %s769 = scalar_lea.vmem [#allocation2], 242
      %v770 = vld [vmem:[%s769] ss:$5 sm:$0xff]
      %s771 = scalar_lea.vmem [#allocation2], 282
      %v772 = vld [vmem:[%s771] ss:$5 sm:$0xff]
      %s773 = scalar_lea.vmem [#allocation2], 322
      %v774 = vld [vmem:[%s773] ss:$5 sm:$0xff]
      %s775 = scalar_lea.vmem [#allocation2], 362
      %v776 = vld [vmem:[%s775] ss:$5 sm:$0xff]
      %s777 = scalar_lea.vmem [#allocation2], 402
      %v778 = vld [vmem:[%s777] ss:$5 sm:$0xff]
      %s779 = scalar_lea.vmem [#allocation2], 442
      %v780 = vld [vmem:[%s779] ss:$5 sm:$0xff]
      %s781 = scalar_lea.vmem [#allocation2], 482
      %v782 = vld [vmem:[%s781] ss:$5 sm:$0xff]
      %s783 = scalar_lea.vmem [#allocation2], 522
      %v784 = vld [vmem:[%s783] ss:$5 sm:$0xff]
      %s785 = scalar_lea.vmem [#allocation2], 562
      %v786 = vld [vmem:[%s785] ss:$5 sm:$0xff]
      %s787 = scalar_lea.vmem [#allocation2], 602
      %v788 = vld [vmem:[%s787] ss:$5 sm:$0xff]
      %v789 = vld [vmem:[%s2 + $0x2] sm:$0x1]
      %791 = vset.pattern.permute.xlu0 0
      %792 = vperm.xlu0 %791, %v758
      %v793 = vpop.permute.xlu0 %792
      %796 = vset.pattern.permute.xlu0 0
      %797 = vperm.xlu0 %796, %v760
      %v798 = vpop.permute.xlu0 %797
      %801 = vset.pattern.permute.xlu0 0
      %802 = vperm.xlu0 %801, %v762
      %v803 = vpop.permute.xlu0 %802
      %806 = vset.pattern.permute.xlu0 0
      %807 = vperm.xlu0 %806, %v764
      %v808 = vpop.permute.xlu0 %807
      %811 = vset.pattern.permute.xlu0 0
      %812 = vperm.xlu0 %811, %v766
      %v813 = vpop.permute.xlu0 %812
      %816 = vset.pattern.permute.xlu0 0
      %817 = vperm.xlu0 %816, %v768
      %v818 = vpop.permute.xlu0 %817
      %821 = vset.pattern.permute.xlu0 0
      %822 = vperm.xlu0 %821, %v770
      %v823 = vpop.permute.xlu0 %822
      %826 = vset.pattern.permute.xlu0 0
      %827 = vperm.xlu0 %826, %v772
      %v828 = vpop.permute.xlu0 %827
      %831 = vset.pattern.permute.xlu0 0
      %832 = vperm.xlu0 %831, %v774
      %v833 = vpop.permute.xlu0 %832
      %836 = vset.pattern.permute.xlu0 0
      %837 = vperm.xlu0 %836, %v776
      %v838 = vpop.permute.xlu0 %837
      %841 = vset.pattern.permute.xlu0 0
      %842 = vperm.xlu0 %841, %v778
      %v843 = vpop.permute.xlu0 %842
      %846 = vset.pattern.permute.xlu0 0
      %847 = vperm.xlu0 %846, %v780
      %v848 = vpop.permute.xlu0 %847
      %851 = vset.pattern.permute.xlu0 0
      %852 = vperm.xlu0 %851, %v782
      %v853 = vpop.permute.xlu0 %852
      %856 = vset.pattern.permute.xlu0 0
      %857 = vperm.xlu0 %856, %v784
      %v858 = vpop.permute.xlu0 %857
      %861 = vset.pattern.permute.xlu0 0
      %862 = vperm.xlu0 %861, %v786
      %v863 = vpop.permute.xlu0 %862
      %866 = vset.pattern.permute.xlu0 0
      %867 = vperm.xlu0 %866, %v788
      %v868 = vpop.permute.xlu0 %867
      %v870 = vperm.slane %v789, 0
      %v871 = vmul.f32 %v793, %v870
      %v872 = vmul.f32 %v798, %v870
      %v873 = vmul.f32 %v803, %v870
      %v874 = vmul.f32 %v808, %v870
      %v875 = vmul.f32 %v813, %v870
      %v876 = vmul.f32 %v818, %v870
      %v877 = vmul.f32 %v823, %v870
      %v878 = vmul.f32 %v828, %v870
      %v879 = vmul.f32 %v833, %v870
      %v880 = vmul.f32 %v838, %v870
      %v881 = vmul.f32 %v843, %v870
      %v882 = vmul.f32 %v848, %v870
      %v883 = vmul.f32 %v853, %v870
      %v884 = vmul.f32 %v858, %v870
      %v885 = vmul.f32 %v863, %v870
      %v886 = vmul.f32 %v868, %v870
      %v887 = vadd.f32 %v741, %v871
      %v888 = vadd.f32 %v742, %v872
      %v889 = vadd.f32 %v743, %v873
      %v890 = vadd.f32 %v744, %v874
      %v891 = vadd.f32 %v745, %v875
      %v892 = vadd.f32 %v746, %v876
      %v893 = vadd.f32 %v747, %v877
      %v894 = vadd.f32 %v748, %v878
      %v895 = vadd.f32 %v749, %v879
      %v896 = vadd.f32 %v750, %v880
      %v897 = vadd.f32 %v751, %v881
      %v898 = vadd.f32 %v752, %v882
      %v899 = vadd.f32 %v753, %v883
      %v900 = vadd.f32 %v754, %v884
      %v901 = vadd.f32 %v755, %v885
      %v902 = vadd.f32 %v756, %v886
      %s903 = scalar_lea.vmem [#allocation2], 3
      %v904 = vld [vmem:[%s903] ss:$5 sm:$0xff]
      %s905 = scalar_lea.vmem [#allocation2], 43
      %v906 = vld [vmem:[%s905] ss:$5 sm:$0xff]
      %s907 = scalar_lea.vmem [#allocation2], 83
      %v908 = vld [vmem:[%s907] ss:$5 sm:$0xff]
      %s909 = scalar_lea.vmem [#allocation2], 123
      %v910 = vld [vmem:[%s909] ss:$5 sm:$0xff]
      %s911 = scalar_lea.vmem [#allocation2], 163
      %v912 = vld [vmem:[%s911] ss:$5 sm:$0xff]
      %s913 = scalar_lea.vmem [#allocation2], 203
      %v914 = vld [vmem:[%s913] ss:$5 sm:$0xff]
      %s915 = scalar_lea.vmem [#allocation2], 243
      %v916 = vld [vmem:[%s915] ss:$5 sm:$0xff]
      %s917 = scalar_lea.vmem [#allocation2], 283
      %v918 = vld [vmem:[%s917] ss:$5 sm:$0xff]
      %s919 = scalar_lea.vmem [#allocation2], 323
      %v920 = vld [vmem:[%s919] ss:$5 sm:$0xff]
      %s921 = scalar_lea.vmem [#allocation2], 363
      %v922 = vld [vmem:[%s921] ss:$5 sm:$0xff]
      %s923 = scalar_lea.vmem [#allocation2], 403
      %v924 = vld [vmem:[%s923] ss:$5 sm:$0xff]
      %s925 = scalar_lea.vmem [#allocation2], 443
      %v926 = vld [vmem:[%s925] ss:$5 sm:$0xff]
      %s927 = scalar_lea.vmem [#allocation2], 483
      %v928 = vld [vmem:[%s927] ss:$5 sm:$0xff]
      %s929 = scalar_lea.vmem [#allocation2], 523
      %v930 = vld [vmem:[%s929] ss:$5 sm:$0xff]
      %s931 = scalar_lea.vmem [#allocation2], 563
      %v932 = vld [vmem:[%s931] ss:$5 sm:$0xff]
      %s933 = scalar_lea.vmem [#allocation2], 603
      %v934 = vld [vmem:[%s933] ss:$5 sm:$0xff]
      %v935 = vld [vmem:[%s2 + $0x3] sm:$0x1]
      %937 = vset.pattern.permute.xlu0 0
      %938 = vperm.xlu0 %937, %v904
      %v939 = vpop.permute.xlu0 %938
      %942 = vset.pattern.permute.xlu0 0
      %943 = vperm.xlu0 %942, %v906
      %v944 = vpop.permute.xlu0 %943
      %947 = vset.pattern.permute.xlu0 0
      %948 = vperm.xlu0 %947, %v908
      %v949 = vpop.permute.xlu0 %948
      %952 = vset.pattern.permute.xlu0 0
      %953 = vperm.xlu0 %952, %v910
      %v954 = vpop.permute.xlu0 %953
      %957 = vset.pattern.permute.xlu0 0
      %958 = vperm.xlu0 %957, %v912
      %v959 = vpop.permute.xlu0 %958
      %962 = vset.pattern.permute.xlu0 0
      %963 = vperm.xlu0 %962, %v914
      %v964 = vpop.permute.xlu0 %963
      %967 = vset.pattern.permute.xlu0 0
      %968 = vperm.xlu0 %967, %v916
      %v969 = vpop.permute.xlu0 %968
      %972 = vset.pattern.permute.xlu0 0
      %973 = vperm.xlu0 %972, %v918
      %v974 = vpop.permute.xlu0 %973
      %977 = vset.pattern.permute.xlu0 0
      %978 = vperm.xlu0 %977, %v920
      %v979 = vpop.permute.xlu0 %978
      %982 = vset.pattern.permute.xlu0 0
      %983 = vperm.xlu0 %982, %v922
      %v984 = vpop.permute.xlu0 %983
      %987 = vset.pattern.permute.xlu0 0
      %988 = vperm.xlu0 %987, %v924
      %v989 = vpop.permute.xlu0 %988
      %992 = vset.pattern.permute.xlu0 0
      %993 = vperm.xlu0 %992, %v926
      %v994 = vpop.permute.xlu0 %993
      %997 = vset.pattern.permute.xlu0 0
      %998 = vperm.xlu0 %997, %v928
      %v999 = vpop.permute.xlu0 %998
      %1002 = vset.pattern.permute.xlu0 0
      %1003 = vperm.xlu0 %1002, %v930
      %v1004 = vpop.permute.xlu0 %1003
      %1007 = vset.pattern.permute.xlu0 0
      %1008 = vperm.xlu0 %1007, %v932
      %v1009 = vpop.permute.xlu0 %1008
      %1012 = vset.pattern.permute.xlu0 0
      %1013 = vperm.xlu0 %1012, %v934
      %v1014 = vpop.permute.xlu0 %1013
      %v1016 = vperm.slane %v935, 0
      %v1017 = vmul.f32 %v939, %v1016
      %v1018 = vmul.f32 %v944, %v1016
      %v1019 = vmul.f32 %v949, %v1016
      %v1020 = vmul.f32 %v954, %v1016
      %v1021 = vmul.f32 %v959, %v1016
      %v1022 = vmul.f32 %v964, %v1016
      %v1023 = vmul.f32 %v969, %v1016
      %v1024 = vmul.f32 %v974, %v1016
      %v1025 = vmul.f32 %v979, %v1016
      %v1026 = vmul.f32 %v984, %v1016
      %v1027 = vmul.f32 %v989, %v1016
      %v1028 = vmul.f32 %v994, %v1016
      %v1029 = vmul.f32 %v999, %v1016
      %v1030 = vmul.f32 %v1004, %v1016
      %v1031 = vmul.f32 %v1009, %v1016
      %v1032 = vmul.f32 %v1014, %v1016
      %v1033 = vadd.f32 %v887, %v1017
      %v1034 = vadd.f32 %v888, %v1018
      %v1035 = vadd.f32 %v889, %v1019
      %v1036 = vadd.f32 %v890, %v1020
      %v1037 = vadd.f32 %v891, %v1021
      %v1038 = vadd.f32 %v892, %v1022
      %v1039 = vadd.f32 %v893, %v1023
      %v1040 = vadd.f32 %v894, %v1024
      %v1041 = vadd.f32 %v895, %v1025
      %v1042 = vadd.f32 %v896, %v1026
      %v1043 = vadd.f32 %v897, %v1027
      %v1044 = vadd.f32 %v898, %v1028
      %v1045 = vadd.f32 %v899, %v1029
      %v1046 = vadd.f32 %v900, %v1030
      %v1047 = vadd.f32 %v901, %v1031
      %v1048 = vadd.f32 %v902, %v1032
      %s1049 = scalar_lea.vmem [#allocation2], 4
      %v1050 = vld [vmem:[%s1049] ss:$5 sm:$0xff]
      %s1051 = scalar_lea.vmem [#allocation2], 44
      %v1052 = vld [vmem:[%s1051] ss:$5 sm:$0xff]
      %s1053 = scalar_lea.vmem [#allocation2], 84
      %v1054 = vld [vmem:[%s1053] ss:$5 sm:$0xff]
      %s1055 = scalar_lea.vmem [#allocation2], 124
      %v1056 = vld [vmem:[%s1055] ss:$5 sm:$0xff]
      %s1057 = scalar_lea.vmem [#allocation2], 164
      %v1058 = vld [vmem:[%s1057] ss:$5 sm:$0xff]
      %s1059 = scalar_lea.vmem [#allocation2], 204
      %v1060 = vld [vmem:[%s1059] ss:$5 sm:$0xff]
      %s1061 = scalar_lea.vmem [#allocation2], 244
      %v1062 = vld [vmem:[%s1061] ss:$5 sm:$0xff]
      %s1063 = scalar_lea.vmem [#allocation2], 284
      %v1064 = vld [vmem:[%s1063] ss:$5 sm:$0xff]
      %s1065 = scalar_lea.vmem [#allocation2], 324
      %v1066 = vld [vmem:[%s1065] ss:$5 sm:$0xff]
      %s1067 = scalar_lea.vmem [#allocation2], 364
      %v1068 = vld [vmem:[%s1067] ss:$5 sm:$0xff]
      %s1069 = scalar_lea.vmem [#allocation2], 404
      %v1070 = vld [vmem:[%s1069] ss:$5 sm:$0xff]
      %s1071 = scalar_lea.vmem [#allocation2], 444
      %v1072 = vld [vmem:[%s1071] ss:$5 sm:$0xff]
      %s1073 = scalar_lea.vmem [#allocation2], 484
      %v1074 = vld [vmem:[%s1073] ss:$5 sm:$0xff]
      %s1075 = scalar_lea.vmem [#allocation2], 524
      %v1076 = vld [vmem:[%s1075] ss:$5 sm:$0xff]
      %s1077 = scalar_lea.vmem [#allocation2], 564
      %v1078 = vld [vmem:[%s1077] ss:$5 sm:$0xff]
      %s1079 = scalar_lea.vmem [#allocation2], 604
      %v1080 = vld [vmem:[%s1079] ss:$5 sm:$0xff]
      %v1081 = vld [vmem:[%s2 + $0x4] sm:$0x1]
      %1083 = vset.pattern.permute.xlu0 0
      %1084 = vperm.xlu0 %1083, %v1050
      %v1085 = vpop.permute.xlu0 %1084
      %1088 = vset.pattern.permute.xlu0 0
      %1089 = vperm.xlu0 %1088, %v1052
      %v1090 = vpop.permute.xlu0 %1089
      %1093 = vset.pattern.permute.xlu0 0
      %1094 = vperm.xlu0 %1093, %v1054
      %v1095 = vpop.permute.xlu0 %1094
      %1098 = vset.pattern.permute.xlu0 0
      %1099 = vperm.xlu0 %1098, %v1056
      %v1100 = vpop.permute.xlu0 %1099
      %1103 = vset.pattern.permute.xlu0 0
      %1104 = vperm.xlu0 %1103, %v1058
      %v1105 = vpop.permute.xlu0 %1104
      %1108 = vset.pattern.permute.xlu0 0
      %1109 = vperm.xlu0 %1108, %v1060
      %v1110 = vpop.permute.xlu0 %1109
      %1113 = vset.pattern.permute.xlu0 0
      %1114 = vperm.xlu0 %1113, %v1062
      %v1115 = vpop.permute.xlu0 %1114
      %1118 = vset.pattern.permute.xlu0 0
      %1119 = vperm.xlu0 %1118, %v1064
      %v1120 = vpop.permute.xlu0 %1119
      %1123 = vset.pattern.permute.xlu0 0
      %1124 = vperm.xlu0 %1123, %v1066
      %v1125 = vpop.permute.xlu0 %1124
      %1128 = vset.pattern.permute.xlu0 0
      %1129 = vperm.xlu0 %1128, %v1068
      %v1130 = vpop.permute.xlu0 %1129
      %1133 = vset.pattern.permute.xlu0 0
      %1134 = vperm.xlu0 %1133, %v1070
      %v1135 = vpop.permute.xlu0 %1134
      %1138 = vset.pattern.permute.xlu0 0
      %1139 = vperm.xlu0 %1138, %v1072
      %v1140 = vpop.permute.xlu0 %1139
      %1143 = vset.pattern.permute.xlu0 0
      %1144 = vperm.xlu0 %1143, %v1074
      %v1145 = vpop.permute.xlu0 %1144
      %1148 = vset.pattern.permute.xlu0 0
      %1149 = vperm.xlu0 %1148, %v1076
      %v1150 = vpop.permute.xlu0 %1149
      %1153 = vset.pattern.permute.xlu0 0
      %1154 = vperm.xlu0 %1153, %v1078
      %v1155 = vpop.permute.xlu0 %1154
      %1158 = vset.pattern.permute.xlu0 0
      %1159 = vperm.xlu0 %1158, %v1080
      %v1160 = vpop.permute.xlu0 %1159
      %v1162 = vperm.slane %v1081, 0
      %v1163 = vmul.f32 %v1085, %v1162
      %v1164 = vmul.f32 %v1090, %v1162
      %v1165 = vmul.f32 %v1095, %v1162
      %v1166 = vmul.f32 %v1100, %v1162
      %v1167 = vmul.f32 %v1105, %v1162
      %v1168 = vmul.f32 %v1110, %v1162
      %v1169 = vmul.f32 %v1115, %v1162
      %v1170 = vmul.f32 %v1120, %v1162
      %v1171 = vmul.f32 %v1125, %v1162
      %v1172 = vmul.f32 %v1130, %v1162
      %v1173 = vmul.f32 %v1135, %v1162
      %v1174 = vmul.f32 %v1140, %v1162
      %v1175 = vmul.f32 %v1145, %v1162
      %v1176 = vmul.f32 %v1150, %v1162
      %v1177 = vmul.f32 %v1155, %v1162
      %v1178 = vmul.f32 %v1160, %v1162
      %v1179 = vadd.f32 %v1033, %v1163
      %v1180 = vadd.f32 %v1034, %v1164
      %v1181 = vadd.f32 %v1035, %v1165
      %v1182 = vadd.f32 %v1036, %v1166
      %v1183 = vadd.f32 %v1037, %v1167
      %v1184 = vadd.f32 %v1038, %v1168
      %v1185 = vadd.f32 %v1039, %v1169
      %v1186 = vadd.f32 %v1040, %v1170
      %v1187 = vadd.f32 %v1041, %v1171
      %v1188 = vadd.f32 %v1042, %v1172
      %v1189 = vadd.f32 %v1043, %v1173
      %v1190 = vadd.f32 %v1044, %v1174
      %v1191 = vadd.f32 %v1045, %v1175
      %v1192 = vadd.f32 %v1046, %v1176
      %v1193 = vadd.f32 %v1047, %v1177
      %v1194 = vadd.f32 %v1048, %v1178
      %s1195 = scalar_lea.vmem [#allocation2], 5
      %v1196 = vld [vmem:[%s1195] ss:$5 sm:$0xff]
      %s1197 = scalar_lea.vmem [#allocation2], 45
      %v1198 = vld [vmem:[%s1197] ss:$5 sm:$0xff]
      %s1199 = scalar_lea.vmem [#allocation2], 85
      %v1200 = vld [vmem:[%s1199] ss:$5 sm:$0xff]
      %s1201 = scalar_lea.vmem [#allocation2], 125
      %v1202 = vld [vmem:[%s1201] ss:$5 sm:$0xff]
      %s1203 = scalar_lea.vmem [#allocation2], 165
      %v1204 = vld [vmem:[%s1203] ss:$5 sm:$0xff]
      %s1205 = scalar_lea.vmem [#allocation2], 205
      %v1206 = vld [vmem:[%s1205] ss:$5 sm:$0xff]
      %s1207 = scalar_lea.vmem [#allocation2], 245
      %v1208 = vld [vmem:[%s1207] ss:$5 sm:$0xff]
      %s1209 = scalar_lea.vmem [#allocation2], 285
      %v1210 = vld [vmem:[%s1209] ss:$5 sm:$0xff]
      %s1211 = scalar_lea.vmem [#allocation2], 325
      %v1212 = vld [vmem:[%s1211] ss:$5 sm:$0xff]
      %s1213 = scalar_lea.vmem [#allocation2], 365
      %v1214 = vld [vmem:[%s1213] ss:$5 sm:$0xff]
      %s1215 = scalar_lea.vmem [#allocation2], 405
      %v1216 = vld [vmem:[%s1215] ss:$5 sm:$0xff]
      %s1217 = scalar_lea.vmem [#allocation2], 445
      %v1218 = vld [vmem:[%s1217] ss:$5 sm:$0xff]
      %s1219 = scalar_lea.vmem [#allocation2], 485
      %v1220 = vld [vmem:[%s1219] ss:$5 sm:$0xff]
      %s1221 = scalar_lea.vmem [#allocation2], 525
      %v1222 = vld [vmem:[%s1221] ss:$5 sm:$0xff]
      %s1223 = scalar_lea.vmem [#allocation2], 565
      %v1224 = vld [vmem:[%s1223] ss:$5 sm:$0xff]
      %s1225 = scalar_lea.vmem [#allocation2], 605
      %v1226 = vld [vmem:[%s1225] ss:$5 sm:$0xff]
      %v1227 = vld [vmem:[%s2 + $0x5] sm:$0x1]
      %1229 = vset.pattern.permute.xlu0 0
      %1230 = vperm.xlu0 %1229, %v1196
      %v1231 = vpop.permute.xlu0 %1230
      %1234 = vset.pattern.permute.xlu0 0
      %1235 = vperm.xlu0 %1234, %v1198
      %v1236 = vpop.permute.xlu0 %1235
      %1239 = vset.pattern.permute.xlu0 0
      %1240 = vperm.xlu0 %1239, %v1200
      %v1241 = vpop.permute.xlu0 %1240
      %1244 = vset.pattern.permute.xlu0 0
      %1245 = vperm.xlu0 %1244, %v1202
      %v1246 = vpop.permute.xlu0 %1245
      %1249 = vset.pattern.permute.xlu0 0
      %1250 = vperm.xlu0 %1249, %v1204
      %v1251 = vpop.permute.xlu0 %1250
      %1254 = vset.pattern.permute.xlu0 0
      %1255 = vperm.xlu0 %1254, %v1206
      %v1256 = vpop.permute.xlu0 %1255
      %1259 = vset.pattern.permute.xlu0 0
      %1260 = vperm.xlu0 %1259, %v1208
      %v1261 = vpop.permute.xlu0 %1260
      %1264 = vset.pattern.permute.xlu0 0
      %1265 = vperm.xlu0 %1264, %v1210
      %v1266 = vpop.permute.xlu0 %1265
      %1269 = vset.pattern.permute.xlu0 0
      %1270 = vperm.xlu0 %1269, %v1212
      %v1271 = vpop.permute.xlu0 %1270
      %1274 = vset.pattern.permute.xlu0 0
      %1275 = vperm.xlu0 %1274, %v1214
      %v1276 = vpop.permute.xlu0 %1275
      %1279 = vset.pattern.permute.xlu0 0
      %1280 = vperm.xlu0 %1279, %v1216
      %v1281 = vpop.permute.xlu0 %1280
      %1284 = vset.pattern.permute.xlu0 0
      %1285 = vperm.xlu0 %1284, %v1218
      %v1286 = vpop.permute.xlu0 %1285
      %1289 = vset.pattern.permute.xlu0 0
      %1290 = vperm.xlu0 %1289, %v1220
      %v1291 = vpop.permute.xlu0 %1290
      %1294 = vset.pattern.permute.xlu0 0
      %1295 = vperm.xlu0 %1294, %v1222
      %v1296 = vpop.permute.xlu0 %1295
      %1299 = vset.pattern.permute.xlu0 0
      %1300 = vperm.xlu0 %1299, %v1224
      %v1301 = vpop.permute.xlu0 %1300
      %1304 = vset.pattern.permute.xlu0 0
      %1305 = vperm.xlu0 %1304, %v1226
      %v1306 = vpop.permute.xlu0 %1305
      %v1308 = vperm.slane %v1227, 0
      %v1309 = vmul.f32 %v1231, %v1308
      %v1310 = vmul.f32 %v1236, %v1308
      %v1311 = vmul.f32 %v1241, %v1308
      %v1312 = vmul.f32 %v1246, %v1308
      %v1313 = vmul.f32 %v1251, %v1308
      %v1314 = vmul.f32 %v1256, %v1308
      %v1315 = vmul.f32 %v1261, %v1308
      %v1316 = vmul.f32 %v1266, %v1308
      %v1317 = vmul.f32 %v1271, %v1308
      %v1318 = vmul.f32 %v1276, %v1308
      %v1319 = vmul.f32 %v1281, %v1308
      %v1320 = vmul.f32 %v1286, %v1308
      %v1321 = vmul.f32 %v1291, %v1308
      %v1322 = vmul.f32 %v1296, %v1308
      %v1323 = vmul.f32 %v1301, %v1308
      %v1324 = vmul.f32 %v1306, %v1308
      %v1325 = vadd.f32 %v1179, %v1309
      %v1326 = vadd.f32 %v1180, %v1310
      %v1327 = vadd.f32 %v1181, %v1311
      %v1328 = vadd.f32 %v1182, %v1312
      %v1329 = vadd.f32 %v1183, %v1313
      %v1330 = vadd.f32 %v1184, %v1314
      %v1331 = vadd.f32 %v1185, %v1315
      %v1332 = vadd.f32 %v1186, %v1316
      %v1333 = vadd.f32 %v1187, %v1317
      %v1334 = vadd.f32 %v1188, %v1318
      %v1335 = vadd.f32 %v1189, %v1319
      %v1336 = vadd.f32 %v1190, %v1320
      %v1337 = vadd.f32 %v1191, %v1321
      %v1338 = vadd.f32 %v1192, %v1322
      %v1339 = vadd.f32 %v1193, %v1323
      %v1340 = vadd.f32 %v1194, %v1324
      %s1341 = scalar_lea.vmem [#allocation2], 6
      %v1342 = vld [vmem:[%s1341] ss:$5 sm:$0xff]
      %s1343 = scalar_lea.vmem [#allocation2], 46
      %v1344 = vld [vmem:[%s1343] ss:$5 sm:$0xff]
      %s1345 = scalar_lea.vmem [#allocation2], 86
      %v1346 = vld [vmem:[%s1345] ss:$5 sm:$0xff]
      %s1347 = scalar_lea.vmem [#allocation2], 126
      %v1348 = vld [vmem:[%s1347] ss:$5 sm:$0xff]
      %s1349 = scalar_lea.vmem [#allocation2], 166
      %v1350 = vld [vmem:[%s1349] ss:$5 sm:$0xff]
      %s1351 = scalar_lea.vmem [#allocation2], 206
      %v1352 = vld [vmem:[%s1351] ss:$5 sm:$0xff]
      %s1353 = scalar_lea.vmem [#allocation2], 246
      %v1354 = vld [vmem:[%s1353] ss:$5 sm:$0xff]
      %s1355 = scalar_lea.vmem [#allocation2], 286
      %v1356 = vld [vmem:[%s1355] ss:$5 sm:$0xff]
      %s1357 = scalar_lea.vmem [#allocation2], 326
      %v1358 = vld [vmem:[%s1357] ss:$5 sm:$0xff]
      %s1359 = scalar_lea.vmem [#allocation2], 366
      %v1360 = vld [vmem:[%s1359] ss:$5 sm:$0xff]
      %s1361 = scalar_lea.vmem [#allocation2], 406
      %v1362 = vld [vmem:[%s1361] ss:$5 sm:$0xff]
      %s1363 = scalar_lea.vmem [#allocation2], 446
      %v1364 = vld [vmem:[%s1363] ss:$5 sm:$0xff]
      %s1365 = scalar_lea.vmem [#allocation2], 486
      %v1366 = vld [vmem:[%s1365] ss:$5 sm:$0xff]
      %s1367 = scalar_lea.vmem [#allocation2], 526
      %v1368 = vld [vmem:[%s1367] ss:$5 sm:$0xff]
      %s1369 = scalar_lea.vmem [#allocation2], 566
      %v1370 = vld [vmem:[%s1369] ss:$5 sm:$0xff]
      %s1371 = scalar_lea.vmem [#allocation2], 606
      %v1372 = vld [vmem:[%s1371] ss:$5 sm:$0xff]
      %v1373 = vld [vmem:[%s2 + $0x6] sm:$0x1]
      %1375 = vset.pattern.permute.xlu0 0
      %1376 = vperm.xlu0 %1375, %v1342
      %v1377 = vpop.permute.xlu0 %1376
      %1380 = vset.pattern.permute.xlu0 0
      %1381 = vperm.xlu0 %1380, %v1344
      %v1382 = vpop.permute.xlu0 %1381
      %1385 = vset.pattern.permute.xlu0 0
      %1386 = vperm.xlu0 %1385, %v1346
      %v1387 = vpop.permute.xlu0 %1386
      %1390 = vset.pattern.permute.xlu0 0
      %1391 = vperm.xlu0 %1390, %v1348
      %v1392 = vpop.permute.xlu0 %1391
      %1395 = vset.pattern.permute.xlu0 0
      %1396 = vperm.xlu0 %1395, %v1350
      %v1397 = vpop.permute.xlu0 %1396
      %1400 = vset.pattern.permute.xlu0 0
      %1401 = vperm.xlu0 %1400, %v1352
      %v1402 = vpop.permute.xlu0 %1401
      %1405 = vset.pattern.permute.xlu0 0
      %1406 = vperm.xlu0 %1405, %v1354
      %v1407 = vpop.permute.xlu0 %1406
      %1410 = vset.pattern.permute.xlu0 0
      %1411 = vperm.xlu0 %1410, %v1356
      %v1412 = vpop.permute.xlu0 %1411
      %1415 = vset.pattern.permute.xlu0 0
      %1416 = vperm.xlu0 %1415, %v1358
      %v1417 = vpop.permute.xlu0 %1416
      %1420 = vset.pattern.permute.xlu0 0
      %1421 = vperm.xlu0 %1420, %v1360
      %v1422 = vpop.permute.xlu0 %1421
      %1425 = vset.pattern.permute.xlu0 0
      %1426 = vperm.xlu0 %1425, %v1362
      %v1427 = vpop.permute.xlu0 %1426
      %1430 = vset.pattern.permute.xlu0 0
      %1431 = vperm.xlu0 %1430, %v1364
      %v1432 = vpop.permute.xlu0 %1431
      %1435 = vset.pattern.permute.xlu0 0
      %1436 = vperm.xlu0 %1435, %v1366
      %v1437 = vpop.permute.xlu0 %1436
      %1440 = vset.pattern.permute.xlu0 0
      %1441 = vperm.xlu0 %1440, %v1368
      %v1442 = vpop.permute.xlu0 %1441
      %1445 = vset.pattern.permute.xlu0 0
      %1446 = vperm.xlu0 %1445, %v1370
      %v1447 = vpop.permute.xlu0 %1446
      %1450 = vset.pattern.permute.xlu0 0
      %1451 = vperm.xlu0 %1450, %v1372
      %v1452 = vpop.permute.xlu0 %1451
      %v1454 = vperm.slane %v1373, 0
      %v1455 = vmul.f32 %v1377, %v1454
      %v1456 = vmul.f32 %v1382, %v1454
      %v1457 = vmul.f32 %v1387, %v1454
      %v1458 = vmul.f32 %v1392, %v1454
      %v1459 = vmul.f32 %v1397, %v1454
      %v1460 = vmul.f32 %v1402, %v1454
      %v1461 = vmul.f32 %v1407, %v1454
      %v1462 = vmul.f32 %v1412, %v1454
      %v1463 = vmul.f32 %v1417, %v1454
      %v1464 = vmul.f32 %v1422, %v1454
      %v1465 = vmul.f32 %v1427, %v1454
      %v1466 = vmul.f32 %v1432, %v1454
      %v1467 = vmul.f32 %v1437, %v1454
      %v1468 = vmul.f32 %v1442, %v1454
      %v1469 = vmul.f32 %v1447, %v1454
      %v1470 = vmul.f32 %v1452, %v1454
      %v1471 = vadd.f32 %v1325, %v1455
      %v1472 = vadd.f32 %v1326, %v1456
      %v1473 = vadd.f32 %v1327, %v1457
      %v1474 = vadd.f32 %v1328, %v1458
      %v1475 = vadd.f32 %v1329, %v1459
      %v1476 = vadd.f32 %v1330, %v1460
      %v1477 = vadd.f32 %v1331, %v1461
      %v1478 = vadd.f32 %v1332, %v1462
      %v1479 = vadd.f32 %v1333, %v1463
      %v1480 = vadd.f32 %v1334, %v1464
      %v1481 = vadd.f32 %v1335, %v1465
      %v1482 = vadd.f32 %v1336, %v1466
      %v1483 = vadd.f32 %v1337, %v1467
      %v1484 = vadd.f32 %v1338, %v1468
      %v1485 = vadd.f32 %v1339, %v1469
      %v1486 = vadd.f32 %v1340, %v1470
      %s1487 = scalar_lea.vmem [#allocation2], 7
      %v1488 = vld [vmem:[%s1487] ss:$5 sm:$0xff]
      %s1489 = scalar_lea.vmem [#allocation2], 47
      %v1490 = vld [vmem:[%s1489] ss:$5 sm:$0xff]
      %s1491 = scalar_lea.vmem [#allocation2], 87
      %v1492 = vld [vmem:[%s1491] ss:$5 sm:$0xff]
      %s1493 = scalar_lea.vmem [#allocation2], 127
      %v1494 = vld [vmem:[%s1493] ss:$5 sm:$0xff]
      %s1495 = scalar_lea.vmem [#allocation2], 167
      %v1496 = vld [vmem:[%s1495] ss:$5 sm:$0xff]
      %s1497 = scalar_lea.vmem [#allocation2], 207
      %v1498 = vld [vmem:[%s1497] ss:$5 sm:$0xff]
      %s1499 = scalar_lea.vmem [#allocation2], 247
      %v1500 = vld [vmem:[%s1499] ss:$5 sm:$0xff]
      %s1501 = scalar_lea.vmem [#allocation2], 287
      %v1502 = vld [vmem:[%s1501] ss:$5 sm:$0xff]
      %s1503 = scalar_lea.vmem [#allocation2], 327
      %v1504 = vld [vmem:[%s1503] ss:$5 sm:$0xff]
      %s1505 = scalar_lea.vmem [#allocation2], 367
      %v1506 = vld [vmem:[%s1505] ss:$5 sm:$0xff]
      %s1507 = scalar_lea.vmem [#allocation2], 407
      %v1508 = vld [vmem:[%s1507] ss:$5 sm:$0xff]
      %s1509 = scalar_lea.vmem [#allocation2], 447
      %v1510 = vld [vmem:[%s1509] ss:$5 sm:$0xff]
      %s1511 = scalar_lea.vmem [#allocation2], 487
      %v1512 = vld [vmem:[%s1511] ss:$5 sm:$0xff]
      %s1513 = scalar_lea.vmem [#allocation2], 527
      %v1514 = vld [vmem:[%s1513] ss:$5 sm:$0xff]
      %s1515 = scalar_lea.vmem [#allocation2], 567
      %v1516 = vld [vmem:[%s1515] ss:$5 sm:$0xff]
      %s1517 = scalar_lea.vmem [#allocation2], 607
      %v1518 = vld [vmem:[%s1517] ss:$5 sm:$0xff]
      %v1519 = vld [vmem:[%s2 + $0x7] sm:$0x1]
      %1521 = vset.pattern.permute.xlu0 0
      %1522 = vperm.xlu0 %1521, %v1488
      %v1523 = vpop.permute.xlu0 %1522
      %1526 = vset.pattern.permute.xlu0 0
      %1527 = vperm.xlu0 %1526, %v1490
      %v1528 = vpop.permute.xlu0 %1527
      %1531 = vset.pattern.permute.xlu0 0
      %1532 = vperm.xlu0 %1531, %v1492
      %v1533 = vpop.permute.xlu0 %1532
      %1536 = vset.pattern.permute.xlu0 0
      %1537 = vperm.xlu0 %1536, %v1494
      %v1538 = vpop.permute.xlu0 %1537
      %1541 = vset.pattern.permute.xlu0 0
      %1542 = vperm.xlu0 %1541, %v1496
      %v1543 = vpop.permute.xlu0 %1542
      %1546 = vset.pattern.permute.xlu0 0
      %1547 = vperm.xlu0 %1546, %v1498
      %v1548 = vpop.permute.xlu0 %1547
      %1551 = vset.pattern.permute.xlu0 0
      %1552 = vperm.xlu0 %1551, %v1500
      %v1553 = vpop.permute.xlu0 %1552
      %1556 = vset.pattern.permute.xlu0 0
      %1557 = vperm.xlu0 %1556, %v1502
      %v1558 = vpop.permute.xlu0 %1557
      %1561 = vset.pattern.permute.xlu0 0
      %1562 = vperm.xlu0 %1561, %v1504
      %v1563 = vpop.permute.xlu0 %1562
      %1566 = vset.pattern.permute.xlu0 0
      %1567 = vperm.xlu0 %1566, %v1506
      %v1568 = vpop.permute.xlu0 %1567
      %1571 = vset.pattern.permute.xlu0 0
      %1572 = vperm.xlu0 %1571, %v1508
      %v1573 = vpop.permute.xlu0 %1572
      %1576 = vset.pattern.permute.xlu0 0
      %1577 = vperm.xlu0 %1576, %v1510
      %v1578 = vpop.permute.xlu0 %1577
      %1581 = vset.pattern.permute.xlu0 0
      %1582 = vperm.xlu0 %1581, %v1512
      %v1583 = vpop.permute.xlu0 %1582
      %1586 = vset.pattern.permute.xlu0 0
      %1587 = vperm.xlu0 %1586, %v1514
      %v1588 = vpop.permute.xlu0 %1587
      %1591 = vset.pattern.permute.xlu0 0
      %1592 = vperm.xlu0 %1591, %v1516
      %v1593 = vpop.permute.xlu0 %1592
      %1596 = vset.pattern.permute.xlu0 0
      %1597 = vperm.xlu0 %1596, %v1518
      %v1598 = vpop.permute.xlu0 %1597
      %v1600 = vperm.slane %v1519, 0
      %v1601 = vmul.f32 %v1523, %v1600
      %v1602 = vmul.f32 %v1528, %v1600
      %v1603 = vmul.f32 %v1533, %v1600
      %v1604 = vmul.f32 %v1538, %v1600
      %v1605 = vmul.f32 %v1543, %v1600
      %v1606 = vmul.f32 %v1548, %v1600
      %v1607 = vmul.f32 %v1553, %v1600
      %v1608 = vmul.f32 %v1558, %v1600
      %v1609 = vmul.f32 %v1563, %v1600
      %v1610 = vmul.f32 %v1568, %v1600
      %v1611 = vmul.f32 %v1573, %v1600
      %v1612 = vmul.f32 %v1578, %v1600
      %v1613 = vmul.f32 %v1583, %v1600
      %v1614 = vmul.f32 %v1588, %v1600
      %v1615 = vmul.f32 %v1593, %v1600
      %v1616 = vmul.f32 %v1598, %v1600
      %v1617 = vadd.f32 %v1471, %v1601
      %v1618 = vadd.f32 %v1472, %v1602
      %v1619 = vadd.f32 %v1473, %v1603
      %v1620 = vadd.f32 %v1474, %v1604
      %v1621 = vadd.f32 %v1475, %v1605
      %v1622 = vadd.f32 %v1476, %v1606
      %v1623 = vadd.f32 %v1477, %v1607
      %v1624 = vadd.f32 %v1478, %v1608
      %v1625 = vadd.f32 %v1479, %v1609
      %v1626 = vadd.f32 %v1480, %v1610
      %v1627 = vadd.f32 %v1481, %v1611
      %v1628 = vadd.f32 %v1482, %v1612
      %v1629 = vadd.f32 %v1483, %v1613
      %v1630 = vadd.f32 %v1484, %v1614
      %v1631 = vadd.f32 %v1485, %v1615
      %v1632 = vadd.f32 %v1486, %v1616
      %s1633 = scalar_lea.vmem [#allocation2], 8
      %v1634 = vld [vmem:[%s1633] ss:$5 sm:$0xff]
      %s1635 = scalar_lea.vmem [#allocation2], 48
      %v1636 = vld [vmem:[%s1635] ss:$5 sm:$0xff]
      %s1637 = scalar_lea.vmem [#allocation2], 88
      %v1638 = vld [vmem:[%s1637] ss:$5 sm:$0xff]
      %s1639 = scalar_lea.vmem [#allocation2], 128
      %v1640 = vld [vmem:[%s1639] ss:$5 sm:$0xff]
      %s1641 = scalar_lea.vmem [#allocation2], 168
      %v1642 = vld [vmem:[%s1641] ss:$5 sm:$0xff]
      %s1643 = scalar_lea.vmem [#allocation2], 208
      %v1644 = vld [vmem:[%s1643] ss:$5 sm:$0xff]
      %s1645 = scalar_lea.vmem [#allocation2], 248
      %v1646 = vld [vmem:[%s1645] ss:$5 sm:$0xff]
      %s1647 = scalar_lea.vmem [#allocation2], 288
      %v1648 = vld [vmem:[%s1647] ss:$5 sm:$0xff]
      %s1649 = scalar_lea.vmem [#allocation2], 328
      %v1650 = vld [vmem:[%s1649] ss:$5 sm:$0xff]
      %s1651 = scalar_lea.vmem [#allocation2], 368
      %v1652 = vld [vmem:[%s1651] ss:$5 sm:$0xff]
      %s1653 = scalar_lea.vmem [#allocation2], 408
      %v1654 = vld [vmem:[%s1653] ss:$5 sm:$0xff]
      %s1655 = scalar_lea.vmem [#allocation2], 448
      %v1656 = vld [vmem:[%s1655] ss:$5 sm:$0xff]
      %s1657 = scalar_lea.vmem [#allocation2], 488
      %v1658 = vld [vmem:[%s1657] ss:$5 sm:$0xff]
      %s1659 = scalar_lea.vmem [#allocation2], 528
      %v1660 = vld [vmem:[%s1659] ss:$5 sm:$0xff]
      %s1661 = scalar_lea.vmem [#allocation2], 568
      %v1662 = vld [vmem:[%s1661] ss:$5 sm:$0xff]
      %s1663 = scalar_lea.vmem [#allocation2], 608
      %v1664 = vld [vmem:[%s1663] ss:$5 sm:$0xff]
      %v1665 = vld [vmem:[%s2 + $0x8] sm:$0x1]
      %1667 = vset.pattern.permute.xlu0 0
      %1668 = vperm.xlu0 %1667, %v1634
      %v1669 = vpop.permute.xlu0 %1668
      %1672 = vset.pattern.permute.xlu0 0
      %1673 = vperm.xlu0 %1672, %v1636
      %v1674 = vpop.permute.xlu0 %1673
      %1677 = vset.pattern.permute.xlu0 0
      %1678 = vperm.xlu0 %1677, %v1638
      %v1679 = vpop.permute.xlu0 %1678
      %1682 = vset.pattern.permute.xlu0 0
      %1683 = vperm.xlu0 %1682, %v1640
      %v1684 = vpop.permute.xlu0 %1683
      %1687 = vset.pattern.permute.xlu0 0
      %1688 = vperm.xlu0 %1687, %v1642
      %v1689 = vpop.permute.xlu0 %1688
      %1692 = vset.pattern.permute.xlu0 0
      %1693 = vperm.xlu0 %1692, %v1644
      %v1694 = vpop.permute.xlu0 %1693
      %1697 = vset.pattern.permute.xlu0 0
      %1698 = vperm.xlu0 %1697, %v1646
      %v1699 = vpop.permute.xlu0 %1698
      %1702 = vset.pattern.permute.xlu0 0
      %1703 = vperm.xlu0 %1702, %v1648
      %v1704 = vpop.permute.xlu0 %1703
      %1707 = vset.pattern.permute.xlu0 0
      %1708 = vperm.xlu0 %1707, %v1650
      %v1709 = vpop.permute.xlu0 %1708
      %1712 = vset.pattern.permute.xlu0 0
      %1713 = vperm.xlu0 %1712, %v1652
      %v1714 = vpop.permute.xlu0 %1713
      %1717 = vset.pattern.permute.xlu0 0
      %1718 = vperm.xlu0 %1717, %v1654
      %v1719 = vpop.permute.xlu0 %1718
      %1722 = vset.pattern.permute.xlu0 0
      %1723 = vperm.xlu0 %1722, %v1656
      %v1724 = vpop.permute.xlu0 %1723
      %1727 = vset.pattern.permute.xlu0 0
      %1728 = vperm.xlu0 %1727, %v1658
      %v1729 = vpop.permute.xlu0 %1728
      %1732 = vset.pattern.permute.xlu0 0
      %1733 = vperm.xlu0 %1732, %v1660
      %v1734 = vpop.permute.xlu0 %1733
      %1737 = vset.pattern.permute.xlu0 0
      %1738 = vperm.xlu0 %1737, %v1662
      %v1739 = vpop.permute.xlu0 %1738
      %1742 = vset.pattern.permute.xlu0 0
      %1743 = vperm.xlu0 %1742, %v1664
      %v1744 = vpop.permute.xlu0 %1743
      %v1746 = vperm.slane %v1665, 0
      %v1747 = vmul.f32 %v1669, %v1746
      %v1748 = vmul.f32 %v1674, %v1746
      %v1749 = vmul.f32 %v1679, %v1746
      %v1750 = vmul.f32 %v1684, %v1746
      %v1751 = vmul.f32 %v1689, %v1746
      %v1752 = vmul.f32 %v1694, %v1746
      %v1753 = vmul.f32 %v1699, %v1746
      %v1754 = vmul.f32 %v1704, %v1746
      %v1755 = vmul.f32 %v1709, %v1746
      %v1756 = vmul.f32 %v1714, %v1746
      %v1757 = vmul.f32 %v1719, %v1746
      %v1758 = vmul.f32 %v1724, %v1746
      %v1759 = vmul.f32 %v1729, %v1746
      %v1760 = vmul.f32 %v1734, %v1746
      %v1761 = vmul.f32 %v1739, %v1746
      %v1762 = vmul.f32 %v1744, %v1746
      %v1763 = vadd.f32 %v1617, %v1747
      %v1764 = vadd.f32 %v1618, %v1748
      %v1765 = vadd.f32 %v1619, %v1749
      %v1766 = vadd.f32 %v1620, %v1750
      %v1767 = vadd.f32 %v1621, %v1751
      %v1768 = vadd.f32 %v1622, %v1752
      %v1769 = vadd.f32 %v1623, %v1753
      %v1770 = vadd.f32 %v1624, %v1754
      %v1771 = vadd.f32 %v1625, %v1755
      %v1772 = vadd.f32 %v1626, %v1756
      %v1773 = vadd.f32 %v1627, %v1757
      %v1774 = vadd.f32 %v1628, %v1758
      %v1775 = vadd.f32 %v1629, %v1759
      %v1776 = vadd.f32 %v1630, %v1760
      %v1777 = vadd.f32 %v1631, %v1761
      %v1778 = vadd.f32 %v1632, %v1762
      %s1779 = scalar_lea.vmem [#allocation2], 9
      %v1780 = vld [vmem:[%s1779] ss:$5 sm:$0xff]
      %s1781 = scalar_lea.vmem [#allocation2], 49
      %v1782 = vld [vmem:[%s1781] ss:$5 sm:$0xff]
      %s1783 = scalar_lea.vmem [#allocation2], 89
      %v1784 = vld [vmem:[%s1783] ss:$5 sm:$0xff]
      %s1785 = scalar_lea.vmem [#allocation2], 129
      %v1786 = vld [vmem:[%s1785] ss:$5 sm:$0xff]
      %s1787 = scalar_lea.vmem [#allocation2], 169
      %v1788 = vld [vmem:[%s1787] ss:$5 sm:$0xff]
      %s1789 = scalar_lea.vmem [#allocation2], 209
      %v1790 = vld [vmem:[%s1789] ss:$5 sm:$0xff]
      %s1791 = scalar_lea.vmem [#allocation2], 249
      %v1792 = vld [vmem:[%s1791] ss:$5 sm:$0xff]
      %s1793 = scalar_lea.vmem [#allocation2], 289
      %v1794 = vld [vmem:[%s1793] ss:$5 sm:$0xff]
      %s1795 = scalar_lea.vmem [#allocation2], 329
      %v1796 = vld [vmem:[%s1795] ss:$5 sm:$0xff]
      %s1797 = scalar_lea.vmem [#allocation2], 369
      %v1798 = vld [vmem:[%s1797] ss:$5 sm:$0xff]
      %s1799 = scalar_lea.vmem [#allocation2], 409
      %v1800 = vld [vmem:[%s1799] ss:$5 sm:$0xff]
      %s1801 = scalar_lea.vmem [#allocation2], 449
      %v1802 = vld [vmem:[%s1801] ss:$5 sm:$0xff]
      %s1803 = scalar_lea.vmem [#allocation2], 489
      %v1804 = vld [vmem:[%s1803] ss:$5 sm:$0xff]
      %s1805 = scalar_lea.vmem [#allocation2], 529
      %v1806 = vld [vmem:[%s1805] ss:$5 sm:$0xff]
      %s1807 = scalar_lea.vmem [#allocation2], 569
      %v1808 = vld [vmem:[%s1807] ss:$5 sm:$0xff]
      %s1809 = scalar_lea.vmem [#allocation2], 609
      %v1810 = vld [vmem:[%s1809] ss:$5 sm:$0xff]
      %v1811 = vld [vmem:[%s2 + $0x9] sm:$0x1]
      %1813 = vset.pattern.permute.xlu0 0
      %1814 = vperm.xlu0 %1813, %v1780
      %v1815 = vpop.permute.xlu0 %1814
      %1818 = vset.pattern.permute.xlu0 0
      %1819 = vperm.xlu0 %1818, %v1782
      %v1820 = vpop.permute.xlu0 %1819
      %1823 = vset.pattern.permute.xlu0 0
      %1824 = vperm.xlu0 %1823, %v1784
      %v1825 = vpop.permute.xlu0 %1824
      %1828 = vset.pattern.permute.xlu0 0
      %1829 = vperm.xlu0 %1828, %v1786
      %v1830 = vpop.permute.xlu0 %1829
      %1833 = vset.pattern.permute.xlu0 0
      %1834 = vperm.xlu0 %1833, %v1788
      %v1835 = vpop.permute.xlu0 %1834
      %1838 = vset.pattern.permute.xlu0 0
      %1839 = vperm.xlu0 %1838, %v1790
      %v1840 = vpop.permute.xlu0 %1839
      %1843 = vset.pattern.permute.xlu0 0
      %1844 = vperm.xlu0 %1843, %v1792
      %v1845 = vpop.permute.xlu0 %1844
      %1848 = vset.pattern.permute.xlu0 0
      %1849 = vperm.xlu0 %1848, %v1794
      %v1850 = vpop.permute.xlu0 %1849
      %1853 = vset.pattern.permute.xlu0 0
      %1854 = vperm.xlu0 %1853, %v1796
      %v1855 = vpop.permute.xlu0 %1854
      %1858 = vset.pattern.permute.xlu0 0
      %1859 = vperm.xlu0 %1858, %v1798
      %v1860 = vpop.permute.xlu0 %1859
      %1863 = vset.pattern.permute.xlu0 0
      %1864 = vperm.xlu0 %1863, %v1800
      %v1865 = vpop.permute.xlu0 %1864
      %1868 = vset.pattern.permute.xlu0 0
      %1869 = vperm.xlu0 %1868, %v1802
      %v1870 = vpop.permute.xlu0 %1869
      %1873 = vset.pattern.permute.xlu0 0
      %1874 = vperm.xlu0 %1873, %v1804
      %v1875 = vpop.permute.xlu0 %1874
      %1878 = vset.pattern.permute.xlu0 0
      %1879 = vperm.xlu0 %1878, %v1806
      %v1880 = vpop.permute.xlu0 %1879
      %1883 = vset.pattern.permute.xlu0 0
      %1884 = vperm.xlu0 %1883, %v1808
      %v1885 = vpop.permute.xlu0 %1884
      %1888 = vset.pattern.permute.xlu0 0
      %1889 = vperm.xlu0 %1888, %v1810
      %v1890 = vpop.permute.xlu0 %1889
      %v1892 = vperm.slane %v1811, 0
      %v1893 = vmul.f32 %v1815, %v1892
      %v1894 = vmul.f32 %v1820, %v1892
      %v1895 = vmul.f32 %v1825, %v1892
      %v1896 = vmul.f32 %v1830, %v1892
      %v1897 = vmul.f32 %v1835, %v1892
      %v1898 = vmul.f32 %v1840, %v1892
      %v1899 = vmul.f32 %v1845, %v1892
      %v1900 = vmul.f32 %v1850, %v1892
      %v1901 = vmul.f32 %v1855, %v1892
      %v1902 = vmul.f32 %v1860, %v1892
      %v1903 = vmul.f32 %v1865, %v1892
      %v1904 = vmul.f32 %v1870, %v1892
      %v1905 = vmul.f32 %v1875, %v1892
      %v1906 = vmul.f32 %v1880, %v1892
      %v1907 = vmul.f32 %v1885, %v1892
      %v1908 = vmul.f32 %v1890, %v1892
      %v1909 = vadd.f32 %v1763, %v1893
      %v1910 = vadd.f32 %v1764, %v1894
      %v1911 = vadd.f32 %v1765, %v1895
      %v1912 = vadd.f32 %v1766, %v1896
      %v1913 = vadd.f32 %v1767, %v1897
      %v1914 = vadd.f32 %v1768, %v1898
      %v1915 = vadd.f32 %v1769, %v1899
      %v1916 = vadd.f32 %v1770, %v1900
      %v1917 = vadd.f32 %v1771, %v1901
      %v1918 = vadd.f32 %v1772, %v1902
      %v1919 = vadd.f32 %v1773, %v1903
      %v1920 = vadd.f32 %v1774, %v1904
      %v1921 = vadd.f32 %v1775, %v1905
      %v1922 = vadd.f32 %v1776, %v1906
      %v1923 = vadd.f32 %v1777, %v1907
      %v1924 = vadd.f32 %v1778, %v1908
      %s1925 = smul.u32 %s21, 128
      %v1926 = vlaneseq
      %v1927 = vshrl.u32 %v1926, 7
      %v1928 = vadd.s32 %v1927, 8
      %v1929 = vadd.s32 %v1927, 16
      %v1930 = vadd.s32 %v1927, 24
      %v1931 = vadd.s32 %v1927, 32
      %v1932 = vadd.s32 %v1927, 40
      %v1933 = vadd.s32 %v1927, 48
      %v1934 = vadd.s32 %v1927, 56
      %v1935 = vadd.s32 %v1927, 64
      %v1936 = vadd.s32 %v1927, 72
      %v1937 = vadd.s32 %v1927, 80
      %v1938 = vadd.s32 %v1927, 88
      %v1939 = vadd.s32 %v1927, 96
      %v1940 = vadd.s32 %v1927, 104
      %v1941 = vadd.s32 %v1927, 112
      %v1942 = vadd.s32 %v1927, 120
      %v1943 = vstv %s1925
      %v1944 = vadd.s32 %v1943, %v1927
      %v1945 = vadd.s32 %v1943, %v1928
      %v1946 = vadd.s32 %v1943, %v1929
      %v1947 = vadd.s32 %v1943, %v1930
      %v1948 = vadd.s32 %v1943, %v1931
      %v1949 = vadd.s32 %v1943, %v1932
      %v1950 = vadd.s32 %v1943, %v1933
      %v1951 = vadd.s32 %v1943, %v1934
      %v1952 = vadd.s32 %v1943, %v1935
      %v1953 = vadd.s32 %v1943, %v1936
      %v1954 = vadd.s32 %v1943, %v1937
      %v1955 = vadd.s32 %v1943, %v1938
      %v1956 = vadd.s32 %v1943, %v1939
      %v1957 = vadd.s32 %v1943, %v1940
      %v1958 = vadd.s32 %v1943, %v1941
      %v1959 = vadd.s32 %v1943, %v1942
      %vm1960 = vcmp.lt.s32.totalorder %v1944, 408
      %vm1961 = vcmp.lt.s32.totalorder %v1945, 408
      %vm1962 = vcmp.lt.s32.totalorder %v1946, 408
      %vm1963 = vcmp.lt.s32.totalorder %v1947, 408
      %vm1964 = vcmp.lt.s32.totalorder %v1948, 408
      %vm1965 = vcmp.lt.s32.totalorder %v1949, 408
      %vm1966 = vcmp.lt.s32.totalorder %v1950, 408
      %vm1967 = vcmp.lt.s32.totalorder %v1951, 408
      %vm1968 = vcmp.lt.s32.totalorder %v1952, 408
      %vm1969 = vcmp.lt.s32.totalorder %v1953, 408
      %vm1970 = vcmp.lt.s32.totalorder %v1954, 408
      %vm1971 = vcmp.lt.s32.totalorder %v1955, 408
      %vm1972 = vcmp.lt.s32.totalorder %v1956, 408
      %vm1973 = vcmp.lt.s32.totalorder %v1957, 408
      %vm1974 = vcmp.lt.s32.totalorder %v1958, 408
      %vm1975 = vcmp.lt.s32.totalorder %v1959, 408
      %v1976 = vsel %vm1960, 1, 0
      %v1977 = vsel %vm1961, 1, 0
      %v1978 = vsel %vm1962, 1, 0
      %v1979 = vsel %vm1963, 1, 0
      %v1980 = vsel %vm1964, 1, 0
      %v1981 = vsel %vm1965, 1, 0
      %v1982 = vsel %vm1966, 1, 0
      %v1983 = vsel %vm1967, 1, 0
      %v1984 = vsel %vm1968, 1, 0
      %v1985 = vsel %vm1969, 1, 0
      %v1986 = vsel %vm1970, 1, 0
      %v1987 = vsel %vm1971, 1, 0
      %v1988 = vsel %vm1972, 1, 0
      %v1989 = vsel %vm1973, 1, 0
      %v1990 = vsel %vm1974, 1, 0
      %v1991 = vsel %vm1975, 1, 0
      %vm1992 = vcmp.eq.s32.totalorder %v1976, 1
      %vm1993 = vcmp.eq.s32.totalorder %v1977, 1
      %vm1994 = vcmp.eq.s32.totalorder %v1978, 1
      %vm1995 = vcmp.eq.s32.totalorder %v1979, 1
      %vm1996 = vcmp.eq.s32.totalorder %v1980, 1
      %vm1997 = vcmp.eq.s32.totalorder %v1981, 1
      %vm1998 = vcmp.eq.s32.totalorder %v1982, 1
      %vm1999 = vcmp.eq.s32.totalorder %v1983, 1
      %vm2000 = vcmp.eq.s32.totalorder %v1984, 1
      %vm2001 = vcmp.eq.s32.totalorder %v1985, 1
      %vm2002 = vcmp.eq.s32.totalorder %v1986, 1
      %vm2003 = vcmp.eq.s32.totalorder %v1987, 1
      %vm2004 = vcmp.eq.s32.totalorder %v1988, 1
      %vm2005 = vcmp.eq.s32.totalorder %v1989, 1
      %vm2006 = vcmp.eq.s32.totalorder %v1990, 1
      %vm2007 = vcmp.eq.s32.totalorder %v1991, 1
      %v2008 = vsel %vm1992, %v1909, 0.0
      %v2009 = vsel %vm1993, %v1910, 0.0
      %v2010 = vsel %vm1994, %v1911, 0.0
      %v2011 = vsel %vm1995, %v1912, 0.0
      %v2012 = vsel %vm1996, %v1913, 0.0
      %v2013 = vsel %vm1997, %v1914, 0.0
      %v2014 = vsel %vm1998, %v1915, 0.0
      %v2015 = vsel %vm1999, %v1916, 0.0
      %v2016 = vsel %vm2000, %v1917, 0.0
      %v2017 = vsel %vm2001, %v1918, 0.0
      %v2018 = vsel %vm2002, %v1919, 0.0
      %v2019 = vsel %vm2003, %v1920, 0.0
      %v2020 = vsel %vm2004, %v1921, 0.0
      %v2021 = vsel %vm2005, %v1922, 0.0
      %v2022 = vsel %vm2006, %v1923, 0.0
      %v2023 = vsel %vm2007, %v1924, 0.0
      %v2024 = vld [vmem:[%s292] sm:$0x1]
      %vm2025 = vcmask 523264
      %v2026 = vsel %vm2025, %v2008, 0.0
      %v2027 = vsel %vm2025, %v2009, 0.0
      %v2028 = vadd.f32 %v2026, %v2027
      %v2029 = vsel %vm2025, %v2010, 0.0
      %v2030 = vadd.f32 %v2028, %v2029
      %v2031 = vsel %vm2025, %v2011, 0.0
      %v2032 = vadd.f32 %v2030, %v2031
      %v2033 = vsel %vm2025, %v2012, 0.0
      %v2034 = vadd.f32 %v2032, %v2033
      %v2035 = vsel %vm2025, %v2013, 0.0
      %v2036 = vadd.f32 %v2034, %v2035
      %v2037 = vsel %vm2025, %v2014, 0.0
      %v2038 = vadd.f32 %v2036, %v2037
      %v2039 = vsel %vm2025, %v2015, 0.0
      %v2040 = vadd.f32 %v2038, %v2039
      %v2041 = vsel %vm2025, %v2016, 0.0
      %v2042 = vadd.f32 %v2040, %v2041
      %v2043 = vsel %vm2025, %v2017, 0.0
      %v2044 = vadd.f32 %v2042, %v2043
      %v2045 = vsel %vm2025, %v2018, 0.0
      %v2046 = vadd.f32 %v2044, %v2045
      %v2047 = vsel %vm2025, %v2019, 0.0
      %v2048 = vadd.f32 %v2046, %v2047
      %v2049 = vsel %vm2025, %v2020, 0.0
      %v2050 = vadd.f32 %v2048, %v2049
      %v2051 = vsel %vm2025, %v2021, 0.0
      %v2052 = vadd.f32 %v2050, %v2051
      %v2053 = vsel %vm2025, %v2022, 0.0
      %v2054 = vadd.f32 %v2052, %v2053
      %v2055 = vsel %vm2025, %v2023, 0.0
      %v2056 = vadd.f32 %v2054, %v2055
      %v2057 = vrot.slane %v2056, 4
      %v2058 = vadd.f32 %v2056, %v2057
      %v2059 = vrot.slane %v2058, 2
      %v2060 = vadd.f32 %v2058, %v2059
      %v2061 = vrot.slane %v2060, 1
      %v2062 = vadd.f32 %v2060, %v2061
      %v2063 = vadd.f32 %v2024, %v2062
      %vm2064 = vcmask 516096
      %2065 = vst.msk [vmem:[%s292] sm:$0x1] %vm2064, %v2063
      %v2066 = vld [vmem:[%s295] sm:$0x1]
      %v2067 = vmul.f32 %v2008, %v2008
      %v2068 = vmul.f32 %v2009, %v2009
      %v2069 = vmul.f32 %v2010, %v2010
      %v2070 = vmul.f32 %v2011, %v2011
      %v2071 = vmul.f32 %v2012, %v2012
      %v2072 = vmul.f32 %v2013, %v2013
      %v2073 = vmul.f32 %v2014, %v2014
      %v2074 = vmul.f32 %v2015, %v2015
      %v2075 = vmul.f32 %v2016, %v2016
      %v2076 = vmul.f32 %v2017, %v2017
      %v2077 = vmul.f32 %v2018, %v2018
      %v2078 = vmul.f32 %v2019, %v2019
      %v2079 = vmul.f32 %v2020, %v2020
      %v2080 = vmul.f32 %v2021, %v2021
      %v2081 = vmul.f32 %v2022, %v2022
      %v2082 = vmul.f32 %v2023, %v2023
      %v2083 = vsel %vm2025, %v2067, 0.0
      %v2084 = vsel %vm2025, %v2068, 0.0
      %v2085 = vadd.f32 %v2083, %v2084
      %v2086 = vsel %vm2025, %v2069, 0.0
      %v2087 = vadd.f32 %v2085, %v2086
      %v2088 = vsel %vm2025, %v2070, 0.0
      %v2089 = vadd.f32 %v2087, %v2088
      %v2090 = vsel %vm2025, %v2071, 0.0
      %v2091 = vadd.f32 %v2089, %v2090
      %v2092 = vsel %vm2025, %v2072, 0.0
      %v2093 = vadd.f32 %v2091, %v2092
      %v2094 = vsel %vm2025, %v2073, 0.0
      %v2095 = vadd.f32 %v2093, %v2094
      %v2096 = vsel %vm2025, %v2074, 0.0
      %v2097 = vadd.f32 %v2095, %v2096
      %v2098 = vsel %vm2025, %v2075, 0.0
      %v2099 = vadd.f32 %v2097, %v2098
      %v2100 = vsel %vm2025, %v2076, 0.0
      %v2101 = vadd.f32 %v2099, %v2100
      %v2102 = vsel %vm2025, %v2077, 0.0
      %v2103 = vadd.f32 %v2101, %v2102
      %v2104 = vsel %vm2025, %v2078, 0.0
      %v2105 = vadd.f32 %v2103, %v2104
      %v2106 = vsel %vm2025, %v2079, 0.0
      %v2107 = vadd.f32 %v2105, %v2106
      %v2108 = vsel %vm2025, %v2080, 0.0
      %v2109 = vadd.f32 %v2107, %v2108
      %v2110 = vsel %vm2025, %v2081, 0.0
      %v2111 = vadd.f32 %v2109, %v2110
      %v2112 = vsel %vm2025, %v2082, 0.0
      %v2113 = vadd.f32 %v2111, %v2112
      %v2114 = vrot.slane %v2113, 4
      %v2115 = vadd.f32 %v2113, %v2114
      %v2116 = vrot.slane %v2115, 2
      %v2117 = vadd.f32 %v2115, %v2116
      %v2118 = vrot.slane %v2117, 1
      %v2119 = vadd.f32 %v2117, %v2118
      %v2120 = vadd.f32 %v2066, %v2119
      %2121 = vst.msk [vmem:[%s295] sm:$0x1] %vm2064, %v2120
      %p2122 = scmp.lt.s32.totalorder %s20, 1
      %s2123 = scalar_select %p2122, %s20, 1
      %s2124 = scalar_lea.vmem %s3, %s2123
      %p2125 = scmp.lt.s32.totalorder %s20, 1
      %s2126 = scalar_select %p2125, %s20, 1
      %s2127 = scalar_lea.vmem %s4, %s2126
      // Predicated region
      $region37: #{_lambda_.4} parent=31 // pred_check
        %p2128 = pneg %p127
      $region38: #{_lambda_.4} parent=31 // pred_check_branch
        %2130 = sbr.rel (%p2128) target = $region40
      $region39: #{_lambda_.4} parent=31 // pred_region
        _
      $region40: #{_lambda_.4} parent=31 // pred_fallthru
        _
      // Predicated region
      $region41: #{_lambda_.4} parent=31 // pred_check
        %p2131 = pneg %p153
      $region42: #{_lambda_.4} parent=31 // pred_check_branch
        %2133 = sbr.rel (%p2131) target = $region44
      $region43: #{_lambda_.4} parent=31 // pred_region
        _
      $region44: #{_lambda_.4} parent=31 // pred_fallthru
        _
    $region32: #{_lambda_.4} parent=5 // pred_fallthru
      _
    %p2134 = scmp.le.s32.totalorder 2, %s11
    // Predicated region
    $region45: #{_lambda_.4} parent=5 // pred_check
      %p2135 = pneg %p2134
    $region46: #{_lambda_.4} parent=5 // pred_check_branch
      %2137 = sbr.rel (%p2135) target = $region48
    $region47: #{_lambda_.4} parent=5 // pred_region
      %s2138 = ssub.s32 %s11, 2
      // Predicated region
      $region49: #{_lambda_.4} parent=47 // pred_check
        %p2139 = pneg %p133
      $region50: #{_lambda_.4} parent=47 // pred_check_branch
        %2141 = sbr.rel (%p2139) target = $region52
      $region51: #{_lambda_.4} parent=47 // pred_region
        %p2142 = scmp.lt.s32.totalorder %s22, 1
        %s2143 = scalar_select %p2142, %s22, 1
        %s2144 = scalar_lea.vmem %s3, %s2143
      $region52: #{_lambda_.4} parent=47 // pred_fallthru
        _
      // Predicated region
      $region53: #{_lambda_.4} parent=47 // pred_check
        %p2145 = pneg %p159
      $region54: #{_lambda_.4} parent=47 // pred_check_branch
        %2147 = sbr.rel (%p2145) target = $region56
      $region55: #{_lambda_.4} parent=47 // pred_region
        %p2148 = scmp.lt.s32.totalorder %s22, 1
        %s2149 = scalar_select %p2148, %s22, 1
        %s2150 = scalar_lea.vmem %s4, %s2149
      $region56: #{_lambda_.4} parent=47 // pred_fallthru
        _
    $region48: #{_lambda_.4} parent=5 // pred_fallthru
      _
  $region6: #{_lambda_.4} parent=0 // loop_footer
    %s15 = sadd.s32 1, %s11
  $region7: #{_lambda_.4} parent=0 // loop_footer_branch
    %10 = sbr.rel target = $region3
  $region8: #{_lambda_.4} parent=0 // loop_exit
    _

// kernel: _lambda_.5
$region0: #{_lambda_.5}
  #allocation0 [shape = 'u32[]', space=smem, size = 0x4, offset = 0x4, fixed_abs, tag = 'smem constant byte address 0x4 - core index']
  #allocation1 [shape = 'u32[72,128]{1,0:T(1,128)}', space=vmem, size = 0x9000, scoped, tag = 'internal scratch']
  #allocation2 [shape = 'f32[648,1]{1,0:T(8,128)}', space=vmem, size = 0x51000, scoped, tag = 'scratch operand']
  %s0 = inlined_call_operand.vmem [shape: f32[2,2568,1], index: 0, kind: input, shape index: {}, may-alias: {0,1}]
  %s1 = inlined_call_operand.vmem [shape: f32[2,2568,1], index: 1, kind: input, shape index: {}, may-alias: {0,1}]
  %s2 = inlined_call_operand.vmem [shape: f32[10,64], index: 2, kind: input, shape index: {}]
  %s3 = inlined_call_operand.vmem [shape: f32[2,1,64], index: 3, kind: input, shape index: {}]
  %s4 = inlined_call_operand.vmem [shape: f32[2,1,64], index: 4, kind: input, shape index: {}]
  %s5 = inlined_call_operand.vmem [shape: bf16[2,512,64], index: 5, kind: output, shape index: {}]
  %s6 = sld [smem:[#allocation0]]
  $region53: #{_lambda_.5} parent=0
    _
  %s8 = ssub.s32 1, %s6
  %s9 = scalar_select 0, %s8, %s6
  loop: start=0, step=1, limit=10
  $region2: #{_lambda_.5} parent=0 // loop_pre_header
    _
  $region3: #{_lambda_.5} parent=0 // loop_header
    %s11 = sphi 0, %s15
    %p12 = scmp.ge.s32.totalorder %s11, 10
    %s18 = sphi 0, %s30
    %s19 = sphi 0, %s26
    %s20 = sphi 0, %s18
    %s21 = sphi 0, %s19
    %s22 = sphi 0, %s20
    %s23 = sphi 0, %s21
    %s35 = sphi 0, %s37
    %s38 = sphi 0, %s35
    %s39 = sphi 0, %s38
    %s55 = sphi 0, %s39
    %s67 = sphi 0, %s69
    %s70 = sphi 0, %s67
    %s71 = sphi 0, %s70
    %s87 = sphi 0, %s71
    %s91 = sphi 0, %s91
    %s93 = sphi 0, %s91
    %s94 = sphi 0, %s93
    %s108 = sphi 0, %s94
    %s114 = sphi 0, %s116
    %s117 = sphi 0, %s114
    %s118 = sphi 0, %s117
    %s134 = sphi 0, %s118
    %s140 = sphi 0, %s142
    %s143 = sphi 0, %s140
    %s144 = sphi 0, %s143
    %s160 = sphi 0, %s144
    %s168 = sphi 0, %s170
    %s171 = sphi 0, %s168
    %s172 = sphi 0, %s171
    %s188 = sphi 0, %s172
  $region4: #{_lambda_.5} parent=0 // loop_header_branch
    %14 = sbr.rel (%p12) target = $region8
  $region5: #{_lambda_.5} parent=0 // loop_body
    %s16 = ssub.s32 %s11, 1
    %s17 = ssub.s32 %s11, 2
    %s24 = sadd.s32 1, %s19
    %p25 = scmp.ge.s32.totalorder %s24, 4
    %s26 = scalar_select %p25, 0, %s24
    %s27 = sadd.s32 1, %s18
    %s28 = scalar_select %p25, %s27, %s18
    %p29 = scmp.ge.s32.totalorder %s28, 2
    %s30 = scalar_select %p29, 0, %s28
    %s31 = ssub.s32 %s18, %s30
    %s32 = ssub.s32 %s19, %s26
    %s33 = sor.u32 %s31, %s32
    %p34 = scmp.eq.s32.totalorder %s33, 0
    %s36 = sadd.s32 %s35, 1
    %s37 = scalar_select %p34, %s35, %s36
    %p40 = pneg %p34
    %p41 = scmp.eq.s32.totalorder %s11, 7
    %p42 = por %p40, %p41
    %p43 = scmp.ne.s32.totalorder %s35, %s38
    %p44 = scmp.eq.s32.totalorder %s11, 0
    %p45 = por %p43, %p44
    %p46 = scmp.ne.s32.totalorder %s35, %s38
    %p47 = scmp.eq.s32.totalorder %s16, 7
    %p48 = por %p46, %p47
    %p49 = scmp.ne.s32.totalorder %s38, %s39
    %p50 = scmp.eq.s32.totalorder %s16, 0
    %p51 = por %p49, %p50
    %p52 = scmp.ne.s32.totalorder %s38, %s39
    %p53 = scmp.eq.s32.totalorder %s17, 7
    %p54 = por %p52, %p53
    %p56 = scmp.ne.s32.totalorder %s39, %s55
    %p57 = scmp.eq.s32.totalorder %s17, 0
    %p58 = por %p56, %p57
    %s59 = sadd.s32 %s19, 1
    %s60 = smul.u32 %s59, 80
    %s61 = sadd.s32 %s26, 1
    %s62 = smul.u32 %s61, 80
    %s63 = ssub.s32 %s18, %s30
    %s64 = ssub.s32 %s60, %s62
    %s65 = sor.u32 %s63, %s64
    %p66 = scmp.eq.s32.totalorder %s65, 0
    %s68 = sadd.s32 %s67, 1
    %s69 = scalar_select %p66, %s67, %s68
    %p72 = pneg %p66
    %p73 = scmp.eq.s32.totalorder %s11, 7
    %p74 = por %p72, %p73
    %p75 = scmp.ne.s32.totalorder %s67, %s70
    %p76 = scmp.eq.s32.totalorder %s11, 0
    %p77 = por %p75, %p76
    %p78 = scmp.ne.s32.totalorder %s67, %s70
    %p79 = scmp.eq.s32.totalorder %s16, 7
    %p80 = por %p78, %p79
    %p81 = scmp.ne.s32.totalorder %s70, %s71
    %p82 = scmp.eq.s32.totalorder %s16, 0
    %p83 = por %p81, %p82
    %p84 = scmp.ne.s32.totalorder %s70, %s71
    %p85 = scmp.eq.s32.totalorder %s17, 7
    %p86 = por %p84, %p85
    %p88 = scmp.ne.s32.totalorder %s71, %s87
    %p89 = scmp.eq.s32.totalorder %s17, 0
    %p90 = por %p88, %p89
    %s92 = sadd.s32 %s91, 1
    %p95 = scmp.eq.s32.totalorder %s11, 7
    %p96 = scmp.ne.s32.totalorder %s91, %s93
    %p97 = scmp.eq.s32.totalorder %s11, 0
    %p98 = por %p96, %p97
    %p99 = scmp.ne.s32.totalorder %s91, %s93
    %p100 = scmp.eq.s32.totalorder %s16, 7
    %p101 = por %p99, %p100
    %p102 = scmp.ne.s32.totalorder %s93, %s94
    %p103 = scmp.eq.s32.totalorder %s16, 0
    %p104 = por %p102, %p103
    %p105 = scmp.ne.s32.totalorder %s93, %s94
    %p106 = scmp.eq.s32.totalorder %s17, 7
    %p107 = por %p105, %p106
    %p109 = scmp.ne.s32.totalorder %s94, %s108
    %p110 = scmp.eq.s32.totalorder %s17, 0
    %p111 = por %p109, %p110
    %s112 = ssub.s32 %s18, %s30
    %p113 = scmp.eq.s32.totalorder %s112, 0
    %s115 = sadd.s32 %s114, 1
    %s116 = scalar_select %p113, %s114, %s115
    %p119 = pneg %p113
    %p120 = scmp.eq.s32.totalorder %s11, 7
    %p121 = por %p119, %p120
    %p122 = scmp.ne.s32.totalorder %s114, %s117
    %p123 = scmp.eq.s32.totalorder %s11, 0
    %p124 = por %p122, %p123
    %p125 = scmp.ne.s32.totalorder %s114, %s117
    %p126 = scmp.eq.s32.totalorder %s16, 7
    %p127 = por %p125, %p126
    %p128 = scmp.ne.s32.totalorder %s117, %s118
    %p129 = scmp.eq.s32.totalorder %s16, 0
    %p130 = por %p128, %p129
    %p131 = scmp.ne.s32.totalorder %s117, %s118
    %p132 = scmp.eq.s32.totalorder %s17, 7
    %p133 = por %p131, %p132
    %p135 = scmp.ne.s32.totalorder %s118, %s134
    %p136 = scmp.eq.s32.totalorder %s17, 0
    %p137 = por %p135, %p136
    %s138 = ssub.s32 %s18, %s30
    %p139 = scmp.eq.s32.totalorder %s138, 0
    %s141 = sadd.s32 %s140, 1
    %s142 = scalar_select %p139, %s140, %s141
    %p145 = pneg %p139
    %p146 = scmp.eq.s32.totalorder %s11, 7
    %p147 = por %p145, %p146
    %p148 = scmp.ne.s32.totalorder %s140, %s143
    %p149 = scmp.eq.s32.totalorder %s11, 0
    %p150 = por %p148, %p149
    %p151 = scmp.ne.s32.totalorder %s140, %s143
    %p152 = scmp.eq.s32.totalorder %s16, 7
    %p153 = por %p151, %p152
    %p154 = scmp.ne.s32.totalorder %s143, %s144
    %p155 = scmp.eq.s32.totalorder %s16, 0
    %p156 = por %p154, %p155
    %p157 = scmp.ne.s32.totalorder %s143, %s144
    %p158 = scmp.eq.s32.totalorder %s17, 7
    %p159 = por %p157, %p158
    %p161 = scmp.ne.s32.totalorder %s144, %s160
    %p162 = scmp.eq.s32.totalorder %s17, 0
    %p163 = por %p161, %p162
    %s164 = ssub.s32 %s18, %s30
    %s165 = ssub.s32 %s19, %s26
    %s166 = sor.u32 %s164, %s165
    %p167 = scmp.eq.s32.totalorder %s166, 0
    %s169 = sadd.s32 %s168, 1
    %s170 = scalar_select %p167, %s168, %s169
    %p173 = pneg %p167
    %p174 = scmp.eq.s32.totalorder %s11, 7
    %p175 = por %p173, %p174
    %p176 = scmp.ne.s32.totalorder %s168, %s171
    %p177 = scmp.eq.s32.totalorder %s11, 0
    %p178 = por %p176, %p177
    %p179 = scmp.ne.s32.totalorder %s168, %s171
    %p180 = scmp.eq.s32.totalorder %s16, 7
    %p181 = por %p179, %p180
    %p182 = scmp.ne.s32.totalorder %s171, %s172
    %p183 = scmp.eq.s32.totalorder %s16, 0
    %p184 = por %p182, %p183
    %p185 = scmp.ne.s32.totalorder %s171, %s172
    %p186 = scmp.eq.s32.totalorder %s17, 7
    %p187 = por %p185, %p186
    %p189 = scmp.ne.s32.totalorder %s172, %s188
    %p190 = scmp.eq.s32.totalorder %s17, 0
    %p191 = por %p189, %p190
    %p192 = scmp.le.s32.totalorder 1, %s11
    %p193 = scmp.lt.s32.totalorder %s11, 9
    %p194 = pnand %p192, %p193
    %p195 = pneg %p194
    // Predicated region
    $region9: #{_lambda_.5} parent=5 // pred_check
      _
    $region10: #{_lambda_.5} parent=5 // pred_check_branch
      %197 = sbr.rel (%p194) target = $region12
    $region11: #{_lambda_.5} parent=5 // pred_region
      %s198 = ssub.s32 %s11, 1
      // Predicated region
      $region13: #{_lambda_.5} parent=11 // pred_check
        %p199 = pneg %p104
      $region14: #{_lambda_.5} parent=11 // pred_check_branch
        %201 = sbr.rel (%p199) target = $region16
      $region15: #{_lambda_.5} parent=11 // pred_region
        _
      $region16: #{_lambda_.5} parent=11 // pred_fallthru
        _
    $region12: #{_lambda_.5} parent=5 // pred_fallthru
      _
    %p202 = scmp.lt.s32.totalorder %s11, 8
    // Predicated region
    $region17: #{_lambda_.5} parent=5 // pred_check
      %p203 = pneg %p202
    $region18: #{_lambda_.5} parent=5 // pred_check_branch
      %205 = sbr.rel (%p203) target = $region20
    $region19: #{_lambda_.5} parent=5 // pred_region
      // Predicated region
      $region21: #{_lambda_.5} parent=19 // pred_check
        %p206 = pneg %p45
      $region22: #{_lambda_.5} parent=19 // pred_check_branch
        %208 = sbr.rel (%p206) target = $region24
      $region23: #{_lambda_.5} parent=19 // pred_region
        %s209 = smul.u32 80, %s19
        %s210 = ssub.s32 321, %s209
        %p211 = scmp.lt.s32.totalorder %s210, 80
        %s212 = scalar_select %p211, %s210, 80
        %s213 = smul.u32 8, %s212
        %p214 = scmp.lt.s32.totalorder %s18, 1
        %s215 = scalar_select %p214, %s18, 1
        %p216 = scmp.lt.s32.totalorder %s209, 320
        %s217 = scalar_select %p216, %s209, 320
        %s218 = smul.addr %s215, 321
        %s219 = sadd.s32 %s217, %s218
        %s220 = smul.addr %s219, 8
        %s221 = scalar_lea.vmem %s0, %s220
        %s222 = smul.u32 80, %s19
        %s223 = ssub.s32 321, %s222
        %p224 = scmp.lt.s32.totalorder %s223, 80
        %s225 = scalar_select %p224, %s223, 80
        %s226 = smul.u32 8, %s225
      $region24: #{_lambda_.5} parent=19 // pred_fallthru
        _
      // Predicated region
      $region25: #{_lambda_.5} parent=19 // pred_check
        %p227 = pneg %p77
      $region26: #{_lambda_.5} parent=19 // pred_check_branch
        %229 = sbr.rel (%p227) target = $region28
      $region27: #{_lambda_.5} parent=19 // pred_region
        %s230 = sadd.s32 %s19, 1
        %s231 = smul.u32 %s230, 80
        %p232 = scmp.lt.s32.totalorder %s18, 1
        %s233 = scalar_select %p232, %s18, 1
        %p234 = scmp.lt.s32.totalorder %s231, 320
        %s235 = scalar_select %p234, %s231, 320
        %s236 = smul.addr %s233, 321
        %s237 = sadd.s32 %s235, %s236
        %s238 = smul.addr %s237, 8
        %s239 = scalar_lea.vmem %s1, %s238
        %s240 = sadd.s32 %s19, 1
        %s241 = smul.u32 %s240, 80
      $region28: #{_lambda_.5} parent=19 // pred_fallthru
        _
      // Predicated region
      $region29: #{_lambda_.5} parent=19 // pred_check
        %p242 = pneg %p124
      $region30: #{_lambda_.5} parent=19 // pred_check_branch
        %244 = sbr.rel (%p242) target = $region32
      $region31: #{_lambda_.5} parent=19 // pred_region
        %p245 = scmp.lt.s32.totalorder %s18, 1
        %s246 = scalar_select %p245, %s18, 1
        %s247 = scalar_lea.vmem %s3, %s246
      $region32: #{_lambda_.5} parent=19 // pred_fallthru
        _
      // Predicated region
      $region33: #{_lambda_.5} parent=19 // pred_check
        %p248 = pneg %p150
      $region34: #{_lambda_.5} parent=19 // pred_check_branch
        %250 = sbr.rel (%p248) target = $region36
      $region35: #{_lambda_.5} parent=19 // pred_region
        %p251 = scmp.lt.s32.totalorder %s18, 1
        %s252 = scalar_select %p251, %s18, 1
        %s253 = scalar_lea.vmem %s4, %s252
      $region36: #{_lambda_.5} parent=19 // pred_fallthru
        _
    $region20: #{_lambda_.5} parent=5 // pred_fallthru
      _
    %p254 = scmp.le.s32.totalorder 1, %s11
    %p255 = scmp.lt.s32.totalorder %s11, 9
    %p256 = pnand %p254, %p255
    %p257 = pneg %p256
    // Predicated region
    $region37: #{_lambda_.5} parent=5 // pred_check
      _
    $region38: #{_lambda_.5} parent=5 // pred_check_branch
      %259 = sbr.rel (%p256) target = $region40
    $region39: #{_lambda_.5} parent=5 // pred_region
      %s260 = ssub.s32 %s11, 1
      %s261 = smul.u32 80, %s21
      %s262 = ssub.s32 321, %s261
      %p263 = scmp.lt.s32.totalorder %s262, 80
      %s264 = scalar_select %p263, %s262, 80
      %s265 = smul.u32 8, %s264
      %p266 = scmp.lt.s32.totalorder %s20, 1
      %s267 = scalar_select %p266, %s20, 1
      %p268 = scmp.lt.s32.totalorder %s261, 320
      %s269 = scalar_select %p268, %s261, 320
      %s270 = smul.addr %s267, 321
      %s271 = sadd.s32 %s269, %s270
      %s272 = smul.addr %s271, 8
      %s273 = scalar_lea.vmem %s0, %s272
      %p274 = pneg %p51
      %p275 = pneg %p48
      %s276 = sadd.s32 %s21, 1
      %s277 = smul.u32 %s276, 80
      %p278 = scmp.lt.s32.totalorder %s20, 1
      %s279 = scalar_select %p278, %s20, 1
      %p280 = scmp.lt.s32.totalorder %s277, 320
      %s281 = scalar_select %p280, %s277, 320
      %s282 = smul.addr %s279, 321
      %s283 = sadd.s32 %s281, %s282
      %s284 = smul.addr %s283, 8
      %s285 = scalar_lea.vmem %s1, %s284
      %p286 = pneg %p83
      %p287 = pneg %p80
      %p288 = pneg %p104
      %p289 = pneg %p101
      %p290 = scmp.lt.s32.totalorder %s20, 1
      %s291 = scalar_select %p290, %s20, 1
      %s292 = scalar_lea.vmem %s3, %s291
      %p293 = pneg %p130
      %p294 = pneg %p127
      %p295 = scmp.lt.s32.totalorder %s20, 1
      %s296 = scalar_select %p295, %s20, 1
      %s297 = scalar_lea.vmem %s4, %s296
      %p298 = pneg %p156
      %p299 = pneg %p153
      %p300 = pneg %p184
      %p301 = pneg %p181
      %s302 = smul.u32 16, %s21
      %p303 = scmp.lt.s32.totalorder %s20, 1
      %s304 = scalar_select %p303, %s20, 1
      %p305 = scmp.lt.s32.totalorder %s302, 63
      %s306 = scalar_select %p305, %s302, 63
      %s307 = smul.addr %s304, 64
      %s308 = sadd.s32 %s306, %s307
      %s309 = smul.addr %s308, 4
      %s310 = scalar_lea.vmem %s5, %s309
      %s311 = smul.u32 80, %s21
      %s312 = ssub.s32 321, %s311
      %p313 = scmp.lt.s32.totalorder %s312, 80
      %s314 = scalar_select %p313, %s312, 80
      %s315 = smul.u32 8, %s314
      %p316 = scmp.lt.s32.totalorder %s20, 1
      %s317 = scalar_select %p316, %s20, 1
      %p318 = scmp.lt.s32.totalorder %s311, 320
      %s319 = scalar_select %p318, %s311, 320
      %s320 = smul.addr %s317, 321
      %s321 = sadd.s32 %s319, %s320
      %s322 = smul.addr %s321, 8
      %s323 = scalar_lea.vmem %s0, %s322
      %s324 = smul.u32 80, %s21
      %s325 = ssub.s32 321, %s324
      %p326 = scmp.lt.s32.totalorder %s325, 80
      %s327 = scalar_select %p326, %s325, 80
      %s328 = smul.u32 8, %s327
      %s329 = sadd.s32 %s21, 1
      %s330 = smul.u32 %s329, 80
      %p331 = scmp.lt.s32.totalorder %s20, 1
      %s332 = scalar_select %p331, %s20, 1
      %p333 = scmp.lt.s32.totalorder %s330, 320
      %s334 = scalar_select %p333, %s330, 320
      %s335 = smul.addr %s332, 321
      %s336 = sadd.s32 %s334, %s335
      %s337 = smul.addr %s336, 8
      %s338 = scalar_lea.vmem %s1, %s337
      %s339 = sadd.s32 %s21, 1
      %s340 = smul.u32 %s339, 80
      %p341 = scmp.lt.s32.totalorder %s20, 1
      %s342 = scalar_select %p341, %s20, 1
      %s343 = scalar_lea.vmem %s3, %s342
      %p344 = scmp.lt.s32.totalorder %s20, 1
      %s345 = scalar_select %p344, %s20, 1
      %s346 = scalar_lea.vmem %s4, %s345
      %s347 = smul.u32 16, %s21
      %p348 = scmp.lt.s32.totalorder %s20, 1
      %s349 = scalar_select %p348, %s20, 1
      %p350 = scmp.lt.s32.totalorder %s347, 63
      %s351 = scalar_select %p350, %s347, 63
      %s352 = smul.addr %s349, 64
      %s353 = sadd.s32 %s351, %s352
      %s354 = smul.addr %s353, 4
      %s355 = scalar_lea.vmem %s5, %s354
      %s356 = smul.u32 16, %s21
      %v357 = vld [vmem:[%s323] sm:$0xff]
      %v358 = vld [vmem:[%s323 + $0x8] sm:$0xff]
      %v359 = vld [vmem:[%s323 + $0x10] sm:$0xff]
      %v360 = vld [vmem:[%s323 + $0x18] sm:$0xff]
      %v361 = vld [vmem:[%s323 + $0x20] sm:$0xff]
      %v362 = vld [vmem:[%s323 + $0x28] sm:$0xff]
      %v363 = vld [vmem:[%s323 + $0x30] sm:$0xff]
      %v364 = vld [vmem:[%s323 + $0x38] sm:$0xff]
      %v365 = vld [vmem:[%s323 + $0x40] sm:$0xff]
      %v366 = vld [vmem:[%s323 + $0x48] sm:$0xff]
      %v367 = vld [vmem:[%s323 + $0x50] sm:$0xff]
      %v368 = vld [vmem:[%s323 + $0x58] sm:$0xff]
      %v369 = vld [vmem:[%s323 + $0x60] sm:$0xff]
      %v370 = vld [vmem:[%s323 + $0x68] sm:$0xff]
      %v371 = vld [vmem:[%s323 + $0x70] sm:$0xff]
      %v372 = vld [vmem:[%s323 + $0x78] sm:$0xff]
      %v373 = vld [vmem:[%s323 + $0x80] sm:$0xff]
      %v374 = vld [vmem:[%s323 + $0x88] sm:$0xff]
      %v375 = vld [vmem:[%s323 + $0x90] sm:$0xff]
      %v376 = vld [vmem:[%s323 + $0x98] sm:$0xff]
      %v377 = vld [vmem:[%s323 + $0xa0] sm:$0xff]
      %v378 = vld [vmem:[%s323 + $0xa8] sm:$0xff]
      %v379 = vld [vmem:[%s323 + $0xb0] sm:$0xff]
      %v380 = vld [vmem:[%s323 + $0xb8] sm:$0xff]
      %v381 = vld [vmem:[%s323 + $0xc0] sm:$0xff]
      %v382 = vld [vmem:[%s323 + $0xc8] sm:$0xff]
      %v383 = vld [vmem:[%s323 + $0xd0] sm:$0xff]
      %v384 = vld [vmem:[%s323 + $0xd8] sm:$0xff]
      %v385 = vld [vmem:[%s323 + $0xe0] sm:$0xff]
      %v386 = vld [vmem:[%s323 + $0xe8] sm:$0xff]
      %v387 = vld [vmem:[%s323 + $0xf0] sm:$0xff]
      %v388 = vld [vmem:[%s323 + $0xf8] sm:$0xff]
      %v389 = vld [vmem:[%s323 + $0x100] sm:$0xff]
      %v390 = vld [vmem:[%s323 + $0x108] sm:$0xff]
      %v391 = vld [vmem:[%s323 + $0x110] sm:$0xff]
      %v392 = vld [vmem:[%s323 + $0x118] sm:$0xff]
      %v393 = vld [vmem:[%s323 + $0x120] sm:$0xff]
      %v394 = vld [vmem:[%s323 + $0x128] sm:$0xff]
      %v395 = vld [vmem:[%s323 + $0x130] sm:$0xff]
      %v396 = vld [vmem:[%s323 + $0x138] sm:$0xff]
      %v397 = vld [vmem:[%s323 + $0x140] sm:$0xff]
      %v398 = vld [vmem:[%s323 + $0x148] sm:$0xff]
      %v399 = vld [vmem:[%s323 + $0x150] sm:$0xff]
      %v400 = vld [vmem:[%s323 + $0x158] sm:$0xff]
      %v401 = vld [vmem:[%s323 + $0x160] sm:$0xff]
      %v402 = vld [vmem:[%s323 + $0x168] sm:$0xff]
      %v403 = vld [vmem:[%s323 + $0x170] sm:$0xff]
      %v404 = vld [vmem:[%s323 + $0x178] sm:$0xff]
      %v405 = vld [vmem:[%s323 + $0x180] sm:$0xff]
      %v406 = vld [vmem:[%s323 + $0x188] sm:$0xff]
      %v407 = vld [vmem:[%s323 + $0x190] sm:$0xff]
      %v408 = vld [vmem:[%s323 + $0x198] sm:$0xff]
      %v409 = vld [vmem:[%s323 + $0x1a0] sm:$0xff]
      %v410 = vld [vmem:[%s323 + $0x1a8] sm:$0xff]
      %v411 = vld [vmem:[%s323 + $0x1b0] sm:$0xff]
      %v412 = vld [vmem:[%s323 + $0x1b8] sm:$0xff]
      %v413 = vld [vmem:[%s323 + $0x1c0] sm:$0xff]
      %v414 = vld [vmem:[%s323 + $0x1c8] sm:$0xff]
      %v415 = vld [vmem:[%s323 + $0x1d0] sm:$0xff]
      %v416 = vld [vmem:[%s323 + $0x1d8] sm:$0xff]
      %v417 = vld [vmem:[%s323 + $0x1e0] sm:$0xff]
      %v418 = vld [vmem:[%s323 + $0x1e8] sm:$0xff]
      %v419 = vld [vmem:[%s323 + $0x1f0] sm:$0xff]
      %v420 = vld [vmem:[%s323 + $0x1f8] sm:$0xff]
      %v421 = vld [vmem:[%s323 + $0x200] sm:$0xff]
      %v422 = vld [vmem:[%s323 + $0x208] sm:$0xff]
      %v423 = vld [vmem:[%s323 + $0x210] sm:$0xff]
      %v424 = vld [vmem:[%s323 + $0x218] sm:$0xff]
      %v425 = vld [vmem:[%s323 + $0x220] sm:$0xff]
      %v426 = vld [vmem:[%s323 + $0x228] sm:$0xff]
      %v427 = vld [vmem:[%s323 + $0x230] sm:$0xff]
      %v428 = vld [vmem:[%s323 + $0x238] sm:$0xff]
      %v429 = vld [vmem:[%s323 + $0x240] sm:$0xff]
      %v430 = vld [vmem:[%s323 + $0x248] sm:$0xff]
      %v431 = vld [vmem:[%s323 + $0x250] sm:$0xff]
      %v432 = vld [vmem:[%s323 + $0x258] sm:$0xff]
      %v433 = vld [vmem:[%s323 + $0x260] sm:$0xff]
      %v434 = vld [vmem:[%s323 + $0x268] sm:$0xff]
      %v435 = vld [vmem:[%s323 + $0x270] sm:$0xff]
      %v436 = vld [vmem:[%s323 + $0x278] sm:$0xff]
      %vm437 = vcmask 7168
      %438 = vst.msk [vmem:[#allocation2] sm:$0xff] %vm437, %v357
      %439 = vst.msk [vmem:[#allocation2 + $0x8] sm:$0xff] %vm437, %v358
      %440 = vst.msk [vmem:[#allocation2 + $0x10] sm:$0xff] %vm437, %v359
      %441 = vst.msk [vmem:[#allocation2 + $0x18] sm:$0xff] %vm437, %v360
      %442 = vst.msk [vmem:[#allocation2 + $0x20] sm:$0xff] %vm437, %v361
      %443 = vst.msk [vmem:[#allocation2 + $0x28] sm:$0xff] %vm437, %v362
      %444 = vst.msk [vmem:[#allocation2 + $0x30] sm:$0xff] %vm437, %v363
      %445 = vst.msk [vmem:[#allocation2 + $0x38] sm:$0xff] %vm437, %v364
      %446 = vst.msk [vmem:[#allocation2 + $0x40] sm:$0xff] %vm437, %v365
      %447 = vst.msk [vmem:[#allocation2 + $0x48] sm:$0xff] %vm437, %v366
      %448 = vst.msk [vmem:[#allocation2 + $0x50] sm:$0xff] %vm437, %v367
      %449 = vst.msk [vmem:[#allocation2 + $0x58] sm:$0xff] %vm437, %v368
      %450 = vst.msk [vmem:[#allocation2 + $0x60] sm:$0xff] %vm437, %v369
      %451 = vst.msk [vmem:[#allocation2 + $0x68] sm:$0xff] %vm437, %v370
      %452 = vst.msk [vmem:[#allocation2 + $0x70] sm:$0xff] %vm437, %v371
      %453 = vst.msk [vmem:[#allocation2 + $0x78] sm:$0xff] %vm437, %v372
      %454 = vst.msk [vmem:[#allocation2 + $0x80] sm:$0xff] %vm437, %v373
      %455 = vst.msk [vmem:[#allocation2 + $0x88] sm:$0xff] %vm437, %v374
      %456 = vst.msk [vmem:[#allocation2 + $0x90] sm:$0xff] %vm437, %v375
      %457 = vst.msk [vmem:[#allocation2 + $0x98] sm:$0xff] %vm437, %v376
      %458 = vst.msk [vmem:[#allocation2 + $0xa0] sm:$0xff] %vm437, %v377
      %459 = vst.msk [vmem:[#allocation2 + $0xa8] sm:$0xff] %vm437, %v378
      %460 = vst.msk [vmem:[#allocation2 + $0xb0] sm:$0xff] %vm437, %v379
      %461 = vst.msk [vmem:[#allocation2 + $0xb8] sm:$0xff] %vm437, %v380
      %462 = vst.msk [vmem:[#allocation2 + $0xc0] sm:$0xff] %vm437, %v381
      %463 = vst.msk [vmem:[#allocation2 + $0xc8] sm:$0xff] %vm437, %v382
      %464 = vst.msk [vmem:[#allocation2 + $0xd0] sm:$0xff] %vm437, %v383
      %465 = vst.msk [vmem:[#allocation2 + $0xd8] sm:$0xff] %vm437, %v384
      %466 = vst.msk [vmem:[#allocation2 + $0xe0] sm:$0xff] %vm437, %v385
      %467 = vst.msk [vmem:[#allocation2 + $0xe8] sm:$0xff] %vm437, %v386
      %468 = vst.msk [vmem:[#allocation2 + $0xf0] sm:$0xff] %vm437, %v387
      %469 = vst.msk [vmem:[#allocation2 + $0xf8] sm:$0xff] %vm437, %v388
      %470 = vst.msk [vmem:[#allocation2 + $0x100] sm:$0xff] %vm437, %v389
      %471 = vst.msk [vmem:[#allocation2 + $0x108] sm:$0xff] %vm437, %v390
      %472 = vst.msk [vmem:[#allocation2 + $0x110] sm:$0xff] %vm437, %v391
      %473 = vst.msk [vmem:[#allocation2 + $0x118] sm:$0xff] %vm437, %v392
      %474 = vst.msk [vmem:[#allocation2 + $0x120] sm:$0xff] %vm437, %v393
      %475 = vst.msk [vmem:[#allocation2 + $0x128] sm:$0xff] %vm437, %v394
      %476 = vst.msk [vmem:[#allocation2 + $0x130] sm:$0xff] %vm437, %v395
      %477 = vst.msk [vmem:[#allocation2 + $0x138] sm:$0xff] %vm437, %v396
      %478 = vst.msk [vmem:[#allocation2 + $0x140] sm:$0xff] %vm437, %v397
      %479 = vst.msk [vmem:[#allocation2 + $0x148] sm:$0xff] %vm437, %v398
      %480 = vst.msk [vmem:[#allocation2 + $0x150] sm:$0xff] %vm437, %v399
      %481 = vst.msk [vmem:[#allocation2 + $0x158] sm:$0xff] %vm437, %v400
      %482 = vst.msk [vmem:[#allocation2 + $0x160] sm:$0xff] %vm437, %v401
      %483 = vst.msk [vmem:[#allocation2 + $0x168] sm:$0xff] %vm437, %v402
      %484 = vst.msk [vmem:[#allocation2 + $0x170] sm:$0xff] %vm437, %v403
      %485 = vst.msk [vmem:[#allocation2 + $0x178] sm:$0xff] %vm437, %v404
      %486 = vst.msk [vmem:[#allocation2 + $0x180] sm:$0xff] %vm437, %v405
      %487 = vst.msk [vmem:[#allocation2 + $0x188] sm:$0xff] %vm437, %v406
      %488 = vst.msk [vmem:[#allocation2 + $0x190] sm:$0xff] %vm437, %v407
      %489 = vst.msk [vmem:[#allocation2 + $0x198] sm:$0xff] %vm437, %v408
      %490 = vst.msk [vmem:[#allocation2 + $0x1a0] sm:$0xff] %vm437, %v409
      %491 = vst.msk [vmem:[#allocation2 + $0x1a8] sm:$0xff] %vm437, %v410
      %492 = vst.msk [vmem:[#allocation2 + $0x1b0] sm:$0xff] %vm437, %v411
      %493 = vst.msk [vmem:[#allocation2 + $0x1b8] sm:$0xff] %vm437, %v412
      %494 = vst.msk [vmem:[#allocation2 + $0x1c0] sm:$0xff] %vm437, %v413
      %495 = vst.msk [vmem:[#allocation2 + $0x1c8] sm:$0xff] %vm437, %v414
      %496 = vst.msk [vmem:[#allocation2 + $0x1d0] sm:$0xff] %vm437, %v415
      %497 = vst.msk [vmem:[#allocation2 + $0x1d8] sm:$0xff] %vm437, %v416
      %498 = vst.msk [vmem:[#allocation2 + $0x1e0] sm:$0xff] %vm437, %v417
      %499 = vst.msk [vmem:[#allocation2 + $0x1e8] sm:$0xff] %vm437, %v418
      %500 = vst.msk [vmem:[#allocation2 + $0x1f0] sm:$0xff] %vm437, %v419
      %501 = vst.msk [vmem:[#allocation2 + $0x1f8] sm:$0xff] %vm437, %v420
      %502 = vst.msk [vmem:[#allocation2 + $0x200] sm:$0xff] %vm437, %v421
      %503 = vst.msk [vmem:[#allocation2 + $0x208] sm:$0xff] %vm437, %v422
      %504 = vst.msk [vmem:[#allocation2 + $0x210] sm:$0xff] %vm437, %v423
      %505 = vst.msk [vmem:[#allocation2 + $0x218] sm:$0xff] %vm437, %v424
      %506 = vst.msk [vmem:[#allocation2 + $0x220] sm:$0xff] %vm437, %v425
      %507 = vst.msk [vmem:[#allocation2 + $0x228] sm:$0xff] %vm437, %v426
      %508 = vst.msk [vmem:[#allocation2 + $0x230] sm:$0xff] %vm437, %v427
      %509 = vst.msk [vmem:[#allocation2 + $0x238] sm:$0xff] %vm437, %v428
      %510 = vst.msk [vmem:[#allocation2 + $0x240] sm:$0xff] %vm437, %v429
      %511 = vst.msk [vmem:[#allocation2 + $0x248] sm:$0xff] %vm437, %v430
      %512 = vst.msk [vmem:[#allocation2 + $0x250] sm:$0xff] %vm437, %v431
      %513 = vst.msk [vmem:[#allocation2 + $0x258] sm:$0xff] %vm437, %v432
      %514 = vst.msk [vmem:[#allocation2 + $0x260] sm:$0xff] %vm437, %v433
      %515 = vst.msk [vmem:[#allocation2 + $0x268] sm:$0xff] %vm437, %v434
      %516 = vst.msk [vmem:[#allocation2 + $0x270] sm:$0xff] %vm437, %v435
      %517 = vst.msk [vmem:[#allocation2 + $0x278] sm:$0xff] %vm437, %v436
      %v518 = vld [vmem:[%s338] sm:$0xff]
      %519 = vst.msk [vmem:[#allocation2 + $0x280] sm:$0xff] %vm437, %v518
      %v520 = vld [vmem:[#allocation2] ss:$5 sm:$0xff]
      %s521 = scalar_lea.vmem [#allocation2], 40
      %v522 = vld [vmem:[%s521] ss:$5 sm:$0xff]
      %s523 = scalar_lea.vmem [#allocation2], 80
      %v524 = vld [vmem:[%s523] ss:$5 sm:$0xff]
      %s525 = scalar_lea.vmem [#allocation2], 120
      %v526 = vld [vmem:[%s525] ss:$5 sm:$0xff]
      %s527 = scalar_lea.vmem [#allocation2], 160
      %v528 = vld [vmem:[%s527] ss:$5 sm:$0xff]
      %s529 = scalar_lea.vmem [#allocation2], 200
      %v530 = vld [vmem:[%s529] ss:$5 sm:$0xff]
      %s531 = scalar_lea.vmem [#allocation2], 240
      %v532 = vld [vmem:[%s531] ss:$5 sm:$0xff]
      %s533 = scalar_lea.vmem [#allocation2], 280
      %v534 = vld [vmem:[%s533] ss:$5 sm:$0xff]
      %s535 = scalar_lea.vmem [#allocation2], 320
      %v536 = vld [vmem:[%s535] ss:$5 sm:$0xff]
      %s537 = scalar_lea.vmem [#allocation2], 360
      %v538 = vld [vmem:[%s537] ss:$5 sm:$0xff]
      %s539 = scalar_lea.vmem [#allocation2], 400
      %v540 = vld [vmem:[%s539] ss:$5 sm:$0xff]
      %s541 = scalar_lea.vmem [#allocation2], 440
      %v542 = vld [vmem:[%s541] ss:$5 sm:$0xff]
      %s543 = scalar_lea.vmem [#allocation2], 480
      %v544 = vld [vmem:[%s543] ss:$5 sm:$0xff]
      %s545 = scalar_lea.vmem [#allocation2], 520
      %v546 = vld [vmem:[%s545] ss:$5 sm:$0xff]
      %s547 = scalar_lea.vmem [#allocation2], 560
      %v548 = vld [vmem:[%s547] ss:$5 sm:$0xff]
      %s549 = scalar_lea.vmem [#allocation2], 600
      %v550 = vld [vmem:[%s549] ss:$5 sm:$0xff]
      %v551 = vld [vmem:[%s2] sm:$0x1]
      %553 = vset.pattern.permute.xlu0 0
      %554 = vperm.xlu0 %553, %v520
      %v555 = vpop.permute.xlu0 %554
      %558 = vset.pattern.permute.xlu0 0
      %559 = vperm.xlu0 %558, %v522
      %v560 = vpop.permute.xlu0 %559
      %563 = vset.pattern.permute.xlu0 0
      %564 = vperm.xlu0 %563, %v524
      %v565 = vpop.permute.xlu0 %564
      %568 = vset.pattern.permute.xlu0 0
      %569 = vperm.xlu0 %568, %v526
      %v570 = vpop.permute.xlu0 %569
      %573 = vset.pattern.permute.xlu0 0
      %574 = vperm.xlu0 %573, %v528
      %v575 = vpop.permute.xlu0 %574
      %578 = vset.pattern.permute.xlu0 0
      %579 = vperm.xlu0 %578, %v530
      %v580 = vpop.permute.xlu0 %579
      %583 = vset.pattern.permute.xlu0 0
      %584 = vperm.xlu0 %583, %v532
      %v585 = vpop.permute.xlu0 %584
      %588 = vset.pattern.permute.xlu0 0
      %589 = vperm.xlu0 %588, %v534
      %v590 = vpop.permute.xlu0 %589
      %593 = vset.pattern.permute.xlu0 0
      %594 = vperm.xlu0 %593, %v536
      %v595 = vpop.permute.xlu0 %594
      %598 = vset.pattern.permute.xlu0 0
      %599 = vperm.xlu0 %598, %v538
      %v600 = vpop.permute.xlu0 %599
      %603 = vset.pattern.permute.xlu0 0
      %604 = vperm.xlu0 %603, %v540
      %v605 = vpop.permute.xlu0 %604
      %608 = vset.pattern.permute.xlu0 0
      %609 = vperm.xlu0 %608, %v542
      %v610 = vpop.permute.xlu0 %609
      %613 = vset.pattern.permute.xlu0 0
      %614 = vperm.xlu0 %613, %v544
      %v615 = vpop.permute.xlu0 %614
      %618 = vset.pattern.permute.xlu0 0
      %619 = vperm.xlu0 %618, %v546
      %v620 = vpop.permute.xlu0 %619
      %623 = vset.pattern.permute.xlu0 0
      %624 = vperm.xlu0 %623, %v548
      %v625 = vpop.permute.xlu0 %624
      %628 = vset.pattern.permute.xlu0 0
      %629 = vperm.xlu0 %628, %v550
      %v630 = vpop.permute.xlu0 %629
      %v632 = vperm.slane %v551, 0
      %v633 = vmul.f32 %v555, %v632
      %v634 = vmul.f32 %v560, %v632
      %v635 = vmul.f32 %v565, %v632
      %v636 = vmul.f32 %v570, %v632
      %v637 = vmul.f32 %v575, %v632
      %v638 = vmul.f32 %v580, %v632
      %v639 = vmul.f32 %v585, %v632
      %v640 = vmul.f32 %v590, %v632
      %v641 = vmul.f32 %v595, %v632
      %v642 = vmul.f32 %v600, %v632
      %v643 = vmul.f32 %v605, %v632
      %v644 = vmul.f32 %v610, %v632
      %v645 = vmul.f32 %v615, %v632
      %v646 = vmul.f32 %v620, %v632
      %v647 = vmul.f32 %v625, %v632
      %v648 = vmul.f32 %v630, %v632
      %v649 = vadd.f32 %v633, 0.0
      %v650 = vadd.f32 %v634, 0.0
      %v651 = vadd.f32 %v635, 0.0
      %v652 = vadd.f32 %v636, 0.0
      %v653 = vadd.f32 %v637, 0.0
      %v654 = vadd.f32 %v638, 0.0
      %v655 = vadd.f32 %v639, 0.0
      %v656 = vadd.f32 %v640, 0.0
      %v657 = vadd.f32 %v641, 0.0
      %v658 = vadd.f32 %v642, 0.0
      %v659 = vadd.f32 %v643, 0.0
      %v660 = vadd.f32 %v644, 0.0
      %v661 = vadd.f32 %v645, 0.0
      %v662 = vadd.f32 %v646, 0.0
      %v663 = vadd.f32 %v647, 0.0
      %v664 = vadd.f32 %v648, 0.0
      %s665 = scalar_lea.vmem [#allocation2], 1
      %v666 = vld [vmem:[%s665] ss:$5 sm:$0xff]
      %s667 = scalar_lea.vmem [#allocation2], 41
      %v668 = vld [vmem:[%s667] ss:$5 sm:$0xff]
      %s669 = scalar_lea.vmem [#allocation2], 81
      %v670 = vld [vmem:[%s669] ss:$5 sm:$0xff]
      %s671 = scalar_lea.vmem [#allocation2], 121
      %v672 = vld [vmem:[%s671] ss:$5 sm:$0xff]
      %s673 = scalar_lea.vmem [#allocation2], 161
      %v674 = vld [vmem:[%s673] ss:$5 sm:$0xff]
      %s675 = scalar_lea.vmem [#allocation2], 201
      %v676 = vld [vmem:[%s675] ss:$5 sm:$0xff]
      %s677 = scalar_lea.vmem [#allocation2], 241
      %v678 = vld [vmem:[%s677] ss:$5 sm:$0xff]
      %s679 = scalar_lea.vmem [#allocation2], 281
      %v680 = vld [vmem:[%s679] ss:$5 sm:$0xff]
      %s681 = scalar_lea.vmem [#allocation2], 321
      %v682 = vld [vmem:[%s681] ss:$5 sm:$0xff]
      %s683 = scalar_lea.vmem [#allocation2], 361
      %v684 = vld [vmem:[%s683] ss:$5 sm:$0xff]
      %s685 = scalar_lea.vmem [#allocation2], 401
      %v686 = vld [vmem:[%s685] ss:$5 sm:$0xff]
      %s687 = scalar_lea.vmem [#allocation2], 441
      %v688 = vld [vmem:[%s687] ss:$5 sm:$0xff]
      %s689 = scalar_lea.vmem [#allocation2], 481
      %v690 = vld [vmem:[%s689] ss:$5 sm:$0xff]
      %s691 = scalar_lea.vmem [#allocation2], 521
      %v692 = vld [vmem:[%s691] ss:$5 sm:$0xff]
      %s693 = scalar_lea.vmem [#allocation2], 561
      %v694 = vld [vmem:[%s693] ss:$5 sm:$0xff]
      %s695 = scalar_lea.vmem [#allocation2], 601
      %v696 = vld [vmem:[%s695] ss:$5 sm:$0xff]
      %v697 = vld [vmem:[%s2 + $0x1] sm:$0x1]
      %699 = vset.pattern.permute.xlu0 0
      %700 = vperm.xlu0 %699, %v666
      %v701 = vpop.permute.xlu0 %700
      %704 = vset.pattern.permute.xlu0 0
      %705 = vperm.xlu0 %704, %v668
      %v706 = vpop.permute.xlu0 %705
      %709 = vset.pattern.permute.xlu0 0
      %710 = vperm.xlu0 %709, %v670
      %v711 = vpop.permute.xlu0 %710
      %714 = vset.pattern.permute.xlu0 0
      %715 = vperm.xlu0 %714, %v672
      %v716 = vpop.permute.xlu0 %715
      %719 = vset.pattern.permute.xlu0 0
      %720 = vperm.xlu0 %719, %v674
      %v721 = vpop.permute.xlu0 %720
      %724 = vset.pattern.permute.xlu0 0
      %725 = vperm.xlu0 %724, %v676
      %v726 = vpop.permute.xlu0 %725
      %729 = vset.pattern.permute.xlu0 0
      %730 = vperm.xlu0 %729, %v678
      %v731 = vpop.permute.xlu0 %730
      %734 = vset.pattern.permute.xlu0 0
      %735 = vperm.xlu0 %734, %v680
      %v736 = vpop.permute.xlu0 %735
      %739 = vset.pattern.permute.xlu0 0
      %740 = vperm.xlu0 %739, %v682
      %v741 = vpop.permute.xlu0 %740
      %744 = vset.pattern.permute.xlu0 0
      %745 = vperm.xlu0 %744, %v684
      %v746 = vpop.permute.xlu0 %745
      %749 = vset.pattern.permute.xlu0 0
      %750 = vperm.xlu0 %749, %v686
      %v751 = vpop.permute.xlu0 %750
      %754 = vset.pattern.permute.xlu0 0
      %755 = vperm.xlu0 %754, %v688
      %v756 = vpop.permute.xlu0 %755
      %759 = vset.pattern.permute.xlu0 0
      %760 = vperm.xlu0 %759, %v690
      %v761 = vpop.permute.xlu0 %760
      %764 = vset.pattern.permute.xlu0 0
      %765 = vperm.xlu0 %764, %v692
      %v766 = vpop.permute.xlu0 %765
      %769 = vset.pattern.permute.xlu0 0
      %770 = vperm.xlu0 %769, %v694
      %v771 = vpop.permute.xlu0 %770
      %774 = vset.pattern.permute.xlu0 0
      %775 = vperm.xlu0 %774, %v696
      %v776 = vpop.permute.xlu0 %775
      %v778 = vperm.slane %v697, 0
      %v779 = vmul.f32 %v701, %v778
      %v780 = vmul.f32 %v706, %v778
      %v781 = vmul.f32 %v711, %v778
      %v782 = vmul.f32 %v716, %v778
      %v783 = vmul.f32 %v721, %v778
      %v784 = vmul.f32 %v726, %v778
      %v785 = vmul.f32 %v731, %v778
      %v786 = vmul.f32 %v736, %v778
      %v787 = vmul.f32 %v741, %v778
      %v788 = vmul.f32 %v746, %v778
      %v789 = vmul.f32 %v751, %v778
      %v790 = vmul.f32 %v756, %v778
      %v791 = vmul.f32 %v761, %v778
      %v792 = vmul.f32 %v766, %v778
      %v793 = vmul.f32 %v771, %v778
      %v794 = vmul.f32 %v776, %v778
      %v795 = vadd.f32 %v649, %v779
      %v796 = vadd.f32 %v650, %v780
      %v797 = vadd.f32 %v651, %v781
      %v798 = vadd.f32 %v652, %v782
      %v799 = vadd.f32 %v653, %v783
      %v800 = vadd.f32 %v654, %v784
      %v801 = vadd.f32 %v655, %v785
      %v802 = vadd.f32 %v656, %v786
      %v803 = vadd.f32 %v657, %v787
      %v804 = vadd.f32 %v658, %v788
      %v805 = vadd.f32 %v659, %v789
      %v806 = vadd.f32 %v660, %v790
      %v807 = vadd.f32 %v661, %v791
      %v808 = vadd.f32 %v662, %v792
      %v809 = vadd.f32 %v663, %v793
      %v810 = vadd.f32 %v664, %v794
      %s811 = scalar_lea.vmem [#allocation2], 2
      %v812 = vld [vmem:[%s811] ss:$5 sm:$0xff]
      %s813 = scalar_lea.vmem [#allocation2], 42
      %v814 = vld [vmem:[%s813] ss:$5 sm:$0xff]
      %s815 = scalar_lea.vmem [#allocation2], 82
      %v816 = vld [vmem:[%s815] ss:$5 sm:$0xff]
      %s817 = scalar_lea.vmem [#allocation2], 122
      %v818 = vld [vmem:[%s817] ss:$5 sm:$0xff]
      %s819 = scalar_lea.vmem [#allocation2], 162
      %v820 = vld [vmem:[%s819] ss:$5 sm:$0xff]
      %s821 = scalar_lea.vmem [#allocation2], 202
      %v822 = vld [vmem:[%s821] ss:$5 sm:$0xff]
      %s823 = scalar_lea.vmem [#allocation2], 242
      %v824 = vld [vmem:[%s823] ss:$5 sm:$0xff]
      %s825 = scalar_lea.vmem [#allocation2], 282
      %v826 = vld [vmem:[%s825] ss:$5 sm:$0xff]
      %s827 = scalar_lea.vmem [#allocation2], 322
      %v828 = vld [vmem:[%s827] ss:$5 sm:$0xff]
      %s829 = scalar_lea.vmem [#allocation2], 362
      %v830 = vld [vmem:[%s829] ss:$5 sm:$0xff]
      %s831 = scalar_lea.vmem [#allocation2], 402
      %v832 = vld [vmem:[%s831] ss:$5 sm:$0xff]
      %s833 = scalar_lea.vmem [#allocation2], 442
      %v834 = vld [vmem:[%s833] ss:$5 sm:$0xff]
      %s835 = scalar_lea.vmem [#allocation2], 482
      %v836 = vld [vmem:[%s835] ss:$5 sm:$0xff]
      %s837 = scalar_lea.vmem [#allocation2], 522
      %v838 = vld [vmem:[%s837] ss:$5 sm:$0xff]
      %s839 = scalar_lea.vmem [#allocation2], 562
      %v840 = vld [vmem:[%s839] ss:$5 sm:$0xff]
      %s841 = scalar_lea.vmem [#allocation2], 602
      %v842 = vld [vmem:[%s841] ss:$5 sm:$0xff]
      %v843 = vld [vmem:[%s2 + $0x2] sm:$0x1]
      %845 = vset.pattern.permute.xlu0 0
      %846 = vperm.xlu0 %845, %v812
      %v847 = vpop.permute.xlu0 %846
      %850 = vset.pattern.permute.xlu0 0
      %851 = vperm.xlu0 %850, %v814
      %v852 = vpop.permute.xlu0 %851
      %855 = vset.pattern.permute.xlu0 0
      %856 = vperm.xlu0 %855, %v816
      %v857 = vpop.permute.xlu0 %856
      %860 = vset.pattern.permute.xlu0 0
      %861 = vperm.xlu0 %860, %v818
      %v862 = vpop.permute.xlu0 %861
      %865 = vset.pattern.permute.xlu0 0
      %866 = vperm.xlu0 %865, %v820
      %v867 = vpop.permute.xlu0 %866
      %870 = vset.pattern.permute.xlu0 0
      %871 = vperm.xlu0 %870, %v822
      %v872 = vpop.permute.xlu0 %871
      %875 = vset.pattern.permute.xlu0 0
      %876 = vperm.xlu0 %875, %v824
      %v877 = vpop.permute.xlu0 %876
      %880 = vset.pattern.permute.xlu0 0
      %881 = vperm.xlu0 %880, %v826
      %v882 = vpop.permute.xlu0 %881
      %885 = vset.pattern.permute.xlu0 0
      %886 = vperm.xlu0 %885, %v828
      %v887 = vpop.permute.xlu0 %886
      %890 = vset.pattern.permute.xlu0 0
      %891 = vperm.xlu0 %890, %v830
      %v892 = vpop.permute.xlu0 %891
      %895 = vset.pattern.permute.xlu0 0
      %896 = vperm.xlu0 %895, %v832
      %v897 = vpop.permute.xlu0 %896
      %900 = vset.pattern.permute.xlu0 0
      %901 = vperm.xlu0 %900, %v834
      %v902 = vpop.permute.xlu0 %901
      %905 = vset.pattern.permute.xlu0 0
      %906 = vperm.xlu0 %905, %v836
      %v907 = vpop.permute.xlu0 %906
      %910 = vset.pattern.permute.xlu0 0
      %911 = vperm.xlu0 %910, %v838
      %v912 = vpop.permute.xlu0 %911
      %915 = vset.pattern.permute.xlu0 0
      %916 = vperm.xlu0 %915, %v840
      %v917 = vpop.permute.xlu0 %916
      %920 = vset.pattern.permute.xlu0 0
      %921 = vperm.xlu0 %920, %v842
      %v922 = vpop.permute.xlu0 %921
      %v924 = vperm.slane %v843, 0
      %v925 = vmul.f32 %v847, %v924
      %v926 = vmul.f32 %v852, %v924
      %v927 = vmul.f32 %v857, %v924
      %v928 = vmul.f32 %v862, %v924
      %v929 = vmul.f32 %v867, %v924
      %v930 = vmul.f32 %v872, %v924
      %v931 = vmul.f32 %v877, %v924
      %v932 = vmul.f32 %v882, %v924
      %v933 = vmul.f32 %v887, %v924
      %v934 = vmul.f32 %v892, %v924
      %v935 = vmul.f32 %v897, %v924
      %v936 = vmul.f32 %v902, %v924
      %v937 = vmul.f32 %v907, %v924
      %v938 = vmul.f32 %v912, %v924
      %v939 = vmul.f32 %v917, %v924
      %v940 = vmul.f32 %v922, %v924
      %v941 = vadd.f32 %v795, %v925
      %v942 = vadd.f32 %v796, %v926
      %v943 = vadd.f32 %v797, %v927
      %v944 = vadd.f32 %v798, %v928
      %v945 = vadd.f32 %v799, %v929
      %v946 = vadd.f32 %v800, %v930
      %v947 = vadd.f32 %v801, %v931
      %v948 = vadd.f32 %v802, %v932
      %v949 = vadd.f32 %v803, %v933
      %v950 = vadd.f32 %v804, %v934
      %v951 = vadd.f32 %v805, %v935
      %v952 = vadd.f32 %v806, %v936
      %v953 = vadd.f32 %v807, %v937
      %v954 = vadd.f32 %v808, %v938
      %v955 = vadd.f32 %v809, %v939
      %v956 = vadd.f32 %v810, %v940
      %s957 = scalar_lea.vmem [#allocation2], 3
      %v958 = vld [vmem:[%s957] ss:$5 sm:$0xff]
      %s959 = scalar_lea.vmem [#allocation2], 43
      %v960 = vld [vmem:[%s959] ss:$5 sm:$0xff]
      %s961 = scalar_lea.vmem [#allocation2], 83
      %v962 = vld [vmem:[%s961] ss:$5 sm:$0xff]
      %s963 = scalar_lea.vmem [#allocation2], 123
      %v964 = vld [vmem:[%s963] ss:$5 sm:$0xff]
      %s965 = scalar_lea.vmem [#allocation2], 163
      %v966 = vld [vmem:[%s965] ss:$5 sm:$0xff]
      %s967 = scalar_lea.vmem [#allocation2], 203
      %v968 = vld [vmem:[%s967] ss:$5 sm:$0xff]
      %s969 = scalar_lea.vmem [#allocation2], 243
      %v970 = vld [vmem:[%s969] ss:$5 sm:$0xff]
      %s971 = scalar_lea.vmem [#allocation2], 283
      %v972 = vld [vmem:[%s971] ss:$5 sm:$0xff]
      %s973 = scalar_lea.vmem [#allocation2], 323
      %v974 = vld [vmem:[%s973] ss:$5 sm:$0xff]
      %s975 = scalar_lea.vmem [#allocation2], 363
      %v976 = vld [vmem:[%s975] ss:$5 sm:$0xff]
      %s977 = scalar_lea.vmem [#allocation2], 403
      %v978 = vld [vmem:[%s977] ss:$5 sm:$0xff]
      %s979 = scalar_lea.vmem [#allocation2], 443
      %v980 = vld [vmem:[%s979] ss:$5 sm:$0xff]
      %s981 = scalar_lea.vmem [#allocation2], 483
      %v982 = vld [vmem:[%s981] ss:$5 sm:$0xff]
      %s983 = scalar_lea.vmem [#allocation2], 523
      %v984 = vld [vmem:[%s983] ss:$5 sm:$0xff]
      %s985 = scalar_lea.vmem [#allocation2], 563
      %v986 = vld [vmem:[%s985] ss:$5 sm:$0xff]
      %s987 = scalar_lea.vmem [#allocation2], 603
      %v988 = vld [vmem:[%s987] ss:$5 sm:$0xff]
      %v989 = vld [vmem:[%s2 + $0x3] sm:$0x1]
      %991 = vset.pattern.permute.xlu0 0
      %992 = vperm.xlu0 %991, %v958
      %v993 = vpop.permute.xlu0 %992
      %996 = vset.pattern.permute.xlu0 0
      %997 = vperm.xlu0 %996, %v960
      %v998 = vpop.permute.xlu0 %997
      %1001 = vset.pattern.permute.xlu0 0
      %1002 = vperm.xlu0 %1001, %v962
      %v1003 = vpop.permute.xlu0 %1002
      %1006 = vset.pattern.permute.xlu0 0
      %1007 = vperm.xlu0 %1006, %v964
      %v1008 = vpop.permute.xlu0 %1007
      %1011 = vset.pattern.permute.xlu0 0
      %1012 = vperm.xlu0 %1011, %v966
      %v1013 = vpop.permute.xlu0 %1012
      %1016 = vset.pattern.permute.xlu0 0
      %1017 = vperm.xlu0 %1016, %v968
      %v1018 = vpop.permute.xlu0 %1017
      %1021 = vset.pattern.permute.xlu0 0
      %1022 = vperm.xlu0 %1021, %v970
      %v1023 = vpop.permute.xlu0 %1022
      %1026 = vset.pattern.permute.xlu0 0
      %1027 = vperm.xlu0 %1026, %v972
      %v1028 = vpop.permute.xlu0 %1027
      %1031 = vset.pattern.permute.xlu0 0
      %1032 = vperm.xlu0 %1031, %v974
      %v1033 = vpop.permute.xlu0 %1032
      %1036 = vset.pattern.permute.xlu0 0
      %1037 = vperm.xlu0 %1036, %v976
      %v1038 = vpop.permute.xlu0 %1037
      %1041 = vset.pattern.permute.xlu0 0
      %1042 = vperm.xlu0 %1041, %v978
      %v1043 = vpop.permute.xlu0 %1042
      %1046 = vset.pattern.permute.xlu0 0
      %1047 = vperm.xlu0 %1046, %v980
      %v1048 = vpop.permute.xlu0 %1047
      %1051 = vset.pattern.permute.xlu0 0
      %1052 = vperm.xlu0 %1051, %v982
      %v1053 = vpop.permute.xlu0 %1052
      %1056 = vset.pattern.permute.xlu0 0
      %1057 = vperm.xlu0 %1056, %v984
      %v1058 = vpop.permute.xlu0 %1057
      %1061 = vset.pattern.permute.xlu0 0
      %1062 = vperm.xlu0 %1061, %v986
      %v1063 = vpop.permute.xlu0 %1062
      %1066 = vset.pattern.permute.xlu0 0
      %1067 = vperm.xlu0 %1066, %v988
      %v1068 = vpop.permute.xlu0 %1067
      %v1070 = vperm.slane %v989, 0
      %v1071 = vmul.f32 %v993, %v1070
      %v1072 = vmul.f32 %v998, %v1070
      %v1073 = vmul.f32 %v1003, %v1070
      %v1074 = vmul.f32 %v1008, %v1070
      %v1075 = vmul.f32 %v1013, %v1070
      %v1076 = vmul.f32 %v1018, %v1070
      %v1077 = vmul.f32 %v1023, %v1070
      %v1078 = vmul.f32 %v1028, %v1070
      %v1079 = vmul.f32 %v1033, %v1070
      %v1080 = vmul.f32 %v1038, %v1070
      %v1081 = vmul.f32 %v1043, %v1070
      %v1082 = vmul.f32 %v1048, %v1070
      %v1083 = vmul.f32 %v1053, %v1070
      %v1084 = vmul.f32 %v1058, %v1070
      %v1085 = vmul.f32 %v1063, %v1070
      %v1086 = vmul.f32 %v1068, %v1070
      %v1087 = vadd.f32 %v941, %v1071
      %v1088 = vadd.f32 %v942, %v1072
      %v1089 = vadd.f32 %v943, %v1073
      %v1090 = vadd.f32 %v944, %v1074
      %v1091 = vadd.f32 %v945, %v1075
      %v1092 = vadd.f32 %v946, %v1076
      %v1093 = vadd.f32 %v947, %v1077
      %v1094 = vadd.f32 %v948, %v1078
      %v1095 = vadd.f32 %v949, %v1079
      %v1096 = vadd.f32 %v950, %v1080
      %v1097 = vadd.f32 %v951, %v1081
      %v1098 = vadd.f32 %v952, %v1082
      %v1099 = vadd.f32 %v953, %v1083
      %v1100 = vadd.f32 %v954, %v1084
      %v1101 = vadd.f32 %v955, %v1085
      %v1102 = vadd.f32 %v956, %v1086
      %s1103 = scalar_lea.vmem [#allocation2], 4
      %v1104 = vld [vmem:[%s1103] ss:$5 sm:$0xff]
      %s1105 = scalar_lea.vmem [#allocation2], 44
      %v1106 = vld [vmem:[%s1105] ss:$5 sm:$0xff]
      %s1107 = scalar_lea.vmem [#allocation2], 84
      %v1108 = vld [vmem:[%s1107] ss:$5 sm:$0xff]
      %s1109 = scalar_lea.vmem [#allocation2], 124
      %v1110 = vld [vmem:[%s1109] ss:$5 sm:$0xff]
      %s1111 = scalar_lea.vmem [#allocation2], 164
      %v1112 = vld [vmem:[%s1111] ss:$5 sm:$0xff]
      %s1113 = scalar_lea.vmem [#allocation2], 204
      %v1114 = vld [vmem:[%s1113] ss:$5 sm:$0xff]
      %s1115 = scalar_lea.vmem [#allocation2], 244
      %v1116 = vld [vmem:[%s1115] ss:$5 sm:$0xff]
      %s1117 = scalar_lea.vmem [#allocation2], 284
      %v1118 = vld [vmem:[%s1117] ss:$5 sm:$0xff]
      %s1119 = scalar_lea.vmem [#allocation2], 324
      %v1120 = vld [vmem:[%s1119] ss:$5 sm:$0xff]
      %s1121 = scalar_lea.vmem [#allocation2], 364
      %v1122 = vld [vmem:[%s1121] ss:$5 sm:$0xff]
      %s1123 = scalar_lea.vmem [#allocation2], 404
      %v1124 = vld [vmem:[%s1123] ss:$5 sm:$0xff]
      %s1125 = scalar_lea.vmem [#allocation2], 444
      %v1126 = vld [vmem:[%s1125] ss:$5 sm:$0xff]
      %s1127 = scalar_lea.vmem [#allocation2], 484
      %v1128 = vld [vmem:[%s1127] ss:$5 sm:$0xff]
      %s1129 = scalar_lea.vmem [#allocation2], 524
      %v1130 = vld [vmem:[%s1129] ss:$5 sm:$0xff]
      %s1131 = scalar_lea.vmem [#allocation2], 564
      %v1132 = vld [vmem:[%s1131] ss:$5 sm:$0xff]
      %s1133 = scalar_lea.vmem [#allocation2], 604
      %v1134 = vld [vmem:[%s1133] ss:$5 sm:$0xff]
      %v1135 = vld [vmem:[%s2 + $0x4] sm:$0x1]
      %1137 = vset.pattern.permute.xlu0 0
      %1138 = vperm.xlu0 %1137, %v1104
      %v1139 = vpop.permute.xlu0 %1138
      %1142 = vset.pattern.permute.xlu0 0
      %1143 = vperm.xlu0 %1142, %v1106
      %v1144 = vpop.permute.xlu0 %1143
      %1147 = vset.pattern.permute.xlu0 0
      %1148 = vperm.xlu0 %1147, %v1108
      %v1149 = vpop.permute.xlu0 %1148
      %1152 = vset.pattern.permute.xlu0 0
      %1153 = vperm.xlu0 %1152, %v1110
      %v1154 = vpop.permute.xlu0 %1153
      %1157 = vset.pattern.permute.xlu0 0
      %1158 = vperm.xlu0 %1157, %v1112
      %v1159 = vpop.permute.xlu0 %1158
      %1162 = vset.pattern.permute.xlu0 0
      %1163 = vperm.xlu0 %1162, %v1114
      %v1164 = vpop.permute.xlu0 %1163
      %1167 = vset.pattern.permute.xlu0 0
      %1168 = vperm.xlu0 %1167, %v1116
      %v1169 = vpop.permute.xlu0 %1168
      %1172 = vset.pattern.permute.xlu0 0
      %1173 = vperm.xlu0 %1172, %v1118
      %v1174 = vpop.permute.xlu0 %1173
      %1177 = vset.pattern.permute.xlu0 0
      %1178 = vperm.xlu0 %1177, %v1120
      %v1179 = vpop.permute.xlu0 %1178
      %1182 = vset.pattern.permute.xlu0 0
      %1183 = vperm.xlu0 %1182, %v1122
      %v1184 = vpop.permute.xlu0 %1183
      %1187 = vset.pattern.permute.xlu0 0
      %1188 = vperm.xlu0 %1187, %v1124
      %v1189 = vpop.permute.xlu0 %1188
      %1192 = vset.pattern.permute.xlu0 0
      %1193 = vperm.xlu0 %1192, %v1126
      %v1194 = vpop.permute.xlu0 %1193
      %1197 = vset.pattern.permute.xlu0 0
      %1198 = vperm.xlu0 %1197, %v1128
      %v1199 = vpop.permute.xlu0 %1198
      %1202 = vset.pattern.permute.xlu0 0
      %1203 = vperm.xlu0 %1202, %v1130
      %v1204 = vpop.permute.xlu0 %1203
      %1207 = vset.pattern.permute.xlu0 0
      %1208 = vperm.xlu0 %1207, %v1132
      %v1209 = vpop.permute.xlu0 %1208
      %1212 = vset.pattern.permute.xlu0 0
      %1213 = vperm.xlu0 %1212, %v1134
      %v1214 = vpop.permute.xlu0 %1213
      %v1216 = vperm.slane %v1135, 0
      %v1217 = vmul.f32 %v1139, %v1216
      %v1218 = vmul.f32 %v1144, %v1216
      %v1219 = vmul.f32 %v1149, %v1216
      %v1220 = vmul.f32 %v1154, %v1216
      %v1221 = vmul.f32 %v1159, %v1216
      %v1222 = vmul.f32 %v1164, %v1216
      %v1223 = vmul.f32 %v1169, %v1216
      %v1224 = vmul.f32 %v1174, %v1216
      %v1225 = vmul.f32 %v1179, %v1216
      %v1226 = vmul.f32 %v1184, %v1216
      %v1227 = vmul.f32 %v1189, %v1216
      %v1228 = vmul.f32 %v1194, %v1216
      %v1229 = vmul.f32 %v1199, %v1216
      %v1230 = vmul.f32 %v1204, %v1216
      %v1231 = vmul.f32 %v1209, %v1216
      %v1232 = vmul.f32 %v1214, %v1216
      %v1233 = vadd.f32 %v1087, %v1217
      %v1234 = vadd.f32 %v1088, %v1218
      %v1235 = vadd.f32 %v1089, %v1219
      %v1236 = vadd.f32 %v1090, %v1220
      %v1237 = vadd.f32 %v1091, %v1221
      %v1238 = vadd.f32 %v1092, %v1222
      %v1239 = vadd.f32 %v1093, %v1223
      %v1240 = vadd.f32 %v1094, %v1224
      %v1241 = vadd.f32 %v1095, %v1225
      %v1242 = vadd.f32 %v1096, %v1226
      %v1243 = vadd.f32 %v1097, %v1227
      %v1244 = vadd.f32 %v1098, %v1228
      %v1245 = vadd.f32 %v1099, %v1229
      %v1246 = vadd.f32 %v1100, %v1230
      %v1247 = vadd.f32 %v1101, %v1231
      %v1248 = vadd.f32 %v1102, %v1232
      %s1249 = scalar_lea.vmem [#allocation2], 5
      %v1250 = vld [vmem:[%s1249] ss:$5 sm:$0xff]
      %s1251 = scalar_lea.vmem [#allocation2], 45
      %v1252 = vld [vmem:[%s1251] ss:$5 sm:$0xff]
      %s1253 = scalar_lea.vmem [#allocation2], 85
      %v1254 = vld [vmem:[%s1253] ss:$5 sm:$0xff]
      %s1255 = scalar_lea.vmem [#allocation2], 125
      %v1256 = vld [vmem:[%s1255] ss:$5 sm:$0xff]
      %s1257 = scalar_lea.vmem [#allocation2], 165
      %v1258 = vld [vmem:[%s1257] ss:$5 sm:$0xff]
      %s1259 = scalar_lea.vmem [#allocation2], 205
      %v1260 = vld [vmem:[%s1259] ss:$5 sm:$0xff]
      %s1261 = scalar_lea.vmem [#allocation2], 245
      %v1262 = vld [vmem:[%s1261] ss:$5 sm:$0xff]
      %s1263 = scalar_lea.vmem [#allocation2], 285
      %v1264 = vld [vmem:[%s1263] ss:$5 sm:$0xff]
      %s1265 = scalar_lea.vmem [#allocation2], 325
      %v1266 = vld [vmem:[%s1265] ss:$5 sm:$0xff]
      %s1267 = scalar_lea.vmem [#allocation2], 365
      %v1268 = vld [vmem:[%s1267] ss:$5 sm:$0xff]
      %s1269 = scalar_lea.vmem [#allocation2], 405
      %v1270 = vld [vmem:[%s1269] ss:$5 sm:$0xff]
      %s1271 = scalar_lea.vmem [#allocation2], 445
      %v1272 = vld [vmem:[%s1271] ss:$5 sm:$0xff]
      %s1273 = scalar_lea.vmem [#allocation2], 485
      %v1274 = vld [vmem:[%s1273] ss:$5 sm:$0xff]
      %s1275 = scalar_lea.vmem [#allocation2], 525
      %v1276 = vld [vmem:[%s1275] ss:$5 sm:$0xff]
      %s1277 = scalar_lea.vmem [#allocation2], 565
      %v1278 = vld [vmem:[%s1277] ss:$5 sm:$0xff]
      %s1279 = scalar_lea.vmem [#allocation2], 605
      %v1280 = vld [vmem:[%s1279] ss:$5 sm:$0xff]
      %v1281 = vld [vmem:[%s2 + $0x5] sm:$0x1]
      %1283 = vset.pattern.permute.xlu0 0
      %1284 = vperm.xlu0 %1283, %v1250
      %v1285 = vpop.permute.xlu0 %1284
      %1288 = vset.pattern.permute.xlu0 0
      %1289 = vperm.xlu0 %1288, %v1252
      %v1290 = vpop.permute.xlu0 %1289
      %1293 = vset.pattern.permute.xlu0 0
      %1294 = vperm.xlu0 %1293, %v1254
      %v1295 = vpop.permute.xlu0 %1294
      %1298 = vset.pattern.permute.xlu0 0
      %1299 = vperm.xlu0 %1298, %v1256
      %v1300 = vpop.permute.xlu0 %1299
      %1303 = vset.pattern.permute.xlu0 0
      %1304 = vperm.xlu0 %1303, %v1258
      %v1305 = vpop.permute.xlu0 %1304
      %1308 = vset.pattern.permute.xlu0 0
      %1309 = vperm.xlu0 %1308, %v1260
      %v1310 = vpop.permute.xlu0 %1309
      %1313 = vset.pattern.permute.xlu0 0
      %1314 = vperm.xlu0 %1313, %v1262
      %v1315 = vpop.permute.xlu0 %1314
      %1318 = vset.pattern.permute.xlu0 0
      %1319 = vperm.xlu0 %1318, %v1264
      %v1320 = vpop.permute.xlu0 %1319
      %1323 = vset.pattern.permute.xlu0 0
      %1324 = vperm.xlu0 %1323, %v1266
      %v1325 = vpop.permute.xlu0 %1324
      %1328 = vset.pattern.permute.xlu0 0
      %1329 = vperm.xlu0 %1328, %v1268
      %v1330 = vpop.permute.xlu0 %1329
      %1333 = vset.pattern.permute.xlu0 0
      %1334 = vperm.xlu0 %1333, %v1270
      %v1335 = vpop.permute.xlu0 %1334
      %1338 = vset.pattern.permute.xlu0 0
      %1339 = vperm.xlu0 %1338, %v1272
      %v1340 = vpop.permute.xlu0 %1339
      %1343 = vset.pattern.permute.xlu0 0
      %1344 = vperm.xlu0 %1343, %v1274
      %v1345 = vpop.permute.xlu0 %1344
      %1348 = vset.pattern.permute.xlu0 0
      %1349 = vperm.xlu0 %1348, %v1276
      %v1350 = vpop.permute.xlu0 %1349
      %1353 = vset.pattern.permute.xlu0 0
      %1354 = vperm.xlu0 %1353, %v1278
      %v1355 = vpop.permute.xlu0 %1354
      %1358 = vset.pattern.permute.xlu0 0
      %1359 = vperm.xlu0 %1358, %v1280
      %v1360 = vpop.permute.xlu0 %1359
      %v1362 = vperm.slane %v1281, 0
      %v1363 = vmul.f32 %v1285, %v1362
      %v1364 = vmul.f32 %v1290, %v1362
      %v1365 = vmul.f32 %v1295, %v1362
      %v1366 = vmul.f32 %v1300, %v1362
      %v1367 = vmul.f32 %v1305, %v1362
      %v1368 = vmul.f32 %v1310, %v1362
      %v1369 = vmul.f32 %v1315, %v1362
      %v1370 = vmul.f32 %v1320, %v1362
      %v1371 = vmul.f32 %v1325, %v1362
      %v1372 = vmul.f32 %v1330, %v1362
      %v1373 = vmul.f32 %v1335, %v1362
      %v1374 = vmul.f32 %v1340, %v1362
      %v1375 = vmul.f32 %v1345, %v1362
      %v1376 = vmul.f32 %v1350, %v1362
      %v1377 = vmul.f32 %v1355, %v1362
      %v1378 = vmul.f32 %v1360, %v1362
      %v1379 = vadd.f32 %v1233, %v1363
      %v1380 = vadd.f32 %v1234, %v1364
      %v1381 = vadd.f32 %v1235, %v1365
      %v1382 = vadd.f32 %v1236, %v1366
      %v1383 = vadd.f32 %v1237, %v1367
      %v1384 = vadd.f32 %v1238, %v1368
      %v1385 = vadd.f32 %v1239, %v1369
      %v1386 = vadd.f32 %v1240, %v1370
      %v1387 = vadd.f32 %v1241, %v1371
      %v1388 = vadd.f32 %v1242, %v1372
      %v1389 = vadd.f32 %v1243, %v1373
      %v1390 = vadd.f32 %v1244, %v1374
      %v1391 = vadd.f32 %v1245, %v1375
      %v1392 = vadd.f32 %v1246, %v1376
      %v1393 = vadd.f32 %v1247, %v1377
      %v1394 = vadd.f32 %v1248, %v1378
      %s1395 = scalar_lea.vmem [#allocation2], 6
      %v1396 = vld [vmem:[%s1395] ss:$5 sm:$0xff]
      %s1397 = scalar_lea.vmem [#allocation2], 46
      %v1398 = vld [vmem:[%s1397] ss:$5 sm:$0xff]
      %s1399 = scalar_lea.vmem [#allocation2], 86
      %v1400 = vld [vmem:[%s1399] ss:$5 sm:$0xff]
      %s1401 = scalar_lea.vmem [#allocation2], 126
      %v1402 = vld [vmem:[%s1401] ss:$5 sm:$0xff]
      %s1403 = scalar_lea.vmem [#allocation2], 166
      %v1404 = vld [vmem:[%s1403] ss:$5 sm:$0xff]
      %s1405 = scalar_lea.vmem [#allocation2], 206
      %v1406 = vld [vmem:[%s1405] ss:$5 sm:$0xff]
      %s1407 = scalar_lea.vmem [#allocation2], 246
      %v1408 = vld [vmem:[%s1407] ss:$5 sm:$0xff]
      %s1409 = scalar_lea.vmem [#allocation2], 286
      %v1410 = vld [vmem:[%s1409] ss:$5 sm:$0xff]
      %s1411 = scalar_lea.vmem [#allocation2], 326
      %v1412 = vld [vmem:[%s1411] ss:$5 sm:$0xff]
      %s1413 = scalar_lea.vmem [#allocation2], 366
      %v1414 = vld [vmem:[%s1413] ss:$5 sm:$0xff]
      %s1415 = scalar_lea.vmem [#allocation2], 406
      %v1416 = vld [vmem:[%s1415] ss:$5 sm:$0xff]
      %s1417 = scalar_lea.vmem [#allocation2], 446
      %v1418 = vld [vmem:[%s1417] ss:$5 sm:$0xff]
      %s1419 = scalar_lea.vmem [#allocation2], 486
      %v1420 = vld [vmem:[%s1419] ss:$5 sm:$0xff]
      %s1421 = scalar_lea.vmem [#allocation2], 526
      %v1422 = vld [vmem:[%s1421] ss:$5 sm:$0xff]
      %s1423 = scalar_lea.vmem [#allocation2], 566
      %v1424 = vld [vmem:[%s1423] ss:$5 sm:$0xff]
      %s1425 = scalar_lea.vmem [#allocation2], 606
      %v1426 = vld [vmem:[%s1425] ss:$5 sm:$0xff]
      %v1427 = vld [vmem:[%s2 + $0x6] sm:$0x1]
      %1429 = vset.pattern.permute.xlu0 0
      %1430 = vperm.xlu0 %1429, %v1396
      %v1431 = vpop.permute.xlu0 %1430
      %1434 = vset.pattern.permute.xlu0 0
      %1435 = vperm.xlu0 %1434, %v1398
      %v1436 = vpop.permute.xlu0 %1435
      %1439 = vset.pattern.permute.xlu0 0
      %1440 = vperm.xlu0 %1439, %v1400
      %v1441 = vpop.permute.xlu0 %1440
      %1444 = vset.pattern.permute.xlu0 0
      %1445 = vperm.xlu0 %1444, %v1402
      %v1446 = vpop.permute.xlu0 %1445
      %1449 = vset.pattern.permute.xlu0 0
      %1450 = vperm.xlu0 %1449, %v1404
      %v1451 = vpop.permute.xlu0 %1450
      %1454 = vset.pattern.permute.xlu0 0
      %1455 = vperm.xlu0 %1454, %v1406
      %v1456 = vpop.permute.xlu0 %1455
      %1459 = vset.pattern.permute.xlu0 0
      %1460 = vperm.xlu0 %1459, %v1408
      %v1461 = vpop.permute.xlu0 %1460
      %1464 = vset.pattern.permute.xlu0 0
      %1465 = vperm.xlu0 %1464, %v1410
      %v1466 = vpop.permute.xlu0 %1465
      %1469 = vset.pattern.permute.xlu0 0
      %1470 = vperm.xlu0 %1469, %v1412
      %v1471 = vpop.permute.xlu0 %1470
      %1474 = vset.pattern.permute.xlu0 0
      %1475 = vperm.xlu0 %1474, %v1414
      %v1476 = vpop.permute.xlu0 %1475
      %1479 = vset.pattern.permute.xlu0 0
      %1480 = vperm.xlu0 %1479, %v1416
      %v1481 = vpop.permute.xlu0 %1480
      %1484 = vset.pattern.permute.xlu0 0
      %1485 = vperm.xlu0 %1484, %v1418
      %v1486 = vpop.permute.xlu0 %1485
      %1489 = vset.pattern.permute.xlu0 0
      %1490 = vperm.xlu0 %1489, %v1420
      %v1491 = vpop.permute.xlu0 %1490
      %1494 = vset.pattern.permute.xlu0 0
      %1495 = vperm.xlu0 %1494, %v1422
      %v1496 = vpop.permute.xlu0 %1495
      %1499 = vset.pattern.permute.xlu0 0
      %1500 = vperm.xlu0 %1499, %v1424
      %v1501 = vpop.permute.xlu0 %1500
      %1504 = vset.pattern.permute.xlu0 0
      %1505 = vperm.xlu0 %1504, %v1426
      %v1506 = vpop.permute.xlu0 %1505
      %v1508 = vperm.slane %v1427, 0
      %v1509 = vmul.f32 %v1431, %v1508
      %v1510 = vmul.f32 %v1436, %v1508
      %v1511 = vmul.f32 %v1441, %v1508
      %v1512 = vmul.f32 %v1446, %v1508
      %v1513 = vmul.f32 %v1451, %v1508
      %v1514 = vmul.f32 %v1456, %v1508
      %v1515 = vmul.f32 %v1461, %v1508
      %v1516 = vmul.f32 %v1466, %v1508
      %v1517 = vmul.f32 %v1471, %v1508
      %v1518 = vmul.f32 %v1476, %v1508
      %v1519 = vmul.f32 %v1481, %v1508
      %v1520 = vmul.f32 %v1486, %v1508
      %v1521 = vmul.f32 %v1491, %v1508
      %v1522 = vmul.f32 %v1496, %v1508
      %v1523 = vmul.f32 %v1501, %v1508
      %v1524 = vmul.f32 %v1506, %v1508
      %v1525 = vadd.f32 %v1379, %v1509
      %v1526 = vadd.f32 %v1380, %v1510
      %v1527 = vadd.f32 %v1381, %v1511
      %v1528 = vadd.f32 %v1382, %v1512
      %v1529 = vadd.f32 %v1383, %v1513
      %v1530 = vadd.f32 %v1384, %v1514
      %v1531 = vadd.f32 %v1385, %v1515
      %v1532 = vadd.f32 %v1386, %v1516
      %v1533 = vadd.f32 %v1387, %v1517
      %v1534 = vadd.f32 %v1388, %v1518
      %v1535 = vadd.f32 %v1389, %v1519
      %v1536 = vadd.f32 %v1390, %v1520
      %v1537 = vadd.f32 %v1391, %v1521
      %v1538 = vadd.f32 %v1392, %v1522
      %v1539 = vadd.f32 %v1393, %v1523
      %v1540 = vadd.f32 %v1394, %v1524
      %s1541 = scalar_lea.vmem [#allocation2], 7
      %v1542 = vld [vmem:[%s1541] ss:$5 sm:$0xff]
      %s1543 = scalar_lea.vmem [#allocation2], 47
      %v1544 = vld [vmem:[%s1543] ss:$5 sm:$0xff]
      %s1545 = scalar_lea.vmem [#allocation2], 87
      %v1546 = vld [vmem:[%s1545] ss:$5 sm:$0xff]
      %s1547 = scalar_lea.vmem [#allocation2], 127
      %v1548 = vld [vmem:[%s1547] ss:$5 sm:$0xff]
      %s1549 = scalar_lea.vmem [#allocation2], 167
      %v1550 = vld [vmem:[%s1549] ss:$5 sm:$0xff]
      %s1551 = scalar_lea.vmem [#allocation2], 207
      %v1552 = vld [vmem:[%s1551] ss:$5 sm:$0xff]
      %s1553 = scalar_lea.vmem [#allocation2], 247
      %v1554 = vld [vmem:[%s1553] ss:$5 sm:$0xff]
      %s1555 = scalar_lea.vmem [#allocation2], 287
      %v1556 = vld [vmem:[%s1555] ss:$5 sm:$0xff]
      %s1557 = scalar_lea.vmem [#allocation2], 327
      %v1558 = vld [vmem:[%s1557] ss:$5 sm:$0xff]
      %s1559 = scalar_lea.vmem [#allocation2], 367
      %v1560 = vld [vmem:[%s1559] ss:$5 sm:$0xff]
      %s1561 = scalar_lea.vmem [#allocation2], 407
      %v1562 = vld [vmem:[%s1561] ss:$5 sm:$0xff]
      %s1563 = scalar_lea.vmem [#allocation2], 447
      %v1564 = vld [vmem:[%s1563] ss:$5 sm:$0xff]
      %s1565 = scalar_lea.vmem [#allocation2], 487
      %v1566 = vld [vmem:[%s1565] ss:$5 sm:$0xff]
      %s1567 = scalar_lea.vmem [#allocation2], 527
      %v1568 = vld [vmem:[%s1567] ss:$5 sm:$0xff]
      %s1569 = scalar_lea.vmem [#allocation2], 567
      %v1570 = vld [vmem:[%s1569] ss:$5 sm:$0xff]
      %s1571 = scalar_lea.vmem [#allocation2], 607
      %v1572 = vld [vmem:[%s1571] ss:$5 sm:$0xff]
      %v1573 = vld [vmem:[%s2 + $0x7] sm:$0x1]
      %1575 = vset.pattern.permute.xlu0 0
      %1576 = vperm.xlu0 %1575, %v1542
      %v1577 = vpop.permute.xlu0 %1576
      %1580 = vset.pattern.permute.xlu0 0
      %1581 = vperm.xlu0 %1580, %v1544
      %v1582 = vpop.permute.xlu0 %1581
      %1585 = vset.pattern.permute.xlu0 0
      %1586 = vperm.xlu0 %1585, %v1546
      %v1587 = vpop.permute.xlu0 %1586
      %1590 = vset.pattern.permute.xlu0 0
      %1591 = vperm.xlu0 %1590, %v1548
      %v1592 = vpop.permute.xlu0 %1591
      %1595 = vset.pattern.permute.xlu0 0
      %1596 = vperm.xlu0 %1595, %v1550
      %v1597 = vpop.permute.xlu0 %1596
      %1600 = vset.pattern.permute.xlu0 0
      %1601 = vperm.xlu0 %1600, %v1552
      %v1602 = vpop.permute.xlu0 %1601
      %1605 = vset.pattern.permute.xlu0 0
      %1606 = vperm.xlu0 %1605, %v1554
      %v1607 = vpop.permute.xlu0 %1606
      %1610 = vset.pattern.permute.xlu0 0
      %1611 = vperm.xlu0 %1610, %v1556
      %v1612 = vpop.permute.xlu0 %1611
      %1615 = vset.pattern.permute.xlu0 0
      %1616 = vperm.xlu0 %1615, %v1558
      %v1617 = vpop.permute.xlu0 %1616
      %1620 = vset.pattern.permute.xlu0 0
      %1621 = vperm.xlu0 %1620, %v1560
      %v1622 = vpop.permute.xlu0 %1621
      %1625 = vset.pattern.permute.xlu0 0
      %1626 = vperm.xlu0 %1625, %v1562
      %v1627 = vpop.permute.xlu0 %1626
      %1630 = vset.pattern.permute.xlu0 0
      %1631 = vperm.xlu0 %1630, %v1564
      %v1632 = vpop.permute.xlu0 %1631
      %1635 = vset.pattern.permute.xlu0 0
      %1636 = vperm.xlu0 %1635, %v1566
      %v1637 = vpop.permute.xlu0 %1636
      %1640 = vset.pattern.permute.xlu0 0
      %1641 = vperm.xlu0 %1640, %v1568
      %v1642 = vpop.permute.xlu0 %1641
      %1645 = vset.pattern.permute.xlu0 0
      %1646 = vperm.xlu0 %1645, %v1570
      %v1647 = vpop.permute.xlu0 %1646
      %1650 = vset.pattern.permute.xlu0 0
      %1651 = vperm.xlu0 %1650, %v1572
      %v1652 = vpop.permute.xlu0 %1651
      %v1654 = vperm.slane %v1573, 0
      %v1655 = vmul.f32 %v1577, %v1654
      %v1656 = vmul.f32 %v1582, %v1654
      %v1657 = vmul.f32 %v1587, %v1654
      %v1658 = vmul.f32 %v1592, %v1654
      %v1659 = vmul.f32 %v1597, %v1654
      %v1660 = vmul.f32 %v1602, %v1654
      %v1661 = vmul.f32 %v1607, %v1654
      %v1662 = vmul.f32 %v1612, %v1654
      %v1663 = vmul.f32 %v1617, %v1654
      %v1664 = vmul.f32 %v1622, %v1654
      %v1665 = vmul.f32 %v1627, %v1654
      %v1666 = vmul.f32 %v1632, %v1654
      %v1667 = vmul.f32 %v1637, %v1654
      %v1668 = vmul.f32 %v1642, %v1654
      %v1669 = vmul.f32 %v1647, %v1654
      %v1670 = vmul.f32 %v1652, %v1654
      %v1671 = vadd.f32 %v1525, %v1655
      %v1672 = vadd.f32 %v1526, %v1656
      %v1673 = vadd.f32 %v1527, %v1657
      %v1674 = vadd.f32 %v1528, %v1658
      %v1675 = vadd.f32 %v1529, %v1659
      %v1676 = vadd.f32 %v1530, %v1660
      %v1677 = vadd.f32 %v1531, %v1661
      %v1678 = vadd.f32 %v1532, %v1662
      %v1679 = vadd.f32 %v1533, %v1663
      %v1680 = vadd.f32 %v1534, %v1664
      %v1681 = vadd.f32 %v1535, %v1665
      %v1682 = vadd.f32 %v1536, %v1666
      %v1683 = vadd.f32 %v1537, %v1667
      %v1684 = vadd.f32 %v1538, %v1668
      %v1685 = vadd.f32 %v1539, %v1669
      %v1686 = vadd.f32 %v1540, %v1670
      %s1687 = scalar_lea.vmem [#allocation2], 8
      %v1688 = vld [vmem:[%s1687] ss:$5 sm:$0xff]
      %s1689 = scalar_lea.vmem [#allocation2], 48
      %v1690 = vld [vmem:[%s1689] ss:$5 sm:$0xff]
      %s1691 = scalar_lea.vmem [#allocation2], 88
      %v1692 = vld [vmem:[%s1691] ss:$5 sm:$0xff]
      %s1693 = scalar_lea.vmem [#allocation2], 128
      %v1694 = vld [vmem:[%s1693] ss:$5 sm:$0xff]
      %s1695 = scalar_lea.vmem [#allocation2], 168
      %v1696 = vld [vmem:[%s1695] ss:$5 sm:$0xff]
      %s1697 = scalar_lea.vmem [#allocation2], 208
      %v1698 = vld [vmem:[%s1697] ss:$5 sm:$0xff]
      %s1699 = scalar_lea.vmem [#allocation2], 248
      %v1700 = vld [vmem:[%s1699] ss:$5 sm:$0xff]
      %s1701 = scalar_lea.vmem [#allocation2], 288
      %v1702 = vld [vmem:[%s1701] ss:$5 sm:$0xff]
      %s1703 = scalar_lea.vmem [#allocation2], 328
      %v1704 = vld [vmem:[%s1703] ss:$5 sm:$0xff]
      %s1705 = scalar_lea.vmem [#allocation2], 368
      %v1706 = vld [vmem:[%s1705] ss:$5 sm:$0xff]
      %s1707 = scalar_lea.vmem [#allocation2], 408
      %v1708 = vld [vmem:[%s1707] ss:$5 sm:$0xff]
      %s1709 = scalar_lea.vmem [#allocation2], 448
      %v1710 = vld [vmem:[%s1709] ss:$5 sm:$0xff]
      %s1711 = scalar_lea.vmem [#allocation2], 488
      %v1712 = vld [vmem:[%s1711] ss:$5 sm:$0xff]
      %s1713 = scalar_lea.vmem [#allocation2], 528
      %v1714 = vld [vmem:[%s1713] ss:$5 sm:$0xff]
      %s1715 = scalar_lea.vmem [#allocation2], 568
      %v1716 = vld [vmem:[%s1715] ss:$5 sm:$0xff]
      %s1717 = scalar_lea.vmem [#allocation2], 608
      %v1718 = vld [vmem:[%s1717] ss:$5 sm:$0xff]
      %v1719 = vld [vmem:[%s2 + $0x8] sm:$0x1]
      %1721 = vset.pattern.permute.xlu0 0
      %1722 = vperm.xlu0 %1721, %v1688
      %v1723 = vpop.permute.xlu0 %1722
      %1726 = vset.pattern.permute.xlu0 0
      %1727 = vperm.xlu0 %1726, %v1690
      %v1728 = vpop.permute.xlu0 %1727
      %1731 = vset.pattern.permute.xlu0 0
      %1732 = vperm.xlu0 %1731, %v1692
      %v1733 = vpop.permute.xlu0 %1732
      %1736 = vset.pattern.permute.xlu0 0
      %1737 = vperm.xlu0 %1736, %v1694
      %v1738 = vpop.permute.xlu0 %1737
      %1741 = vset.pattern.permute.xlu0 0
      %1742 = vperm.xlu0 %1741, %v1696
      %v1743 = vpop.permute.xlu0 %1742
      %1746 = vset.pattern.permute.xlu0 0
      %1747 = vperm.xlu0 %1746, %v1698
      %v1748 = vpop.permute.xlu0 %1747
      %1751 = vset.pattern.permute.xlu0 0
      %1752 = vperm.xlu0 %1751, %v1700
      %v1753 = vpop.permute.xlu0 %1752
      %1756 = vset.pattern.permute.xlu0 0
      %1757 = vperm.xlu0 %1756, %v1702
      %v1758 = vpop.permute.xlu0 %1757
      %1761 = vset.pattern.permute.xlu0 0
      %1762 = vperm.xlu0 %1761, %v1704
      %v1763 = vpop.permute.xlu0 %1762
      %1766 = vset.pattern.permute.xlu0 0
      %1767 = vperm.xlu0 %1766, %v1706
      %v1768 = vpop.permute.xlu0 %1767
      %1771 = vset.pattern.permute.xlu0 0
      %1772 = vperm.xlu0 %1771, %v1708
      %v1773 = vpop.permute.xlu0 %1772
      %1776 = vset.pattern.permute.xlu0 0
      %1777 = vperm.xlu0 %1776, %v1710
      %v1778 = vpop.permute.xlu0 %1777
      %1781 = vset.pattern.permute.xlu0 0
      %1782 = vperm.xlu0 %1781, %v1712
      %v1783 = vpop.permute.xlu0 %1782
      %1786 = vset.pattern.permute.xlu0 0
      %1787 = vperm.xlu0 %1786, %v1714
      %v1788 = vpop.permute.xlu0 %1787
      %1791 = vset.pattern.permute.xlu0 0
      %1792 = vperm.xlu0 %1791, %v1716
      %v1793 = vpop.permute.xlu0 %1792
      %1796 = vset.pattern.permute.xlu0 0
      %1797 = vperm.xlu0 %1796, %v1718
      %v1798 = vpop.permute.xlu0 %1797
      %v1800 = vperm.slane %v1719, 0
      %v1801 = vmul.f32 %v1723, %v1800
      %v1802 = vmul.f32 %v1728, %v1800
      %v1803 = vmul.f32 %v1733, %v1800
      %v1804 = vmul.f32 %v1738, %v1800
      %v1805 = vmul.f32 %v1743, %v1800
      %v1806 = vmul.f32 %v1748, %v1800
      %v1807 = vmul.f32 %v1753, %v1800
      %v1808 = vmul.f32 %v1758, %v1800
      %v1809 = vmul.f32 %v1763, %v1800
      %v1810 = vmul.f32 %v1768, %v1800
      %v1811 = vmul.f32 %v1773, %v1800
      %v1812 = vmul.f32 %v1778, %v1800
      %v1813 = vmul.f32 %v1783, %v1800
      %v1814 = vmul.f32 %v1788, %v1800
      %v1815 = vmul.f32 %v1793, %v1800
      %v1816 = vmul.f32 %v1798, %v1800
      %v1817 = vadd.f32 %v1671, %v1801
      %v1818 = vadd.f32 %v1672, %v1802
      %v1819 = vadd.f32 %v1673, %v1803
      %v1820 = vadd.f32 %v1674, %v1804
      %v1821 = vadd.f32 %v1675, %v1805
      %v1822 = vadd.f32 %v1676, %v1806
      %v1823 = vadd.f32 %v1677, %v1807
      %v1824 = vadd.f32 %v1678, %v1808
      %v1825 = vadd.f32 %v1679, %v1809
      %v1826 = vadd.f32 %v1680, %v1810
      %v1827 = vadd.f32 %v1681, %v1811
      %v1828 = vadd.f32 %v1682, %v1812
      %v1829 = vadd.f32 %v1683, %v1813
      %v1830 = vadd.f32 %v1684, %v1814
      %v1831 = vadd.f32 %v1685, %v1815
      %v1832 = vadd.f32 %v1686, %v1816
      %s1833 = scalar_lea.vmem [#allocation2], 9
      %v1834 = vld [vmem:[%s1833] ss:$5 sm:$0xff]
      %s1835 = scalar_lea.vmem [#allocation2], 49
      %v1836 = vld [vmem:[%s1835] ss:$5 sm:$0xff]
      %s1837 = scalar_lea.vmem [#allocation2], 89
      %v1838 = vld [vmem:[%s1837] ss:$5 sm:$0xff]
      %s1839 = scalar_lea.vmem [#allocation2], 129
      %v1840 = vld [vmem:[%s1839] ss:$5 sm:$0xff]
      %s1841 = scalar_lea.vmem [#allocation2], 169
      %v1842 = vld [vmem:[%s1841] ss:$5 sm:$0xff]
      %s1843 = scalar_lea.vmem [#allocation2], 209
      %v1844 = vld [vmem:[%s1843] ss:$5 sm:$0xff]
      %s1845 = scalar_lea.vmem [#allocation2], 249
      %v1846 = vld [vmem:[%s1845] ss:$5 sm:$0xff]
      %s1847 = scalar_lea.vmem [#allocation2], 289
      %v1848 = vld [vmem:[%s1847] ss:$5 sm:$0xff]
      %s1849 = scalar_lea.vmem [#allocation2], 329
      %v1850 = vld [vmem:[%s1849] ss:$5 sm:$0xff]
      %s1851 = scalar_lea.vmem [#allocation2], 369
      %v1852 = vld [vmem:[%s1851] ss:$5 sm:$0xff]
      %s1853 = scalar_lea.vmem [#allocation2], 409
      %v1854 = vld [vmem:[%s1853] ss:$5 sm:$0xff]
      %s1855 = scalar_lea.vmem [#allocation2], 449
      %v1856 = vld [vmem:[%s1855] ss:$5 sm:$0xff]
      %s1857 = scalar_lea.vmem [#allocation2], 489
      %v1858 = vld [vmem:[%s1857] ss:$5 sm:$0xff]
      %s1859 = scalar_lea.vmem [#allocation2], 529
      %v1860 = vld [vmem:[%s1859] ss:$5 sm:$0xff]
      %s1861 = scalar_lea.vmem [#allocation2], 569
      %v1862 = vld [vmem:[%s1861] ss:$5 sm:$0xff]
      %s1863 = scalar_lea.vmem [#allocation2], 609
      %v1864 = vld [vmem:[%s1863] ss:$5 sm:$0xff]
      %v1865 = vld [vmem:[%s2 + $0x9] sm:$0x1]
      %1867 = vset.pattern.permute.xlu0 0
      %1868 = vperm.xlu0 %1867, %v1834
      %v1869 = vpop.permute.xlu0 %1868
      %1872 = vset.pattern.permute.xlu0 0
      %1873 = vperm.xlu0 %1872, %v1836
      %v1874 = vpop.permute.xlu0 %1873
      %1877 = vset.pattern.permute.xlu0 0
      %1878 = vperm.xlu0 %1877, %v1838
      %v1879 = vpop.permute.xlu0 %1878
      %1882 = vset.pattern.permute.xlu0 0
      %1883 = vperm.xlu0 %1882, %v1840
      %v1884 = vpop.permute.xlu0 %1883
      %1887 = vset.pattern.permute.xlu0 0
      %1888 = vperm.xlu0 %1887, %v1842
      %v1889 = vpop.permute.xlu0 %1888
      %1892 = vset.pattern.permute.xlu0 0
      %1893 = vperm.xlu0 %1892, %v1844
      %v1894 = vpop.permute.xlu0 %1893
      %1897 = vset.pattern.permute.xlu0 0
      %1898 = vperm.xlu0 %1897, %v1846
      %v1899 = vpop.permute.xlu0 %1898
      %1902 = vset.pattern.permute.xlu0 0
      %1903 = vperm.xlu0 %1902, %v1848
      %v1904 = vpop.permute.xlu0 %1903
      %1907 = vset.pattern.permute.xlu0 0
      %1908 = vperm.xlu0 %1907, %v1850
      %v1909 = vpop.permute.xlu0 %1908
      %1912 = vset.pattern.permute.xlu0 0
      %1913 = vperm.xlu0 %1912, %v1852
      %v1914 = vpop.permute.xlu0 %1913
      %1917 = vset.pattern.permute.xlu0 0
      %1918 = vperm.xlu0 %1917, %v1854
      %v1919 = vpop.permute.xlu0 %1918
      %1922 = vset.pattern.permute.xlu0 0
      %1923 = vperm.xlu0 %1922, %v1856
      %v1924 = vpop.permute.xlu0 %1923
      %1927 = vset.pattern.permute.xlu0 0
      %1928 = vperm.xlu0 %1927, %v1858
      %v1929 = vpop.permute.xlu0 %1928
      %1932 = vset.pattern.permute.xlu0 0
      %1933 = vperm.xlu0 %1932, %v1860
      %v1934 = vpop.permute.xlu0 %1933
      %1937 = vset.pattern.permute.xlu0 0
      %1938 = vperm.xlu0 %1937, %v1862
      %v1939 = vpop.permute.xlu0 %1938
      %1942 = vset.pattern.permute.xlu0 0
      %1943 = vperm.xlu0 %1942, %v1864
      %v1944 = vpop.permute.xlu0 %1943
      %v1946 = vperm.slane %v1865, 0
      %v1947 = vmul.f32 %v1869, %v1946
      %v1948 = vmul.f32 %v1874, %v1946
      %v1949 = vmul.f32 %v1879, %v1946
      %v1950 = vmul.f32 %v1884, %v1946
      %v1951 = vmul.f32 %v1889, %v1946
      %v1952 = vmul.f32 %v1894, %v1946
      %v1953 = vmul.f32 %v1899, %v1946
      %v1954 = vmul.f32 %v1904, %v1946
      %v1955 = vmul.f32 %v1909, %v1946
      %v1956 = vmul.f32 %v1914, %v1946
      %v1957 = vmul.f32 %v1919, %v1946
      %v1958 = vmul.f32 %v1924, %v1946
      %v1959 = vmul.f32 %v1929, %v1946
      %v1960 = vmul.f32 %v1934, %v1946
      %v1961 = vmul.f32 %v1939, %v1946
      %v1962 = vmul.f32 %v1944, %v1946
      %v1963 = vadd.f32 %v1817, %v1947
      %v1964 = vadd.f32 %v1818, %v1948
      %v1965 = vadd.f32 %v1819, %v1949
      %v1966 = vadd.f32 %v1820, %v1950
      %v1967 = vadd.f32 %v1821, %v1951
      %v1968 = vadd.f32 %v1822, %v1952
      %v1969 = vadd.f32 %v1823, %v1953
      %v1970 = vadd.f32 %v1824, %v1954
      %v1971 = vadd.f32 %v1825, %v1955
      %v1972 = vadd.f32 %v1826, %v1956
      %v1973 = vadd.f32 %v1827, %v1957
      %v1974 = vadd.f32 %v1828, %v1958
      %v1975 = vadd.f32 %v1829, %v1959
      %v1976 = vadd.f32 %v1830, %v1960
      %v1977 = vadd.f32 %v1831, %v1961
      %v1978 = vadd.f32 %v1832, %v1962
      %v1979 = vld [vmem:[%s343] sm:$0x1]
      %v1981 = vperm.slane %v1979, 0
      %v1983 = vmul.f32 %v1963, %v1981
      %v1984 = vmul.f32 %v1964, %v1981
      %v1985 = vmul.f32 %v1965, %v1981
      %v1986 = vmul.f32 %v1966, %v1981
      %v1987 = vmul.f32 %v1967, %v1981
      %v1988 = vmul.f32 %v1968, %v1981
      %v1989 = vmul.f32 %v1969, %v1981
      %v1990 = vmul.f32 %v1970, %v1981
      %v1991 = vmul.f32 %v1971, %v1981
      %v1992 = vmul.f32 %v1972, %v1981
      %v1993 = vmul.f32 %v1973, %v1981
      %v1994 = vmul.f32 %v1974, %v1981
      %v1995 = vmul.f32 %v1975, %v1981
      %v1996 = vmul.f32 %v1976, %v1981
      %v1997 = vmul.f32 %v1977, %v1981
      %v1998 = vmul.f32 %v1978, %v1981
      %v1999 = vld [vmem:[%s346] sm:$0x1]
      %v2001 = vperm.slane %v1999, 0
      %v2003 = vadd.f32 %v1983, %v2001
      %v2004 = vadd.f32 %v1984, %v2001
      %v2005 = vadd.f32 %v1985, %v2001
      %v2006 = vadd.f32 %v1986, %v2001
      %v2007 = vadd.f32 %v1987, %v2001
      %v2008 = vadd.f32 %v1988, %v2001
      %v2009 = vadd.f32 %v1989, %v2001
      %v2010 = vadd.f32 %v1990, %v2001
      %v2011 = vadd.f32 %v1991, %v2001
      %v2012 = vadd.f32 %v1992, %v2001
      %v2013 = vadd.f32 %v1993, %v2001
      %v2014 = vadd.f32 %v1994, %v2001
      %v2015 = vadd.f32 %v1995, %v2001
      %v2016 = vadd.f32 %v1996, %v2001
      %v2017 = vadd.f32 %v1997, %v2001
      %v2018 = vadd.f32 %v1998, %v2001
      %v2019 = vmul.f32 %v2003, 0.5
      %v2020 = vmul.f32 %v2004, 0.5
      %v2021 = vmul.f32 %v2005, 0.5
      %v2022 = vmul.f32 %v2006, 0.5
      %v2023 = vmul.f32 %v2007, 0.5
      %v2024 = vmul.f32 %v2008, 0.5
      %v2025 = vmul.f32 %v2009, 0.5
      %v2026 = vmul.f32 %v2010, 0.5
      %v2027 = vmul.f32 %v2011, 0.5
      %v2028 = vmul.f32 %v2012, 0.5
      %v2029 = vmul.f32 %v2013, 0.5
      %v2030 = vmul.f32 %v2014, 0.5
      %v2031 = vmul.f32 %v2015, 0.5
      %v2032 = vmul.f32 %v2016, 0.5
      %v2033 = vmul.f32 %v2017, 0.5
      %v2034 = vmul.f32 %v2018, 0.5
      %v2035 = vmul.f32 %v2003, 0.70710677
      %v2036 = vmul.f32 %v2004, 0.70710677
      %v2037 = vmul.f32 %v2005, 0.70710677
      %v2038 = vmul.f32 %v2006, 0.70710677
      %v2039 = vmul.f32 %v2007, 0.70710677
      %v2040 = vmul.f32 %v2008, 0.70710677
      %v2041 = vmul.f32 %v2009, 0.70710677
      %v2042 = vmul.f32 %v2010, 0.70710677
      %v2043 = vmul.f32 %v2011, 0.70710677
      %v2044 = vmul.f32 %v2012, 0.70710677
      %v2045 = vmul.f32 %v2013, 0.70710677
      %v2046 = vmul.f32 %v2014, 0.70710677
      %v2047 = vmul.f32 %v2015, 0.70710677
      %v2048 = vmul.f32 %v2016, 0.70710677
      %v2049 = vmul.f32 %v2017, 0.70710677
      %v2050 = vmul.f32 %v2018, 0.70710677
      %v2051 = vmul.f32 %v2035, %v2035
      %v2052 = vmin.f32 16.0, %v2051
      %v2053 = vmul.f32 %v2052, 2.1237322e-06
      %v2054 = vadd.f32 %v2053, 0.00028619796
      %v2055 = vmul.f32 %v2052, %v2054
      %v2056 = vadd.f32 %v2055, 0.0036580483
      %v2057 = vmul.f32 %v2052, %v2056
      %v2058 = vadd.f32 %v2057, 0.05243302
      %v2059 = vmul.f32 %v2052, %v2058
      %v2060 = vadd.f32 %v2059, 0.18741608
      %v2061 = vmul.f32 %v2052, %v2060
      %v2062 = vadd.f32 %v2061, 1.1283791
      %v2063 = vmul.f32 %v2035, %v2062
      %v2064 = vmul.f32 %v2052, 3.8918573e-05
      %v2065 = vadd.f32 %v2064, 0.001143296
      %v2066 = vmul.f32 %v2052, %v2065
      %v2067 = vadd.f32 %v2066, 0.014752088
      %v2068 = vmul.f32 %v2052, %v2067
      %v2069 = vadd.f32 %v2068, 0.112945676
      %v2070 = vmul.f32 %v2052, %v2069
      %v2071 = vadd.f32 %v2070, 0.4994258
      %v2072 = vmul.f32 %v2052, %v2071
      %v2073 = vadd.f32 %v2072, 1.0
      %v2074 = vrcp.pop %v2073
      %v2075 = vmul.f32 %v2073, %v2074
      %v2076 = vsub.f32 1.0, %v2075
      %v2077 = vmul.f32 %v2074, %v2076
      %v2078 = vadd.f32 %v2074, %v2077
      %vm2079 = vweird.f32 %v2073
      %vm2080 = vweird.f32 %v2074
      %vm2081 = vmor %vm2079, %vm2080
      %v2082 = vsel %vm2081, %v2074, %v2078
      %v2083 = vand.u32 2147483647, %v2073
      %vm2084 = vcmp.eq.f32.partialorder %v2083, 8.507059e+37
      %v2085 = vand.u32 %v2073, 2147483648
      %v2086 = vor.u32 1.1754944e-38, %v2085
      %v2087 = vsel %vm2084, %v2086, %v2082
      %v2088 = vmul.f32 %v2063, %v2087
      %v2089 = vmin.f32 %v2088, 1.0
      %v2090 = vmax.f32 %v2089, -1.0
      %v2091 = vmul.f32 %v2036, %v2036
      %v2092 = vmin.f32 16.0, %v2091
      %v2093 = vmul.f32 %v2092, 2.1237322e-06
      %v2094 = vadd.f32 %v2093, 0.00028619796
      %v2095 = vmul.f32 %v2092, %v2094
      %v2096 = vadd.f32 %v2095, 0.0036580483
      %v2097 = vmul.f32 %v2092, %v2096
      %v2098 = vadd.f32 %v2097, 0.05243302
      %v2099 = vmul.f32 %v2092, %v2098
      %v2100 = vadd.f32 %v2099, 0.18741608
      %v2101 = vmul.f32 %v2092, %v2100
      %v2102 = vadd.f32 %v2101, 1.1283791
      %v2103 = vmul.f32 %v2036, %v2102
      %v2104 = vmul.f32 %v2092, 3.8918573e-05
      %v2105 = vadd.f32 %v2104, 0.001143296
      %v2106 = vmul.f32 %v2092, %v2105
      %v2107 = vadd.f32 %v2106, 0.014752088
      %v2108 = vmul.f32 %v2092, %v2107
      %v2109 = vadd.f32 %v2108, 0.112945676
      %v2110 = vmul.f32 %v2092, %v2109
      %v2111 = vadd.f32 %v2110, 0.4994258
      %v2112 = vmul.f32 %v2092, %v2111
      %v2113 = vadd.f32 %v2112, 1.0
      %v2114 = vrcp.pop %v2113
      %v2115 = vmul.f32 %v2113, %v2114
      %v2116 = vsub.f32 1.0, %v2115
      %v2117 = vmul.f32 %v2114, %v2116
      %v2118 = vadd.f32 %v2114, %v2117
      %vm2119 = vweird.f32 %v2113
      %vm2120 = vweird.f32 %v2114
      %vm2121 = vmor %vm2119, %vm2120
      %v2122 = vsel %vm2121, %v2114, %v2118
      %v2123 = vand.u32 2147483647, %v2113
      %vm2124 = vcmp.eq.f32.partialorder %v2123, 8.507059e+37
      %v2125 = vand.u32 %v2113, 2147483648
      %v2126 = vor.u32 1.1754944e-38, %v2125
      %v2127 = vsel %vm2124, %v2126, %v2122
      %v2128 = vmul.f32 %v2103, %v2127
      %v2129 = vmin.f32 %v2128, 1.0
      %v2130 = vmax.f32 %v2129, -1.0
      %v2131 = vmul.f32 %v2037, %v2037
      %v2132 = vmin.f32 16.0, %v2131
      %v2133 = vmul.f32 %v2132, 2.1237322e-06
      %v2134 = vadd.f32 %v2133, 0.00028619796
      %v2135 = vmul.f32 %v2132, %v2134
      %v2136 = vadd.f32 %v2135, 0.0036580483
      %v2137 = vmul.f32 %v2132, %v2136
      %v2138 = vadd.f32 %v2137, 0.05243302
      %v2139 = vmul.f32 %v2132, %v2138
      %v2140 = vadd.f32 %v2139, 0.18741608
      %v2141 = vmul.f32 %v2132, %v2140
      %v2142 = vadd.f32 %v2141, 1.1283791
      %v2143 = vmul.f32 %v2037, %v2142
      %v2144 = vmul.f32 %v2132, 3.8918573e-05
      %v2145 = vadd.f32 %v2144, 0.001143296
      %v2146 = vmul.f32 %v2132, %v2145
      %v2147 = vadd.f32 %v2146, 0.014752088
      %v2148 = vmul.f32 %v2132, %v2147
      %v2149 = vadd.f32 %v2148, 0.112945676
      %v2150 = vmul.f32 %v2132, %v2149
      %v2151 = vadd.f32 %v2150, 0.4994258
      %v2152 = vmul.f32 %v2132, %v2151
      %v2153 = vadd.f32 %v2152, 1.0
      %v2154 = vrcp.pop %v2153
      %v2155 = vmul.f32 %v2153, %v2154
      %v2156 = vsub.f32 1.0, %v2155
      %v2157 = vmul.f32 %v2154, %v2156
      %v2158 = vadd.f32 %v2154, %v2157
      %vm2159 = vweird.f32 %v2153
      %vm2160 = vweird.f32 %v2154
      %vm2161 = vmor %vm2159, %vm2160
      %v2162 = vsel %vm2161, %v2154, %v2158
      %v2163 = vand.u32 2147483647, %v2153
      %vm2164 = vcmp.eq.f32.partialorder %v2163, 8.507059e+37
      %v2165 = vand.u32 %v2153, 2147483648
      %v2166 = vor.u32 1.1754944e-38, %v2165
      %v2167 = vsel %vm2164, %v2166, %v2162
      %v2168 = vmul.f32 %v2143, %v2167
      %v2169 = vmin.f32 %v2168, 1.0
      %v2170 = vmax.f32 %v2169, -1.0
      %v2171 = vmul.f32 %v2038, %v2038
      %v2172 = vmin.f32 16.0, %v2171
      %v2173 = vmul.f32 %v2172, 2.1237322e-06
      %v2174 = vadd.f32 %v2173, 0.00028619796
      %v2175 = vmul.f32 %v2172, %v2174
      %v2176 = vadd.f32 %v2175, 0.0036580483
      %v2177 = vmul.f32 %v2172, %v2176
      %v2178 = vadd.f32 %v2177, 0.05243302
      %v2179 = vmul.f32 %v2172, %v2178
      %v2180 = vadd.f32 %v2179, 0.18741608
      %v2181 = vmul.f32 %v2172, %v2180
      %v2182 = vadd.f32 %v2181, 1.1283791
      %v2183 = vmul.f32 %v2038, %v2182
      %v2184 = vmul.f32 %v2172, 3.8918573e-05
      %v2185 = vadd.f32 %v2184, 0.001143296
      %v2186 = vmul.f32 %v2172, %v2185
      %v2187 = vadd.f32 %v2186, 0.014752088
      %v2188 = vmul.f32 %v2172, %v2187
      %v2189 = vadd.f32 %v2188, 0.112945676
      %v2190 = vmul.f32 %v2172, %v2189
      %v2191 = vadd.f32 %v2190, 0.4994258
      %v2192 = vmul.f32 %v2172, %v2191
      %v2193 = vadd.f32 %v2192, 1.0
      %v2194 = vrcp.pop %v2193
      %v2195 = vmul.f32 %v2193, %v2194
      %v2196 = vsub.f32 1.0, %v2195
      %v2197 = vmul.f32 %v2194, %v2196
      %v2198 = vadd.f32 %v2194, %v2197
      %vm2199 = vweird.f32 %v2193
      %vm2200 = vweird.f32 %v2194
      %vm2201 = vmor %vm2199, %vm2200
      %v2202 = vsel %vm2201, %v2194, %v2198
      %v2203 = vand.u32 2147483647, %v2193
      %vm2204 = vcmp.eq.f32.partialorder %v2203, 8.507059e+37
      %v2205 = vand.u32 %v2193, 2147483648
      %v2206 = vor.u32 1.1754944e-38, %v2205
      %v2207 = vsel %vm2204, %v2206, %v2202
      %v2208 = vmul.f32 %v2183, %v2207
      %v2209 = vmin.f32 %v2208, 1.0
      %v2210 = vmax.f32 %v2209, -1.0
      %v2211 = vmul.f32 %v2039, %v2039
      %v2212 = vmin.f32 16.0, %v2211
      %v2213 = vmul.f32 %v2212, 2.1237322e-06
      %v2214 = vadd.f32 %v2213, 0.00028619796
      %v2215 = vmul.f32 %v2212, %v2214
      %v2216 = vadd.f32 %v2215, 0.0036580483
      %v2217 = vmul.f32 %v2212, %v2216
      %v2218 = vadd.f32 %v2217, 0.05243302
      %v2219 = vmul.f32 %v2212, %v2218
      %v2220 = vadd.f32 %v2219, 0.18741608
      %v2221 = vmul.f32 %v2212, %v2220
      %v2222 = vadd.f32 %v2221, 1.1283791
      %v2223 = vmul.f32 %v2039, %v2222
      %v2224 = vmul.f32 %v2212, 3.8918573e-05
      %v2225 = vadd.f32 %v2224, 0.001143296
      %v2226 = vmul.f32 %v2212, %v2225
      %v2227 = vadd.f32 %v2226, 0.014752088
      %v2228 = vmul.f32 %v2212, %v2227
      %v2229 = vadd.f32 %v2228, 0.112945676
      %v2230 = vmul.f32 %v2212, %v2229
      %v2231 = vadd.f32 %v2230, 0.4994258
      %v2232 = vmul.f32 %v2212, %v2231
      %v2233 = vadd.f32 %v2232, 1.0
      %v2234 = vrcp.pop %v2233
      %v2235 = vmul.f32 %v2233, %v2234
      %v2236 = vsub.f32 1.0, %v2235
      %v2237 = vmul.f32 %v2234, %v2236
      %v2238 = vadd.f32 %v2234, %v2237
      %vm2239 = vweird.f32 %v2233
      %vm2240 = vweird.f32 %v2234
      %vm2241 = vmor %vm2239, %vm2240
      %v2242 = vsel %vm2241, %v2234, %v2238
      %v2243 = vand.u32 2147483647, %v2233
      %vm2244 = vcmp.eq.f32.partialorder %v2243, 8.507059e+37
      %v2245 = vand.u32 %v2233, 2147483648
      %v2246 = vor.u32 1.1754944e-38, %v2245
      %v2247 = vsel %vm2244, %v2246, %v2242
      %v2248 = vmul.f32 %v2223, %v2247
      %v2249 = vmin.f32 %v2248, 1.0
      %v2250 = vmax.f32 %v2249, -1.0
      %v2251 = vmul.f32 %v2040, %v2040
      %v2252 = vmin.f32 16.0, %v2251
      %v2253 = vmul.f32 %v2252, 2.1237322e-06
      %v2254 = vadd.f32 %v2253, 0.00028619796
      %v2255 = vmul.f32 %v2252, %v2254
      %v2256 = vadd.f32 %v2255, 0.0036580483
      %v2257 = vmul.f32 %v2252, %v2256
      %v2258 = vadd.f32 %v2257, 0.05243302
      %v2259 = vmul.f32 %v2252, %v2258
      %v2260 = vadd.f32 %v2259, 0.18741608
      %v2261 = vmul.f32 %v2252, %v2260
      %v2262 = vadd.f32 %v2261, 1.1283791
      %v2263 = vmul.f32 %v2040, %v2262
      %v2264 = vmul.f32 %v2252, 3.8918573e-05
      %v2265 = vadd.f32 %v2264, 0.001143296
      %v2266 = vmul.f32 %v2252, %v2265
      %v2267 = vadd.f32 %v2266, 0.014752088
      %v2268 = vmul.f32 %v2252, %v2267
      %v2269 = vadd.f32 %v2268, 0.112945676
      %v2270 = vmul.f32 %v2252, %v2269
      %v2271 = vadd.f32 %v2270, 0.4994258
      %v2272 = vmul.f32 %v2252, %v2271
      %v2273 = vadd.f32 %v2272, 1.0
      %v2274 = vrcp.pop %v2273
      %v2275 = vmul.f32 %v2273, %v2274
      %v2276 = vsub.f32 1.0, %v2275
      %v2277 = vmul.f32 %v2274, %v2276
      %v2278 = vadd.f32 %v2274, %v2277
      %vm2279 = vweird.f32 %v2273
      %vm2280 = vweird.f32 %v2274
      %vm2281 = vmor %vm2279, %vm2280
      %v2282 = vsel %vm2281, %v2274, %v2278
      %v2283 = vand.u32 2147483647, %v2273
      %vm2284 = vcmp.eq.f32.partialorder %v2283, 8.507059e+37
      %v2285 = vand.u32 %v2273, 2147483648
      %v2286 = vor.u32 1.1754944e-38, %v2285
      %v2287 = vsel %vm2284, %v2286, %v2282
      %v2288 = vmul.f32 %v2263, %v2287
      %v2289 = vmin.f32 %v2288, 1.0
      %v2290 = vmax.f32 %v2289, -1.0
      %v2291 = vmul.f32 %v2041, %v2041
      %v2292 = vmin.f32 16.0, %v2291
      %v2293 = vmul.f32 %v2292, 2.1237322e-06
      %v2294 = vadd.f32 %v2293, 0.00028619796
      %v2295 = vmul.f32 %v2292, %v2294
      %v2296 = vadd.f32 %v2295, 0.0036580483
      %v2297 = vmul.f32 %v2292, %v2296
      %v2298 = vadd.f32 %v2297, 0.05243302
      %v2299 = vmul.f32 %v2292, %v2298
      %v2300 = vadd.f32 %v2299, 0.18741608
      %v2301 = vmul.f32 %v2292, %v2300
      %v2302 = vadd.f32 %v2301, 1.1283791
      %v2303 = vmul.f32 %v2041, %v2302
      %v2304 = vmul.f32 %v2292, 3.8918573e-05
      %v2305 = vadd.f32 %v2304, 0.001143296
      %v2306 = vmul.f32 %v2292, %v2305
      %v2307 = vadd.f32 %v2306, 0.014752088
      %v2308 = vmul.f32 %v2292, %v2307
      %v2309 = vadd.f32 %v2308, 0.112945676
      %v2310 = vmul.f32 %v2292, %v2309
      %v2311 = vadd.f32 %v2310, 0.4994258
      %v2312 = vmul.f32 %v2292, %v2311
      %v2313 = vadd.f32 %v2312, 1.0
      %v2314 = vrcp.pop %v2313
      %v2315 = vmul.f32 %v2313, %v2314
      %v2316 = vsub.f32 1.0, %v2315
      %v2317 = vmul.f32 %v2314, %v2316
      %v2318 = vadd.f32 %v2314, %v2317
      %vm2319 = vweird.f32 %v2313
      %vm2320 = vweird.f32 %v2314
      %vm2321 = vmor %vm2319, %vm2320
      %v2322 = vsel %vm2321, %v2314, %v2318
      %v2323 = vand.u32 2147483647, %v2313
      %vm2324 = vcmp.eq.f32.partialorder %v2323, 8.507059e+37
      %v2325 = vand.u32 %v2313, 2147483648
      %v2326 = vor.u32 1.1754944e-38, %v2325
      %v2327 = vsel %vm2324, %v2326, %v2322
      %v2328 = vmul.f32 %v2303, %v2327
      %v2329 = vmin.f32 %v2328, 1.0
      %v2330 = vmax.f32 %v2329, -1.0
      %v2331 = vmul.f32 %v2042, %v2042
      %v2332 = vmin.f32 16.0, %v2331
      %v2333 = vmul.f32 %v2332, 2.1237322e-06
      %v2334 = vadd.f32 %v2333, 0.00028619796
      %v2335 = vmul.f32 %v2332, %v2334
      %v2336 = vadd.f32 %v2335, 0.0036580483
      %v2337 = vmul.f32 %v2332, %v2336
      %v2338 = vadd.f32 %v2337, 0.05243302
      %v2339 = vmul.f32 %v2332, %v2338
      %v2340 = vadd.f32 %v2339, 0.18741608
      %v2341 = vmul.f32 %v2332, %v2340
      %v2342 = vadd.f32 %v2341, 1.1283791
      %v2343 = vmul.f32 %v2042, %v2342
      %v2344 = vmul.f32 %v2332, 3.8918573e-05
      %v2345 = vadd.f32 %v2344, 0.001143296
      %v2346 = vmul.f32 %v2332, %v2345
      %v2347 = vadd.f32 %v2346, 0.014752088
      %v2348 = vmul.f32 %v2332, %v2347
      %v2349 = vadd.f32 %v2348, 0.112945676
      %v2350 = vmul.f32 %v2332, %v2349
      %v2351 = vadd.f32 %v2350, 0.4994258
      %v2352 = vmul.f32 %v2332, %v2351
      %v2353 = vadd.f32 %v2352, 1.0
      %v2354 = vrcp.pop %v2353
      %v2355 = vmul.f32 %v2353, %v2354
      %v2356 = vsub.f32 1.0, %v2355
      %v2357 = vmul.f32 %v2354, %v2356
      %v2358 = vadd.f32 %v2354, %v2357
      %vm2359 = vweird.f32 %v2353
      %vm2360 = vweird.f32 %v2354
      %vm2361 = vmor %vm2359, %vm2360
      %v2362 = vsel %vm2361, %v2354, %v2358
      %v2363 = vand.u32 2147483647, %v2353
      %vm2364 = vcmp.eq.f32.partialorder %v2363, 8.507059e+37
      %v2365 = vand.u32 %v2353, 2147483648
      %v2366 = vor.u32 1.1754944e-38, %v2365
      %v2367 = vsel %vm2364, %v2366, %v2362
      %v2368 = vmul.f32 %v2343, %v2367
      %v2369 = vmin.f32 %v2368, 1.0
      %v2370 = vmax.f32 %v2369, -1.0
      %v2371 = vmul.f32 %v2043, %v2043
      %v2372 = vmin.f32 16.0, %v2371
      %v2373 = vmul.f32 %v2372, 2.1237322e-06
      %v2374 = vadd.f32 %v2373, 0.00028619796
      %v2375 = vmul.f32 %v2372, %v2374
      %v2376 = vadd.f32 %v2375, 0.0036580483
      %v2377 = vmul.f32 %v2372, %v2376
      %v2378 = vadd.f32 %v2377, 0.05243302
      %v2379 = vmul.f32 %v2372, %v2378
      %v2380 = vadd.f32 %v2379, 0.18741608
      %v2381 = vmul.f32 %v2372, %v2380
      %v2382 = vadd.f32 %v2381, 1.1283791
      %v2383 = vmul.f32 %v2043, %v2382
      %v2384 = vmul.f32 %v2372, 3.8918573e-05
      %v2385 = vadd.f32 %v2384, 0.001143296
      %v2386 = vmul.f32 %v2372, %v2385
      %v2387 = vadd.f32 %v2386, 0.014752088
      %v2388 = vmul.f32 %v2372, %v2387
      %v2389 = vadd.f32 %v2388, 0.112945676
      %v2390 = vmul.f32 %v2372, %v2389
      %v2391 = vadd.f32 %v2390, 0.4994258
      %v2392 = vmul.f32 %v2372, %v2391
      %v2393 = vadd.f32 %v2392, 1.0
      %v2394 = vrcp.pop %v2393
      %v2395 = vmul.f32 %v2393, %v2394
      %v2396 = vsub.f32 1.0, %v2395
      %v2397 = vmul.f32 %v2394, %v2396
      %v2398 = vadd.f32 %v2394, %v2397
      %vm2399 = vweird.f32 %v2393
      %vm2400 = vweird.f32 %v2394
      %vm2401 = vmor %vm2399, %vm2400
      %v2402 = vsel %vm2401, %v2394, %v2398
      %v2403 = vand.u32 2147483647, %v2393
      %vm2404 = vcmp.eq.f32.partialorder %v2403, 8.507059e+37
      %v2405 = vand.u32 %v2393, 2147483648
      %v2406 = vor.u32 1.1754944e-38, %v2405
      %v2407 = vsel %vm2404, %v2406, %v2402
      %v2408 = vmul.f32 %v2383, %v2407
      %v2409 = vmin.f32 %v2408, 1.0
      %v2410 = vmax.f32 %v2409, -1.0
      %v2411 = vmul.f32 %v2044, %v2044
      %v2412 = vmin.f32 16.0, %v2411
      %v2413 = vmul.f32 %v2412, 2.1237322e-06
      %v2414 = vadd.f32 %v2413, 0.00028619796
      %v2415 = vmul.f32 %v2412, %v2414
      %v2416 = vadd.f32 %v2415, 0.0036580483
      %v2417 = vmul.f32 %v2412, %v2416
      %v2418 = vadd.f32 %v2417, 0.05243302
      %v2419 = vmul.f32 %v2412, %v2418
      %v2420 = vadd.f32 %v2419, 0.18741608
      %v2421 = vmul.f32 %v2412, %v2420
      %v2422 = vadd.f32 %v2421, 1.1283791
      %v2423 = vmul.f32 %v2044, %v2422
      %v2424 = vmul.f32 %v2412, 3.8918573e-05
      %v2425 = vadd.f32 %v2424, 0.001143296
      %v2426 = vmul.f32 %v2412, %v2425
      %v2427 = vadd.f32 %v2426, 0.014752088
      %v2428 = vmul.f32 %v2412, %v2427
      %v2429 = vadd.f32 %v2428, 0.112945676
      %v2430 = vmul.f32 %v2412, %v2429
      %v2431 = vadd.f32 %v2430, 0.4994258
      %v2432 = vmul.f32 %v2412, %v2431
      %v2433 = vadd.f32 %v2432, 1.0
      %v2434 = vrcp.pop %v2433
      %v2435 = vmul.f32 %v2433, %v2434
      %v2436 = vsub.f32 1.0, %v2435
      %v2437 = vmul.f32 %v2434, %v2436
      %v2438 = vadd.f32 %v2434, %v2437
      %vm2439 = vweird.f32 %v2433
      %vm2440 = vweird.f32 %v2434
      %vm2441 = vmor %vm2439, %vm2440
      %v2442 = vsel %vm2441, %v2434, %v2438
      %v2443 = vand.u32 2147483647, %v2433
      %vm2444 = vcmp.eq.f32.partialorder %v2443, 8.507059e+37
      %v2445 = vand.u32 %v2433, 2147483648
      %v2446 = vor.u32 1.1754944e-38, %v2445
      %v2447 = vsel %vm2444, %v2446, %v2442
      %v2448 = vmul.f32 %v2423, %v2447
      %v2449 = vmin.f32 %v2448, 1.0
      %v2450 = vmax.f32 %v2449, -1.0
      %v2451 = vmul.f32 %v2045, %v2045
      %v2452 = vmin.f32 16.0, %v2451
      %v2453 = vmul.f32 %v2452, 2.1237322e-06
      %v2454 = vadd.f32 %v2453, 0.00028619796
      %v2455 = vmul.f32 %v2452, %v2454
      %v2456 = vadd.f32 %v2455, 0.0036580483
      %v2457 = vmul.f32 %v2452, %v2456
      %v2458 = vadd.f32 %v2457, 0.05243302
      %v2459 = vmul.f32 %v2452, %v2458
      %v2460 = vadd.f32 %v2459, 0.18741608
      %v2461 = vmul.f32 %v2452, %v2460
      %v2462 = vadd.f32 %v2461, 1.1283791
      %v2463 = vmul.f32 %v2045, %v2462
      %v2464 = vmul.f32 %v2452, 3.8918573e-05
      %v2465 = vadd.f32 %v2464, 0.001143296
      %v2466 = vmul.f32 %v2452, %v2465
      %v2467 = vadd.f32 %v2466, 0.014752088
      %v2468 = vmul.f32 %v2452, %v2467
      %v2469 = vadd.f32 %v2468, 0.112945676
      %v2470 = vmul.f32 %v2452, %v2469
      %v2471 = vadd.f32 %v2470, 0.4994258
      %v2472 = vmul.f32 %v2452, %v2471
      %v2473 = vadd.f32 %v2472, 1.0
      %v2474 = vrcp.pop %v2473
      %v2475 = vmul.f32 %v2473, %v2474
      %v2476 = vsub.f32 1.0, %v2475
      %v2477 = vmul.f32 %v2474, %v2476
      %v2478 = vadd.f32 %v2474, %v2477
      %vm2479 = vweird.f32 %v2473
      %vm2480 = vweird.f32 %v2474
      %vm2481 = vmor %vm2479, %vm2480
      %v2482 = vsel %vm2481, %v2474, %v2478
      %v2483 = vand.u32 2147483647, %v2473
      %vm2484 = vcmp.eq.f32.partialorder %v2483, 8.507059e+37
      %v2485 = vand.u32 %v2473, 2147483648
      %v2486 = vor.u32 1.1754944e-38, %v2485
      %v2487 = vsel %vm2484, %v2486, %v2482
      %v2488 = vmul.f32 %v2463, %v2487
      %v2489 = vmin.f32 %v2488, 1.0
      %v2490 = vmax.f32 %v2489, -1.0
      %v2491 = vmul.f32 %v2046, %v2046
      %v2492 = vmin.f32 16.0, %v2491
      %v2493 = vmul.f32 %v2492, 2.1237322e-06
      %v2494 = vadd.f32 %v2493, 0.00028619796
      %v2495 = vmul.f32 %v2492, %v2494
      %v2496 = vadd.f32 %v2495, 0.0036580483
      %v2497 = vmul.f32 %v2492, %v2496
      %v2498 = vadd.f32 %v2497, 0.05243302
      %v2499 = vmul.f32 %v2492, %v2498
      %v2500 = vadd.f32 %v2499, 0.18741608
      %v2501 = vmul.f32 %v2492, %v2500
      %v2502 = vadd.f32 %v2501, 1.1283791
      %v2503 = vmul.f32 %v2046, %v2502
      %v2504 = vmul.f32 %v2492, 3.8918573e-05
      %v2505 = vadd.f32 %v2504, 0.001143296
      %v2506 = vmul.f32 %v2492, %v2505
      %v2507 = vadd.f32 %v2506, 0.014752088
      %v2508 = vmul.f32 %v2492, %v2507
      %v2509 = vadd.f32 %v2508, 0.112945676
      %v2510 = vmul.f32 %v2492, %v2509
      %v2511 = vadd.f32 %v2510, 0.4994258
      %v2512 = vmul.f32 %v2492, %v2511
      %v2513 = vadd.f32 %v2512, 1.0
      %v2514 = vrcp.pop %v2513
      %v2515 = vmul.f32 %v2513, %v2514
      %v2516 = vsub.f32 1.0, %v2515
      %v2517 = vmul.f32 %v2514, %v2516
      %v2518 = vadd.f32 %v2514, %v2517
      %vm2519 = vweird.f32 %v2513
      %vm2520 = vweird.f32 %v2514
      %vm2521 = vmor %vm2519, %vm2520
      %v2522 = vsel %vm2521, %v2514, %v2518
      %v2523 = vand.u32 2147483647, %v2513
      %vm2524 = vcmp.eq.f32.partialorder %v2523, 8.507059e+37
      %v2525 = vand.u32 %v2513, 2147483648
      %v2526 = vor.u32 1.1754944e-38, %v2525
      %v2527 = vsel %vm2524, %v2526, %v2522
      %v2528 = vmul.f32 %v2503, %v2527
      %v2529 = vmin.f32 %v2528, 1.0
      %v2530 = vmax.f32 %v2529, -1.0
      %v2531 = vmul.f32 %v2047, %v2047
      %v2532 = vmin.f32 16.0, %v2531
      %v2533 = vmul.f32 %v2532, 2.1237322e-06
      %v2534 = vadd.f32 %v2533, 0.00028619796
      %v2535 = vmul.f32 %v2532, %v2534
      %v2536 = vadd.f32 %v2535, 0.0036580483
      %v2537 = vmul.f32 %v2532, %v2536
      %v2538 = vadd.f32 %v2537, 0.05243302
      %v2539 = vmul.f32 %v2532, %v2538
      %v2540 = vadd.f32 %v2539, 0.18741608
      %v2541 = vmul.f32 %v2532, %v2540
      %v2542 = vadd.f32 %v2541, 1.1283791
      %v2543 = vmul.f32 %v2047, %v2542
      %v2544 = vmul.f32 %v2532, 3.8918573e-05
      %v2545 = vadd.f32 %v2544, 0.001143296
      %v2546 = vmul.f32 %v2532, %v2545
      %v2547 = vadd.f32 %v2546, 0.014752088
      %v2548 = vmul.f32 %v2532, %v2547
      %v2549 = vadd.f32 %v2548, 0.112945676
      %v2550 = vmul.f32 %v2532, %v2549
      %v2551 = vadd.f32 %v2550, 0.4994258
      %v2552 = vmul.f32 %v2532, %v2551
      %v2553 = vadd.f32 %v2552, 1.0
      %v2554 = vrcp.pop %v2553
      %v2555 = vmul.f32 %v2553, %v2554
      %v2556 = vsub.f32 1.0, %v2555
      %v2557 = vmul.f32 %v2554, %v2556
      %v2558 = vadd.f32 %v2554, %v2557
      %vm2559 = vweird.f32 %v2553
      %vm2560 = vweird.f32 %v2554
      %vm2561 = vmor %vm2559, %vm2560
      %v2562 = vsel %vm2561, %v2554, %v2558
      %v2563 = vand.u32 2147483647, %v2553
      %vm2564 = vcmp.eq.f32.partialorder %v2563, 8.507059e+37
      %v2565 = vand.u32 %v2553, 2147483648
      %v2566 = vor.u32 1.1754944e-38, %v2565
      %v2567 = vsel %vm2564, %v2566, %v2562
      %v2568 = vmul.f32 %v2543, %v2567
      %v2569 = vmin.f32 %v2568, 1.0
      %v2570 = vmax.f32 %v2569, -1.0
      %v2571 = vmul.f32 %v2048, %v2048
      %v2572 = vmin.f32 16.0, %v2571
      %v2573 = vmul.f32 %v2572, 2.1237322e-06
      %v2574 = vadd.f32 %v2573, 0.00028619796
      %v2575 = vmul.f32 %v2572, %v2574
      %v2576 = vadd.f32 %v2575, 0.0036580483
      %v2577 = vmul.f32 %v2572, %v2576
      %v2578 = vadd.f32 %v2577, 0.05243302
      %v2579 = vmul.f32 %v2572, %v2578
      %v2580 = vadd.f32 %v2579, 0.18741608
      %v2581 = vmul.f32 %v2572, %v2580
      %v2582 = vadd.f32 %v2581, 1.1283791
      %v2583 = vmul.f32 %v2048, %v2582
      %v2584 = vmul.f32 %v2572, 3.8918573e-05
      %v2585 = vadd.f32 %v2584, 0.001143296
      %v2586 = vmul.f32 %v2572, %v2585
      %v2587 = vadd.f32 %v2586, 0.014752088
      %v2588 = vmul.f32 %v2572, %v2587
      %v2589 = vadd.f32 %v2588, 0.112945676
      %v2590 = vmul.f32 %v2572, %v2589
      %v2591 = vadd.f32 %v2590, 0.4994258
      %v2592 = vmul.f32 %v2572, %v2591
      %v2593 = vadd.f32 %v2592, 1.0
      %v2594 = vrcp.pop %v2593
      %v2595 = vmul.f32 %v2593, %v2594
      %v2596 = vsub.f32 1.0, %v2595
      %v2597 = vmul.f32 %v2594, %v2596
      %v2598 = vadd.f32 %v2594, %v2597
      %vm2599 = vweird.f32 %v2593
      %vm2600 = vweird.f32 %v2594
      %vm2601 = vmor %vm2599, %vm2600
      %v2602 = vsel %vm2601, %v2594, %v2598
      %v2603 = vand.u32 2147483647, %v2593
      %vm2604 = vcmp.eq.f32.partialorder %v2603, 8.507059e+37
      %v2605 = vand.u32 %v2593, 2147483648
      %v2606 = vor.u32 1.1754944e-38, %v2605
      %v2607 = vsel %vm2604, %v2606, %v2602
      %v2608 = vmul.f32 %v2583, %v2607
      %v2609 = vmin.f32 %v2608, 1.0
      %v2610 = vmax.f32 %v2609, -1.0
      %v2611 = vmul.f32 %v2049, %v2049
      %v2612 = vmin.f32 16.0, %v2611
      %v2613 = vmul.f32 %v2612, 2.1237322e-06
      %v2614 = vadd.f32 %v2613, 0.00028619796
      %v2615 = vmul.f32 %v2612, %v2614
      %v2616 = vadd.f32 %v2615, 0.0036580483
      %v2617 = vmul.f32 %v2612, %v2616
      %v2618 = vadd.f32 %v2617, 0.05243302
      %v2619 = vmul.f32 %v2612, %v2618
      %v2620 = vadd.f32 %v2619, 0.18741608
      %v2621 = vmul.f32 %v2612, %v2620
      %v2622 = vadd.f32 %v2621, 1.1283791
      %v2623 = vmul.f32 %v2049, %v2622
      %v2624 = vmul.f32 %v2612, 3.8918573e-05
      %v2625 = vadd.f32 %v2624, 0.001143296
      %v2626 = vmul.f32 %v2612, %v2625
      %v2627 = vadd.f32 %v2626, 0.014752088
      %v2628 = vmul.f32 %v2612, %v2627
      %v2629 = vadd.f32 %v2628, 0.112945676
      %v2630 = vmul.f32 %v2612, %v2629
      %v2631 = vadd.f32 %v2630, 0.4994258
      %v2632 = vmul.f32 %v2612, %v2631
      %v2633 = vadd.f32 %v2632, 1.0
      %v2634 = vrcp.pop %v2633
      %v2635 = vmul.f32 %v2633, %v2634
      %v2636 = vsub.f32 1.0, %v2635
      %v2637 = vmul.f32 %v2634, %v2636
      %v2638 = vadd.f32 %v2634, %v2637
      %vm2639 = vweird.f32 %v2633
      %vm2640 = vweird.f32 %v2634
      %vm2641 = vmor %vm2639, %vm2640
      %v2642 = vsel %vm2641, %v2634, %v2638
      %v2643 = vand.u32 2147483647, %v2633
      %vm2644 = vcmp.eq.f32.partialorder %v2643, 8.507059e+37
      %v2645 = vand.u32 %v2633, 2147483648
      %v2646 = vor.u32 1.1754944e-38, %v2645
      %v2647 = vsel %vm2644, %v2646, %v2642
      %v2648 = vmul.f32 %v2623, %v2647
      %v2649 = vmin.f32 %v2648, 1.0
      %v2650 = vmax.f32 %v2649, -1.0
      %v2651 = vmul.f32 %v2050, %v2050
      %v2652 = vmin.f32 16.0, %v2651
      %v2653 = vmul.f32 %v2652, 2.1237322e-06
      %v2654 = vadd.f32 %v2653, 0.00028619796
      %v2655 = vmul.f32 %v2652, %v2654
      %v2656 = vadd.f32 %v2655, 0.0036580483
      %v2657 = vmul.f32 %v2652, %v2656
      %v2658 = vadd.f32 %v2657, 0.05243302
      %v2659 = vmul.f32 %v2652, %v2658
      %v2660 = vadd.f32 %v2659, 0.18741608
      %v2661 = vmul.f32 %v2652, %v2660
      %v2662 = vadd.f32 %v2661, 1.1283791
      %v2663 = vmul.f32 %v2050, %v2662
      %v2664 = vmul.f32 %v2652, 3.8918573e-05
      %v2665 = vadd.f32 %v2664, 0.001143296
      %v2666 = vmul.f32 %v2652, %v2665
      %v2667 = vadd.f32 %v2666, 0.014752088
      %v2668 = vmul.f32 %v2652, %v2667
      %v2669 = vadd.f32 %v2668, 0.112945676
      %v2670 = vmul.f32 %v2652, %v2669
      %v2671 = vadd.f32 %v2670, 0.4994258
      %v2672 = vmul.f32 %v2652, %v2671
      %v2673 = vadd.f32 %v2672, 1.0
      %v2674 = vrcp.pop %v2673
      %v2675 = vmul.f32 %v2673, %v2674
      %v2676 = vsub.f32 1.0, %v2675
      %v2677 = vmul.f32 %v2674, %v2676
      %v2678 = vadd.f32 %v2674, %v2677
      %vm2679 = vweird.f32 %v2673
      %vm2680 = vweird.f32 %v2674
      %vm2681 = vmor %vm2679, %vm2680
      %v2682 = vsel %vm2681, %v2674, %v2678
      %v2683 = vand.u32 2147483647, %v2673
      %vm2684 = vcmp.eq.f32.partialorder %v2683, 8.507059e+37
      %v2685 = vand.u32 %v2673, 2147483648
      %v2686 = vor.u32 1.1754944e-38, %v2685
      %v2687 = vsel %vm2684, %v2686, %v2682
      %v2688 = vmul.f32 %v2663, %v2687
      %v2689 = vmin.f32 %v2688, 1.0
      %v2690 = vmax.f32 %v2689, -1.0
      %v2691 = vadd.f32 %v2090, 1.0
      %v2692 = vadd.f32 %v2130, 1.0
      %v2693 = vadd.f32 %v2170, 1.0
      %v2694 = vadd.f32 %v2210, 1.0
      %v2695 = vadd.f32 %v2250, 1.0
      %v2696 = vadd.f32 %v2290, 1.0
      %v2697 = vadd.f32 %v2330, 1.0
      %v2698 = vadd.f32 %v2370, 1.0
      %v2699 = vadd.f32 %v2410, 1.0
      %v2700 = vadd.f32 %v2450, 1.0
      %v2701 = vadd.f32 %v2490, 1.0
      %v2702 = vadd.f32 %v2530, 1.0
      %v2703 = vadd.f32 %v2570, 1.0
      %v2704 = vadd.f32 %v2610, 1.0
      %v2705 = vadd.f32 %v2650, 1.0
      %v2706 = vadd.f32 %v2690, 1.0
      %v2707 = vmul.f32 %v2019, %v2691
      %v2708 = vmul.f32 %v2020, %v2692
      %v2709 = vmul.f32 %v2021, %v2693
      %v2710 = vmul.f32 %v2022, %v2694
      %v2711 = vmul.f32 %v2023, %v2695
      %v2712 = vmul.f32 %v2024, %v2696
      %v2713 = vmul.f32 %v2025, %v2697
      %v2714 = vmul.f32 %v2026, %v2698
      %v2715 = vmul.f32 %v2027, %v2699
      %v2716 = vmul.f32 %v2028, %v2700
      %v2717 = vmul.f32 %v2029, %v2701
      %v2718 = vmul.f32 %v2030, %v2702
      %v2719 = vmul.f32 %v2031, %v2703
      %v2720 = vmul.f32 %v2032, %v2704
      %v2721 = vmul.f32 %v2033, %v2705
      %v2722 = vmul.f32 %v2034, %v2706
      %v2723 = vpack.c.bf16 %v2707, %v2707
      %v2724 = vpack.c.bf16 %v2708, %v2708
      %v2725 = vpack.c.bf16 %v2709, %v2709
      %v2726 = vpack.c.bf16 %v2710, %v2710
      %v2727 = vpack.c.bf16 %v2711, %v2711
      %v2728 = vpack.c.bf16 %v2712, %v2712
      %v2729 = vpack.c.bf16 %v2713, %v2713
      %v2730 = vpack.c.bf16 %v2714, %v2714
      %v2731 = vpack.c.bf16 %v2715, %v2715
      %v2732 = vpack.c.bf16 %v2716, %v2716
      %v2733 = vpack.c.bf16 %v2717, %v2717
      %v2734 = vpack.c.bf16 %v2718, %v2718
      %v2735 = vpack.c.bf16 %v2719, %v2719
      %v2736 = vpack.c.bf16 %v2720, %v2720
      %v2737 = vpack.c.bf16 %v2721, %v2721
      %v2738 = vpack.c.bf16 %v2722, %v2722
      %vm2739 = vcmask 519168
      %2740 = vst.msk [vmem:[%s355] sm:$0xf] %vm2739, %v2723
      %2741 = vst.msk [vmem:[%s355 + $0x4] sm:$0xf] %vm2739, %v2724
      %2742 = vst.msk [vmem:[%s355 + $0x8] sm:$0xf] %vm2739, %v2725
      %2743 = vst.msk [vmem:[%s355 + $0xc] sm:$0xf] %vm2739, %v2726
      %2744 = vst.msk [vmem:[%s355 + $0x10] sm:$0xf] %vm2739, %v2727
      %2745 = vst.msk [vmem:[%s355 + $0x14] sm:$0xf] %vm2739, %v2728
      %2746 = vst.msk [vmem:[%s355 + $0x18] sm:$0xf] %vm2739, %v2729
      %2747 = vst.msk [vmem:[%s355 + $0x1c] sm:$0xf] %vm2739, %v2730
      %2748 = vst.msk [vmem:[%s355 + $0x20] sm:$0xf] %vm2739, %v2731
      %2749 = vst.msk [vmem:[%s355 + $0x24] sm:$0xf] %vm2739, %v2732
      %2750 = vst.msk [vmem:[%s355 + $0x28] sm:$0xf] %vm2739, %v2733
      %2751 = vst.msk [vmem:[%s355 + $0x2c] sm:$0xf] %vm2739, %v2734
      %2752 = vst.msk [vmem:[%s355 + $0x30] sm:$0xf] %vm2739, %v2735
      %2753 = vst.msk [vmem:[%s355 + $0x34] sm:$0xf] %vm2739, %v2736
      %2754 = vst.msk [vmem:[%s355 + $0x38] sm:$0xf] %vm2739, %v2737
      %2755 = vst.msk [vmem:[%s355 + $0x3c] sm:$0xf] %vm2739, %v2738
      %s2756 = smul.u32 16, %s21
      %p2757 = scmp.lt.s32.totalorder %s20, 1
      %s2758 = scalar_select %p2757, %s20, 1
      %p2759 = scmp.lt.s32.totalorder %s2756, 63
      %s2760 = scalar_select %p2759, %s2756, 63
      %s2761 = smul.addr %s2758, 64
      %s2762 = sadd.s32 %s2760, %s2761
      %s2763 = smul.addr %s2762, 4
      %s2764 = scalar_lea.vmem %s5, %s2763
      // Predicated region
      $region41: #{_lambda_.5} parent=39 // pred_check
        %p2765 = pneg %p181
      $region42: #{_lambda_.5} parent=39 // pred_check_branch
        %2767 = sbr.rel (%p2765) target = $region44
      $region43: #{_lambda_.5} parent=39 // pred_region
        %s2768 = smul.u32 16, %s21
      $region44: #{_lambda_.5} parent=39 // pred_fallthru
        _
    $region40: #{_lambda_.5} parent=5 // pred_fallthru
      _
    %p2769 = scmp.le.s32.totalorder 2, %s11
    // Predicated region
    $region45: #{_lambda_.5} parent=5 // pred_check
      %p2770 = pneg %p2769
    $region46: #{_lambda_.5} parent=5 // pred_check_branch
      %2772 = sbr.rel (%p2770) target = $region48
    $region47: #{_lambda_.5} parent=5 // pred_region
      %s2773 = ssub.s32 %s11, 2
      // Predicated region
      $region49: #{_lambda_.5} parent=47 // pred_check
        %p2774 = pneg %p187
      $region50: #{_lambda_.5} parent=47 // pred_check_branch
        %2776 = sbr.rel (%p2774) target = $region52
      $region51: #{_lambda_.5} parent=47 // pred_region
        %s2777 = smul.u32 16, %s23
        %p2778 = scmp.lt.s32.totalorder %s22, 1
        %s2779 = scalar_select %p2778, %s22, 1
        %p2780 = scmp.lt.s32.totalorder %s2777, 63
        %s2781 = scalar_select %p2780, %s2777, 63
        %s2782 = smul.addr %s2779, 64
        %s2783 = sadd.s32 %s2781, %s2782
        %s2784 = smul.addr %s2783, 4
        %s2785 = scalar_lea.vmem %s5, %s2784
      $region52: #{_lambda_.5} parent=47 // pred_fallthru
        _
    $region48: #{_lambda_.5} parent=5 // pred_fallthru
      _
  $region6: #{_lambda_.5} parent=0 // loop_footer
    %s15 = sadd.s32 1, %s11
  $region7: #{_lambda_.5} parent=0 // loop_footer_branch
    %10 = sbr.rel target = $region3
  $region8: #{_lambda_.5} parent=0 // loop_exit
    _

// kernel: _lambda_.6
$region0: #{_lambda_.6}
  #allocation0 [shape = 'u32[]', space=smem, size = 0x4, offset = 0x4, fixed_abs, tag = 'smem constant byte address 0x4 - core index']
  #allocation1 [shape = 'u32[72,128]{1,0:T(1,128)}', space=vmem, size = 0x9000, scoped, tag = 'internal scratch']
  #allocation2 [shape = 'f32[264,64]{1,0:T(8,128)}', space=vmem, size = 0x21000, scoped, tag = 'scratch operand']
  %s0 = inlined_call_operand.vmem [shape: bf16[2,520,64], index: 0, kind: input, shape index: {}, may-alias: {0,1}]
  %s1 = inlined_call_operand.vmem [shape: bf16[2,520,64], index: 1, kind: input, shape index: {}, may-alias: {0,1}]
  %s2 = inlined_call_operand.vmem [shape: bf16[3,64,64], index: 2, kind: input, shape index: {}]
  %s3 = inlined_call_operand.vmem [shape: bf16[2,256,64], index: 3, kind: output, shape index: {}]
  %s4 = sld [smem:[#allocation0]]
  $region45: #{_lambda_.6} parent=0
    _
  %s6 = ssub.s32 1, %s4
  %s7 = scalar_select 0, %s6, %s4
  loop: start=0, step=1, limit=6
  $region2: #{_lambda_.6} parent=0 // loop_pre_header
    _
  $region3: #{_lambda_.6} parent=0 // loop_header
    %s9 = sphi 0, %s13
    %p10 = scmp.ge.s32.totalorder %s9, 6
    %s16 = sphi 0, %s28
    %s17 = sphi 0, %s24
    %s18 = sphi 0, %s16
    %s19 = sphi 0, %s17
    %s20 = sphi 0, %s18
    %s21 = sphi 0, %s19
    %s33 = sphi 0, %s35
    %s36 = sphi 0, %s33
    %s37 = sphi 0, %s36
    %s53 = sphi 0, %s37
    %s65 = sphi 0, %s67
    %s68 = sphi 0, %s65
    %s69 = sphi 0, %s68
    %s85 = sphi 0, %s69
    %s89 = sphi 0, %s89
    %s91 = sphi 0, %s89
    %s92 = sphi 0, %s91
    %s106 = sphi 0, %s92
    %s114 = sphi 0, %s116
    %s117 = sphi 0, %s114
    %s118 = sphi 0, %s117
    %s134 = sphi 0, %s118
  $region4: #{_lambda_.6} parent=0 // loop_header_branch
    %12 = sbr.rel (%p10) target = $region8
  $region5: #{_lambda_.6} parent=0 // loop_body
    %s14 = ssub.s32 %s9, 1
    %s15 = ssub.s32 %s9, 2
    %s22 = sadd.s32 1, %s17
    %p23 = scmp.ge.s32.totalorder %s22, 2
    %s24 = scalar_select %p23, 0, %s22
    %s25 = sadd.s32 1, %s16
    %s26 = scalar_select %p23, %s25, %s16
    %p27 = scmp.ge.s32.totalorder %s26, 2
    %s28 = scalar_select %p27, 0, %s26
    %s29 = ssub.s32 %s16, %s28
    %s30 = ssub.s32 %s17, %s24
    %s31 = sor.u32 %s29, %s30
    %p32 = scmp.eq.s32.totalorder %s31, 0
    %s34 = sadd.s32 %s33, 1
    %s35 = scalar_select %p32, %s33, %s34
    %p38 = pneg %p32
    %p39 = scmp.eq.s32.totalorder %s9, 3
    %p40 = por %p38, %p39
    %p41 = scmp.ne.s32.totalorder %s33, %s36
    %p42 = scmp.eq.s32.totalorder %s9, 0
    %p43 = por %p41, %p42
    %p44 = scmp.ne.s32.totalorder %s33, %s36
    %p45 = scmp.eq.s32.totalorder %s14, 3
    %p46 = por %p44, %p45
    %p47 = scmp.ne.s32.totalorder %s36, %s37
    %p48 = scmp.eq.s32.totalorder %s14, 0
    %p49 = por %p47, %p48
    %p50 = scmp.ne.s32.totalorder %s36, %s37
    %p51 = scmp.eq.s32.totalorder %s15, 3
    %p52 = por %p50, %p51
    %p54 = scmp.ne.s32.totalorder %s37, %s53
    %p55 = scmp.eq.s32.totalorder %s15, 0
    %p56 = por %p54, %p55
    %s57 = sadd.s32 %s17, 1
    %s58 = smul.u32 %s57, 32
    %s59 = sadd.s32 %s24, 1
    %s60 = smul.u32 %s59, 32
    %s61 = ssub.s32 %s16, %s28
    %s62 = ssub.s32 %s58, %s60
    %s63 = sor.u32 %s61, %s62
    %p64 = scmp.eq.s32.totalorder %s63, 0
    %s66 = sadd.s32 %s65, 1
    %s67 = scalar_select %p64, %s65, %s66
    %p70 = pneg %p64
    %p71 = scmp.eq.s32.totalorder %s9, 3
    %p72 = por %p70, %p71
    %p73 = scmp.ne.s32.totalorder %s65, %s68
    %p74 = scmp.eq.s32.totalorder %s9, 0
    %p75 = por %p73, %p74
    %p76 = scmp.ne.s32.totalorder %s65, %s68
    %p77 = scmp.eq.s32.totalorder %s14, 3
    %p78 = por %p76, %p77
    %p79 = scmp.ne.s32.totalorder %s68, %s69
    %p80 = scmp.eq.s32.totalorder %s14, 0
    %p81 = por %p79, %p80
    %p82 = scmp.ne.s32.totalorder %s68, %s69
    %p83 = scmp.eq.s32.totalorder %s15, 3
    %p84 = por %p82, %p83
    %p86 = scmp.ne.s32.totalorder %s69, %s85
    %p87 = scmp.eq.s32.totalorder %s15, 0
    %p88 = por %p86, %p87
    %s90 = sadd.s32 %s89, 1
    %p93 = scmp.eq.s32.totalorder %s9, 3
    %p94 = scmp.ne.s32.totalorder %s89, %s91
    %p95 = scmp.eq.s32.totalorder %s9, 0
    %p96 = por %p94, %p95
    %p97 = scmp.ne.s32.totalorder %s89, %s91
    %p98 = scmp.eq.s32.totalorder %s14, 3
    %p99 = por %p97, %p98
    %p100 = scmp.ne.s32.totalorder %s91, %s92
    %p101 = scmp.eq.s32.totalorder %s14, 0
    %p102 = por %p100, %p101
    %p103 = scmp.ne.s32.totalorder %s91, %s92
    %p104 = scmp.eq.s32.totalorder %s15, 3
    %p105 = por %p103, %p104
    %p107 = scmp.ne.s32.totalorder %s92, %s106
    %p108 = scmp.eq.s32.totalorder %s15, 0
    %p109 = por %p107, %p108
    %s110 = ssub.s32 %s16, %s28
    %s111 = ssub.s32 %s17, %s24
    %s112 = sor.u32 %s110, %s111
    %p113 = scmp.eq.s32.totalorder %s112, 0
    %s115 = sadd.s32 %s114, 1
    %s116 = scalar_select %p113, %s114, %s115
    %p119 = pneg %p113
    %p120 = scmp.eq.s32.totalorder %s9, 3
    %p121 = por %p119, %p120
    %p122 = scmp.ne.s32.totalorder %s114, %s117
    %p123 = scmp.eq.s32.totalorder %s9, 0
    %p124 = por %p122, %p123
    %p125 = scmp.ne.s32.totalorder %s114, %s117
    %p126 = scmp.eq.s32.totalorder %s14, 3
    %p127 = por %p125, %p126
    %p128 = scmp.ne.s32.totalorder %s117, %s118
    %p129 = scmp.eq.s32.totalorder %s14, 0
    %p130 = por %p128, %p129
    %p131 = scmp.ne.s32.totalorder %s117, %s118
    %p132 = scmp.eq.s32.totalorder %s15, 3
    %p133 = por %p131, %p132
    %p135 = scmp.ne.s32.totalorder %s118, %s134
    %p136 = scmp.eq.s32.totalorder %s15, 0
    %p137 = por %p135, %p136
    %p138 = scmp.le.s32.totalorder 1, %s9
    %p139 = scmp.lt.s32.totalorder %s9, 5
    %p140 = pnand %p138, %p139
    %p141 = pneg %p140
    // Predicated region
    $region9: #{_lambda_.6} parent=5 // pred_check
      _
    $region10: #{_lambda_.6} parent=5 // pred_check_branch
      %143 = sbr.rel (%p140) target = $region12
    $region11: #{_lambda_.6} parent=5 // pred_region
      %s144 = ssub.s32 %s9, 1
      // Predicated region
      $region13: #{_lambda_.6} parent=11 // pred_check
        %p145 = pneg %p102
      $region14: #{_lambda_.6} parent=11 // pred_check_branch
        %147 = sbr.rel (%p145) target = $region16
      $region15: #{_lambda_.6} parent=11 // pred_region
        _
      $region16: #{_lambda_.6} parent=11 // pred_fallthru
        _
    $region12: #{_lambda_.6} parent=5 // pred_fallthru
      _
    %p148 = scmp.lt.s32.totalorder %s9, 4
    // Predicated region
    $region17: #{_lambda_.6} parent=5 // pred_check
      %p149 = pneg %p148
    $region18: #{_lambda_.6} parent=5 // pred_check_branch
      %151 = sbr.rel (%p149) target = $region20
    $region19: #{_lambda_.6} parent=5 // pred_region
      // Predicated region
      $region21: #{_lambda_.6} parent=19 // pred_check
        %p152 = pneg %p43
      $region22: #{_lambda_.6} parent=19 // pred_check_branch
        %154 = sbr.rel (%p152) target = $region24
      $region23: #{_lambda_.6} parent=19 // pred_region
        %s155 = smul.u32 32, %s17
        %s156 = ssub.s32 65, %s155
        %p157 = scmp.lt.s32.totalorder %s156, 32
        %s158 = scalar_select %p157, %s156, 32
        %s159 = smul.u32 4, %s158
        %p160 = scmp.lt.s32.totalorder %s16, 1
        %s161 = scalar_select %p160, %s16, 1
        %p162 = scmp.lt.s32.totalorder %s155, 64
        %s163 = scalar_select %p162, %s155, 64
        %s164 = smul.addr %s161, 65
        %s165 = sadd.s32 %s163, %s164
        %s166 = smul.addr %s165, 4
        %s167 = scalar_lea.vmem %s0, %s166
        %s168 = smul.u32 32, %s17
        %s169 = ssub.s32 65, %s168
        %p170 = scmp.lt.s32.totalorder %s169, 32
        %s171 = scalar_select %p170, %s169, 32
        %s172 = smul.u32 4, %s171
      $region24: #{_lambda_.6} parent=19 // pred_fallthru
        _
      // Predicated region
      $region25: #{_lambda_.6} parent=19 // pred_check
        %p173 = pneg %p75
      $region26: #{_lambda_.6} parent=19 // pred_check_branch
        %175 = sbr.rel (%p173) target = $region28
      $region27: #{_lambda_.6} parent=19 // pred_region
        %s176 = sadd.s32 %s17, 1
        %s177 = smul.u32 %s176, 32
        %p178 = scmp.lt.s32.totalorder %s16, 1
        %s179 = scalar_select %p178, %s16, 1
        %p180 = scmp.lt.s32.totalorder %s177, 64
        %s181 = scalar_select %p180, %s177, 64
        %s182 = smul.addr %s179, 65
        %s183 = sadd.s32 %s181, %s182
        %s184 = smul.addr %s183, 4
        %s185 = scalar_lea.vmem %s1, %s184
        %s186 = sadd.s32 %s17, 1
        %s187 = smul.u32 %s186, 32
      $region28: #{_lambda_.6} parent=19 // pred_fallthru
        _
    $region20: #{_lambda_.6} parent=5 // pred_fallthru
      _
    %p188 = scmp.le.s32.totalorder 1, %s9
    %p189 = scmp.lt.s32.totalorder %s9, 5
    %p190 = pnand %p188, %p189
    %p191 = pneg %p190
    // Predicated region
    $region29: #{_lambda_.6} parent=5 // pred_check
      _
    $region30: #{_lambda_.6} parent=5 // pred_check_branch
      %193 = sbr.rel (%p190) target = $region32
    $region31: #{_lambda_.6} parent=5 // pred_region
      %s194 = ssub.s32 %s9, 1
      %s195 = smul.u32 32, %s19
      %s196 = ssub.s32 65, %s195
      %p197 = scmp.lt.s32.totalorder %s196, 32
      %s198 = scalar_select %p197, %s196, 32
      %s199 = smul.u32 4, %s198
      %p200 = scmp.lt.s32.totalorder %s18, 1
      %s201 = scalar_select %p200, %s18, 1
      %p202 = scmp.lt.s32.totalorder %s195, 64
      %s203 = scalar_select %p202, %s195, 64
      %s204 = smul.addr %s201, 65
      %s205 = sadd.s32 %s203, %s204
      %s206 = smul.addr %s205, 4
      %s207 = scalar_lea.vmem %s0, %s206
      %p208 = pneg %p49
      %p209 = pneg %p46
      %s210 = sadd.s32 %s19, 1
      %s211 = smul.u32 %s210, 32
      %p212 = scmp.lt.s32.totalorder %s18, 1
      %s213 = scalar_select %p212, %s18, 1
      %p214 = scmp.lt.s32.totalorder %s211, 64
      %s215 = scalar_select %p214, %s211, 64
      %s216 = smul.addr %s213, 65
      %s217 = sadd.s32 %s215, %s216
      %s218 = smul.addr %s217, 4
      %s219 = scalar_lea.vmem %s1, %s218
      %p220 = pneg %p81
      %p221 = pneg %p78
      %p222 = pneg %p102
      %p223 = pneg %p99
      %p224 = pneg %p130
      %p225 = pneg %p127
      %s226 = smul.u32 16, %s19
      %p227 = scmp.lt.s32.totalorder %s18, 1
      %s228 = scalar_select %p227, %s18, 1
      %p229 = scmp.lt.s32.totalorder %s226, 31
      %s230 = scalar_select %p229, %s226, 31
      %s231 = smul.addr %s228, 32
      %s232 = sadd.s32 %s230, %s231
      %s233 = smul.addr %s232, 4
      %s234 = scalar_lea.vmem %s3, %s233
      %s235 = smul.u32 32, %s19
      %s236 = ssub.s32 65, %s235
      %p237 = scmp.lt.s32.totalorder %s236, 32
      %s238 = scalar_select %p237, %s236, 32
      %s239 = smul.u32 4, %s238
      %p240 = scmp.lt.s32.totalorder %s18, 1
      %s241 = scalar_select %p240, %s18, 1
      %p242 = scmp.lt.s32.totalorder %s235, 64
      %s243 = scalar_select %p242, %s235, 64
      %s244 = smul.addr %s241, 65
      %s245 = sadd.s32 %s243, %s244
      %s246 = smul.addr %s245, 4
      %s247 = scalar_lea.vmem %s0, %s246
      %s248 = smul.u32 32, %s19
      %s249 = ssub.s32 65, %s248
      %p250 = scmp.lt.s32.totalorder %s249, 32
      %s251 = scalar_select %p250, %s249, 32
      %s252 = smul.u32 4, %s251
      %s253 = sadd.s32 %s19, 1
      %s254 = smul.u32 %s253, 32
      %p255 = scmp.lt.s32.totalorder %s18, 1
      %s256 = scalar_select %p255, %s18, 1
      %p257 = scmp.lt.s32.totalorder %s254, 64
      %s258 = scalar_select %p257, %s254, 64
      %s259 = smul.addr %s256, 65
      %s260 = sadd.s32 %s258, %s259
      %s261 = smul.addr %s260, 4
      %s262 = scalar_lea.vmem %s1, %s261
      %s263 = sadd.s32 %s19, 1
      %s264 = smul.u32 %s263, 32
      %s265 = smul.u32 16, %s19
      %p266 = scmp.lt.s32.totalorder %s18, 1
      %s267 = scalar_select %p266, %s18, 1
      %p268 = scmp.lt.s32.totalorder %s265, 31
      %s269 = scalar_select %p268, %s265, 31
      %s270 = smul.addr %s267, 32
      %s271 = sadd.s32 %s269, %s270
      %s272 = smul.addr %s271, 4
      %s273 = scalar_lea.vmem %s3, %s272
      %s274 = smul.u32 16, %s19
      %v276 = vld [vmem:[%s247] sm:$0xf]
      %v277 = vld [vmem:[%s247 + $0x4] sm:$0xf]
      %v278 = vld [vmem:[%s247 + $0x8] sm:$0xf]
      %v279 = vld [vmem:[%s247 + $0xc] sm:$0xf]
      %v280 = vld [vmem:[%s247 + $0x10] sm:$0xf]
      %v281 = vld [vmem:[%s247 + $0x14] sm:$0xf]
      %v282 = vld [vmem:[%s247 + $0x18] sm:$0xf]
      %v283 = vld [vmem:[%s247 + $0x1c] sm:$0xf]
      %v284 = vld [vmem:[%s247 + $0x20] sm:$0xf]
      %v285 = vld [vmem:[%s247 + $0x24] sm:$0xf]
      %v286 = vld [vmem:[%s247 + $0x28] sm:$0xf]
      %v287 = vld [vmem:[%s247 + $0x2c] sm:$0xf]
      %v288 = vld [vmem:[%s247 + $0x30] sm:$0xf]
      %v289 = vld [vmem:[%s247 + $0x34] sm:$0xf]
      %v290 = vld [vmem:[%s247 + $0x38] sm:$0xf]
      %v291 = vld [vmem:[%s247 + $0x3c] sm:$0xf]
      %v292 = vld [vmem:[%s247 + $0x40] sm:$0xf]
      %v293 = vld [vmem:[%s247 + $0x44] sm:$0xf]
      %v294 = vld [vmem:[%s247 + $0x48] sm:$0xf]
      %v295 = vld [vmem:[%s247 + $0x4c] sm:$0xf]
      %v296 = vld [vmem:[%s247 + $0x50] sm:$0xf]
      %v297 = vld [vmem:[%s247 + $0x54] sm:$0xf]
      %v298 = vld [vmem:[%s247 + $0x58] sm:$0xf]
      %v299 = vld [vmem:[%s247 + $0x5c] sm:$0xf]
      %v300 = vld [vmem:[%s247 + $0x60] sm:$0xf]
      %v301 = vld [vmem:[%s247 + $0x64] sm:$0xf]
      %v302 = vld [vmem:[%s247 + $0x68] sm:$0xf]
      %v303 = vld [vmem:[%s247 + $0x6c] sm:$0xf]
      %v304 = vld [vmem:[%s247 + $0x70] sm:$0xf]
      %v305 = vld [vmem:[%s247 + $0x74] sm:$0xf]
      %v306 = vld [vmem:[%s247 + $0x78] sm:$0xf]
      %v307 = vld [vmem:[%s247 + $0x7c] sm:$0xf]
      %v308 = vunpack.c.l.bf16 %v276
      %v309 = vunpack.c.l.bf16 %v277
      %v310 = vunpack.c.l.bf16 %v278
      %v311 = vunpack.c.l.bf16 %v279
      %v312 = vunpack.c.l.bf16 %v280
      %v313 = vunpack.c.l.bf16 %v281
      %v314 = vunpack.c.l.bf16 %v282
      %v315 = vunpack.c.l.bf16 %v283
      %v316 = vunpack.c.l.bf16 %v284
      %v317 = vunpack.c.l.bf16 %v285
      %v318 = vunpack.c.l.bf16 %v286
      %v319 = vunpack.c.l.bf16 %v287
      %v320 = vunpack.c.l.bf16 %v288
      %v321 = vunpack.c.l.bf16 %v289
      %v322 = vunpack.c.l.bf16 %v290
      %v323 = vunpack.c.l.bf16 %v291
      %v324 = vunpack.c.l.bf16 %v292
      %v325 = vunpack.c.l.bf16 %v293
      %v326 = vunpack.c.l.bf16 %v294
      %v327 = vunpack.c.l.bf16 %v295
      %v328 = vunpack.c.l.bf16 %v296
      %v329 = vunpack.c.l.bf16 %v297
      %v330 = vunpack.c.l.bf16 %v298
      %v331 = vunpack.c.l.bf16 %v299
      %v332 = vunpack.c.l.bf16 %v300
      %v333 = vunpack.c.l.bf16 %v301
      %v334 = vunpack.c.l.bf16 %v302
      %v335 = vunpack.c.l.bf16 %v303
      %v336 = vunpack.c.l.bf16 %v304
      %v337 = vunpack.c.l.bf16 %v305
      %v338 = vunpack.c.l.bf16 %v306
      %v339 = vunpack.c.l.bf16 %v307
      %vm340 = vcmask 523264
      %341 = vst.msk [vmem:[#allocation2] sm:$0xff] %vm340, %v308
      %342 = vst.msk [vmem:[#allocation2 + $0x8] sm:$0xff] %vm340, %v309
      %343 = vst.msk [vmem:[#allocation2 + $0x10] sm:$0xff] %vm340, %v310
      %344 = vst.msk [vmem:[#allocation2 + $0x18] sm:$0xff] %vm340, %v311
      %345 = vst.msk [vmem:[#allocation2 + $0x20] sm:$0xff] %vm340, %v312
      %346 = vst.msk [vmem:[#allocation2 + $0x28] sm:$0xff] %vm340, %v313
      %347 = vst.msk [vmem:[#allocation2 + $0x30] sm:$0xff] %vm340, %v314
      %348 = vst.msk [vmem:[#allocation2 + $0x38] sm:$0xff] %vm340, %v315
      %349 = vst.msk [vmem:[#allocation2 + $0x40] sm:$0xff] %vm340, %v316
      %350 = vst.msk [vmem:[#allocation2 + $0x48] sm:$0xff] %vm340, %v317
      %351 = vst.msk [vmem:[#allocation2 + $0x50] sm:$0xff] %vm340, %v318
      %352 = vst.msk [vmem:[#allocation2 + $0x58] sm:$0xff] %vm340, %v319
      %353 = vst.msk [vmem:[#allocation2 + $0x60] sm:$0xff] %vm340, %v320
      %354 = vst.msk [vmem:[#allocation2 + $0x68] sm:$0xff] %vm340, %v321
      %355 = vst.msk [vmem:[#allocation2 + $0x70] sm:$0xff] %vm340, %v322
      %356 = vst.msk [vmem:[#allocation2 + $0x78] sm:$0xff] %vm340, %v323
      %357 = vst.msk [vmem:[#allocation2 + $0x80] sm:$0xff] %vm340, %v324
      %358 = vst.msk [vmem:[#allocation2 + $0x88] sm:$0xff] %vm340, %v325
      %359 = vst.msk [vmem:[#allocation2 + $0x90] sm:$0xff] %vm340, %v326
      %360 = vst.msk [vmem:[#allocation2 + $0x98] sm:$0xff] %vm340, %v327
      %361 = vst.msk [vmem:[#allocation2 + $0xa0] sm:$0xff] %vm340, %v328
      %362 = vst.msk [vmem:[#allocation2 + $0xa8] sm:$0xff] %vm340, %v329
      %363 = vst.msk [vmem:[#allocation2 + $0xb0] sm:$0xff] %vm340, %v330
      %364 = vst.msk [vmem:[#allocation2 + $0xb8] sm:$0xff] %vm340, %v331
      %365 = vst.msk [vmem:[#allocation2 + $0xc0] sm:$0xff] %vm340, %v332
      %366 = vst.msk [vmem:[#allocation2 + $0xc8] sm:$0xff] %vm340, %v333
      %367 = vst.msk [vmem:[#allocation2 + $0xd0] sm:$0xff] %vm340, %v334
      %368 = vst.msk [vmem:[#allocation2 + $0xd8] sm:$0xff] %vm340, %v335
      %369 = vst.msk [vmem:[#allocation2 + $0xe0] sm:$0xff] %vm340, %v336
      %370 = vst.msk [vmem:[#allocation2 + $0xe8] sm:$0xff] %vm340, %v337
      %371 = vst.msk [vmem:[#allocation2 + $0xf0] sm:$0xff] %vm340, %v338
      %372 = vst.msk [vmem:[#allocation2 + $0xf8] sm:$0xff] %vm340, %v339
      %v373 = vld [vmem:[%s262] sm:$0xf]
      %v374 = vunpack.c.l.bf16 %v373
      %375 = vst.msk [vmem:[#allocation2 + $0x100] sm:$0xff] %vm340, %v374
      %v376 = vld [vmem:[#allocation2] ss:$2 sm:$0xff]
      %s377 = scalar_lea.vmem [#allocation2], 16
      %v378 = vld [vmem:[%s377] ss:$2 sm:$0xff]
      %s379 = scalar_lea.vmem [#allocation2], 32
      %v380 = vld [vmem:[%s379] ss:$2 sm:$0xff]
      %s381 = scalar_lea.vmem [#allocation2], 48
      %v382 = vld [vmem:[%s381] ss:$2 sm:$0xff]
      %s383 = scalar_lea.vmem [#allocation2], 64
      %v384 = vld [vmem:[%s383] ss:$2 sm:$0xff]
      %s385 = scalar_lea.vmem [#allocation2], 80
      %v386 = vld [vmem:[%s385] ss:$2 sm:$0xff]
      %s387 = scalar_lea.vmem [#allocation2], 96
      %v388 = vld [vmem:[%s387] ss:$2 sm:$0xff]
      %s389 = scalar_lea.vmem [#allocation2], 112
      %v390 = vld [vmem:[%s389] ss:$2 sm:$0xff]
      %s391 = scalar_lea.vmem [#allocation2], 128
      %v392 = vld [vmem:[%s391] ss:$2 sm:$0xff]
      %s393 = scalar_lea.vmem [#allocation2], 144
      %v394 = vld [vmem:[%s393] ss:$2 sm:$0xff]
      %s395 = scalar_lea.vmem [#allocation2], 160
      %v396 = vld [vmem:[%s395] ss:$2 sm:$0xff]
      %s397 = scalar_lea.vmem [#allocation2], 176
      %v398 = vld [vmem:[%s397] ss:$2 sm:$0xff]
      %s399 = scalar_lea.vmem [#allocation2], 192
      %v400 = vld [vmem:[%s399] ss:$2 sm:$0xff]
      %s401 = scalar_lea.vmem [#allocation2], 208
      %v402 = vld [vmem:[%s401] ss:$2 sm:$0xff]
      %s403 = scalar_lea.vmem [#allocation2], 224
      %v404 = vld [vmem:[%s403] ss:$2 sm:$0xff]
      %s405 = scalar_lea.vmem [#allocation2], 240
      %v406 = vld [vmem:[%s405] ss:$2 sm:$0xff]
      %v407 = vpack.c.bf16 %v378, %v376
      %v408 = vpack.c.bf16 %v382, %v380
      %v409 = vpack.c.bf16 %v386, %v384
      %v410 = vpack.c.bf16 %v390, %v388
      %v411 = vpack.c.bf16 %v394, %v392
      %v412 = vpack.c.bf16 %v398, %v396
      %v413 = vpack.c.bf16 %v402, %v400
      %v414 = vpack.c.bf16 %v406, %v404
      %v415 = vld [vmem:[%s2] sm:$0xf]
      %v416 = vld [vmem:[%s2 + $0x4] sm:$0xf]
      %v417 = vld [vmem:[%s2 + $0x8] sm:$0xf]
      %v418 = vld [vmem:[%s2 + $0xc] sm:$0xf]
      %v419 = vld [vmem:[%s2 + $0x10] sm:$0xf]
      %v420 = vld [vmem:[%s2 + $0x14] sm:$0xf]
      %v421 = vld [vmem:[%s2 + $0x18] sm:$0xf]
      %v422 = vld [vmem:[%s2 + $0x1c] sm:$0xf]
      %s423 = scalar_lea.vmem [#allocation2], 1
      %v424 = vld [vmem:[%s423] ss:$2 sm:$0xff]
      %s425 = scalar_lea.vmem [#allocation2], 17
      %v426 = vld [vmem:[%s425] ss:$2 sm:$0xff]
      %s427 = scalar_lea.vmem [#allocation2], 33
      %v428 = vld [vmem:[%s427] ss:$2 sm:$0xff]
      %s429 = scalar_lea.vmem [#allocation2], 49
      %v430 = vld [vmem:[%s429] ss:$2 sm:$0xff]
      %s431 = scalar_lea.vmem [#allocation2], 65
      %v432 = vld [vmem:[%s431] ss:$2 sm:$0xff]
      %s433 = scalar_lea.vmem [#allocation2], 81
      %v434 = vld [vmem:[%s433] ss:$2 sm:$0xff]
      %s435 = scalar_lea.vmem [#allocation2], 97
      %v436 = vld [vmem:[%s435] ss:$2 sm:$0xff]
      %s437 = scalar_lea.vmem [#allocation2], 113
      %v438 = vld [vmem:[%s437] ss:$2 sm:$0xff]
      %s439 = scalar_lea.vmem [#allocation2], 129
      %v440 = vld [vmem:[%s439] ss:$2 sm:$0xff]
      %s441 = scalar_lea.vmem [#allocation2], 145
      %v442 = vld [vmem:[%s441] ss:$2 sm:$0xff]
      %s443 = scalar_lea.vmem [#allocation2], 161
      %v444 = vld [vmem:[%s443] ss:$2 sm:$0xff]
      %s445 = scalar_lea.vmem [#allocation2], 177
      %v446 = vld [vmem:[%s445] ss:$2 sm:$0xff]
      %s447 = scalar_lea.vmem [#allocation2], 193
      %v448 = vld [vmem:[%s447] ss:$2 sm:$0xff]
      %s449 = scalar_lea.vmem [#allocation2], 209
      %v450 = vld [vmem:[%s449] ss:$2 sm:$0xff]
      %s451 = scalar_lea.vmem [#allocation2], 225
      %v452 = vld [vmem:[%s451] ss:$2 sm:$0xff]
      %s453 = scalar_lea.vmem [#allocation2], 241
      %v454 = vld [vmem:[%s453] ss:$2 sm:$0xff]
      %v455 = vpack.c.bf16 %v426, %v424
      %v456 = vpack.c.bf16 %v430, %v428
      %v457 = vpack.c.bf16 %v434, %v432
      %v458 = vpack.c.bf16 %v438, %v436
      %v459 = vpack.c.bf16 %v442, %v440
      %v460 = vpack.c.bf16 %v446, %v444
      %v461 = vpack.c.bf16 %v450, %v448
      %v462 = vpack.c.bf16 %v454, %v452
      %s463 = scalar_lea.vmem %s2, 32
      %v464 = vld [vmem:[%s463] sm:$0xf]
      %v465 = vld [vmem:[%s463 + $0x4] sm:$0xf]
      %v466 = vld [vmem:[%s463 + $0x8] sm:$0xf]
      %v467 = vld [vmem:[%s463 + $0xc] sm:$0xf]
      %v468 = vld [vmem:[%s463 + $0x10] sm:$0xf]
      %v469 = vld [vmem:[%s463 + $0x14] sm:$0xf]
      %v470 = vld [vmem:[%s463 + $0x18] sm:$0xf]
      %v471 = vld [vmem:[%s463 + $0x1c] sm:$0xf]
      %v480 = vunpack.c.l.b16 %v464
      %v481 = vunpack.c.l.b16 %v465
      %v482 = vunpack.c.l.b16 %v466
      %v483 = vunpack.c.l.b16 %v467
      %v484 = vunpack.c.l.b16 %v468
      %v485 = vunpack.c.l.b16 %v469
      %v486 = vunpack.c.l.b16 %v470
      %v487 = vunpack.c.l.b16 %v471
      %v488 = vpack.c.b16 %v481, %v480
      %v489 = vpack.c.b16 %v483, %v482
      %v490 = vpack.c.b16 %v485, %v484
      %v491 = vpack.c.b16 %v487, %v486
      %v497 = vsel %vm340, %v455, 0
      %v500 = vsel %vm340, %v456, 0
      %v503 = vsel %vm340, %v457, 0
      %v506 = vsel %vm340, %v458, 0
      %v509 = vsel %vm340, %v459, 0
      %v512 = vsel %vm340, %v460, 0
      %v515 = vsel %vm340, %v461, 0
      %v518 = vsel %vm340, %v462, 0
      %520 = vmatpush.bf16.msra.mxu0 0
      %521 = vmatpush.bf16.msra.mxu0 0
      %522 = vmatpush.bf16.msra.mxu0 0
      %523 = vmatpush.bf16.msra.mxu0 0
      %524 = vmatpush.bf16.msra.mxu0 %v491
      %525 = vmatpush.bf16.msra.mxu0 %v490
      %526 = vmatpush.bf16.msra.mxu0 %v489
      %527 = vmatpush.bf16.msra.mxu0 %v488
      %528 = vmatmul.bf16.gmra.mxu0 %v497
      %v529 = vpop.f32.mrf.mxu0
      %v530 = vadd.f32 0.0, %v529
      %v531 = vpop.f32.mrf.mxu0
      %v532 = vadd.f32 0.0, %v531
      %533 = vmatmul.bf16.gmra.mxu0 %v500
      %v534 = vpop.f32.mrf.mxu0
      %v535 = vadd.f32 0.0, %v534
      %v536 = vpop.f32.mrf.mxu0
      %v537 = vadd.f32 0.0, %v536
      %538 = vmatmul.bf16.gmra.mxu0 %v503
      %v539 = vpop.f32.mrf.mxu0
      %v540 = vadd.f32 0.0, %v539
      %v541 = vpop.f32.mrf.mxu0
      %v542 = vadd.f32 0.0, %v541
      %543 = vmatmul.bf16.gmra.mxu0 %v506
      %v544 = vpop.f32.mrf.mxu0
      %v545 = vadd.f32 0.0, %v544
      %v546 = vpop.f32.mrf.mxu0
      %v547 = vadd.f32 0.0, %v546
      %548 = vmatmul.bf16.gmra.mxu0 %v509
      %v549 = vpop.f32.mrf.mxu0
      %v550 = vadd.f32 0.0, %v549
      %v551 = vpop.f32.mrf.mxu0
      %v552 = vadd.f32 0.0, %v551
      %553 = vmatmul.bf16.gmra.mxu0 %v512
      %v554 = vpop.f32.mrf.mxu0
      %v555 = vadd.f32 0.0, %v554
      %v556 = vpop.f32.mrf.mxu0
      %v557 = vadd.f32 0.0, %v556
      %558 = vmatmul.bf16.gmra.mxu0 %v515
      %v559 = vpop.f32.mrf.mxu0
      %v560 = vadd.f32 0.0, %v559
      %v561 = vpop.f32.mrf.mxu0
      %v562 = vadd.f32 0.0, %v561
      %563 = vmatmul.bf16.gmra.mxu0 %v518
      %v564 = vpop.f32.mrf.mxu0
      %v565 = vadd.f32 0.0, %v564
      %v566 = vpop.f32.mrf.mxu0
      %v567 = vadd.f32 0.0, %v566
      %568 = vdwg.mxu0
      %v577 = vunpack.c.l.b16 %v415
      %v578 = vunpack.c.l.b16 %v416
      %v579 = vunpack.c.l.b16 %v417
      %v580 = vunpack.c.l.b16 %v418
      %v581 = vunpack.c.l.b16 %v419
      %v582 = vunpack.c.l.b16 %v420
      %v583 = vunpack.c.l.b16 %v421
      %v584 = vunpack.c.l.b16 %v422
      %v585 = vpack.c.b16 %v578, %v577
      %v586 = vpack.c.b16 %v580, %v579
      %v587 = vpack.c.b16 %v582, %v581
      %v588 = vpack.c.b16 %v584, %v583
      %v594 = vsel %vm340, %v407, 0
      %v597 = vsel %vm340, %v408, 0
      %v600 = vsel %vm340, %v409, 0
      %v603 = vsel %vm340, %v410, 0
      %v606 = vsel %vm340, %v411, 0
      %v609 = vsel %vm340, %v412, 0
      %v612 = vsel %vm340, %v413, 0
      %v615 = vsel %vm340, %v414, 0
      %617 = vmatpush.bf16.msra.mxu0 0
      %618 = vmatpush.bf16.msra.mxu0 0
      %619 = vmatpush.bf16.msra.mxu0 0
      %620 = vmatpush.bf16.msra.mxu0 0
      %621 = vmatpush.bf16.msra.mxu0 %v588
      %622 = vmatpush.bf16.msra.mxu0 %v587
      %623 = vmatpush.bf16.msra.mxu0 %v586
      %624 = vmatpush.bf16.msra.mxu0 %v585
      %625 = vmatmul.bf16.gmra.mxu0 %v594
      %v626 = vpop.f32.mrf.mxu0
      %v627 = vadd.f32 %v530, %v626
      %v628 = vpop.f32.mrf.mxu0
      %v629 = vadd.f32 %v532, %v628
      %630 = vmatmul.bf16.gmra.mxu0 %v597
      %v631 = vpop.f32.mrf.mxu0
      %v632 = vadd.f32 %v535, %v631
      %v633 = vpop.f32.mrf.mxu0
      %v634 = vadd.f32 %v537, %v633
      %635 = vmatmul.bf16.gmra.mxu0 %v600
      %v636 = vpop.f32.mrf.mxu0
      %v637 = vadd.f32 %v540, %v636
      %v638 = vpop.f32.mrf.mxu0
      %v639 = vadd.f32 %v542, %v638
      %640 = vmatmul.bf16.gmra.mxu0 %v603
      %v641 = vpop.f32.mrf.mxu0
      %v642 = vadd.f32 %v545, %v641
      %v643 = vpop.f32.mrf.mxu0
      %v644 = vadd.f32 %v547, %v643
      %645 = vmatmul.bf16.gmra.mxu0 %v606
      %v646 = vpop.f32.mrf.mxu0
      %v647 = vadd.f32 %v550, %v646
      %v648 = vpop.f32.mrf.mxu0
      %v649 = vadd.f32 %v552, %v648
      %650 = vmatmul.bf16.gmra.mxu0 %v609
      %v651 = vpop.f32.mrf.mxu0
      %v652 = vadd.f32 %v555, %v651
      %v653 = vpop.f32.mrf.mxu0
      %v654 = vadd.f32 %v557, %v653
      %655 = vmatmul.bf16.gmra.mxu0 %v612
      %v656 = vpop.f32.mrf.mxu0
      %v657 = vadd.f32 %v560, %v656
      %v658 = vpop.f32.mrf.mxu0
      %v659 = vadd.f32 %v562, %v658
      %660 = vmatmul.bf16.gmra.mxu0 %v615
      %v661 = vpop.f32.mrf.mxu0
      %v662 = vadd.f32 %v565, %v661
      %v663 = vpop.f32.mrf.mxu0
      %v664 = vadd.f32 %v567, %v663
      %665 = vdwg.mxu0
      %s666 = scalar_lea.vmem [#allocation2], 2
      %v667 = vld [vmem:[%s666] ss:$2 sm:$0xff]
      %s668 = scalar_lea.vmem [#allocation2], 18
      %v669 = vld [vmem:[%s668] ss:$2 sm:$0xff]
      %s670 = scalar_lea.vmem [#allocation2], 34
      %v671 = vld [vmem:[%s670] ss:$2 sm:$0xff]
      %s672 = scalar_lea.vmem [#allocation2], 50
      %v673 = vld [vmem:[%s672] ss:$2 sm:$0xff]
      %s674 = scalar_lea.vmem [#allocation2], 66
      %v675 = vld [vmem:[%s674] ss:$2 sm:$0xff]
      %s676 = scalar_lea.vmem [#allocation2], 82
      %v677 = vld [vmem:[%s676] ss:$2 sm:$0xff]
      %s678 = scalar_lea.vmem [#allocation2], 98
      %v679 = vld [vmem:[%s678] ss:$2 sm:$0xff]
      %s680 = scalar_lea.vmem [#allocation2], 114
      %v681 = vld [vmem:[%s680] ss:$2 sm:$0xff]
      %s682 = scalar_lea.vmem [#allocation2], 130
      %v683 = vld [vmem:[%s682] ss:$2 sm:$0xff]
      %s684 = scalar_lea.vmem [#allocation2], 146
      %v685 = vld [vmem:[%s684] ss:$2 sm:$0xff]
      %s686 = scalar_lea.vmem [#allocation2], 162
      %v687 = vld [vmem:[%s686] ss:$2 sm:$0xff]
      %s688 = scalar_lea.vmem [#allocation2], 178
      %v689 = vld [vmem:[%s688] ss:$2 sm:$0xff]
      %s690 = scalar_lea.vmem [#allocation2], 194
      %v691 = vld [vmem:[%s690] ss:$2 sm:$0xff]
      %s692 = scalar_lea.vmem [#allocation2], 210
      %v693 = vld [vmem:[%s692] ss:$2 sm:$0xff]
      %s694 = scalar_lea.vmem [#allocation2], 226
      %v695 = vld [vmem:[%s694] ss:$2 sm:$0xff]
      %s696 = scalar_lea.vmem [#allocation2], 242
      %v697 = vld [vmem:[%s696] ss:$2 sm:$0xff]
      %v698 = vpack.c.bf16 %v669, %v667
      %v699 = vpack.c.bf16 %v673, %v671
      %v700 = vpack.c.bf16 %v677, %v675
      %v701 = vpack.c.bf16 %v681, %v679
      %v702 = vpack.c.bf16 %v685, %v683
      %v703 = vpack.c.bf16 %v689, %v687
      %v704 = vpack.c.bf16 %v693, %v691
      %v705 = vpack.c.bf16 %v697, %v695
      %s706 = scalar_lea.vmem %s2, 64
      %v707 = vld [vmem:[%s706] sm:$0xf]
      %v708 = vld [vmem:[%s706 + $0x4] sm:$0xf]
      %v709 = vld [vmem:[%s706 + $0x8] sm:$0xf]
      %v710 = vld [vmem:[%s706 + $0xc] sm:$0xf]
      %v711 = vld [vmem:[%s706 + $0x10] sm:$0xf]
      %v712 = vld [vmem:[%s706 + $0x14] sm:$0xf]
      %v713 = vld [vmem:[%s706 + $0x18] sm:$0xf]
      %v714 = vld [vmem:[%s706 + $0x1c] sm:$0xf]
      %v723 = vunpack.c.l.b16 %v707
      %v724 = vunpack.c.l.b16 %v708
      %v725 = vunpack.c.l.b16 %v709
      %v726 = vunpack.c.l.b16 %v710
      %v727 = vunpack.c.l.b16 %v711
      %v728 = vunpack.c.l.b16 %v712
      %v729 = vunpack.c.l.b16 %v713
      %v730 = vunpack.c.l.b16 %v714
      %v731 = vpack.c.b16 %v724, %v723
      %v732 = vpack.c.b16 %v726, %v725
      %v733 = vpack.c.b16 %v728, %v727
      %v734 = vpack.c.b16 %v730, %v729
      %v740 = vsel %vm340, %v698, 0
      %v743 = vsel %vm340, %v699, 0
      %v746 = vsel %vm340, %v700, 0
      %v749 = vsel %vm340, %v701, 0
      %v752 = vsel %vm340, %v702, 0
      %v755 = vsel %vm340, %v703, 0
      %v758 = vsel %vm340, %v704, 0
      %v761 = vsel %vm340, %v705, 0
      %763 = vmatpush.bf16.msra.mxu0 0
      %764 = vmatpush.bf16.msra.mxu0 0
      %765 = vmatpush.bf16.msra.mxu0 0
      %766 = vmatpush.bf16.msra.mxu0 0
      %767 = vmatpush.bf16.msra.mxu0 %v734
      %768 = vmatpush.bf16.msra.mxu0 %v733
      %769 = vmatpush.bf16.msra.mxu0 %v732
      %770 = vmatpush.bf16.msra.mxu0 %v731
      %771 = vmatmul.bf16.gmra.mxu0 %v740
      %v772 = vpop.f32.mrf.mxu0
      %v773 = vadd.f32 0.0, %v772
      %v774 = vpop.f32.mrf.mxu0
      %v775 = vadd.f32 0.0, %v774
      %776 = vmatmul.bf16.gmra.mxu0 %v743
      %v777 = vpop.f32.mrf.mxu0
      %v778 = vadd.f32 0.0, %v777
      %v779 = vpop.f32.mrf.mxu0
      %v780 = vadd.f32 0.0, %v779
      %781 = vmatmul.bf16.gmra.mxu0 %v746
      %v782 = vpop.f32.mrf.mxu0
      %v783 = vadd.f32 0.0, %v782
      %v784 = vpop.f32.mrf.mxu0
      %v785 = vadd.f32 0.0, %v784
      %786 = vmatmul.bf16.gmra.mxu0 %v749
      %v787 = vpop.f32.mrf.mxu0
      %v788 = vadd.f32 0.0, %v787
      %v789 = vpop.f32.mrf.mxu0
      %v790 = vadd.f32 0.0, %v789
      %791 = vmatmul.bf16.gmra.mxu0 %v752
      %v792 = vpop.f32.mrf.mxu0
      %v793 = vadd.f32 0.0, %v792
      %v794 = vpop.f32.mrf.mxu0
      %v795 = vadd.f32 0.0, %v794
      %796 = vmatmul.bf16.gmra.mxu0 %v755
      %v797 = vpop.f32.mrf.mxu0
      %v798 = vadd.f32 0.0, %v797
      %v799 = vpop.f32.mrf.mxu0
      %v800 = vadd.f32 0.0, %v799
      %801 = vmatmul.bf16.gmra.mxu0 %v758
      %v802 = vpop.f32.mrf.mxu0
      %v803 = vadd.f32 0.0, %v802
      %v804 = vpop.f32.mrf.mxu0
      %v805 = vadd.f32 0.0, %v804
      %806 = vmatmul.bf16.gmra.mxu0 %v761
      %v807 = vpop.f32.mrf.mxu0
      %v808 = vadd.f32 0.0, %v807
      %v809 = vpop.f32.mrf.mxu0
      %v810 = vadd.f32 0.0, %v809
      %811 = vdwg.mxu0
      %v812 = vadd.f32 %v627, %v773
      %v813 = vadd.f32 %v629, %v775
      %v814 = vadd.f32 %v632, %v778
      %v815 = vadd.f32 %v634, %v780
      %v816 = vadd.f32 %v637, %v783
      %v817 = vadd.f32 %v639, %v785
      %v818 = vadd.f32 %v642, %v788
      %v819 = vadd.f32 %v644, %v790
      %v820 = vadd.f32 %v647, %v793
      %v821 = vadd.f32 %v649, %v795
      %v822 = vadd.f32 %v652, %v798
      %v823 = vadd.f32 %v654, %v800
      %v824 = vadd.f32 %v657, %v803
      %v825 = vadd.f32 %v659, %v805
      %v826 = vadd.f32 %v662, %v808
      %v827 = vadd.f32 %v664, %v810
      %v828 = vmul.f32 %v812, 0.5
      %v829 = vmul.f32 %v813, 0.5
      %v830 = vmul.f32 %v814, 0.5
      %v831 = vmul.f32 %v815, 0.5
      %v832 = vmul.f32 %v816, 0.5
      %v833 = vmul.f32 %v817, 0.5
      %v834 = vmul.f32 %v818, 0.5
      %v835 = vmul.f32 %v819, 0.5
      %v836 = vmul.f32 %v820, 0.5
      %v837 = vmul.f32 %v821, 0.5
      %v838 = vmul.f32 %v822, 0.5
      %v839 = vmul.f32 %v823, 0.5
      %v840 = vmul.f32 %v824, 0.5
      %v841 = vmul.f32 %v825, 0.5
      %v842 = vmul.f32 %v826, 0.5
      %v843 = vmul.f32 %v827, 0.5
      %v844 = vmul.f32 %v812, 0.70710677
      %v845 = vmul.f32 %v813, 0.70710677
      %v846 = vmul.f32 %v814, 0.70710677
      %v847 = vmul.f32 %v815, 0.70710677
      %v848 = vmul.f32 %v816, 0.70710677
      %v849 = vmul.f32 %v817, 0.70710677
      %v850 = vmul.f32 %v818, 0.70710677
      %v851 = vmul.f32 %v819, 0.70710677
      %v852 = vmul.f32 %v820, 0.70710677
      %v853 = vmul.f32 %v821, 0.70710677
      %v854 = vmul.f32 %v822, 0.70710677
      %v855 = vmul.f32 %v823, 0.70710677
      %v856 = vmul.f32 %v824, 0.70710677
      %v857 = vmul.f32 %v825, 0.70710677
      %v858 = vmul.f32 %v826, 0.70710677
      %v859 = vmul.f32 %v827, 0.70710677
      %v860 = vmul.f32 %v844, %v844
      %v861 = vmin.f32 16.0, %v860
      %v862 = vmul.f32 %v861, 2.1237322e-06
      %v863 = vadd.f32 %v862, 0.00028619796
      %v864 = vmul.f32 %v861, %v863
      %v865 = vadd.f32 %v864, 0.0036580483
      %v866 = vmul.f32 %v861, %v865
      %v867 = vadd.f32 %v866, 0.05243302
      %v868 = vmul.f32 %v861, %v867
      %v869 = vadd.f32 %v868, 0.18741608
      %v870 = vmul.f32 %v861, %v869
      %v871 = vadd.f32 %v870, 1.1283791
      %v872 = vmul.f32 %v844, %v871
      %v873 = vmul.f32 %v861, 3.8918573e-05
      %v874 = vadd.f32 %v873, 0.001143296
      %v875 = vmul.f32 %v861, %v874
      %v876 = vadd.f32 %v875, 0.014752088
      %v877 = vmul.f32 %v861, %v876
      %v878 = vadd.f32 %v877, 0.112945676
      %v879 = vmul.f32 %v861, %v878
      %v880 = vadd.f32 %v879, 0.4994258
      %v881 = vmul.f32 %v861, %v880
      %v882 = vadd.f32 %v881, 1.0
      %v883 = vrcp.pop %v882
      %v884 = vmul.f32 %v882, %v883
      %v885 = vsub.f32 1.0, %v884
      %v886 = vmul.f32 %v883, %v885
      %v887 = vadd.f32 %v883, %v886
      %vm888 = vweird.f32 %v882
      %vm889 = vweird.f32 %v883
      %vm890 = vmor %vm888, %vm889
      %v891 = vsel %vm890, %v883, %v887
      %v892 = vand.u32 2147483647, %v882
      %vm893 = vcmp.eq.f32.partialorder %v892, 8.507059e+37
      %v894 = vand.u32 %v882, 2147483648
      %v895 = vor.u32 1.1754944e-38, %v894
      %v896 = vsel %vm893, %v895, %v891
      %v897 = vmul.f32 %v872, %v896
      %v898 = vmin.f32 %v897, 1.0
      %v899 = vmax.f32 %v898, -1.0
      %v900 = vmul.f32 %v845, %v845
      %v901 = vmin.f32 16.0, %v900
      %v902 = vmul.f32 %v901, 2.1237322e-06
      %v903 = vadd.f32 %v902, 0.00028619796
      %v904 = vmul.f32 %v901, %v903
      %v905 = vadd.f32 %v904, 0.0036580483
      %v906 = vmul.f32 %v901, %v905
      %v907 = vadd.f32 %v906, 0.05243302
      %v908 = vmul.f32 %v901, %v907
      %v909 = vadd.f32 %v908, 0.18741608
      %v910 = vmul.f32 %v901, %v909
      %v911 = vadd.f32 %v910, 1.1283791
      %v912 = vmul.f32 %v845, %v911
      %v913 = vmul.f32 %v901, 3.8918573e-05
      %v914 = vadd.f32 %v913, 0.001143296
      %v915 = vmul.f32 %v901, %v914
      %v916 = vadd.f32 %v915, 0.014752088
      %v917 = vmul.f32 %v901, %v916
      %v918 = vadd.f32 %v917, 0.112945676
      %v919 = vmul.f32 %v901, %v918
      %v920 = vadd.f32 %v919, 0.4994258
      %v921 = vmul.f32 %v901, %v920
      %v922 = vadd.f32 %v921, 1.0
      %v923 = vrcp.pop %v922
      %v924 = vmul.f32 %v922, %v923
      %v925 = vsub.f32 1.0, %v924
      %v926 = vmul.f32 %v923, %v925
      %v927 = vadd.f32 %v923, %v926
      %vm928 = vweird.f32 %v922
      %vm929 = vweird.f32 %v923
      %vm930 = vmor %vm928, %vm929
      %v931 = vsel %vm930, %v923, %v927
      %v932 = vand.u32 2147483647, %v922
      %vm933 = vcmp.eq.f32.partialorder %v932, 8.507059e+37
      %v934 = vand.u32 %v922, 2147483648
      %v935 = vor.u32 1.1754944e-38, %v934
      %v936 = vsel %vm933, %v935, %v931
      %v937 = vmul.f32 %v912, %v936
      %v938 = vmin.f32 %v937, 1.0
      %v939 = vmax.f32 %v938, -1.0
      %v940 = vmul.f32 %v846, %v846
      %v941 = vmin.f32 16.0, %v940
      %v942 = vmul.f32 %v941, 2.1237322e-06
      %v943 = vadd.f32 %v942, 0.00028619796
      %v944 = vmul.f32 %v941, %v943
      %v945 = vadd.f32 %v944, 0.0036580483
      %v946 = vmul.f32 %v941, %v945
      %v947 = vadd.f32 %v946, 0.05243302
      %v948 = vmul.f32 %v941, %v947
      %v949 = vadd.f32 %v948, 0.18741608
      %v950 = vmul.f32 %v941, %v949
      %v951 = vadd.f32 %v950, 1.1283791
      %v952 = vmul.f32 %v846, %v951
      %v953 = vmul.f32 %v941, 3.8918573e-05
      %v954 = vadd.f32 %v953, 0.001143296
      %v955 = vmul.f32 %v941, %v954
      %v956 = vadd.f32 %v955, 0.014752088
      %v957 = vmul.f32 %v941, %v956
      %v958 = vadd.f32 %v957, 0.112945676
      %v959 = vmul.f32 %v941, %v958
      %v960 = vadd.f32 %v959, 0.4994258
      %v961 = vmul.f32 %v941, %v960
      %v962 = vadd.f32 %v961, 1.0
      %v963 = vrcp.pop %v962
      %v964 = vmul.f32 %v962, %v963
      %v965 = vsub.f32 1.0, %v964
      %v966 = vmul.f32 %v963, %v965
      %v967 = vadd.f32 %v963, %v966
      %vm968 = vweird.f32 %v962
      %vm969 = vweird.f32 %v963
      %vm970 = vmor %vm968, %vm969
      %v971 = vsel %vm970, %v963, %v967
      %v972 = vand.u32 2147483647, %v962
      %vm973 = vcmp.eq.f32.partialorder %v972, 8.507059e+37
      %v974 = vand.u32 %v962, 2147483648
      %v975 = vor.u32 1.1754944e-38, %v974
      %v976 = vsel %vm973, %v975, %v971
      %v977 = vmul.f32 %v952, %v976
      %v978 = vmin.f32 %v977, 1.0
      %v979 = vmax.f32 %v978, -1.0
      %v980 = vmul.f32 %v847, %v847
      %v981 = vmin.f32 16.0, %v980
      %v982 = vmul.f32 %v981, 2.1237322e-06
      %v983 = vadd.f32 %v982, 0.00028619796
      %v984 = vmul.f32 %v981, %v983
      %v985 = vadd.f32 %v984, 0.0036580483
      %v986 = vmul.f32 %v981, %v985
      %v987 = vadd.f32 %v986, 0.05243302
      %v988 = vmul.f32 %v981, %v987
      %v989 = vadd.f32 %v988, 0.18741608
      %v990 = vmul.f32 %v981, %v989
      %v991 = vadd.f32 %v990, 1.1283791
      %v992 = vmul.f32 %v847, %v991
      %v993 = vmul.f32 %v981, 3.8918573e-05
      %v994 = vadd.f32 %v993, 0.001143296
      %v995 = vmul.f32 %v981, %v994
      %v996 = vadd.f32 %v995, 0.014752088
      %v997 = vmul.f32 %v981, %v996
      %v998 = vadd.f32 %v997, 0.112945676
      %v999 = vmul.f32 %v981, %v998
      %v1000 = vadd.f32 %v999, 0.4994258
      %v1001 = vmul.f32 %v981, %v1000
      %v1002 = vadd.f32 %v1001, 1.0
      %v1003 = vrcp.pop %v1002
      %v1004 = vmul.f32 %v1002, %v1003
      %v1005 = vsub.f32 1.0, %v1004
      %v1006 = vmul.f32 %v1003, %v1005
      %v1007 = vadd.f32 %v1003, %v1006
      %vm1008 = vweird.f32 %v1002
      %vm1009 = vweird.f32 %v1003
      %vm1010 = vmor %vm1008, %vm1009
      %v1011 = vsel %vm1010, %v1003, %v1007
      %v1012 = vand.u32 2147483647, %v1002
      %vm1013 = vcmp.eq.f32.partialorder %v1012, 8.507059e+37
      %v1014 = vand.u32 %v1002, 2147483648
      %v1015 = vor.u32 1.1754944e-38, %v1014
      %v1016 = vsel %vm1013, %v1015, %v1011
      %v1017 = vmul.f32 %v992, %v1016
      %v1018 = vmin.f32 %v1017, 1.0
      %v1019 = vmax.f32 %v1018, -1.0
      %v1020 = vmul.f32 %v848, %v848
      %v1021 = vmin.f32 16.0, %v1020
      %v1022 = vmul.f32 %v1021, 2.1237322e-06
      %v1023 = vadd.f32 %v1022, 0.00028619796
      %v1024 = vmul.f32 %v1021, %v1023
      %v1025 = vadd.f32 %v1024, 0.0036580483
      %v1026 = vmul.f32 %v1021, %v1025
      %v1027 = vadd.f32 %v1026, 0.05243302
      %v1028 = vmul.f32 %v1021, %v1027
      %v1029 = vadd.f32 %v1028, 0.18741608
      %v1030 = vmul.f32 %v1021, %v1029
      %v1031 = vadd.f32 %v1030, 1.1283791
      %v1032 = vmul.f32 %v848, %v1031
      %v1033 = vmul.f32 %v1021, 3.8918573e-05
      %v1034 = vadd.f32 %v1033, 0.001143296
      %v1035 = vmul.f32 %v1021, %v1034
      %v1036 = vadd.f32 %v1035, 0.014752088
      %v1037 = vmul.f32 %v1021, %v1036
      %v1038 = vadd.f32 %v1037, 0.112945676
      %v1039 = vmul.f32 %v1021, %v1038
      %v1040 = vadd.f32 %v1039, 0.4994258
      %v1041 = vmul.f32 %v1021, %v1040
      %v1042 = vadd.f32 %v1041, 1.0
      %v1043 = vrcp.pop %v1042
      %v1044 = vmul.f32 %v1042, %v1043
      %v1045 = vsub.f32 1.0, %v1044
      %v1046 = vmul.f32 %v1043, %v1045
      %v1047 = vadd.f32 %v1043, %v1046
      %vm1048 = vweird.f32 %v1042
      %vm1049 = vweird.f32 %v1043
      %vm1050 = vmor %vm1048, %vm1049
      %v1051 = vsel %vm1050, %v1043, %v1047
      %v1052 = vand.u32 2147483647, %v1042
      %vm1053 = vcmp.eq.f32.partialorder %v1052, 8.507059e+37
      %v1054 = vand.u32 %v1042, 2147483648
      %v1055 = vor.u32 1.1754944e-38, %v1054
      %v1056 = vsel %vm1053, %v1055, %v1051
      %v1057 = vmul.f32 %v1032, %v1056
      %v1058 = vmin.f32 %v1057, 1.0
      %v1059 = vmax.f32 %v1058, -1.0
      %v1060 = vmul.f32 %v849, %v849
      %v1061 = vmin.f32 16.0, %v1060
      %v1062 = vmul.f32 %v1061, 2.1237322e-06
      %v1063 = vadd.f32 %v1062, 0.00028619796
      %v1064 = vmul.f32 %v1061, %v1063
      %v1065 = vadd.f32 %v1064, 0.0036580483
      %v1066 = vmul.f32 %v1061, %v1065
      %v1067 = vadd.f32 %v1066, 0.05243302
      %v1068 = vmul.f32 %v1061, %v1067
      %v1069 = vadd.f32 %v1068, 0.18741608
      %v1070 = vmul.f32 %v1061, %v1069
      %v1071 = vadd.f32 %v1070, 1.1283791
      %v1072 = vmul.f32 %v849, %v1071
      %v1073 = vmul.f32 %v1061, 3.8918573e-05
      %v1074 = vadd.f32 %v1073, 0.001143296
      %v1075 = vmul.f32 %v1061, %v1074
      %v1076 = vadd.f32 %v1075, 0.014752088
      %v1077 = vmul.f32 %v1061, %v1076
      %v1078 = vadd.f32 %v1077, 0.112945676
      %v1079 = vmul.f32 %v1061, %v1078
      %v1080 = vadd.f32 %v1079, 0.4994258
      %v1081 = vmul.f32 %v1061, %v1080
      %v1082 = vadd.f32 %v1081, 1.0
      %v1083 = vrcp.pop %v1082
      %v1084 = vmul.f32 %v1082, %v1083
      %v1085 = vsub.f32 1.0, %v1084
      %v1086 = vmul.f32 %v1083, %v1085
      %v1087 = vadd.f32 %v1083, %v1086
      %vm1088 = vweird.f32 %v1082
      %vm1089 = vweird.f32 %v1083
      %vm1090 = vmor %vm1088, %vm1089
      %v1091 = vsel %vm1090, %v1083, %v1087
      %v1092 = vand.u32 2147483647, %v1082
      %vm1093 = vcmp.eq.f32.partialorder %v1092, 8.507059e+37
      %v1094 = vand.u32 %v1082, 2147483648
      %v1095 = vor.u32 1.1754944e-38, %v1094
      %v1096 = vsel %vm1093, %v1095, %v1091
      %v1097 = vmul.f32 %v1072, %v1096
      %v1098 = vmin.f32 %v1097, 1.0
      %v1099 = vmax.f32 %v1098, -1.0
      %v1100 = vmul.f32 %v850, %v850
      %v1101 = vmin.f32 16.0, %v1100
      %v1102 = vmul.f32 %v1101, 2.1237322e-06
      %v1103 = vadd.f32 %v1102, 0.00028619796
      %v1104 = vmul.f32 %v1101, %v1103
      %v1105 = vadd.f32 %v1104, 0.0036580483
      %v1106 = vmul.f32 %v1101, %v1105
      %v1107 = vadd.f32 %v1106, 0.05243302
      %v1108 = vmul.f32 %v1101, %v1107
      %v1109 = vadd.f32 %v1108, 0.18741608
      %v1110 = vmul.f32 %v1101, %v1109
      %v1111 = vadd.f32 %v1110, 1.1283791
      %v1112 = vmul.f32 %v850, %v1111
      %v1113 = vmul.f32 %v1101, 3.8918573e-05
      %v1114 = vadd.f32 %v1113, 0.001143296
      %v1115 = vmul.f32 %v1101, %v1114
      %v1116 = vadd.f32 %v1115, 0.014752088
      %v1117 = vmul.f32 %v1101, %v1116
      %v1118 = vadd.f32 %v1117, 0.112945676
      %v1119 = vmul.f32 %v1101, %v1118
      %v1120 = vadd.f32 %v1119, 0.4994258
      %v1121 = vmul.f32 %v1101, %v1120
      %v1122 = vadd.f32 %v1121, 1.0
      %v1123 = vrcp.pop %v1122
      %v1124 = vmul.f32 %v1122, %v1123
      %v1125 = vsub.f32 1.0, %v1124
      %v1126 = vmul.f32 %v1123, %v1125
      %v1127 = vadd.f32 %v1123, %v1126
      %vm1128 = vweird.f32 %v1122
      %vm1129 = vweird.f32 %v1123
      %vm1130 = vmor %vm1128, %vm1129
      %v1131 = vsel %vm1130, %v1123, %v1127
      %v1132 = vand.u32 2147483647, %v1122
      %vm1133 = vcmp.eq.f32.partialorder %v1132, 8.507059e+37
      %v1134 = vand.u32 %v1122, 2147483648
      %v1135 = vor.u32 1.1754944e-38, %v1134
      %v1136 = vsel %vm1133, %v1135, %v1131
      %v1137 = vmul.f32 %v1112, %v1136
      %v1138 = vmin.f32 %v1137, 1.0
      %v1139 = vmax.f32 %v1138, -1.0
      %v1140 = vmul.f32 %v851, %v851
      %v1141 = vmin.f32 16.0, %v1140
      %v1142 = vmul.f32 %v1141, 2.1237322e-06
      %v1143 = vadd.f32 %v1142, 0.00028619796
      %v1144 = vmul.f32 %v1141, %v1143
      %v1145 = vadd.f32 %v1144, 0.0036580483
      %v1146 = vmul.f32 %v1141, %v1145
      %v1147 = vadd.f32 %v1146, 0.05243302
      %v1148 = vmul.f32 %v1141, %v1147
      %v1149 = vadd.f32 %v1148, 0.18741608
      %v1150 = vmul.f32 %v1141, %v1149
      %v1151 = vadd.f32 %v1150, 1.1283791
      %v1152 = vmul.f32 %v851, %v1151
      %v1153 = vmul.f32 %v1141, 3.8918573e-05
      %v1154 = vadd.f32 %v1153, 0.001143296
      %v1155 = vmul.f32 %v1141, %v1154
      %v1156 = vadd.f32 %v1155, 0.014752088
      %v1157 = vmul.f32 %v1141, %v1156
      %v1158 = vadd.f32 %v1157, 0.112945676
      %v1159 = vmul.f32 %v1141, %v1158
      %v1160 = vadd.f32 %v1159, 0.4994258
      %v1161 = vmul.f32 %v1141, %v1160
      %v1162 = vadd.f32 %v1161, 1.0
      %v1163 = vrcp.pop %v1162
      %v1164 = vmul.f32 %v1162, %v1163
      %v1165 = vsub.f32 1.0, %v1164
      %v1166 = vmul.f32 %v1163, %v1165
      %v1167 = vadd.f32 %v1163, %v1166
      %vm1168 = vweird.f32 %v1162
      %vm1169 = vweird.f32 %v1163
      %vm1170 = vmor %vm1168, %vm1169
      %v1171 = vsel %vm1170, %v1163, %v1167
      %v1172 = vand.u32 2147483647, %v1162
      %vm1173 = vcmp.eq.f32.partialorder %v1172, 8.507059e+37
      %v1174 = vand.u32 %v1162, 2147483648
      %v1175 = vor.u32 1.1754944e-38, %v1174
      %v1176 = vsel %vm1173, %v1175, %v1171
      %v1177 = vmul.f32 %v1152, %v1176
      %v1178 = vmin.f32 %v1177, 1.0
      %v1179 = vmax.f32 %v1178, -1.0
      %v1180 = vmul.f32 %v852, %v852
      %v1181 = vmin.f32 16.0, %v1180
      %v1182 = vmul.f32 %v1181, 2.1237322e-06
      %v1183 = vadd.f32 %v1182, 0.00028619796
      %v1184 = vmul.f32 %v1181, %v1183
      %v1185 = vadd.f32 %v1184, 0.0036580483
      %v1186 = vmul.f32 %v1181, %v1185
      %v1187 = vadd.f32 %v1186, 0.05243302
      %v1188 = vmul.f32 %v1181, %v1187
      %v1189 = vadd.f32 %v1188, 0.18741608
      %v1190 = vmul.f32 %v1181, %v1189
      %v1191 = vadd.f32 %v1190, 1.1283791
      %v1192 = vmul.f32 %v852, %v1191
      %v1193 = vmul.f32 %v1181, 3.8918573e-05
      %v1194 = vadd.f32 %v1193, 0.001143296
      %v1195 = vmul.f32 %v1181, %v1194
      %v1196 = vadd.f32 %v1195, 0.014752088
      %v1197 = vmul.f32 %v1181, %v1196
      %v1198 = vadd.f32 %v1197, 0.112945676
      %v1199 = vmul.f32 %v1181, %v1198
      %v1200 = vadd.f32 %v1199, 0.4994258
      %v1201 = vmul.f32 %v1181, %v1200
      %v1202 = vadd.f32 %v1201, 1.0
      %v1203 = vrcp.pop %v1202
      %v1204 = vmul.f32 %v1202, %v1203
      %v1205 = vsub.f32 1.0, %v1204
      %v1206 = vmul.f32 %v1203, %v1205
      %v1207 = vadd.f32 %v1203, %v1206
      %vm1208 = vweird.f32 %v1202
      %vm1209 = vweird.f32 %v1203
      %vm1210 = vmor %vm1208, %vm1209
      %v1211 = vsel %vm1210, %v1203, %v1207
      %v1212 = vand.u32 2147483647, %v1202
      %vm1213 = vcmp.eq.f32.partialorder %v1212, 8.507059e+37
      %v1214 = vand.u32 %v1202, 2147483648
      %v1215 = vor.u32 1.1754944e-38, %v1214
      %v1216 = vsel %vm1213, %v1215, %v1211
      %v1217 = vmul.f32 %v1192, %v1216
      %v1218 = vmin.f32 %v1217, 1.0
      %v1219 = vmax.f32 %v1218, -1.0
      %v1220 = vmul.f32 %v853, %v853
      %v1221 = vmin.f32 16.0, %v1220
      %v1222 = vmul.f32 %v1221, 2.1237322e-06
      %v1223 = vadd.f32 %v1222, 0.00028619796
      %v1224 = vmul.f32 %v1221, %v1223
      %v1225 = vadd.f32 %v1224, 0.0036580483
      %v1226 = vmul.f32 %v1221, %v1225
      %v1227 = vadd.f32 %v1226, 0.05243302
      %v1228 = vmul.f32 %v1221, %v1227
      %v1229 = vadd.f32 %v1228, 0.18741608
      %v1230 = vmul.f32 %v1221, %v1229
      %v1231 = vadd.f32 %v1230, 1.1283791
      %v1232 = vmul.f32 %v853, %v1231
      %v1233 = vmul.f32 %v1221, 3.8918573e-05
      %v1234 = vadd.f32 %v1233, 0.001143296
      %v1235 = vmul.f32 %v1221, %v1234
      %v1236 = vadd.f32 %v1235, 0.014752088
      %v1237 = vmul.f32 %v1221, %v1236
      %v1238 = vadd.f32 %v1237, 0.112945676
      %v1239 = vmul.f32 %v1221, %v1238
      %v1240 = vadd.f32 %v1239, 0.4994258
      %v1241 = vmul.f32 %v1221, %v1240
      %v1242 = vadd.f32 %v1241, 1.0
      %v1243 = vrcp.pop %v1242
      %v1244 = vmul.f32 %v1242, %v1243
      %v1245 = vsub.f32 1.0, %v1244
      %v1246 = vmul.f32 %v1243, %v1245
      %v1247 = vadd.f32 %v1243, %v1246
      %vm1248 = vweird.f32 %v1242
      %vm1249 = vweird.f32 %v1243
      %vm1250 = vmor %vm1248, %vm1249
      %v1251 = vsel %vm1250, %v1243, %v1247
      %v1252 = vand.u32 2147483647, %v1242
      %vm1253 = vcmp.eq.f32.partialorder %v1252, 8.507059e+37
      %v1254 = vand.u32 %v1242, 2147483648
      %v1255 = vor.u32 1.1754944e-38, %v1254
      %v1256 = vsel %vm1253, %v1255, %v1251
      %v1257 = vmul.f32 %v1232, %v1256
      %v1258 = vmin.f32 %v1257, 1.0
      %v1259 = vmax.f32 %v1258, -1.0
      %v1260 = vmul.f32 %v854, %v854
      %v1261 = vmin.f32 16.0, %v1260
      %v1262 = vmul.f32 %v1261, 2.1237322e-06
      %v1263 = vadd.f32 %v1262, 0.00028619796
      %v1264 = vmul.f32 %v1261, %v1263
      %v1265 = vadd.f32 %v1264, 0.0036580483
      %v1266 = vmul.f32 %v1261, %v1265
      %v1267 = vadd.f32 %v1266, 0.05243302
      %v1268 = vmul.f32 %v1261, %v1267
      %v1269 = vadd.f32 %v1268, 0.18741608
      %v1270 = vmul.f32 %v1261, %v1269
      %v1271 = vadd.f32 %v1270, 1.1283791
      %v1272 = vmul.f32 %v854, %v1271
      %v1273 = vmul.f32 %v1261, 3.8918573e-05
      %v1274 = vadd.f32 %v1273, 0.001143296
      %v1275 = vmul.f32 %v1261, %v1274
      %v1276 = vadd.f32 %v1275, 0.014752088
      %v1277 = vmul.f32 %v1261, %v1276
      %v1278 = vadd.f32 %v1277, 0.112945676
      %v1279 = vmul.f32 %v1261, %v1278
      %v1280 = vadd.f32 %v1279, 0.4994258
      %v1281 = vmul.f32 %v1261, %v1280
      %v1282 = vadd.f32 %v1281, 1.0
      %v1283 = vrcp.pop %v1282
      %v1284 = vmul.f32 %v1282, %v1283
      %v1285 = vsub.f32 1.0, %v1284
      %v1286 = vmul.f32 %v1283, %v1285
      %v1287 = vadd.f32 %v1283, %v1286
      %vm1288 = vweird.f32 %v1282
      %vm1289 = vweird.f32 %v1283
      %vm1290 = vmor %vm1288, %vm1289
      %v1291 = vsel %vm1290, %v1283, %v1287
      %v1292 = vand.u32 2147483647, %v1282
      %vm1293 = vcmp.eq.f32.partialorder %v1292, 8.507059e+37
      %v1294 = vand.u32 %v1282, 2147483648
      %v1295 = vor.u32 1.1754944e-38, %v1294
      %v1296 = vsel %vm1293, %v1295, %v1291
      %v1297 = vmul.f32 %v1272, %v1296
      %v1298 = vmin.f32 %v1297, 1.0
      %v1299 = vmax.f32 %v1298, -1.0
      %v1300 = vmul.f32 %v855, %v855
      %v1301 = vmin.f32 16.0, %v1300
      %v1302 = vmul.f32 %v1301, 2.1237322e-06
      %v1303 = vadd.f32 %v1302, 0.00028619796
      %v1304 = vmul.f32 %v1301, %v1303
      %v1305 = vadd.f32 %v1304, 0.0036580483
      %v1306 = vmul.f32 %v1301, %v1305
      %v1307 = vadd.f32 %v1306, 0.05243302
      %v1308 = vmul.f32 %v1301, %v1307
      %v1309 = vadd.f32 %v1308, 0.18741608
      %v1310 = vmul.f32 %v1301, %v1309
      %v1311 = vadd.f32 %v1310, 1.1283791
      %v1312 = vmul.f32 %v855, %v1311
      %v1313 = vmul.f32 %v1301, 3.8918573e-05
      %v1314 = vadd.f32 %v1313, 0.001143296
      %v1315 = vmul.f32 %v1301, %v1314
      %v1316 = vadd.f32 %v1315, 0.014752088
      %v1317 = vmul.f32 %v1301, %v1316
      %v1318 = vadd.f32 %v1317, 0.112945676
      %v1319 = vmul.f32 %v1301, %v1318
      %v1320 = vadd.f32 %v1319, 0.4994258
      %v1321 = vmul.f32 %v1301, %v1320
      %v1322 = vadd.f32 %v1321, 1.0
      %v1323 = vrcp.pop %v1322
      %v1324 = vmul.f32 %v1322, %v1323
      %v1325 = vsub.f32 1.0, %v1324
      %v1326 = vmul.f32 %v1323, %v1325
      %v1327 = vadd.f32 %v1323, %v1326
      %vm1328 = vweird.f32 %v1322
      %vm1329 = vweird.f32 %v1323
      %vm1330 = vmor %vm1328, %vm1329
      %v1331 = vsel %vm1330, %v1323, %v1327
      %v1332 = vand.u32 2147483647, %v1322
      %vm1333 = vcmp.eq.f32.partialorder %v1332, 8.507059e+37
      %v1334 = vand.u32 %v1322, 2147483648
      %v1335 = vor.u32 1.1754944e-38, %v1334
      %v1336 = vsel %vm1333, %v1335, %v1331
      %v1337 = vmul.f32 %v1312, %v1336
      %v1338 = vmin.f32 %v1337, 1.0
      %v1339 = vmax.f32 %v1338, -1.0
      %v1340 = vmul.f32 %v856, %v856
      %v1341 = vmin.f32 16.0, %v1340
      %v1342 = vmul.f32 %v1341, 2.1237322e-06
      %v1343 = vadd.f32 %v1342, 0.00028619796
      %v1344 = vmul.f32 %v1341, %v1343
      %v1345 = vadd.f32 %v1344, 0.0036580483
      %v1346 = vmul.f32 %v1341, %v1345
      %v1347 = vadd.f32 %v1346, 0.05243302
      %v1348 = vmul.f32 %v1341, %v1347
      %v1349 = vadd.f32 %v1348, 0.18741608
      %v1350 = vmul.f32 %v1341, %v1349
      %v1351 = vadd.f32 %v1350, 1.1283791
      %v1352 = vmul.f32 %v856, %v1351
      %v1353 = vmul.f32 %v1341, 3.8918573e-05
      %v1354 = vadd.f32 %v1353, 0.001143296
      %v1355 = vmul.f32 %v1341, %v1354
      %v1356 = vadd.f32 %v1355, 0.014752088
      %v1357 = vmul.f32 %v1341, %v1356
      %v1358 = vadd.f32 %v1357, 0.112945676
      %v1359 = vmul.f32 %v1341, %v1358
      %v1360 = vadd.f32 %v1359, 0.4994258
      %v1361 = vmul.f32 %v1341, %v1360
      %v1362 = vadd.f32 %v1361, 1.0
      %v1363 = vrcp.pop %v1362
      %v1364 = vmul.f32 %v1362, %v1363
      %v1365 = vsub.f32 1.0, %v1364
      %v1366 = vmul.f32 %v1363, %v1365
      %v1367 = vadd.f32 %v1363, %v1366
      %vm1368 = vweird.f32 %v1362
      %vm1369 = vweird.f32 %v1363
      %vm1370 = vmor %vm1368, %vm1369
      %v1371 = vsel %vm1370, %v1363, %v1367
      %v1372 = vand.u32 2147483647, %v1362
      %vm1373 = vcmp.eq.f32.partialorder %v1372, 8.507059e+37
      %v1374 = vand.u32 %v1362, 2147483648
      %v1375 = vor.u32 1.1754944e-38, %v1374
      %v1376 = vsel %vm1373, %v1375, %v1371
      %v1377 = vmul.f32 %v1352, %v1376
      %v1378 = vmin.f32 %v1377, 1.0
      %v1379 = vmax.f32 %v1378, -1.0
      %v1380 = vmul.f32 %v857, %v857
      %v1381 = vmin.f32 16.0, %v1380
      %v1382 = vmul.f32 %v1381, 2.1237322e-06
      %v1383 = vadd.f32 %v1382, 0.00028619796
      %v1384 = vmul.f32 %v1381, %v1383
      %v1385 = vadd.f32 %v1384, 0.0036580483
      %v1386 = vmul.f32 %v1381, %v1385
      %v1387 = vadd.f32 %v1386, 0.05243302
      %v1388 = vmul.f32 %v1381, %v1387
      %v1389 = vadd.f32 %v1388, 0.18741608
      %v1390 = vmul.f32 %v1381, %v1389
      %v1391 = vadd.f32 %v1390, 1.1283791
      %v1392 = vmul.f32 %v857, %v1391
      %v1393 = vmul.f32 %v1381, 3.8918573e-05
      %v1394 = vadd.f32 %v1393, 0.001143296
      %v1395 = vmul.f32 %v1381, %v1394
      %v1396 = vadd.f32 %v1395, 0.014752088
      %v1397 = vmul.f32 %v1381, %v1396
      %v1398 = vadd.f32 %v1397, 0.112945676
      %v1399 = vmul.f32 %v1381, %v1398
      %v1400 = vadd.f32 %v1399, 0.4994258
      %v1401 = vmul.f32 %v1381, %v1400
      %v1402 = vadd.f32 %v1401, 1.0
      %v1403 = vrcp.pop %v1402
      %v1404 = vmul.f32 %v1402, %v1403
      %v1405 = vsub.f32 1.0, %v1404
      %v1406 = vmul.f32 %v1403, %v1405
      %v1407 = vadd.f32 %v1403, %v1406
      %vm1408 = vweird.f32 %v1402
      %vm1409 = vweird.f32 %v1403
      %vm1410 = vmor %vm1408, %vm1409
      %v1411 = vsel %vm1410, %v1403, %v1407
      %v1412 = vand.u32 2147483647, %v1402
      %vm1413 = vcmp.eq.f32.partialorder %v1412, 8.507059e+37
      %v1414 = vand.u32 %v1402, 2147483648
      %v1415 = vor.u32 1.1754944e-38, %v1414
      %v1416 = vsel %vm1413, %v1415, %v1411
      %v1417 = vmul.f32 %v1392, %v1416
      %v1418 = vmin.f32 %v1417, 1.0
      %v1419 = vmax.f32 %v1418, -1.0
      %v1420 = vmul.f32 %v858, %v858
      %v1421 = vmin.f32 16.0, %v1420
      %v1422 = vmul.f32 %v1421, 2.1237322e-06
      %v1423 = vadd.f32 %v1422, 0.00028619796
      %v1424 = vmul.f32 %v1421, %v1423
      %v1425 = vadd.f32 %v1424, 0.0036580483
      %v1426 = vmul.f32 %v1421, %v1425
      %v1427 = vadd.f32 %v1426, 0.05243302
      %v1428 = vmul.f32 %v1421, %v1427
      %v1429 = vadd.f32 %v1428, 0.18741608
      %v1430 = vmul.f32 %v1421, %v1429
      %v1431 = vadd.f32 %v1430, 1.1283791
      %v1432 = vmul.f32 %v858, %v1431
      %v1433 = vmul.f32 %v1421, 3.8918573e-05
      %v1434 = vadd.f32 %v1433, 0.001143296
      %v1435 = vmul.f32 %v1421, %v1434
      %v1436 = vadd.f32 %v1435, 0.014752088
      %v1437 = vmul.f32 %v1421, %v1436
      %v1438 = vadd.f32 %v1437, 0.112945676
      %v1439 = vmul.f32 %v1421, %v1438
      %v1440 = vadd.f32 %v1439, 0.4994258
      %v1441 = vmul.f32 %v1421, %v1440
      %v1442 = vadd.f32 %v1441, 1.0
      %v1443 = vrcp.pop %v1442
      %v1444 = vmul.f32 %v1442, %v1443
      %v1445 = vsub.f32 1.0, %v1444
      %v1446 = vmul.f32 %v1443, %v1445
      %v1447 = vadd.f32 %v1443, %v1446
      %vm1448 = vweird.f32 %v1442
      %vm1449 = vweird.f32 %v1443
      %vm1450 = vmor %vm1448, %vm1449
      %v1451 = vsel %vm1450, %v1443, %v1447
      %v1452 = vand.u32 2147483647, %v1442
      %vm1453 = vcmp.eq.f32.partialorder %v1452, 8.507059e+37
      %v1454 = vand.u32 %v1442, 2147483648
      %v1455 = vor.u32 1.1754944e-38, %v1454
      %v1456 = vsel %vm1453, %v1455, %v1451
      %v1457 = vmul.f32 %v1432, %v1456
      %v1458 = vmin.f32 %v1457, 1.0
      %v1459 = vmax.f32 %v1458, -1.0
      %v1460 = vmul.f32 %v859, %v859
      %v1461 = vmin.f32 16.0, %v1460
      %v1462 = vmul.f32 %v1461, 2.1237322e-06
      %v1463 = vadd.f32 %v1462, 0.00028619796
      %v1464 = vmul.f32 %v1461, %v1463
      %v1465 = vadd.f32 %v1464, 0.0036580483
      %v1466 = vmul.f32 %v1461, %v1465
      %v1467 = vadd.f32 %v1466, 0.05243302
      %v1468 = vmul.f32 %v1461, %v1467
      %v1469 = vadd.f32 %v1468, 0.18741608
      %v1470 = vmul.f32 %v1461, %v1469
      %v1471 = vadd.f32 %v1470, 1.1283791
      %v1472 = vmul.f32 %v859, %v1471
      %v1473 = vmul.f32 %v1461, 3.8918573e-05
      %v1474 = vadd.f32 %v1473, 0.001143296
      %v1475 = vmul.f32 %v1461, %v1474
      %v1476 = vadd.f32 %v1475, 0.014752088
      %v1477 = vmul.f32 %v1461, %v1476
      %v1478 = vadd.f32 %v1477, 0.112945676
      %v1479 = vmul.f32 %v1461, %v1478
      %v1480 = vadd.f32 %v1479, 0.4994258
      %v1481 = vmul.f32 %v1461, %v1480
      %v1482 = vadd.f32 %v1481, 1.0
      %v1483 = vrcp.pop %v1482
      %v1484 = vmul.f32 %v1482, %v1483
      %v1485 = vsub.f32 1.0, %v1484
      %v1486 = vmul.f32 %v1483, %v1485
      %v1487 = vadd.f32 %v1483, %v1486
      %vm1488 = vweird.f32 %v1482
      %vm1489 = vweird.f32 %v1483
      %vm1490 = vmor %vm1488, %vm1489
      %v1491 = vsel %vm1490, %v1483, %v1487
      %v1492 = vand.u32 2147483647, %v1482
      %vm1493 = vcmp.eq.f32.partialorder %v1492, 8.507059e+37
      %v1494 = vand.u32 %v1482, 2147483648
      %v1495 = vor.u32 1.1754944e-38, %v1494
      %v1496 = vsel %vm1493, %v1495, %v1491
      %v1497 = vmul.f32 %v1472, %v1496
      %v1498 = vmin.f32 %v1497, 1.0
      %v1499 = vmax.f32 %v1498, -1.0
      %v1500 = vadd.f32 %v899, 1.0
      %v1501 = vadd.f32 %v939, 1.0
      %v1502 = vadd.f32 %v979, 1.0
      %v1503 = vadd.f32 %v1019, 1.0
      %v1504 = vadd.f32 %v1059, 1.0
      %v1505 = vadd.f32 %v1099, 1.0
      %v1506 = vadd.f32 %v1139, 1.0
      %v1507 = vadd.f32 %v1179, 1.0
      %v1508 = vadd.f32 %v1219, 1.0
      %v1509 = vadd.f32 %v1259, 1.0
      %v1510 = vadd.f32 %v1299, 1.0
      %v1511 = vadd.f32 %v1339, 1.0
      %v1512 = vadd.f32 %v1379, 1.0
      %v1513 = vadd.f32 %v1419, 1.0
      %v1514 = vadd.f32 %v1459, 1.0
      %v1515 = vadd.f32 %v1499, 1.0
      %v1516 = vmul.f32 %v828, %v1500
      %v1517 = vmul.f32 %v829, %v1501
      %v1518 = vmul.f32 %v830, %v1502
      %v1519 = vmul.f32 %v831, %v1503
      %v1520 = vmul.f32 %v832, %v1504
      %v1521 = vmul.f32 %v833, %v1505
      %v1522 = vmul.f32 %v834, %v1506
      %v1523 = vmul.f32 %v835, %v1507
      %v1524 = vmul.f32 %v836, %v1508
      %v1525 = vmul.f32 %v837, %v1509
      %v1526 = vmul.f32 %v838, %v1510
      %v1527 = vmul.f32 %v839, %v1511
      %v1528 = vmul.f32 %v840, %v1512
      %v1529 = vmul.f32 %v841, %v1513
      %v1530 = vmul.f32 %v842, %v1514
      %v1531 = vmul.f32 %v843, %v1515
      %v1532 = vpack.c.bf16 %v1516, %v1516
      %v1533 = vpack.c.bf16 %v1517, %v1517
      %v1534 = vpack.c.bf16 %v1518, %v1518
      %v1535 = vpack.c.bf16 %v1519, %v1519
      %v1536 = vpack.c.bf16 %v1520, %v1520
      %v1537 = vpack.c.bf16 %v1521, %v1521
      %v1538 = vpack.c.bf16 %v1522, %v1522
      %v1539 = vpack.c.bf16 %v1523, %v1523
      %v1540 = vpack.c.bf16 %v1524, %v1524
      %v1541 = vpack.c.bf16 %v1525, %v1525
      %v1542 = vpack.c.bf16 %v1526, %v1526
      %v1543 = vpack.c.bf16 %v1527, %v1527
      %v1544 = vpack.c.bf16 %v1528, %v1528
      %v1545 = vpack.c.bf16 %v1529, %v1529
      %v1546 = vpack.c.bf16 %v1530, %v1530
      %v1547 = vpack.c.bf16 %v1531, %v1531
      %vm1548 = vcmask 519168
      %1549 = vst.msk [vmem:[%s273] sm:$0xf] %vm1548, %v1532
      %1550 = vst.msk [vmem:[%s273 + $0x4] sm:$0xf] %vm1548, %v1533
      %1551 = vst.msk [vmem:[%s273 + $0x8] sm:$0xf] %vm1548, %v1534
      %1552 = vst.msk [vmem:[%s273 + $0xc] sm:$0xf] %vm1548, %v1535
      %1553 = vst.msk [vmem:[%s273 + $0x10] sm:$0xf] %vm1548, %v1536
      %1554 = vst.msk [vmem:[%s273 + $0x14] sm:$0xf] %vm1548, %v1537
      %1555 = vst.msk [vmem:[%s273 + $0x18] sm:$0xf] %vm1548, %v1538
      %1556 = vst.msk [vmem:[%s273 + $0x1c] sm:$0xf] %vm1548, %v1539
      %1557 = vst.msk [vmem:[%s273 + $0x20] sm:$0xf] %vm1548, %v1540
      %1558 = vst.msk [vmem:[%s273 + $0x24] sm:$0xf] %vm1548, %v1541
      %1559 = vst.msk [vmem:[%s273 + $0x28] sm:$0xf] %vm1548, %v1542
      %1560 = vst.msk [vmem:[%s273 + $0x2c] sm:$0xf] %vm1548, %v1543
      %1561 = vst.msk [vmem:[%s273 + $0x30] sm:$0xf] %vm1548, %v1544
      %1562 = vst.msk [vmem:[%s273 + $0x34] sm:$0xf] %vm1548, %v1545
      %1563 = vst.msk [vmem:[%s273 + $0x38] sm:$0xf] %vm1548, %v1546
      %1564 = vst.msk [vmem:[%s273 + $0x3c] sm:$0xf] %vm1548, %v1547
      %s1565 = smul.u32 16, %s19
      %p1566 = scmp.lt.s32.totalorder %s18, 1
      %s1567 = scalar_select %p1566, %s18, 1
      %p1568 = scmp.lt.s32.totalorder %s1565, 31
      %s1569 = scalar_select %p1568, %s1565, 31
      %s1570 = smul.addr %s1567, 32
      %s1571 = sadd.s32 %s1569, %s1570
      %s1572 = smul.addr %s1571, 4
      %s1573 = scalar_lea.vmem %s3, %s1572
      // Predicated region
      $region33: #{_lambda_.6} parent=31 // pred_check
        %p1574 = pneg %p127
      $region34: #{_lambda_.6} parent=31 // pred_check_branch
        %1576 = sbr.rel (%p1574) target = $region36
      $region35: #{_lambda_.6} parent=31 // pred_region
        %s1577 = smul.u32 16, %s19
      $region36: #{_lambda_.6} parent=31 // pred_fallthru
        _
    $region32: #{_lambda_.6} parent=5 // pred_fallthru
      _
    %p1578 = scmp.le.s32.totalorder 2, %s9
    // Predicated region
    $region37: #{_lambda_.6} parent=5 // pred_check
      %p1579 = pneg %p1578
    $region38: #{_lambda_.6} parent=5 // pred_check_branch
      %1581 = sbr.rel (%p1579) target = $region40
    $region39: #{_lambda_.6} parent=5 // pred_region
      %s1582 = ssub.s32 %s9, 2
      // Predicated region
      $region41: #{_lambda_.6} parent=39 // pred_check
        %p1583 = pneg %p133
      $region42: #{_lambda_.6} parent=39 // pred_check_branch
        %1585 = sbr.rel (%p1583) target = $region44
      $region43: #{_lambda_.6} parent=39 // pred_region
        %s1586 = smul.u32 16, %s21
        %p1587 = scmp.lt.s32.totalorder %s20, 1
        %s1588 = scalar_select %p1587, %s20, 1
        %p1589 = scmp.lt.s32.totalorder %s1586, 31
        %s1590 = scalar_select %p1589, %s1586, 31
        %s1591 = smul.addr %s1588, 32
        %s1592 = sadd.s32 %s1590, %s1591
        %s1593 = smul.addr %s1592, 4
        %s1594 = scalar_lea.vmem %s3, %s1593
      $region44: #{_lambda_.6} parent=39 // pred_fallthru
        _
    $region40: #{_lambda_.6} parent=5 // pred_fallthru
      _
  $region6: #{_lambda_.6} parent=0 // loop_footer
    %s13 = sadd.s32 1, %s9
  $region7: #{_lambda_.6} parent=0 // loop_footer_branch
    %8 = sbr.rel target = $region3
  $region8: #{_lambda_.6} parent=0 // loop_exit
    _

// kernel: _lambda_.7
$region0: #{_lambda_.7}
  #allocation0 [shape = 'u32[]', space=smem, size = 0x4, offset = 0x4, fixed_abs, tag = 'smem constant byte address 0x4 - core index']
  #allocation1 [shape = 'u32[72,128]{1,0:T(1,128)}', space=vmem, size = 0x9000, scoped, tag = 'internal scratch']
  #allocation2 [shape = 'f32[256,64]{1,0:T(8,128)}', space=vmem, size = 0x20000, scoped, tag = 'scratch operand']
  %s0 = inlined_call_operand.vmem [shape: bf16[2,256,64], index: 0, kind: input, shape index: {}]
  %s1 = inlined_call_operand.vmem [shape: bf16[2,64,64], index: 1, kind: input, shape index: {}]
  %s2 = inlined_call_operand.hbm [shape: bf16[2,64,128], index: 2, kind: output, shape index: {}]
  %s3 = sld [smem:[#allocation0]]
  $region41: #{_lambda_.7} parent=0
    _
  %s5 = ssub.s32 1, %s3
  %s6 = scalar_select 0, %s5, %s3
  $region1: #{_lambda_.7} parent=0
    #allocation3 [shape = 'u8[32768]{0}', space=vmem, size = 0x8000, scoped, tag = 'output window, operand 0']
    #allocation4 [shape = 's32[2]{0}', space=sflag, size = 0x8, scoped, tag = 'scoped memory for _lambda_.7']
    %7 = vsyncpa [#allocation4], 0
    %s8 = scalar_lea.sflag [#allocation4], 1
    %9 = vsyncpa %s8, 0
    loop: start=0, step=1, limit=4
    $region2: #{_lambda_.7} parent=1 // loop_pre_header
      _
    $region3: #{_lambda_.7} parent=1 // loop_header
      %s11 = sphi 0, %s15
      %p12 = scmp.ge.s32.totalorder %s11, 4
      %s18 = sphi 0, %s30
      %s19 = sphi 0, %s26
      %s20 = sphi 0, %s18
      %s21 = sphi 0, %s19
      %s22 = sphi 0, %s20
      %s23 = sphi 0, %s21
      %s35 = sphi 0, %s37
      %s38 = sphi 0, %s35
      %s39 = sphi 0, %s38
      %s55 = sphi 0, %s39
      %s59 = sphi 0, %s59
      %s61 = sphi 0, %s59
      %s62 = sphi 0, %s61
      %s76 = sphi 0, %s62
      %s84 = sphi 0, %s86
      %s87 = sphi 0, %s84
      %s88 = sphi 0, %s87
      %s104 = sphi 0, %s88
    $region4: #{_lambda_.7} parent=1 // loop_header_branch
      %14 = sbr.rel (%p12) target = $region8
    $region5: #{_lambda_.7} parent=1 // loop_body
      %s16 = ssub.s32 %s11, 1
      %s17 = ssub.s32 %s11, 2
      %s24 = sadd.s32 1, %s19
      %p25 = scmp.ge.s32.totalorder %s24, 1
      %s26 = scalar_select %p25, 0, %s24
      %s27 = sadd.s32 1, %s18
      %s28 = scalar_select %p25, %s27, %s18
      %p29 = scmp.ge.s32.totalorder %s28, 2
      %s30 = scalar_select %p29, 0, %s28
      %s31 = ssub.s32 %s18, %s30
      %s32 = ssub.s32 %s19, %s26
      %s33 = sor.u32 %s31, %s32
      %p34 = scmp.eq.s32.totalorder %s33, 0
      %s36 = sadd.s32 %s35, 1
      %s37 = scalar_select %p34, %s35, %s36
      %p40 = pneg %p34
      %p41 = scmp.eq.s32.totalorder %s11, 1
      %p42 = por %p40, %p41
      %p43 = scmp.ne.s32.totalorder %s35, %s38
      %p44 = scmp.eq.s32.totalorder %s11, 0
      %p45 = por %p43, %p44
      %p46 = scmp.ne.s32.totalorder %s35, %s38
      %p47 = scmp.eq.s32.totalorder %s16, 1
      %p48 = por %p46, %p47
      %p49 = scmp.ne.s32.totalorder %s38, %s39
      %p50 = scmp.eq.s32.totalorder %s16, 0
      %p51 = por %p49, %p50
      %p52 = scmp.ne.s32.totalorder %s38, %s39
      %p53 = scmp.eq.s32.totalorder %s17, 1
      %p54 = por %p52, %p53
      %p56 = scmp.ne.s32.totalorder %s39, %s55
      %p57 = scmp.eq.s32.totalorder %s17, 0
      %p58 = por %p56, %p57
      %s60 = sadd.s32 %s59, 1
      %p63 = scmp.eq.s32.totalorder %s11, 1
      %p64 = scmp.ne.s32.totalorder %s59, %s61
      %p65 = scmp.eq.s32.totalorder %s11, 0
      %p66 = por %p64, %p65
      %p67 = scmp.ne.s32.totalorder %s59, %s61
      %p68 = scmp.eq.s32.totalorder %s16, 1
      %p69 = por %p67, %p68
      %p70 = scmp.ne.s32.totalorder %s61, %s62
      %p71 = scmp.eq.s32.totalorder %s16, 0
      %p72 = por %p70, %p71
      %p73 = scmp.ne.s32.totalorder %s61, %s62
      %p74 = scmp.eq.s32.totalorder %s17, 1
      %p75 = por %p73, %p74
      %p77 = scmp.ne.s32.totalorder %s62, %s76
      %p78 = scmp.eq.s32.totalorder %s17, 0
      %p79 = por %p77, %p78
      %s80 = ssub.s32 %s18, %s30
      %s81 = ssub.s32 %s19, %s26
      %s82 = sor.u32 %s80, %s81
      %p83 = scmp.eq.s32.totalorder %s82, 0
      %s85 = sadd.s32 %s84, 1
      %s86 = scalar_select %p83, %s84, %s85
      %p89 = pneg %p83
      %p90 = scmp.eq.s32.totalorder %s11, 1
      %p91 = por %p89, %p90
      %p92 = scmp.ne.s32.totalorder %s84, %s87
      %p93 = scmp.eq.s32.totalorder %s11, 0
      %p94 = por %p92, %p93
      %p95 = scmp.ne.s32.totalorder %s84, %s87
      %p96 = scmp.eq.s32.totalorder %s16, 1
      %p97 = por %p95, %p96
      %p98 = scmp.ne.s32.totalorder %s87, %s88
      %p99 = scmp.eq.s32.totalorder %s16, 0
      %p100 = por %p98, %p99
      %p101 = scmp.ne.s32.totalorder %s87, %s88
      %p102 = scmp.eq.s32.totalorder %s17, 1
      %p103 = por %p101, %p102
      %p105 = scmp.ne.s32.totalorder %s88, %s104
      %p106 = scmp.eq.s32.totalorder %s17, 0
      %p107 = por %p105, %p106
      %p108 = scmp.le.s32.totalorder 1, %s11
      %p109 = scmp.lt.s32.totalorder %s11, 3
      %p110 = pnand %p108, %p109
      %p111 = pneg %p110
      // Predicated region
      $region9: #{_lambda_.7} parent=5 // pred_check
        _
      $region10: #{_lambda_.7} parent=5 // pred_check_branch
        %113 = sbr.rel (%p110) target = $region12
      $region11: #{_lambda_.7} parent=5 // pred_region
        %s114 = ssub.s32 %s11, 1
        // Predicated region
        $region13: #{_lambda_.7} parent=11 // pred_check
          %p115 = pneg %p72
        $region14: #{_lambda_.7} parent=11 // pred_check_branch
          %117 = sbr.rel (%p115) target = $region16
        $region15: #{_lambda_.7} parent=11 // pred_region
          _
        $region16: #{_lambda_.7} parent=11 // pred_fallthru
          _
      $region12: #{_lambda_.7} parent=5 // pred_fallthru
        _
      %p118 = scmp.lt.s32.totalorder %s11, 2
      // Predicated region
      $region17: #{_lambda_.7} parent=5 // pred_check
        %p119 = pneg %p118
      $region18: #{_lambda_.7} parent=5 // pred_check_branch
        %121 = sbr.rel (%p119) target = $region20
      $region19: #{_lambda_.7} parent=5 // pred_region
        // Predicated region
        $region21: #{_lambda_.7} parent=19 // pred_check
          %p122 = pneg %p45
        $region22: #{_lambda_.7} parent=19 // pred_check_branch
          %124 = sbr.rel (%p122) target = $region24
        $region23: #{_lambda_.7} parent=19 // pred_region
          %s125 = smul.u32 32, %s19
          %p126 = scmp.lt.s32.totalorder %s18, 1
          %s127 = scalar_select %p126, %s18, 1
          %p128 = scmp.lt.s32.totalorder %s125, 31
          %s129 = scalar_select %p128, %s125, 31
          %s130 = smul.addr %s127, 32
          %s131 = sadd.s32 %s129, %s130
          %s132 = smul.addr %s131, 4
          %s133 = scalar_lea.vmem %s0, %s132
          %s134 = smul.u32 32, %s19
        $region24: #{_lambda_.7} parent=19 // pred_fallthru
          _
      $region20: #{_lambda_.7} parent=5 // pred_fallthru
        _
      %p135 = scmp.le.s32.totalorder 1, %s11
      %p136 = scmp.lt.s32.totalorder %s11, 3
      %p137 = pnand %p135, %p136
      %p138 = pneg %p137
      // Predicated region
      $region25: #{_lambda_.7} parent=5 // pred_check
        _
      $region26: #{_lambda_.7} parent=5 // pred_check_branch
        %140 = sbr.rel (%p137) target = $region28
      $region27: #{_lambda_.7} parent=5 // pred_region
        %s141 = ssub.s32 %s11, 1
        %s142 = smul.u32 32, %s21
        %p143 = scmp.lt.s32.totalorder %s20, 1
        %s144 = scalar_select %p143, %s20, 1
        %p145 = scmp.lt.s32.totalorder %s142, 31
        %s146 = scalar_select %p145, %s142, 31
        %s147 = smul.addr %s144, 32
        %s148 = sadd.s32 %s146, %s147
        %s149 = smul.addr %s148, 4
        %s150 = scalar_lea.vmem %s0, %s149
        %p151 = pneg %p51
        %p152 = pneg %p48
        %p153 = pneg %p72
        %p154 = pneg %p69
        %p155 = pneg %p100
        %p156 = pneg %p97
        %s157 = sand.u32 %s87, 1
        %s158 = scalar_lea.sflag [#allocation4], %s157
        %s159 = sand.u32 %s87, 1
        %s160 = smul.addr %s159, 32
        %s161 = scalar_lea.vmem [#allocation3], %s160
        %s162 = smul.u32 32, %s21
        %p163 = scmp.lt.s32.totalorder %s20, 1
        %s164 = scalar_select %p163, %s20, 1
        %p165 = scmp.lt.s32.totalorder %s162, 31
        %s166 = scalar_select %p165, %s162, 31
        %s167 = smul.addr %s164, 32
        %s168 = sadd.s32 %s166, %s167
        %s169 = smul.addr %s168, 4
        %s170 = scalar_lea.vmem %s0, %s169
        %s171 = smul.u32 32, %s21
        %v173 = vld [vmem:[%s170] sm:$0xf]
        %v174 = vld [vmem:[%s170 + $0x4] sm:$0xf]
        %v175 = vld [vmem:[%s170 + $0x8] sm:$0xf]
        %v176 = vld [vmem:[%s170 + $0xc] sm:$0xf]
        %v177 = vld [vmem:[%s170 + $0x10] sm:$0xf]
        %v178 = vld [vmem:[%s170 + $0x14] sm:$0xf]
        %v179 = vld [vmem:[%s170 + $0x18] sm:$0xf]
        %v180 = vld [vmem:[%s170 + $0x1c] sm:$0xf]
        %v181 = vld [vmem:[%s170 + $0x20] sm:$0xf]
        %v182 = vld [vmem:[%s170 + $0x24] sm:$0xf]
        %v183 = vld [vmem:[%s170 + $0x28] sm:$0xf]
        %v184 = vld [vmem:[%s170 + $0x2c] sm:$0xf]
        %v185 = vld [vmem:[%s170 + $0x30] sm:$0xf]
        %v186 = vld [vmem:[%s170 + $0x34] sm:$0xf]
        %v187 = vld [vmem:[%s170 + $0x38] sm:$0xf]
        %v188 = vld [vmem:[%s170 + $0x3c] sm:$0xf]
        %v189 = vld [vmem:[%s170 + $0x40] sm:$0xf]
        %v190 = vld [vmem:[%s170 + $0x44] sm:$0xf]
        %v191 = vld [vmem:[%s170 + $0x48] sm:$0xf]
        %v192 = vld [vmem:[%s170 + $0x4c] sm:$0xf]
        %v193 = vld [vmem:[%s170 + $0x50] sm:$0xf]
        %v194 = vld [vmem:[%s170 + $0x54] sm:$0xf]
        %v195 = vld [vmem:[%s170 + $0x58] sm:$0xf]
        %v196 = vld [vmem:[%s170 + $0x5c] sm:$0xf]
        %v197 = vld [vmem:[%s170 + $0x60] sm:$0xf]
        %v198 = vld [vmem:[%s170 + $0x64] sm:$0xf]
        %v199 = vld [vmem:[%s170 + $0x68] sm:$0xf]
        %v200 = vld [vmem:[%s170 + $0x6c] sm:$0xf]
        %v201 = vld [vmem:[%s170 + $0x70] sm:$0xf]
        %v202 = vld [vmem:[%s170 + $0x74] sm:$0xf]
        %v203 = vld [vmem:[%s170 + $0x78] sm:$0xf]
        %v204 = vld [vmem:[%s170 + $0x7c] sm:$0xf]
        %v205 = vunpack.c.l.bf16 %v173
        %v206 = vunpack.c.l.bf16 %v174
        %v207 = vunpack.c.l.bf16 %v175
        %v208 = vunpack.c.l.bf16 %v176
        %v209 = vunpack.c.l.bf16 %v177
        %v210 = vunpack.c.l.bf16 %v178
        %v211 = vunpack.c.l.bf16 %v179
        %v212 = vunpack.c.l.bf16 %v180
        %v213 = vunpack.c.l.bf16 %v181
        %v214 = vunpack.c.l.bf16 %v182
        %v215 = vunpack.c.l.bf16 %v183
        %v216 = vunpack.c.l.bf16 %v184
        %v217 = vunpack.c.l.bf16 %v185
        %v218 = vunpack.c.l.bf16 %v186
        %v219 = vunpack.c.l.bf16 %v187
        %v220 = vunpack.c.l.bf16 %v188
        %v221 = vunpack.c.l.bf16 %v189
        %v222 = vunpack.c.l.bf16 %v190
        %v223 = vunpack.c.l.bf16 %v191
        %v224 = vunpack.c.l.bf16 %v192
        %v225 = vunpack.c.l.bf16 %v193
        %v226 = vunpack.c.l.bf16 %v194
        %v227 = vunpack.c.l.bf16 %v195
        %v228 = vunpack.c.l.bf16 %v196
        %v229 = vunpack.c.l.bf16 %v197
        %v230 = vunpack.c.l.bf16 %v198
        %v231 = vunpack.c.l.bf16 %v199
        %v232 = vunpack.c.l.bf16 %v200
        %v233 = vunpack.c.l.bf16 %v201
        %v234 = vunpack.c.l.bf16 %v202
        %v235 = vunpack.c.l.bf16 %v203
        %v236 = vunpack.c.l.bf16 %v204
        %vm237 = vcmask 523264
        %238 = vst.msk [vmem:[#allocation2] sm:$0xff] %vm237, %v205
        %239 = vst.msk [vmem:[#allocation2 + $0x8] sm:$0xff] %vm237, %v206
        %240 = vst.msk [vmem:[#allocation2 + $0x10] sm:$0xff] %vm237, %v207
        %241 = vst.msk [vmem:[#allocation2 + $0x18] sm:$0xff] %vm237, %v208
        %242 = vst.msk [vmem:[#allocation2 + $0x20] sm:$0xff] %vm237, %v209
        %243 = vst.msk [vmem:[#allocation2 + $0x28] sm:$0xff] %vm237, %v210
        %244 = vst.msk [vmem:[#allocation2 + $0x30] sm:$0xff] %vm237, %v211
        %245 = vst.msk [vmem:[#allocation2 + $0x38] sm:$0xff] %vm237, %v212
        %246 = vst.msk [vmem:[#allocation2 + $0x40] sm:$0xff] %vm237, %v213
        %247 = vst.msk [vmem:[#allocation2 + $0x48] sm:$0xff] %vm237, %v214
        %248 = vst.msk [vmem:[#allocation2 + $0x50] sm:$0xff] %vm237, %v215
        %249 = vst.msk [vmem:[#allocation2 + $0x58] sm:$0xff] %vm237, %v216
        %250 = vst.msk [vmem:[#allocation2 + $0x60] sm:$0xff] %vm237, %v217
        %251 = vst.msk [vmem:[#allocation2 + $0x68] sm:$0xff] %vm237, %v218
        %252 = vst.msk [vmem:[#allocation2 + $0x70] sm:$0xff] %vm237, %v219
        %253 = vst.msk [vmem:[#allocation2 + $0x78] sm:$0xff] %vm237, %v220
        %254 = vst.msk [vmem:[#allocation2 + $0x80] sm:$0xff] %vm237, %v221
        %255 = vst.msk [vmem:[#allocation2 + $0x88] sm:$0xff] %vm237, %v222
        %256 = vst.msk [vmem:[#allocation2 + $0x90] sm:$0xff] %vm237, %v223
        %257 = vst.msk [vmem:[#allocation2 + $0x98] sm:$0xff] %vm237, %v224
        %258 = vst.msk [vmem:[#allocation2 + $0xa0] sm:$0xff] %vm237, %v225
        %259 = vst.msk [vmem:[#allocation2 + $0xa8] sm:$0xff] %vm237, %v226
        %260 = vst.msk [vmem:[#allocation2 + $0xb0] sm:$0xff] %vm237, %v227
        %261 = vst.msk [vmem:[#allocation2 + $0xb8] sm:$0xff] %vm237, %v228
        %262 = vst.msk [vmem:[#allocation2 + $0xc0] sm:$0xff] %vm237, %v229
        %263 = vst.msk [vmem:[#allocation2 + $0xc8] sm:$0xff] %vm237, %v230
        %264 = vst.msk [vmem:[#allocation2 + $0xd0] sm:$0xff] %vm237, %v231
        %265 = vst.msk [vmem:[#allocation2 + $0xd8] sm:$0xff] %vm237, %v232
        %266 = vst.msk [vmem:[#allocation2 + $0xe0] sm:$0xff] %vm237, %v233
        %267 = vst.msk [vmem:[#allocation2 + $0xe8] sm:$0xff] %vm237, %v234
        %268 = vst.msk [vmem:[#allocation2 + $0xf0] sm:$0xff] %vm237, %v235
        %269 = vst.msk [vmem:[#allocation2 + $0xf8] sm:$0xff] %vm237, %v236
        %v270 = vld [vmem:[#allocation2] ss:$2 sm:$0xff]
        %s271 = scalar_lea.vmem [#allocation2], 16
        %v272 = vld [vmem:[%s271] ss:$2 sm:$0xff]
        %s273 = scalar_lea.vmem [#allocation2], 32
        %v274 = vld [vmem:[%s273] ss:$2 sm:$0xff]
        %s275 = scalar_lea.vmem [#allocation2], 48
        %v276 = vld [vmem:[%s275] ss:$2 sm:$0xff]
        %s277 = scalar_lea.vmem [#allocation2], 64
        %v278 = vld [vmem:[%s277] ss:$2 sm:$0xff]
        %s279 = scalar_lea.vmem [#allocation2], 80
        %v280 = vld [vmem:[%s279] ss:$2 sm:$0xff]
        %s281 = scalar_lea.vmem [#allocation2], 96
        %v282 = vld [vmem:[%s281] ss:$2 sm:$0xff]
        %s283 = scalar_lea.vmem [#allocation2], 112
        %v284 = vld [vmem:[%s283] ss:$2 sm:$0xff]
        %s285 = scalar_lea.vmem [#allocation2], 128
        %v286 = vld [vmem:[%s285] ss:$2 sm:$0xff]
        %s287 = scalar_lea.vmem [#allocation2], 144
        %v288 = vld [vmem:[%s287] ss:$2 sm:$0xff]
        %s289 = scalar_lea.vmem [#allocation2], 160
        %v290 = vld [vmem:[%s289] ss:$2 sm:$0xff]
        %s291 = scalar_lea.vmem [#allocation2], 176
        %v292 = vld [vmem:[%s291] ss:$2 sm:$0xff]
        %s293 = scalar_lea.vmem [#allocation2], 192
        %v294 = vld [vmem:[%s293] ss:$2 sm:$0xff]
        %s295 = scalar_lea.vmem [#allocation2], 208
        %v296 = vld [vmem:[%s295] ss:$2 sm:$0xff]
        %s297 = scalar_lea.vmem [#allocation2], 224
        %v298 = vld [vmem:[%s297] ss:$2 sm:$0xff]
        %s299 = scalar_lea.vmem [#allocation2], 240
        %v300 = vld [vmem:[%s299] ss:$2 sm:$0xff]
        %v301 = vpack.c.bf16 %v272, %v270
        %v302 = vpack.c.bf16 %v276, %v274
        %v303 = vpack.c.bf16 %v280, %v278
        %v304 = vpack.c.bf16 %v284, %v282
        %v305 = vpack.c.bf16 %v288, %v286
        %v306 = vpack.c.bf16 %v292, %v290
        %v307 = vpack.c.bf16 %v296, %v294
        %v308 = vpack.c.bf16 %v300, %v298
        %v309 = vld [vmem:[%s1] sm:$0xf]
        %v310 = vld [vmem:[%s1 + $0x4] sm:$0xf]
        %v311 = vld [vmem:[%s1 + $0x8] sm:$0xf]
        %v312 = vld [vmem:[%s1 + $0xc] sm:$0xf]
        %v313 = vld [vmem:[%s1 + $0x10] sm:$0xf]
        %v314 = vld [vmem:[%s1 + $0x14] sm:$0xf]
        %v315 = vld [vmem:[%s1 + $0x18] sm:$0xf]
        %v316 = vld [vmem:[%s1 + $0x1c] sm:$0xf]
        %s317 = scalar_lea.vmem [#allocation2], 1
        %v318 = vld [vmem:[%s317] ss:$2 sm:$0xff]
        %s319 = scalar_lea.vmem [#allocation2], 17
        %v320 = vld [vmem:[%s319] ss:$2 sm:$0xff]
        %s321 = scalar_lea.vmem [#allocation2], 33
        %v322 = vld [vmem:[%s321] ss:$2 sm:$0xff]
        %s323 = scalar_lea.vmem [#allocation2], 49
        %v324 = vld [vmem:[%s323] ss:$2 sm:$0xff]
        %s325 = scalar_lea.vmem [#allocation2], 65
        %v326 = vld [vmem:[%s325] ss:$2 sm:$0xff]
        %s327 = scalar_lea.vmem [#allocation2], 81
        %v328 = vld [vmem:[%s327] ss:$2 sm:$0xff]
        %s329 = scalar_lea.vmem [#allocation2], 97
        %v330 = vld [vmem:[%s329] ss:$2 sm:$0xff]
        %s331 = scalar_lea.vmem [#allocation2], 113
        %v332 = vld [vmem:[%s331] ss:$2 sm:$0xff]
        %s333 = scalar_lea.vmem [#allocation2], 129
        %v334 = vld [vmem:[%s333] ss:$2 sm:$0xff]
        %s335 = scalar_lea.vmem [#allocation2], 145
        %v336 = vld [vmem:[%s335] ss:$2 sm:$0xff]
        %s337 = scalar_lea.vmem [#allocation2], 161
        %v338 = vld [vmem:[%s337] ss:$2 sm:$0xff]
        %s339 = scalar_lea.vmem [#allocation2], 177
        %v340 = vld [vmem:[%s339] ss:$2 sm:$0xff]
        %s341 = scalar_lea.vmem [#allocation2], 193
        %v342 = vld [vmem:[%s341] ss:$2 sm:$0xff]
        %s343 = scalar_lea.vmem [#allocation2], 209
        %v344 = vld [vmem:[%s343] ss:$2 sm:$0xff]
        %s345 = scalar_lea.vmem [#allocation2], 225
        %v346 = vld [vmem:[%s345] ss:$2 sm:$0xff]
        %s347 = scalar_lea.vmem [#allocation2], 241
        %v348 = vld [vmem:[%s347] ss:$2 sm:$0xff]
        %v349 = vpack.c.bf16 %v320, %v318
        %v350 = vpack.c.bf16 %v324, %v322
        %v351 = vpack.c.bf16 %v328, %v326
        %v352 = vpack.c.bf16 %v332, %v330
        %v353 = vpack.c.bf16 %v336, %v334
        %v354 = vpack.c.bf16 %v340, %v338
        %v355 = vpack.c.bf16 %v344, %v342
        %v356 = vpack.c.bf16 %v348, %v346
        %s357 = scalar_lea.vmem %s1, 32
        %v358 = vld [vmem:[%s357] sm:$0xf]
        %v359 = vld [vmem:[%s357 + $0x4] sm:$0xf]
        %v360 = vld [vmem:[%s357 + $0x8] sm:$0xf]
        %v361 = vld [vmem:[%s357 + $0xc] sm:$0xf]
        %v362 = vld [vmem:[%s357 + $0x10] sm:$0xf]
        %v363 = vld [vmem:[%s357 + $0x14] sm:$0xf]
        %v364 = vld [vmem:[%s357 + $0x18] sm:$0xf]
        %v365 = vld [vmem:[%s357 + $0x1c] sm:$0xf]
        %v374 = vunpack.c.l.b16 %v358
        %v375 = vunpack.c.l.b16 %v359
        %v376 = vunpack.c.l.b16 %v360
        %v377 = vunpack.c.l.b16 %v361
        %v378 = vunpack.c.l.b16 %v362
        %v379 = vunpack.c.l.b16 %v363
        %v380 = vunpack.c.l.b16 %v364
        %v381 = vunpack.c.l.b16 %v365
        %v382 = vpack.c.b16 %v375, %v374
        %v383 = vpack.c.b16 %v377, %v376
        %v384 = vpack.c.b16 %v379, %v378
        %v385 = vpack.c.b16 %v381, %v380
        %v391 = vsel %vm237, %v349, 0
        %v394 = vsel %vm237, %v350, 0
        %v397 = vsel %vm237, %v351, 0
        %v400 = vsel %vm237, %v352, 0
        %v403 = vsel %vm237, %v353, 0
        %v406 = vsel %vm237, %v354, 0
        %v409 = vsel %vm237, %v355, 0
        %v412 = vsel %vm237, %v356, 0
        %414 = vmatpush.bf16.msra.mxu0 0
        %415 = vmatpush.bf16.msra.mxu0 0
        %416 = vmatpush.bf16.msra.mxu0 0
        %417 = vmatpush.bf16.msra.mxu0 0
        %418 = vmatpush.bf16.msra.mxu0 %v385
        %419 = vmatpush.bf16.msra.mxu0 %v384
        %420 = vmatpush.bf16.msra.mxu0 %v383
        %421 = vmatpush.bf16.msra.mxu0 %v382
        %422 = vmatmul.bf16.gmra.mxu0 %v391
        %v423 = vpop.f32.mrf.mxu0
        %v424 = vadd.f32 0.0, %v423
        %v425 = vpop.f32.mrf.mxu0
        %v426 = vadd.f32 0.0, %v425
        %427 = vmatmul.bf16.gmra.mxu0 %v394
        %v428 = vpop.f32.mrf.mxu0
        %v429 = vadd.f32 0.0, %v428
        %v430 = vpop.f32.mrf.mxu0
        %v431 = vadd.f32 0.0, %v430
        %432 = vmatmul.bf16.gmra.mxu0 %v397
        %v433 = vpop.f32.mrf.mxu0
        %v434 = vadd.f32 0.0, %v433
        %v435 = vpop.f32.mrf.mxu0
        %v436 = vadd.f32 0.0, %v435
        %437 = vmatmul.bf16.gmra.mxu0 %v400
        %v438 = vpop.f32.mrf.mxu0
        %v439 = vadd.f32 0.0, %v438
        %v440 = vpop.f32.mrf.mxu0
        %v441 = vadd.f32 0.0, %v440
        %442 = vmatmul.bf16.gmra.mxu0 %v403
        %v443 = vpop.f32.mrf.mxu0
        %v444 = vadd.f32 0.0, %v443
        %v445 = vpop.f32.mrf.mxu0
        %v446 = vadd.f32 0.0, %v445
        %447 = vmatmul.bf16.gmra.mxu0 %v406
        %v448 = vpop.f32.mrf.mxu0
        %v449 = vadd.f32 0.0, %v448
        %v450 = vpop.f32.mrf.mxu0
        %v451 = vadd.f32 0.0, %v450
        %452 = vmatmul.bf16.gmra.mxu0 %v409
        %v453 = vpop.f32.mrf.mxu0
        %v454 = vadd.f32 0.0, %v453
        %v455 = vpop.f32.mrf.mxu0
        %v456 = vadd.f32 0.0, %v455
        %457 = vmatmul.bf16.gmra.mxu0 %v412
        %v458 = vpop.f32.mrf.mxu0
        %v459 = vadd.f32 0.0, %v458
        %v460 = vpop.f32.mrf.mxu0
        %v461 = vadd.f32 0.0, %v460
        %462 = vdwg.mxu0
        %v471 = vunpack.c.l.b16 %v309
        %v472 = vunpack.c.l.b16 %v310
        %v473 = vunpack.c.l.b16 %v311
        %v474 = vunpack.c.l.b16 %v312
        %v475 = vunpack.c.l.b16 %v313
        %v476 = vunpack.c.l.b16 %v314
        %v477 = vunpack.c.l.b16 %v315
        %v478 = vunpack.c.l.b16 %v316
        %v479 = vpack.c.b16 %v472, %v471
        %v480 = vpack.c.b16 %v474, %v473
        %v481 = vpack.c.b16 %v476, %v475
        %v482 = vpack.c.b16 %v478, %v477
        %v488 = vsel %vm237, %v301, 0
        %v491 = vsel %vm237, %v302, 0
        %v494 = vsel %vm237, %v303, 0
        %v497 = vsel %vm237, %v304, 0
        %v500 = vsel %vm237, %v305, 0
        %v503 = vsel %vm237, %v306, 0
        %v506 = vsel %vm237, %v307, 0
        %v509 = vsel %vm237, %v308, 0
        %511 = vmatpush.bf16.msra.mxu0 0
        %512 = vmatpush.bf16.msra.mxu0 0
        %513 = vmatpush.bf16.msra.mxu0 0
        %514 = vmatpush.bf16.msra.mxu0 0
        %515 = vmatpush.bf16.msra.mxu0 %v482
        %516 = vmatpush.bf16.msra.mxu0 %v481
        %517 = vmatpush.bf16.msra.mxu0 %v480
        %518 = vmatpush.bf16.msra.mxu0 %v479
        %519 = vmatmul.bf16.gmra.mxu0 %v488
        %v520 = vpop.f32.mrf.mxu0
        %v521 = vadd.f32 %v424, %v520
        %v522 = vpop.f32.mrf.mxu0
        %v523 = vadd.f32 %v426, %v522
        %524 = vmatmul.bf16.gmra.mxu0 %v491
        %v525 = vpop.f32.mrf.mxu0
        %v526 = vadd.f32 %v429, %v525
        %v527 = vpop.f32.mrf.mxu0
        %v528 = vadd.f32 %v431, %v527
        %529 = vmatmul.bf16.gmra.mxu0 %v494
        %v530 = vpop.f32.mrf.mxu0
        %v531 = vadd.f32 %v434, %v530
        %v532 = vpop.f32.mrf.mxu0
        %v533 = vadd.f32 %v436, %v532
        %534 = vmatmul.bf16.gmra.mxu0 %v497
        %v535 = vpop.f32.mrf.mxu0
        %v536 = vadd.f32 %v439, %v535
        %v537 = vpop.f32.mrf.mxu0
        %v538 = vadd.f32 %v441, %v537
        %539 = vmatmul.bf16.gmra.mxu0 %v500
        %v540 = vpop.f32.mrf.mxu0
        %v541 = vadd.f32 %v444, %v540
        %v542 = vpop.f32.mrf.mxu0
        %v543 = vadd.f32 %v446, %v542
        %544 = vmatmul.bf16.gmra.mxu0 %v503
        %v545 = vpop.f32.mrf.mxu0
        %v546 = vadd.f32 %v449, %v545
        %v547 = vpop.f32.mrf.mxu0
        %v548 = vadd.f32 %v451, %v547
        %549 = vmatmul.bf16.gmra.mxu0 %v506
        %v550 = vpop.f32.mrf.mxu0
        %v551 = vadd.f32 %v454, %v550
        %v552 = vpop.f32.mrf.mxu0
        %v553 = vadd.f32 %v456, %v552
        %554 = vmatmul.bf16.gmra.mxu0 %v509
        %v555 = vpop.f32.mrf.mxu0
        %v556 = vadd.f32 %v459, %v555
        %v557 = vpop.f32.mrf.mxu0
        %v558 = vadd.f32 %v461, %v557
        %559 = vdwg.mxu0
        %v560 = vmul.f32 %v521, 0.5
        %v561 = vmul.f32 %v523, 0.5
        %v562 = vmul.f32 %v526, 0.5
        %v563 = vmul.f32 %v528, 0.5
        %v564 = vmul.f32 %v531, 0.5
        %v565 = vmul.f32 %v533, 0.5
        %v566 = vmul.f32 %v536, 0.5
        %v567 = vmul.f32 %v538, 0.5
        %v568 = vmul.f32 %v541, 0.5
        %v569 = vmul.f32 %v543, 0.5
        %v570 = vmul.f32 %v546, 0.5
        %v571 = vmul.f32 %v548, 0.5
        %v572 = vmul.f32 %v551, 0.5
        %v573 = vmul.f32 %v553, 0.5
        %v574 = vmul.f32 %v556, 0.5
        %v575 = vmul.f32 %v558, 0.5
        %v576 = vmul.f32 %v521, 0.70710677
        %v577 = vmul.f32 %v523, 0.70710677
        %v578 = vmul.f32 %v526, 0.70710677
        %v579 = vmul.f32 %v528, 0.70710677
        %v580 = vmul.f32 %v531, 0.70710677
        %v581 = vmul.f32 %v533, 0.70710677
        %v582 = vmul.f32 %v536, 0.70710677
        %v583 = vmul.f32 %v538, 0.70710677
        %v584 = vmul.f32 %v541, 0.70710677
        %v585 = vmul.f32 %v543, 0.70710677
        %v586 = vmul.f32 %v546, 0.70710677
        %v587 = vmul.f32 %v548, 0.70710677
        %v588 = vmul.f32 %v551, 0.70710677
        %v589 = vmul.f32 %v553, 0.70710677
        %v590 = vmul.f32 %v556, 0.70710677
        %v591 = vmul.f32 %v558, 0.70710677
        %v592 = vmul.f32 %v576, %v576
        %v593 = vmin.f32 16.0, %v592
        %v594 = vmul.f32 %v593, 2.1237322e-06
        %v595 = vadd.f32 %v594, 0.00028619796
        %v596 = vmul.f32 %v593, %v595
        %v597 = vadd.f32 %v596, 0.0036580483
        %v598 = vmul.f32 %v593, %v597
        %v599 = vadd.f32 %v598, 0.05243302
        %v600 = vmul.f32 %v593, %v599
        %v601 = vadd.f32 %v600, 0.18741608
        %v602 = vmul.f32 %v593, %v601
        %v603 = vadd.f32 %v602, 1.1283791
        %v604 = vmul.f32 %v576, %v603
        %v605 = vmul.f32 %v593, 3.8918573e-05
        %v606 = vadd.f32 %v605, 0.001143296
        %v607 = vmul.f32 %v593, %v606
        %v608 = vadd.f32 %v607, 0.014752088
        %v609 = vmul.f32 %v593, %v608
        %v610 = vadd.f32 %v609, 0.112945676
        %v611 = vmul.f32 %v593, %v610
        %v612 = vadd.f32 %v611, 0.4994258
        %v613 = vmul.f32 %v593, %v612
        %v614 = vadd.f32 %v613, 1.0
        %v615 = vrcp.pop %v614
        %v616 = vmul.f32 %v614, %v615
        %v617 = vsub.f32 1.0, %v616
        %v618 = vmul.f32 %v615, %v617
        %v619 = vadd.f32 %v615, %v618
        %vm620 = vweird.f32 %v614
        %vm621 = vweird.f32 %v615
        %vm622 = vmor %vm620, %vm621
        %v623 = vsel %vm622, %v615, %v619
        %v624 = vand.u32 2147483647, %v614
        %vm625 = vcmp.eq.f32.partialorder %v624, 8.507059e+37
        %v626 = vand.u32 %v614, 2147483648
        %v627 = vor.u32 1.1754944e-38, %v626
        %v628 = vsel %vm625, %v627, %v623
        %v629 = vmul.f32 %v604, %v628
        %v630 = vmin.f32 %v629, 1.0
        %v631 = vmax.f32 %v630, -1.0
        %v632 = vmul.f32 %v577, %v577
        %v633 = vmin.f32 16.0, %v632
        %v634 = vmul.f32 %v633, 2.1237322e-06
        %v635 = vadd.f32 %v634, 0.00028619796
        %v636 = vmul.f32 %v633, %v635
        %v637 = vadd.f32 %v636, 0.0036580483
        %v638 = vmul.f32 %v633, %v637
        %v639 = vadd.f32 %v638, 0.05243302
        %v640 = vmul.f32 %v633, %v639
        %v641 = vadd.f32 %v640, 0.18741608
        %v642 = vmul.f32 %v633, %v641
        %v643 = vadd.f32 %v642, 1.1283791
        %v644 = vmul.f32 %v577, %v643
        %v645 = vmul.f32 %v633, 3.8918573e-05
        %v646 = vadd.f32 %v645, 0.001143296
        %v647 = vmul.f32 %v633, %v646
        %v648 = vadd.f32 %v647, 0.014752088
        %v649 = vmul.f32 %v633, %v648
        %v650 = vadd.f32 %v649, 0.112945676
        %v651 = vmul.f32 %v633, %v650
        %v652 = vadd.f32 %v651, 0.4994258
        %v653 = vmul.f32 %v633, %v652
        %v654 = vadd.f32 %v653, 1.0
        %v655 = vrcp.pop %v654
        %v656 = vmul.f32 %v654, %v655
        %v657 = vsub.f32 1.0, %v656
        %v658 = vmul.f32 %v655, %v657
        %v659 = vadd.f32 %v655, %v658
        %vm660 = vweird.f32 %v654
        %vm661 = vweird.f32 %v655
        %vm662 = vmor %vm660, %vm661
        %v663 = vsel %vm662, %v655, %v659
        %v664 = vand.u32 2147483647, %v654
        %vm665 = vcmp.eq.f32.partialorder %v664, 8.507059e+37
        %v666 = vand.u32 %v654, 2147483648
        %v667 = vor.u32 1.1754944e-38, %v666
        %v668 = vsel %vm665, %v667, %v663
        %v669 = vmul.f32 %v644, %v668
        %v670 = vmin.f32 %v669, 1.0
        %v671 = vmax.f32 %v670, -1.0
        %v672 = vmul.f32 %v578, %v578
        %v673 = vmin.f32 16.0, %v672
        %v674 = vmul.f32 %v673, 2.1237322e-06
        %v675 = vadd.f32 %v674, 0.00028619796
        %v676 = vmul.f32 %v673, %v675
        %v677 = vadd.f32 %v676, 0.0036580483
        %v678 = vmul.f32 %v673, %v677
        %v679 = vadd.f32 %v678, 0.05243302
        %v680 = vmul.f32 %v673, %v679
        %v681 = vadd.f32 %v680, 0.18741608
        %v682 = vmul.f32 %v673, %v681
        %v683 = vadd.f32 %v682, 1.1283791
        %v684 = vmul.f32 %v578, %v683
        %v685 = vmul.f32 %v673, 3.8918573e-05
        %v686 = vadd.f32 %v685, 0.001143296
        %v687 = vmul.f32 %v673, %v686
        %v688 = vadd.f32 %v687, 0.014752088
        %v689 = vmul.f32 %v673, %v688
        %v690 = vadd.f32 %v689, 0.112945676
        %v691 = vmul.f32 %v673, %v690
        %v692 = vadd.f32 %v691, 0.4994258
        %v693 = vmul.f32 %v673, %v692
        %v694 = vadd.f32 %v693, 1.0
        %v695 = vrcp.pop %v694
        %v696 = vmul.f32 %v694, %v695
        %v697 = vsub.f32 1.0, %v696
        %v698 = vmul.f32 %v695, %v697
        %v699 = vadd.f32 %v695, %v698
        %vm700 = vweird.f32 %v694
        %vm701 = vweird.f32 %v695
        %vm702 = vmor %vm700, %vm701
        %v703 = vsel %vm702, %v695, %v699
        %v704 = vand.u32 2147483647, %v694
        %vm705 = vcmp.eq.f32.partialorder %v704, 8.507059e+37
        %v706 = vand.u32 %v694, 2147483648
        %v707 = vor.u32 1.1754944e-38, %v706
        %v708 = vsel %vm705, %v707, %v703
        %v709 = vmul.f32 %v684, %v708
        %v710 = vmin.f32 %v709, 1.0
        %v711 = vmax.f32 %v710, -1.0
        %v712 = vmul.f32 %v579, %v579
        %v713 = vmin.f32 16.0, %v712
        %v714 = vmul.f32 %v713, 2.1237322e-06
        %v715 = vadd.f32 %v714, 0.00028619796
        %v716 = vmul.f32 %v713, %v715
        %v717 = vadd.f32 %v716, 0.0036580483
        %v718 = vmul.f32 %v713, %v717
        %v719 = vadd.f32 %v718, 0.05243302
        %v720 = vmul.f32 %v713, %v719
        %v721 = vadd.f32 %v720, 0.18741608
        %v722 = vmul.f32 %v713, %v721
        %v723 = vadd.f32 %v722, 1.1283791
        %v724 = vmul.f32 %v579, %v723
        %v725 = vmul.f32 %v713, 3.8918573e-05
        %v726 = vadd.f32 %v725, 0.001143296
        %v727 = vmul.f32 %v713, %v726
        %v728 = vadd.f32 %v727, 0.014752088
        %v729 = vmul.f32 %v713, %v728
        %v730 = vadd.f32 %v729, 0.112945676
        %v731 = vmul.f32 %v713, %v730
        %v732 = vadd.f32 %v731, 0.4994258
        %v733 = vmul.f32 %v713, %v732
        %v734 = vadd.f32 %v733, 1.0
        %v735 = vrcp.pop %v734
        %v736 = vmul.f32 %v734, %v735
        %v737 = vsub.f32 1.0, %v736
        %v738 = vmul.f32 %v735, %v737
        %v739 = vadd.f32 %v735, %v738
        %vm740 = vweird.f32 %v734
        %vm741 = vweird.f32 %v735
        %vm742 = vmor %vm740, %vm741
        %v743 = vsel %vm742, %v735, %v739
        %v744 = vand.u32 2147483647, %v734
        %vm745 = vcmp.eq.f32.partialorder %v744, 8.507059e+37
        %v746 = vand.u32 %v734, 2147483648
        %v747 = vor.u32 1.1754944e-38, %v746
        %v748 = vsel %vm745, %v747, %v743
        %v749 = vmul.f32 %v724, %v748
        %v750 = vmin.f32 %v749, 1.0
        %v751 = vmax.f32 %v750, -1.0
        %v752 = vmul.f32 %v580, %v580
        %v753 = vmin.f32 16.0, %v752
        %v754 = vmul.f32 %v753, 2.1237322e-06
        %v755 = vadd.f32 %v754, 0.00028619796
        %v756 = vmul.f32 %v753, %v755
        %v757 = vadd.f32 %v756, 0.0036580483
        %v758 = vmul.f32 %v753, %v757
        %v759 = vadd.f32 %v758, 0.05243302
        %v760 = vmul.f32 %v753, %v759
        %v761 = vadd.f32 %v760, 0.18741608
        %v762 = vmul.f32 %v753, %v761
        %v763 = vadd.f32 %v762, 1.1283791
        %v764 = vmul.f32 %v580, %v763
        %v765 = vmul.f32 %v753, 3.8918573e-05
        %v766 = vadd.f32 %v765, 0.001143296
        %v767 = vmul.f32 %v753, %v766
        %v768 = vadd.f32 %v767, 0.014752088
        %v769 = vmul.f32 %v753, %v768
        %v770 = vadd.f32 %v769, 0.112945676
        %v771 = vmul.f32 %v753, %v770
        %v772 = vadd.f32 %v771, 0.4994258
        %v773 = vmul.f32 %v753, %v772
        %v774 = vadd.f32 %v773, 1.0
        %v775 = vrcp.pop %v774
        %v776 = vmul.f32 %v774, %v775
        %v777 = vsub.f32 1.0, %v776
        %v778 = vmul.f32 %v775, %v777
        %v779 = vadd.f32 %v775, %v778
        %vm780 = vweird.f32 %v774
        %vm781 = vweird.f32 %v775
        %vm782 = vmor %vm780, %vm781
        %v783 = vsel %vm782, %v775, %v779
        %v784 = vand.u32 2147483647, %v774
        %vm785 = vcmp.eq.f32.partialorder %v784, 8.507059e+37
        %v786 = vand.u32 %v774, 2147483648
        %v787 = vor.u32 1.1754944e-38, %v786
        %v788 = vsel %vm785, %v787, %v783
        %v789 = vmul.f32 %v764, %v788
        %v790 = vmin.f32 %v789, 1.0
        %v791 = vmax.f32 %v790, -1.0
        %v792 = vmul.f32 %v581, %v581
        %v793 = vmin.f32 16.0, %v792
        %v794 = vmul.f32 %v793, 2.1237322e-06
        %v795 = vadd.f32 %v794, 0.00028619796
        %v796 = vmul.f32 %v793, %v795
        %v797 = vadd.f32 %v796, 0.0036580483
        %v798 = vmul.f32 %v793, %v797
        %v799 = vadd.f32 %v798, 0.05243302
        %v800 = vmul.f32 %v793, %v799
        %v801 = vadd.f32 %v800, 0.18741608
        %v802 = vmul.f32 %v793, %v801
        %v803 = vadd.f32 %v802, 1.1283791
        %v804 = vmul.f32 %v581, %v803
        %v805 = vmul.f32 %v793, 3.8918573e-05
        %v806 = vadd.f32 %v805, 0.001143296
        %v807 = vmul.f32 %v793, %v806
        %v808 = vadd.f32 %v807, 0.014752088
        %v809 = vmul.f32 %v793, %v808
        %v810 = vadd.f32 %v809, 0.112945676
        %v811 = vmul.f32 %v793, %v810
        %v812 = vadd.f32 %v811, 0.4994258
        %v813 = vmul.f32 %v793, %v812
        %v814 = vadd.f32 %v813, 1.0
        %v815 = vrcp.pop %v814
        %v816 = vmul.f32 %v814, %v815
        %v817 = vsub.f32 1.0, %v816
        %v818 = vmul.f32 %v815, %v817
        %v819 = vadd.f32 %v815, %v818
        %vm820 = vweird.f32 %v814
        %vm821 = vweird.f32 %v815
        %vm822 = vmor %vm820, %vm821
        %v823 = vsel %vm822, %v815, %v819
        %v824 = vand.u32 2147483647, %v814
        %vm825 = vcmp.eq.f32.partialorder %v824, 8.507059e+37
        %v826 = vand.u32 %v814, 2147483648
        %v827 = vor.u32 1.1754944e-38, %v826
        %v828 = vsel %vm825, %v827, %v823
        %v829 = vmul.f32 %v804, %v828
        %v830 = vmin.f32 %v829, 1.0
        %v831 = vmax.f32 %v830, -1.0
        %v832 = vmul.f32 %v582, %v582
        %v833 = vmin.f32 16.0, %v832
        %v834 = vmul.f32 %v833, 2.1237322e-06
        %v835 = vadd.f32 %v834, 0.00028619796
        %v836 = vmul.f32 %v833, %v835
        %v837 = vadd.f32 %v836, 0.0036580483
        %v838 = vmul.f32 %v833, %v837
        %v839 = vadd.f32 %v838, 0.05243302
        %v840 = vmul.f32 %v833, %v839
        %v841 = vadd.f32 %v840, 0.18741608
        %v842 = vmul.f32 %v833, %v841
        %v843 = vadd.f32 %v842, 1.1283791
        %v844 = vmul.f32 %v582, %v843
        %v845 = vmul.f32 %v833, 3.8918573e-05
        %v846 = vadd.f32 %v845, 0.001143296
        %v847 = vmul.f32 %v833, %v846
        %v848 = vadd.f32 %v847, 0.014752088
        %v849 = vmul.f32 %v833, %v848
        %v850 = vadd.f32 %v849, 0.112945676
        %v851 = vmul.f32 %v833, %v850
        %v852 = vadd.f32 %v851, 0.4994258
        %v853 = vmul.f32 %v833, %v852
        %v854 = vadd.f32 %v853, 1.0
        %v855 = vrcp.pop %v854
        %v856 = vmul.f32 %v854, %v855
        %v857 = vsub.f32 1.0, %v856
        %v858 = vmul.f32 %v855, %v857
        %v859 = vadd.f32 %v855, %v858
        %vm860 = vweird.f32 %v854
        %vm861 = vweird.f32 %v855
        %vm862 = vmor %vm860, %vm861
        %v863 = vsel %vm862, %v855, %v859
        %v864 = vand.u32 2147483647, %v854
        %vm865 = vcmp.eq.f32.partialorder %v864, 8.507059e+37
        %v866 = vand.u32 %v854, 2147483648
        %v867 = vor.u32 1.1754944e-38, %v866
        %v868 = vsel %vm865, %v867, %v863
        %v869 = vmul.f32 %v844, %v868
        %v870 = vmin.f32 %v869, 1.0
        %v871 = vmax.f32 %v870, -1.0
        %v872 = vmul.f32 %v583, %v583
        %v873 = vmin.f32 16.0, %v872
        %v874 = vmul.f32 %v873, 2.1237322e-06
        %v875 = vadd.f32 %v874, 0.00028619796
        %v876 = vmul.f32 %v873, %v875
        %v877 = vadd.f32 %v876, 0.0036580483
        %v878 = vmul.f32 %v873, %v877
        %v879 = vadd.f32 %v878, 0.05243302
        %v880 = vmul.f32 %v873, %v879
        %v881 = vadd.f32 %v880, 0.18741608
        %v882 = vmul.f32 %v873, %v881
        %v883 = vadd.f32 %v882, 1.1283791
        %v884 = vmul.f32 %v583, %v883
        %v885 = vmul.f32 %v873, 3.8918573e-05
        %v886 = vadd.f32 %v885, 0.001143296
        %v887 = vmul.f32 %v873, %v886
        %v888 = vadd.f32 %v887, 0.014752088
        %v889 = vmul.f32 %v873, %v888
        %v890 = vadd.f32 %v889, 0.112945676
        %v891 = vmul.f32 %v873, %v890
        %v892 = vadd.f32 %v891, 0.4994258
        %v893 = vmul.f32 %v873, %v892
        %v894 = vadd.f32 %v893, 1.0
        %v895 = vrcp.pop %v894
        %v896 = vmul.f32 %v894, %v895
        %v897 = vsub.f32 1.0, %v896
        %v898 = vmul.f32 %v895, %v897
        %v899 = vadd.f32 %v895, %v898
        %vm900 = vweird.f32 %v894
        %vm901 = vweird.f32 %v895
        %vm902 = vmor %vm900, %vm901
        %v903 = vsel %vm902, %v895, %v899
        %v904 = vand.u32 2147483647, %v894
        %vm905 = vcmp.eq.f32.partialorder %v904, 8.507059e+37
        %v906 = vand.u32 %v894, 2147483648
        %v907 = vor.u32 1.1754944e-38, %v906
        %v908 = vsel %vm905, %v907, %v903
        %v909 = vmul.f32 %v884, %v908
        %v910 = vmin.f32 %v909, 1.0
        %v911 = vmax.f32 %v910, -1.0
        %v912 = vmul.f32 %v584, %v584
        %v913 = vmin.f32 16.0, %v912
        %v914 = vmul.f32 %v913, 2.1237322e-06
        %v915 = vadd.f32 %v914, 0.00028619796
        %v916 = vmul.f32 %v913, %v915
        %v917 = vadd.f32 %v916, 0.0036580483
        %v918 = vmul.f32 %v913, %v917
        %v919 = vadd.f32 %v918, 0.05243302
        %v920 = vmul.f32 %v913, %v919
        %v921 = vadd.f32 %v920, 0.18741608
        %v922 = vmul.f32 %v913, %v921
        %v923 = vadd.f32 %v922, 1.1283791
        %v924 = vmul.f32 %v584, %v923
        %v925 = vmul.f32 %v913, 3.8918573e-05
        %v926 = vadd.f32 %v925, 0.001143296
        %v927 = vmul.f32 %v913, %v926
        %v928 = vadd.f32 %v927, 0.014752088
        %v929 = vmul.f32 %v913, %v928
        %v930 = vadd.f32 %v929, 0.112945676
        %v931 = vmul.f32 %v913, %v930
        %v932 = vadd.f32 %v931, 0.4994258
        %v933 = vmul.f32 %v913, %v932
        %v934 = vadd.f32 %v933, 1.0
        %v935 = vrcp.pop %v934
        %v936 = vmul.f32 %v934, %v935
        %v937 = vsub.f32 1.0, %v936
        %v938 = vmul.f32 %v935, %v937
        %v939 = vadd.f32 %v935, %v938
        %vm940 = vweird.f32 %v934
        %vm941 = vweird.f32 %v935
        %vm942 = vmor %vm940, %vm941
        %v943 = vsel %vm942, %v935, %v939
        %v944 = vand.u32 2147483647, %v934
        %vm945 = vcmp.eq.f32.partialorder %v944, 8.507059e+37
        %v946 = vand.u32 %v934, 2147483648
        %v947 = vor.u32 1.1754944e-38, %v946
        %v948 = vsel %vm945, %v947, %v943
        %v949 = vmul.f32 %v924, %v948
        %v950 = vmin.f32 %v949, 1.0
        %v951 = vmax.f32 %v950, -1.0
        %v952 = vmul.f32 %v585, %v585
        %v953 = vmin.f32 16.0, %v952
        %v954 = vmul.f32 %v953, 2.1237322e-06
        %v955 = vadd.f32 %v954, 0.00028619796
        %v956 = vmul.f32 %v953, %v955
        %v957 = vadd.f32 %v956, 0.0036580483
        %v958 = vmul.f32 %v953, %v957
        %v959 = vadd.f32 %v958, 0.05243302
        %v960 = vmul.f32 %v953, %v959
        %v961 = vadd.f32 %v960, 0.18741608
        %v962 = vmul.f32 %v953, %v961
        %v963 = vadd.f32 %v962, 1.1283791
        %v964 = vmul.f32 %v585, %v963
        %v965 = vmul.f32 %v953, 3.8918573e-05
        %v966 = vadd.f32 %v965, 0.001143296
        %v967 = vmul.f32 %v953, %v966
        %v968 = vadd.f32 %v967, 0.014752088
        %v969 = vmul.f32 %v953, %v968
        %v970 = vadd.f32 %v969, 0.112945676
        %v971 = vmul.f32 %v953, %v970
        %v972 = vadd.f32 %v971, 0.4994258
        %v973 = vmul.f32 %v953, %v972
        %v974 = vadd.f32 %v973, 1.0
        %v975 = vrcp.pop %v974
        %v976 = vmul.f32 %v974, %v975
        %v977 = vsub.f32 1.0, %v976
        %v978 = vmul.f32 %v975, %v977
        %v979 = vadd.f32 %v975, %v978
        %vm980 = vweird.f32 %v974
        %vm981 = vweird.f32 %v975
        %vm982 = vmor %vm980, %vm981
        %v983 = vsel %vm982, %v975, %v979
        %v984 = vand.u32 2147483647, %v974
        %vm985 = vcmp.eq.f32.partialorder %v984, 8.507059e+37
        %v986 = vand.u32 %v974, 2147483648
        %v987 = vor.u32 1.1754944e-38, %v986
        %v988 = vsel %vm985, %v987, %v983
        %v989 = vmul.f32 %v964, %v988
        %v990 = vmin.f32 %v989, 1.0
        %v991 = vmax.f32 %v990, -1.0
        %v992 = vmul.f32 %v586, %v586
        %v993 = vmin.f32 16.0, %v992
        %v994 = vmul.f32 %v993, 2.1237322e-06
        %v995 = vadd.f32 %v994, 0.00028619796
        %v996 = vmul.f32 %v993, %v995
        %v997 = vadd.f32 %v996, 0.0036580483
        %v998 = vmul.f32 %v993, %v997
        %v999 = vadd.f32 %v998, 0.05243302
        %v1000 = vmul.f32 %v993, %v999
        %v1001 = vadd.f32 %v1000, 0.18741608
        %v1002 = vmul.f32 %v993, %v1001
        %v1003 = vadd.f32 %v1002, 1.1283791
        %v1004 = vmul.f32 %v586, %v1003
        %v1005 = vmul.f32 %v993, 3.8918573e-05
        %v1006 = vadd.f32 %v1005, 0.001143296
        %v1007 = vmul.f32 %v993, %v1006
        %v1008 = vadd.f32 %v1007, 0.014752088
        %v1009 = vmul.f32 %v993, %v1008
        %v1010 = vadd.f32 %v1009, 0.112945676
        %v1011 = vmul.f32 %v993, %v1010
        %v1012 = vadd.f32 %v1011, 0.4994258
        %v1013 = vmul.f32 %v993, %v1012
        %v1014 = vadd.f32 %v1013, 1.0
        %v1015 = vrcp.pop %v1014
        %v1016 = vmul.f32 %v1014, %v1015
        %v1017 = vsub.f32 1.0, %v1016
        %v1018 = vmul.f32 %v1015, %v1017
        %v1019 = vadd.f32 %v1015, %v1018
        %vm1020 = vweird.f32 %v1014
        %vm1021 = vweird.f32 %v1015
        %vm1022 = vmor %vm1020, %vm1021
        %v1023 = vsel %vm1022, %v1015, %v1019
        %v1024 = vand.u32 2147483647, %v1014
        %vm1025 = vcmp.eq.f32.partialorder %v1024, 8.507059e+37
        %v1026 = vand.u32 %v1014, 2147483648
        %v1027 = vor.u32 1.1754944e-38, %v1026
        %v1028 = vsel %vm1025, %v1027, %v1023
        %v1029 = vmul.f32 %v1004, %v1028
        %v1030 = vmin.f32 %v1029, 1.0
        %v1031 = vmax.f32 %v1030, -1.0
        %v1032 = vmul.f32 %v587, %v587
        %v1033 = vmin.f32 16.0, %v1032
        %v1034 = vmul.f32 %v1033, 2.1237322e-06
        %v1035 = vadd.f32 %v1034, 0.00028619796
        %v1036 = vmul.f32 %v1033, %v1035
        %v1037 = vadd.f32 %v1036, 0.0036580483
        %v1038 = vmul.f32 %v1033, %v1037
        %v1039 = vadd.f32 %v1038, 0.05243302
        %v1040 = vmul.f32 %v1033, %v1039
        %v1041 = vadd.f32 %v1040, 0.18741608
        %v1042 = vmul.f32 %v1033, %v1041
        %v1043 = vadd.f32 %v1042, 1.1283791
        %v1044 = vmul.f32 %v587, %v1043
        %v1045 = vmul.f32 %v1033, 3.8918573e-05
        %v1046 = vadd.f32 %v1045, 0.001143296
        %v1047 = vmul.f32 %v1033, %v1046
        %v1048 = vadd.f32 %v1047, 0.014752088
        %v1049 = vmul.f32 %v1033, %v1048
        %v1050 = vadd.f32 %v1049, 0.112945676
        %v1051 = vmul.f32 %v1033, %v1050
        %v1052 = vadd.f32 %v1051, 0.4994258
        %v1053 = vmul.f32 %v1033, %v1052
        %v1054 = vadd.f32 %v1053, 1.0
        %v1055 = vrcp.pop %v1054
        %v1056 = vmul.f32 %v1054, %v1055
        %v1057 = vsub.f32 1.0, %v1056
        %v1058 = vmul.f32 %v1055, %v1057
        %v1059 = vadd.f32 %v1055, %v1058
        %vm1060 = vweird.f32 %v1054
        %vm1061 = vweird.f32 %v1055
        %vm1062 = vmor %vm1060, %vm1061
        %v1063 = vsel %vm1062, %v1055, %v1059
        %v1064 = vand.u32 2147483647, %v1054
        %vm1065 = vcmp.eq.f32.partialorder %v1064, 8.507059e+37
        %v1066 = vand.u32 %v1054, 2147483648
        %v1067 = vor.u32 1.1754944e-38, %v1066
        %v1068 = vsel %vm1065, %v1067, %v1063
        %v1069 = vmul.f32 %v1044, %v1068
        %v1070 = vmin.f32 %v1069, 1.0
        %v1071 = vmax.f32 %v1070, -1.0
        %v1072 = vmul.f32 %v588, %v588
        %v1073 = vmin.f32 16.0, %v1072
        %v1074 = vmul.f32 %v1073, 2.1237322e-06
        %v1075 = vadd.f32 %v1074, 0.00028619796
        %v1076 = vmul.f32 %v1073, %v1075
        %v1077 = vadd.f32 %v1076, 0.0036580483
        %v1078 = vmul.f32 %v1073, %v1077
        %v1079 = vadd.f32 %v1078, 0.05243302
        %v1080 = vmul.f32 %v1073, %v1079
        %v1081 = vadd.f32 %v1080, 0.18741608
        %v1082 = vmul.f32 %v1073, %v1081
        %v1083 = vadd.f32 %v1082, 1.1283791
        %v1084 = vmul.f32 %v588, %v1083
        %v1085 = vmul.f32 %v1073, 3.8918573e-05
        %v1086 = vadd.f32 %v1085, 0.001143296
        %v1087 = vmul.f32 %v1073, %v1086
        %v1088 = vadd.f32 %v1087, 0.014752088
        %v1089 = vmul.f32 %v1073, %v1088
        %v1090 = vadd.f32 %v1089, 0.112945676
        %v1091 = vmul.f32 %v1073, %v1090
        %v1092 = vadd.f32 %v1091, 0.4994258
        %v1093 = vmul.f32 %v1073, %v1092
        %v1094 = vadd.f32 %v1093, 1.0
        %v1095 = vrcp.pop %v1094
        %v1096 = vmul.f32 %v1094, %v1095
        %v1097 = vsub.f32 1.0, %v1096
        %v1098 = vmul.f32 %v1095, %v1097
        %v1099 = vadd.f32 %v1095, %v1098
        %vm1100 = vweird.f32 %v1094
        %vm1101 = vweird.f32 %v1095
        %vm1102 = vmor %vm1100, %vm1101
        %v1103 = vsel %vm1102, %v1095, %v1099
        %v1104 = vand.u32 2147483647, %v1094
        %vm1105 = vcmp.eq.f32.partialorder %v1104, 8.507059e+37
        %v1106 = vand.u32 %v1094, 2147483648
        %v1107 = vor.u32 1.1754944e-38, %v1106
        %v1108 = vsel %vm1105, %v1107, %v1103
        %v1109 = vmul.f32 %v1084, %v1108
        %v1110 = vmin.f32 %v1109, 1.0
        %v1111 = vmax.f32 %v1110, -1.0
        %v1112 = vmul.f32 %v589, %v589
        %v1113 = vmin.f32 16.0, %v1112
        %v1114 = vmul.f32 %v1113, 2.1237322e-06
        %v1115 = vadd.f32 %v1114, 0.00028619796
        %v1116 = vmul.f32 %v1113, %v1115
        %v1117 = vadd.f32 %v1116, 0.0036580483
        %v1118 = vmul.f32 %v1113, %v1117
        %v1119 = vadd.f32 %v1118, 0.05243302
        %v1120 = vmul.f32 %v1113, %v1119
        %v1121 = vadd.f32 %v1120, 0.18741608
        %v1122 = vmul.f32 %v1113, %v1121
        %v1123 = vadd.f32 %v1122, 1.1283791
        %v1124 = vmul.f32 %v589, %v1123
        %v1125 = vmul.f32 %v1113, 3.8918573e-05
        %v1126 = vadd.f32 %v1125, 0.001143296
        %v1127 = vmul.f32 %v1113, %v1126
        %v1128 = vadd.f32 %v1127, 0.014752088
        %v1129 = vmul.f32 %v1113, %v1128
        %v1130 = vadd.f32 %v1129, 0.112945676
        %v1131 = vmul.f32 %v1113, %v1130
        %v1132 = vadd.f32 %v1131, 0.4994258
        %v1133 = vmul.f32 %v1113, %v1132
        %v1134 = vadd.f32 %v1133, 1.0
        %v1135 = vrcp.pop %v1134
        %v1136 = vmul.f32 %v1134, %v1135
        %v1137 = vsub.f32 1.0, %v1136
        %v1138 = vmul.f32 %v1135, %v1137
        %v1139 = vadd.f32 %v1135, %v1138
        %vm1140 = vweird.f32 %v1134
        %vm1141 = vweird.f32 %v1135
        %vm1142 = vmor %vm1140, %vm1141
        %v1143 = vsel %vm1142, %v1135, %v1139
        %v1144 = vand.u32 2147483647, %v1134
        %vm1145 = vcmp.eq.f32.partialorder %v1144, 8.507059e+37
        %v1146 = vand.u32 %v1134, 2147483648
        %v1147 = vor.u32 1.1754944e-38, %v1146
        %v1148 = vsel %vm1145, %v1147, %v1143
        %v1149 = vmul.f32 %v1124, %v1148
        %v1150 = vmin.f32 %v1149, 1.0
        %v1151 = vmax.f32 %v1150, -1.0
        %v1152 = vmul.f32 %v590, %v590
        %v1153 = vmin.f32 16.0, %v1152
        %v1154 = vmul.f32 %v1153, 2.1237322e-06
        %v1155 = vadd.f32 %v1154, 0.00028619796
        %v1156 = vmul.f32 %v1153, %v1155
        %v1157 = vadd.f32 %v1156, 0.0036580483
        %v1158 = vmul.f32 %v1153, %v1157
        %v1159 = vadd.f32 %v1158, 0.05243302
        %v1160 = vmul.f32 %v1153, %v1159
        %v1161 = vadd.f32 %v1160, 0.18741608
        %v1162 = vmul.f32 %v1153, %v1161
        %v1163 = vadd.f32 %v1162, 1.1283791
        %v1164 = vmul.f32 %v590, %v1163
        %v1165 = vmul.f32 %v1153, 3.8918573e-05
        %v1166 = vadd.f32 %v1165, 0.001143296
        %v1167 = vmul.f32 %v1153, %v1166
        %v1168 = vadd.f32 %v1167, 0.014752088
        %v1169 = vmul.f32 %v1153, %v1168
        %v1170 = vadd.f32 %v1169, 0.112945676
        %v1171 = vmul.f32 %v1153, %v1170
        %v1172 = vadd.f32 %v1171, 0.4994258
        %v1173 = vmul.f32 %v1153, %v1172
        %v1174 = vadd.f32 %v1173, 1.0
        %v1175 = vrcp.pop %v1174
        %v1176 = vmul.f32 %v1174, %v1175
        %v1177 = vsub.f32 1.0, %v1176
        %v1178 = vmul.f32 %v1175, %v1177
        %v1179 = vadd.f32 %v1175, %v1178
        %vm1180 = vweird.f32 %v1174
        %vm1181 = vweird.f32 %v1175
        %vm1182 = vmor %vm1180, %vm1181
        %v1183 = vsel %vm1182, %v1175, %v1179
        %v1184 = vand.u32 2147483647, %v1174
        %vm1185 = vcmp.eq.f32.partialorder %v1184, 8.507059e+37
        %v1186 = vand.u32 %v1174, 2147483648
        %v1187 = vor.u32 1.1754944e-38, %v1186
        %v1188 = vsel %vm1185, %v1187, %v1183
        %v1189 = vmul.f32 %v1164, %v1188
        %v1190 = vmin.f32 %v1189, 1.0
        %v1191 = vmax.f32 %v1190, -1.0
        %v1192 = vmul.f32 %v591, %v591
        %v1193 = vmin.f32 16.0, %v1192
        %v1194 = vmul.f32 %v1193, 2.1237322e-06
        %v1195 = vadd.f32 %v1194, 0.00028619796
        %v1196 = vmul.f32 %v1193, %v1195
        %v1197 = vadd.f32 %v1196, 0.0036580483
        %v1198 = vmul.f32 %v1193, %v1197
        %v1199 = vadd.f32 %v1198, 0.05243302
        %v1200 = vmul.f32 %v1193, %v1199
        %v1201 = vadd.f32 %v1200, 0.18741608
        %v1202 = vmul.f32 %v1193, %v1201
        %v1203 = vadd.f32 %v1202, 1.1283791
        %v1204 = vmul.f32 %v591, %v1203
        %v1205 = vmul.f32 %v1193, 3.8918573e-05
        %v1206 = vadd.f32 %v1205, 0.001143296
        %v1207 = vmul.f32 %v1193, %v1206
        %v1208 = vadd.f32 %v1207, 0.014752088
        %v1209 = vmul.f32 %v1193, %v1208
        %v1210 = vadd.f32 %v1209, 0.112945676
        %v1211 = vmul.f32 %v1193, %v1210
        %v1212 = vadd.f32 %v1211, 0.4994258
        %v1213 = vmul.f32 %v1193, %v1212
        %v1214 = vadd.f32 %v1213, 1.0
        %v1215 = vrcp.pop %v1214
        %v1216 = vmul.f32 %v1214, %v1215
        %v1217 = vsub.f32 1.0, %v1216
        %v1218 = vmul.f32 %v1215, %v1217
        %v1219 = vadd.f32 %v1215, %v1218
        %vm1220 = vweird.f32 %v1214
        %vm1221 = vweird.f32 %v1215
        %vm1222 = vmor %vm1220, %vm1221
        %v1223 = vsel %vm1222, %v1215, %v1219
        %v1224 = vand.u32 2147483647, %v1214
        %vm1225 = vcmp.eq.f32.partialorder %v1224, 8.507059e+37
        %v1226 = vand.u32 %v1214, 2147483648
        %v1227 = vor.u32 1.1754944e-38, %v1226
        %v1228 = vsel %vm1225, %v1227, %v1223
        %v1229 = vmul.f32 %v1204, %v1228
        %v1230 = vmin.f32 %v1229, 1.0
        %v1231 = vmax.f32 %v1230, -1.0
        %v1232 = vadd.f32 %v631, 1.0
        %v1233 = vadd.f32 %v671, 1.0
        %v1234 = vadd.f32 %v711, 1.0
        %v1235 = vadd.f32 %v751, 1.0
        %v1236 = vadd.f32 %v791, 1.0
        %v1237 = vadd.f32 %v831, 1.0
        %v1238 = vadd.f32 %v871, 1.0
        %v1239 = vadd.f32 %v911, 1.0
        %v1240 = vadd.f32 %v951, 1.0
        %v1241 = vadd.f32 %v991, 1.0
        %v1242 = vadd.f32 %v1031, 1.0
        %v1243 = vadd.f32 %v1071, 1.0
        %v1244 = vadd.f32 %v1111, 1.0
        %v1245 = vadd.f32 %v1151, 1.0
        %v1246 = vadd.f32 %v1191, 1.0
        %v1247 = vadd.f32 %v1231, 1.0
        %v1248 = vmul.f32 %v560, %v1232
        %v1249 = vmul.f32 %v561, %v1233
        %v1250 = vmul.f32 %v562, %v1234
        %v1251 = vmul.f32 %v563, %v1235
        %v1252 = vmul.f32 %v564, %v1236
        %v1253 = vmul.f32 %v565, %v1237
        %v1254 = vmul.f32 %v566, %v1238
        %v1255 = vmul.f32 %v567, %v1239
        %v1256 = vmul.f32 %v568, %v1240
        %v1257 = vmul.f32 %v569, %v1241
        %v1258 = vmul.f32 %v570, %v1242
        %v1259 = vmul.f32 %v571, %v1243
        %v1260 = vmul.f32 %v572, %v1244
        %v1261 = vmul.f32 %v573, %v1245
        %v1262 = vmul.f32 %v574, %v1246
        %v1263 = vmul.f32 %v575, %v1247
        %1264 = vxpose.xlu0.b32.start [1/16] %v1248, 128
        %1265 = vxpose.xlu0.b32.cont [2/16] %v1249, 128
        %1266 = vxpose.xlu0.b32.cont [3/16] %v1250, 128
        %1267 = vxpose.xlu0.b32.cont [4/16] %v1251, 128
        %1268 = vxpose.xlu0.b32.cont [5/16] %v1252, 128
        %1269 = vxpose.xlu0.b32.cont [6/16] %v1253, 128
        %1270 = vxpose.xlu0.b32.cont [7/16] %v1254, 128
        %1271 = vxpose.xlu0.b32.cont [8/16] %v1255, 128
        %1272 = vxpose.xlu0.b32.cont [9/16] %v1256, 128
        %1273 = vxpose.xlu0.b32.cont [10/16] %v1257, 128
        %1274 = vxpose.xlu0.b32.cont [11/16] %v1258, 128
        %1275 = vxpose.xlu0.b32.cont [12/16] %v1259, 128
        %1276 = vxpose.xlu0.b32.cont [13/16] %v1260, 128
        %1277 = vxpose.xlu0.b32.cont [14/16] %v1261, 128
        %1278 = vxpose.xlu0.b32.cont [15/16] %v1262, 128
        %1279 = vxpose.xlu0.b32.end [16/16] %v1263, 128
        %v1280 = vpop.trf.xlu0
        %v1281 = vpop.trf.xlu0
        %v1282 = vpop.trf.xlu0
        %v1283 = vpop.trf.xlu0
        %v1284 = vpop.trf.xlu0
        %v1285 = vpop.trf.xlu0
        %v1286 = vpop.trf.xlu0
        %v1287 = vpop.trf.xlu0
        %v1288 = vpop.trf.xlu0
        %v1289 = vpop.trf.xlu0
        %v1290 = vpop.trf.xlu0
        %v1291 = vpop.trf.xlu0
        %v1292 = vpop.trf.xlu0
        %v1293 = vpop.trf.xlu0
        %v1294 = vpop.trf.xlu0
        %v1295 = vpop.trf.xlu0
        %v1296 = vpack.c.bf16 %v1280, %v1280
        %v1297 = vpack.c.bf16 %v1281, %v1281
        %v1298 = vpack.c.bf16 %v1282, %v1282
        %v1299 = vpack.c.bf16 %v1283, %v1283
        %v1300 = vpack.c.bf16 %v1284, %v1284
        %v1301 = vpack.c.bf16 %v1285, %v1285
        %v1302 = vpack.c.bf16 %v1286, %v1286
        %v1303 = vpack.c.bf16 %v1287, %v1287
        %1304 = vst [vmem:[%s161] sm:$0xf] %v1296
        %1305 = vst [vmem:[%s161 + $0x4] sm:$0xf] %v1297
        %1306 = vst [vmem:[%s161 + $0x8] sm:$0xf] %v1298
        %1307 = vst [vmem:[%s161 + $0xc] sm:$0xf] %v1299
        %1308 = vst [vmem:[%s161 + $0x10] sm:$0xf] %v1300
        %1309 = vst [vmem:[%s161 + $0x14] sm:$0xf] %v1301
        %1310 = vst [vmem:[%s161 + $0x18] sm:$0xf] %v1302
        %1311 = vst [vmem:[%s161 + $0x1c] sm:$0xf] %v1303
        %s1312 = sand.u32 %s87, 1
        %s1313 = scalar_lea.sflag [#allocation4], %s1312
        %s1314 = sand.u32 %s87, 1
        %s1315 = smul.addr %s1314, 32
        %s1316 = scalar_lea.vmem [#allocation3], %s1315
        // Predicated region
        $region29: #{_lambda_.7} parent=27 // pred_check
          %p1317 = pneg %p97
        $region30: #{_lambda_.7} parent=27 // pred_check_branch
          %1319 = sbr.rel (%p1317) target = $region32
        $region31: #{_lambda_.7} parent=27 // pred_region
          %1321 = vsyncadd %s1313, 0
          %s1322 = smul.addr %s20, 8
          %s1323 = sadd.s32 %s21, %s1322
          %s1324 = smul.addr %s1323, 4
          %s1325 = scalar_lea.hbm %s2, %s1324
          %s1326 = sshll.u32 %s1316, 4
          %s1327 = int_to_ptr.vmem [resolvable:$true] %s1326
          %s1328 = sshll.u32 %s1325, 4
          %s1329 = int_to_ptr.hbm [resolvable:$true] %s1328
          %1334 = dma.vmem_to_hbm [thread:$0]  %s1327, 512, %s1329, %s1313, 64, 64, 4
        $region32: #{_lambda_.7} parent=27 // pred_fallthru
          _
      $region28: #{_lambda_.7} parent=5 // pred_fallthru
        _
      %p1335 = scmp.le.s32.totalorder 2, %s11
      // Predicated region
      $region33: #{_lambda_.7} parent=5 // pred_check
        %p1336 = pneg %p1335
      $region34: #{_lambda_.7} parent=5 // pred_check_branch
        %1338 = sbr.rel (%p1336) target = $region36
      $region35: #{_lambda_.7} parent=5 // pred_region
        %s1339 = ssub.s32 %s11, 2
        // Predicated region
        $region37: #{_lambda_.7} parent=35 // pred_check
          %p1340 = pneg %p103
        $region38: #{_lambda_.7} parent=35 // pred_check_branch
          %1342 = sbr.rel (%p1340) target = $region40
        $region39: #{_lambda_.7} parent=35 // pred_region
          %s1343 = sand.u32 %s88, 1
          %s1344 = scalar_lea.sflag [#allocation4], %s1343
          %s1345 = sand.u32 %s88, 1
          %s1346 = smul.addr %s1345, 32
          %s1347 = scalar_lea.vmem [#allocation3], %s1346
          %1349 = dma.done %s1344, 512
        $region40: #{_lambda_.7} parent=35 // pred_fallthru
          _
      $region36: #{_lambda_.7} parent=5 // pred_fallthru
        _
    $region6: #{_lambda_.7} parent=1 // loop_footer
      %s15 = sadd.s32 1, %s11
    $region7: #{_lambda_.7} parent=1 // loop_footer_branch
      %10 = sbr.rel target = $region3
    $region8: #{_lambda_.7} parent=1 // loop_exit
      _
    %1350 = vsyncpa [#allocation4], 1
    %s1351 = scalar_lea.sflag [#allocation4], 1
    %1352 = vsyncpa %s1351, 1

</llo_original>
